<compile_context>
chip_gen: v7x
topology: tpu7x:2x2x1
jax: 0.10.0
libtpu: 0.0.40
codegen_flags: <defaults>
</compile_context>

<pallas_src>
import math
from functools import partial

import jax
import jax.numpy as jnp
from jax.experimental import pallas as pl
from jax.experimental.pallas import tpu as pltpu

GROUPS = 32
EPS = 1e-5


# ----------------------------------------------------------------------------
# In-kernel helpers (operate on VMEM values / refs).
# ----------------------------------------------------------------------------
def _group_norm_silu(x, gamma, beta, *, groups, eps):
    """GroupNorm (affine) + SiLU on a (rows, C) f32 value, rows = H*W."""
    rows, c = x.shape
    cg = c // groups
    # Channel->group membership matrices built from 2-D iota (no HBM inputs).
    ci = jax.lax.broadcasted_iota(jnp.int32, (c, groups), 0)
    gi = jax.lax.broadcasted_iota(jnp.int32, (c, groups), 1) * cg
    m = jnp.logical_and(ci >= gi, ci < gi + cg).astype(jnp.float32)        # (C, G)
    ci_t = jax.lax.broadcasted_iota(jnp.int32, (groups, c), 1)
    gi_t = jax.lax.broadcasted_iota(jnp.int32, (groups, c), 0) * cg
    mt = jnp.logical_and(ci_t >= gi_t, ci_t < gi_t + cg).astype(jnp.float32)  # (G, C)

    cnt = float(rows * cg)
    s_c = jnp.sum(x, axis=0, keepdims=True)                                # (1, C)
    mean_g = jnp.dot(s_c, m, preferred_element_type=jnp.float32) / cnt     # (1, G)
    mean_c = jnp.dot(mean_g, mt, preferred_element_type=jnp.float32)       # (1, C)
    xc = x - mean_c                                                        # centered (stable)
    ss_c = jnp.sum(xc * xc, axis=0, keepdims=True)                         # (1, C)
    var_g = jnp.dot(ss_c, m, preferred_element_type=jnp.float32) / cnt     # (1, G)
    inv_c = jnp.dot(jax.lax.rsqrt(var_g + eps), mt,
                    preferred_element_type=jnp.float32)                    # (1, C)
    y = xc * (inv_c * gamma) + beta        # fused scale/shift (x already centered)
    return y * jax.nn.sigmoid(y)           # SiLU


def _conv3x3(y, pad_ref, w_ref, b_ref, *, h, w, cin, cout, conv_dtype):
    """3x3 / stride-1 / pad-1 conv.

    y:       (H*W, Cin) f32 activation.
    pad_ref: persistent VMEM scratch (H+2, W+2, Cin) in conv_dtype (halo pad).
    w_ref:   (9*Cin, Cout) weights in conv_dtype, row order (kh, kw, cin).
    b_ref:   (1, Cout) f32 bias.
    """
    # Zero halo + write interior (see header comment re: zeroing every step).
    pad_ref[...] = jnp.zeros_like(pad_ref)
    pad_ref[1:h + 1, 1:w + 1, :] = y.reshape(h, w, cin).astype(conv_dtype)

    # im2col: one (H*W, 9*Cin) slab, one MXU matmul with K = 9*Cin.
    slab = jnp.concatenate(
        [pad_ref[kh:kh + h, kw:kw + w, :].reshape(h * w, cin)
         for kh in range(3) for kw in range(3)], axis=-1)                  # (H*W, 9*Cin)
    acc = jnp.dot(slab, w_ref[...], preferred_element_type=jnp.float32)    # (H*W, Cout) f32
    return acc + b_ref[...]


# ----------------------------------------------------------------------------
# The fused ResnetBlock kernel (one batch image per grid step).
# ----------------------------------------------------------------------------
def _resnet_block_kernel(x_ref, g1_ref, b1_ref, w1_ref, c1b_ref,
                         g2_ref, b2_ref, w2_ref, c2b_ref, *rest,
                         h, w, cin, cout, groups, eps, skip_scale,
                         has_shortcut, conv_dtype):
    if has_shortcut:
        ws_ref, bs_ref, o_ref, pad1_ref, pad2_ref = rest
    else:
        o_ref, pad1_ref, pad2_ref = rest

    # NCHW block (1, Cin, H*W) -> row-major (H*W, Cin) working layout.
    # The transpose stays in VMEM (XLU); no HBM transpose round trip.
    x_cm = x_ref[...].reshape(cin, h * w).astype(jnp.float32)              # (Cin, H*W)
    x = jnp.transpose(x_cm)                                                # (H*W, Cin)

    # norm1 + SiLU + conv1
    y1 = _group_norm_silu(x, g1_ref[...], b1_ref[...], groups=groups, eps=eps)
    h1 = _conv3x3(y1, pad1_ref, w1_ref, c1b_ref,
                  h=h, w=w, cin=cin, cout=cout, conv_dtype=conv_dtype)

    # norm2 + SiLU + conv2
    y2 = _group_norm_silu(h1, g2_ref[...], b2_ref[...], groups=groups, eps=eps)
    h2 = _conv3x3(y2, pad2_ref, w2_ref, c2b_ref,
                  h=h, w=w, cin=cout, cout=cout, conv_dtype=conv_dtype)

    # shortcut (1x1 conv when Cin != Cout, identity otherwise; kept f32) + scale
    if has_shortcut:
        sc = jnp.dot(x, ws_ref[...], preferred_element_type=jnp.float32) + bs_ref[...]
    else:
        sc = x
    out = (h2 + sc) * skip_scale                                           # (H*W, Cout) f32

    # Store channel-major (Cout, H*W): lane-dense last dim and already in NCHW
    # element order, so the wrapper only reshapes (no transpose, no HBM pass).
    o_ref[...] = jnp.transpose(out).reshape(1, cout, h * w).astype(o_ref.dtype)


def resnet_block_forward(params, x_nchw, *, groups=GROUPS, eps=EPS,
                         skip_scale=1.0, resample="default",
                         conv_dtype=jnp.bfloat16):
    assert resample == "default", "only resample='default' is implemented"
    n, cin, h, w = x_nchw.shape
    cout = params["w1"].shape[-1]
    assert cin % groups == 0 and cout % groups == 0, \
        "channel counts must be divisible by `groups`"
    has_shortcut = "ws" in params

    # Free reshapes only (contiguous NCHW): no wrapper transposes.
    x = x_nchw.reshape(n, cin, h * w)
    # HWIO (3,3,Cin,Cout) -> (9*Cin, Cout) with (kh, kw, cin) row order; bf16
    # weights halve DMA / VMEM and feed the MXU at its bf16 peak.
    w1 = params["w1"].reshape(9 * cin, cout).astype(conv_dtype)
    w2 = params["w2"].reshape(9 * cout, cout).astype(conv_dtype)

    kern = partial(_resnet_block_kernel, h=h, w=w, cin=cin, cout=cout,
                   groups=groups, eps=eps, skip_scale=float(skip_scale),
                   has_shortcut=has_shortcut, conv_dtype=conv_dtype)

    in_specs = [
        pl.BlockSpec((1, cin, h * w), lambda i: (i, 0, 0)),      # x (one image / block)
        pl.BlockSpec((1, cin), lambda i: (0, 0)),                # norm1 gamma
        pl.BlockSpec((1, cin), lambda i: (0, 0)),                # norm1 beta
        pl.BlockSpec((9 * cin, cout), lambda i: (0, 0)),         # conv1 weight (bf16)
        pl.BlockSpec((1, cout), lambda i: (0, 0)),               # conv1 bias
        pl.BlockSpec((1, cout), lambda i: (0, 0)),               # norm2 gamma
        pl.BlockSpec((1, cout), lambda i: (0, 0)),               # norm2 beta
        pl.BlockSpec((9 * cout, cout), lambda i: (0, 0)),        # conv2 weight (bf16)
        pl.BlockSpec((1, cout), lambda i: (0, 0)),               # conv2 bias
    ]
    args = [x,
            params["g1"].reshape(1, cin), params["b1"].reshape(1, cin),
            w1, params["bias1"].reshape(1, cout),
            params["g2"].reshape(1, cout), params["b2"].reshape(1, cout),
            w2, params["bias2"].reshape(1, cout)]
    if has_shortcut:
        in_specs += [pl.BlockSpec((cin, cout), lambda i: (0, 0)),
                     pl.BlockSpec((1, cout), lambda i: (0, 0))]
        args += [params["ws"], params["bs"].reshape(1, cout)]

    out = pl.pallas_call(
        kern,
        out_shape=jax.ShapeDtypeStruct((n, cout, h * w), jnp.float32),
        grid=(n,),
        in_specs=in_specs,
        out_specs=pl.BlockSpec((1, cout, h * w), lambda i: (i, 0, 0)),
        scratch_shapes=[pltpu.VMEM((h + 2, w + 2, cin), conv_dtype),   # conv1 halo pad
                        pltpu.VMEM((h + 2, w + 2, cout), conv_dtype)], # conv2 halo pad
        compiler_params=pltpu.CompilerParams(
            # Batch axis -> 2-TC shard on v7x; serial loop on v5e/v6e.
            dimension_semantics=("parallel",),
            # No vmem_limit_bytes: per-step working set is small; a hard
            # 64 MiB request would be unsafe on v7x (64 MiB physical VMEM).
        ),
    )(*args)
    return out.reshape(n, cout, h, w)        # pure reshape back to NCHW (free)


# ----------------------------------------------------------------------------
# Deterministic parameter init (shapes implied by the PyTorch __init__).
# ----------------------------------------------------------------------------
def init_params(key, in_channels, out_channels):
    def nrm(k, shape, scl):
        return scl * jax.random.normal(k, shape, jnp.float32)

    key, *ks = jax.random.split(key, 12)
    p = {
        "g1": 1.0 + nrm(ks[0], (in_channels,), 0.1),
        "b1": nrm(ks[1], (in_channels,), 0.1),
        "w1": nrm(ks[2], (3, 3, in_channels, out_channels),
                  1.0 / math.sqrt(9 * in_channels)),
        "bias1": nrm(ks[3], (out_channels,), 0.05),
        "g2": 1.0 + nrm(ks[4], (out_channels,), 0.1),
        "b2": nrm(ks[5], (out_channels,), 0.1),
        "w2": nrm(ks[6], (3, 3, out_channels, out_channels),
                  1.0 / math.sqrt(9 * out_channels)),
        "bias2": nrm(ks[7], (out_channels,), 0.05),
    }
    if in_channels != out_channels:   # 1x1 shortcut conv
        p["ws"] = nrm(ks[8], (in_channels, out_channels), 1.0 / math.sqrt(in_channels))
        p["bs"] = nrm(ks[9], (out_channels,), 0.05)
    return p


# ----------------------------------------------------------------------------
# Pure-JAX reference (correctness check only, f32 math).
# ----------------------------------------------------------------------------
def _ref_group_norm(x, gamma, beta, groups=GROUPS, eps=EPS):
    n, h, w, c = x.shape
    cg = c // groups
    xr = x.reshape(n, h * w, groups, cg)
    mean = xr.mean(axis=(1, 3), keepdims=True)
    var = ((xr - mean) ** 2).mean(axis=(1, 3), keepdims=True)
    y = ((xr - mean) / jnp.sqrt(var + eps)).reshape(n, h, w, c)
    return y * gamma + beta


def _ref_conv3x3(x, wgt, b):
    y = jax.lax.conv_general_dilated(x, wgt, (1, 1), "SAME",
                                     dimension_numbers=("NHWC", "HWIO", "NHWC"))
    return y + b


def resnet_block_reference(params, x_nchw, *, groups=GROUPS, eps=EPS, skip_scale=1.0):
    x = jnp.transpose(x_nchw, (0, 2, 3, 1))
    res = x
    h = jax.nn.silu(_ref_group_norm(x, params["g1"], params["b1"], groups, eps))
    h = _ref_conv3x3(h, params["w1"], params["bias1"])
    h = jax.nn.silu(_ref_group_norm(h, params["g2"], params["b2"], groups, eps))
    h = _ref_conv3x3(h, params["w2"], params["bias2"])
    if "ws" in params:
        sc = jnp.einsum("nhwc,cd->nhwd", res, params["ws"]) + params["bs"]
    else:
        sc = res
    out = (h + sc) * skip_scale
    return jnp.transpose(out, (0, 3, 1, 2))


if __name__ == "__main__":
    key = jax.random.PRNGKey(0)

    # Config A: in_channels != out_channels -> exercises the fused 1x1 shortcut.
    #   ResnetBlock(32, 64, groups=32, eps=1e-5, skip_scale=1/sqrt(2))
    key, kx, kp = jax.random.split(key, 3)
    xA = jax.random.normal(kx, (2, 32, 16, 16), jnp.float32)         # NCHW
    pA = init_params(kp, 32, 64)
    ss = 0.70710678
    refA = resnet_block_reference(pA, xA, skip_scale=ss)

    # A1: exact-path check with f32 conv operands (tight tolerance).
    outA32 = jax.block_until_ready(
        resnet_block_forward(pA, xA, skip_scale=ss, conv_dtype=jnp.float32))
    assert outA32.shape == (2, 64, 16, 16), outA32.shape
    errA32 = float(jnp.max(jnp.abs(outA32 - refA)))
    assert errA32 < 2e-3, f"config A (f32 conv) max abs error vs reference: {errA32}"

    # A2: default fast path (bf16 MXU operands, f32 accumulation) -> looser tol.
    outA = jax.block_until_ready(resnet_block_forward(pA, xA, skip_scale=ss))
    errA = float(jnp.max(jnp.abs(outA - refA)))
    assert errA < 1e-1, f"config A (bf16 conv) max abs error vs reference: {errA}"

    # Config B: in_channels == out_channels -> identity shortcut path.
    #   ResnetBlock(64, 64, groups=32, eps=1e-5, skip_scale=1)
    key, kx2, kp2 = jax.random.split(key, 3)
    xB = jax.random.normal(kx2, (2, 64, 8, 8), jnp.float32)          # NCHW
    pB = init_params(kp2, 64, 64)
    outB = jax.block_until_ready(resnet_block_forward(pB, xB))
    assert outB.shape == (2, 64, 8, 8), outB.shape
    refB = resnet_block_reference(pB, xB)
    errB = float(jnp.max(jnp.abs(outB - refB)))
    assert errB < 1e-1, f"config B (bf16 conv) max abs error vs reference: {errB}"

    print("KERNEL_OK")
</pallas_src>

<mosaic_0001>
module attributes {stable_mosaic.version = 11 : i64} {
  func.func @_resnet_block_kernel(%arg0: i32, %arg1: memref<1x32x256xf32, #tpu.memory_space<vmem>>, %arg2: memref<1x32xf32, #tpu.memory_space<vmem>>, %arg3: memref<1x32xf32, #tpu.memory_space<vmem>>, %arg4: memref<288x64xf32, #tpu.memory_space<vmem>>, %arg5: memref<1x64xf32, #tpu.memory_space<vmem>>, %arg6: memref<1x64xf32, #tpu.memory_space<vmem>>, %arg7: memref<1x64xf32, #tpu.memory_space<vmem>>, %arg8: memref<576x64xf32, #tpu.memory_space<vmem>>, %arg9: memref<1x64xf32, #tpu.memory_space<vmem>>, %arg10: memref<32x64xf32, #tpu.memory_space<vmem>>, %arg11: memref<1x64xf32, #tpu.memory_space<vmem>>, %arg12: memref<1x64x256xf32, #tpu.memory_space<vmem>>, %arg13: memref<18x18x32xf32, #tpu.memory_space<vmem>>, %arg14: memref<18x18x64xf32, #tpu.memory_space<vmem>>) attributes {dimension_semantics = [#tpu.dimension_semantics<parallel>], iteration_bounds = array<i64: 2>, scalar_prefetch = 0 : i64, scratch_operands = 2 : i64, tpu.core_type = #tpu.core_type<tc>, window_params = [{transform_indices = @transform_0, window_bounds = array<i64: 1, 32, 256>}, {pipeline_mode = #tpu.pipeline_mode<synchronous>, transform_indices = @transform_1, window_bounds = array<i64: 1, 32>}, {pipeline_mode = #tpu.pipeline_mode<synchronous>, transform_indices = @transform_2, window_bounds = array<i64: 1, 32>}, {pipeline_mode = #tpu.pipeline_mode<synchronous>, transform_indices = @transform_3, window_bounds = array<i64: 288, 64>}, {pipeline_mode = #tpu.pipeline_mode<synchronous>, transform_indices = @transform_4, window_bounds = array<i64: 1, 64>}, {pipeline_mode = #tpu.pipeline_mode<synchronous>, transform_indices = @transform_5, window_bounds = array<i64: 1, 64>}, {pipeline_mode = #tpu.pipeline_mode<synchronous>, transform_indices = @transform_6, window_bounds = array<i64: 1, 64>}, {pipeline_mode = #tpu.pipeline_mode<synchronous>, transform_indices = @transform_7, window_bounds = array<i64: 576, 64>}, {pipeline_mode = #tpu.pipeline_mode<synchronous>, transform_indices = @transform_8, window_bounds = array<i64: 1, 64>}, {pipeline_mode = #tpu.pipeline_mode<synchronous>, transform_indices = @transform_9, window_bounds = array<i64: 32, 64>}, {pipeline_mode = #tpu.pipeline_mode<synchronous>, transform_indices = @transform_10, window_bounds = array<i64: 1, 64>}, {transform_indices = @transform_11, window_bounds = array<i64: 1, 64, 256>}]} {
    %c0 = arith.constant 0 : index
    %c0_0 = arith.constant 0 : index
    %c0_1 = arith.constant 0 : index
    %0 = vector.load %arg1[%c0, %c0_0, %c0_1] : memref<1x32x256xf32, #tpu.memory_space<vmem>>, vector<1x32x256xf32>
    %1 = vector.shape_cast %0 : vector<1x32x256xf32> to vector<32x256xf32>
    %2 = tpu.transpose %1, [1, 0] : vector<32x256xf32> -> vector<256x32xf32>
    %c0_2 = arith.constant 0 : index
    %c0_3 = arith.constant 0 : index
    %3 = vector.load %arg2[%c0_2, %c0_3] : memref<1x32xf32, #tpu.memory_space<vmem>>, vector<1x32xf32>
    %c0_4 = arith.constant 0 : index
    %c0_5 = arith.constant 0 : index
    %4 = vector.load %arg3[%c0_4, %c0_5] : memref<1x32xf32, #tpu.memory_space<vmem>>, vector<1x32xf32>
    %5 = tpu.iota {dimensions = array<i32: 0>} : vector<32x32xi32>
    %6 = tpu.iota {dimensions = array<i32: 1>} : vector<32x32xi32>
    %c1_i32 = arith.constant 1 : i32
    %7 = vector.broadcast %c1_i32 : i32 to vector<32x32xi32>
    %8 = arith.muli %6, %7 : vector<32x32xi32>
    %9 = arith.cmpi sge, %5, %8 : vector<32x32xi32>
    %c1_i32_6 = arith.constant 1 : i32
    %10 = vector.broadcast %c1_i32_6 : i32 to vector<32x32xi32>
    %11 = arith.addi %8, %10 : vector<32x32xi32>
    %12 = arith.cmpi slt, %5, %11 : vector<32x32xi32>
    %13 = arith.andi %9, %12 : vector<32x32xi1>
    %14 = arith.extui %13 : vector<32x32xi1> to vector<32x32xi32>
    %15 = arith.sitofp %14 : vector<32x32xi32> to vector<32x32xf32>
    %16 = tpu.iota {dimensions = array<i32: 1>} : vector<32x32xi32>
    %17 = tpu.iota {dimensions = array<i32: 0>} : vector<32x32xi32>
    %c1_i32_7 = arith.constant 1 : i32
    %18 = vector.broadcast %c1_i32_7 : i32 to vector<32x32xi32>
    %19 = arith.muli %17, %18 : vector<32x32xi32>
    %20 = arith.cmpi sge, %16, %19 : vector<32x32xi32>
    %c1_i32_8 = arith.constant 1 : i32
    %21 = vector.broadcast %c1_i32_8 : i32 to vector<32x32xi32>
    %22 = arith.addi %19, %21 : vector<32x32xi32>
    %23 = arith.cmpi slt, %16, %22 : vector<32x32xi32>
    %24 = arith.andi %20, %23 : vector<32x32xi1>
    %25 = arith.extui %24 : vector<32x32xi1> to vector<32x32xi32>
    %26 = arith.sitofp %25 : vector<32x32xi32> to vector<32x32xf32>
    %cst = arith.constant dense<0.000000e+00> : vector<32xf32>
    %27 = vector.multi_reduction <add>, %2, %cst [0] : vector<256x32xf32> to vector<32xf32>
    %28 = vector.shape_cast %27 : vector<32xf32> to vector<1x32xf32>
    %cst_9 = arith.constant dense<0.000000e+00> : vector<1x32xf32>
    %29 = tpu.matmul %28, %15, %cst_9 {dimension_numbers = #tpu.dot_dimension_numbers<[1], [0], [0], [1], [0, 0, 1, 1], [], []>} : vector<1x32xf32>, vector<32x32xf32>, vector<1x32xf32> -> vector<1x32xf32>
    %cst_10 = arith.constant 2.560000e+02 : f32
    %30 = vector.broadcast %cst_10 : f32 to vector<1x32xf32>
    %31 = arith.divf %29, %30 : vector<1x32xf32>
    %cst_11 = arith.constant dense<0.000000e+00> : vector<1x32xf32>
    %32 = tpu.matmul %31, %26, %cst_11 {dimension_numbers = #tpu.dot_dimension_numbers<[1], [0], [0], [1], [0, 0, 1, 1], [], []>} : vector<1x32xf32>, vector<32x32xf32>, vector<1x32xf32> -> vector<1x32xf32>
    %33 = vector.broadcast %32 : vector<1x32xf32> to vector<256x32xf32>
    %34 = arith.subf %2, %33 : vector<256x32xf32>
    %35 = arith.mulf %34, %34 : vector<256x32xf32>
    %cst_12 = arith.constant dense<0.000000e+00> : vector<32xf32>
    %36 = vector.multi_reduction <add>, %35, %cst_12 [0] : vector<256x32xf32> to vector<32xf32>
    %37 = vector.shape_cast %36 : vector<32xf32> to vector<1x32xf32>
    %cst_13 = arith.constant dense<0.000000e+00> : vector<1x32xf32>
    %38 = tpu.matmul %37, %15, %cst_13 {dimension_numbers = #tpu.dot_dimension_numbers<[1], [0], [0], [1], [0, 0, 1, 1], [], []>} : vector<1x32xf32>, vector<32x32xf32>, vector<1x32xf32> -> vector<1x32xf32>
    %cst_14 = arith.constant 2.560000e+02 : f32
    %39 = vector.broadcast %cst_14 : f32 to vector<1x32xf32>
    %40 = arith.divf %38, %39 : vector<1x32xf32>
    %cst_15 = arith.constant 9.99999974E-6 : f32
    %41 = vector.broadcast %cst_15 : f32 to vector<1x32xf32>
    %42 = arith.addf %40, %41 : vector<1x32xf32>
    %43 = math.rsqrt %42 : vector<1x32xf32>
    %cst_16 = arith.constant dense<0.000000e+00> : vector<1x32xf32>
    %44 = tpu.matmul %43, %26, %cst_16 {dimension_numbers = #tpu.dot_dimension_numbers<[1], [0], [0], [1], [0, 0, 1, 1], [], []>} : vector<1x32xf32>, vector<32x32xf32>, vector<1x32xf32> -> vector<1x32xf32>
    %45 = arith.mulf %44, %3 : vector<1x32xf32>
    %46 = vector.broadcast %45 : vector<1x32xf32> to vector<256x32xf32>
    %47 = arith.mulf %34, %46 : vector<256x32xf32>
    %48 = vector.broadcast %4 : vector<1x32xf32> to vector<256x32xf32>
    %49 = arith.addf %47, %48 : vector<256x32xf32>
    %50 = arith.negf %49 : vector<256x32xf32>
    %51 = math.exp %50 : vector<256x32xf32>
    %cst_17 = arith.constant 1.000000e+00 : f32
    %52 = vector.broadcast %cst_17 : f32 to vector<256x32xf32>
    %53 = arith.addf %52, %51 : vector<256x32xf32>
    %54 = arith.divf %52, %53 : vector<256x32xf32>
    %55 = arith.mulf %49, %54 : vector<256x32xf32>
    %cst_18 = arith.constant 0.000000e+00 : f32
    %56 = vector.broadcast %cst_18 : f32 to vector<18x18x32xf32>
    %c0_19 = arith.constant 0 : index
    %c0_20 = arith.constant 0 : index
    %c0_21 = arith.constant 0 : index
    %57 = vector.load %arg13[%c0_19, %c0_20, %c0_21] : memref<18x18x32xf32, #tpu.memory_space<vmem>>, vector<18x18x32xf32>
    tpu.vector_store %arg13[%c0_19, %c0_20, %c0_21], %56 {strides = array<i32>} : memref<18x18x32xf32, #tpu.memory_space<vmem>>, vector<18x18x32xf32>,
    %58 = vector.shape_cast %55 : vector<256x32xf32> to vector<16x16x32xf32>
    %c1 = arith.constant 1 : index
    %c1_22 = arith.constant 1 : index
    %c0_23 = arith.constant 0 : index
    %59 = vector.load %arg13[%c1, %c1_22, %c0_23] : memref<18x18x32xf32, #tpu.memory_space<vmem>>, vector<16x16x32xf32>
    tpu.vector_store %arg13[%c1, %c1_22, %c0_23], %58 {strides = array<i32>} : memref<18x18x32xf32, #tpu.memory_space<vmem>>, vector<16x16x32xf32>,
    %c0_24 = arith.constant 0 : index
    %c0_25 = arith.constant 0 : index
    %c0_26 = arith.constant 0 : index
    %60 = vector.load %arg13[%c0_24, %c0_25, %c0_26] : memref<18x18x32xf32, #tpu.memory_space<vmem>>, vector<16x16x32xf32>
    %61 = vector.shape_cast %60 : vector<16x16x32xf32> to vector<256x32xf32>
    %c0_27 = arith.constant 0 : index
    %c1_28 = arith.constant 1 : index
    %c0_29 = arith.constant 0 : index
    %62 = vector.load %arg13[%c0_27, %c1_28, %c0_29] : memref<18x18x32xf32, #tpu.memory_space<vmem>>, vector<16x16x32xf32>
    %63 = vector.shape_cast %62 : vector<16x16x32xf32> to vector<256x32xf32>
    %c0_30 = arith.constant 0 : index
    %c2 = arith.constant 2 : index
    %c0_31 = arith.constant 0 : index
    %64 = vector.load %arg13[%c0_30, %c2, %c0_31] : memref<18x18x32xf32, #tpu.memory_space<vmem>>, vector<16x16x32xf32>
    %65 = vector.shape_cast %64 : vector<16x16x32xf32> to vector<256x32xf32>
    %c1_32 = arith.constant 1 : index
    %c0_33 = arith.constant 0 : index
    %c0_34 = arith.constant 0 : index
    %66 = vector.load %arg13[%c1_32, %c0_33, %c0_34] : memref<18x18x32xf32, #tpu.memory_space<vmem>>, vector<16x16x32xf32>
    %67 = vector.shape_cast %66 : vector<16x16x32xf32> to vector<256x32xf32>
    %c1_35 = arith.constant 1 : index
    %c1_36 = arith.constant 1 : index
    %c0_37 = arith.constant 0 : index
    %68 = vector.load %arg13[%c1_35, %c1_36, %c0_37] : memref<18x18x32xf32, #tpu.memory_space<vmem>>, vector<16x16x32xf32>
    %69 = vector.shape_cast %68 : vector<16x16x32xf32> to vector<256x32xf32>
    %c1_38 = arith.constant 1 : index
    %c2_39 = arith.constant 2 : index
    %c0_40 = arith.constant 0 : index
    %70 = vector.load %arg13[%c1_38, %c2_39, %c0_40] : memref<18x18x32xf32, #tpu.memory_space<vmem>>, vector<16x16x32xf32>
    %71 = vector.shape_cast %70 : vector<16x16x32xf32> to vector<256x32xf32>
    %c2_41 = arith.constant 2 : index
    %c0_42 = arith.constant 0 : index
    %c0_43 = arith.constant 0 : index
    %72 = vector.load %arg13[%c2_41, %c0_42, %c0_43] : memref<18x18x32xf32, #tpu.memory_space<vmem>>, vector<16x16x32xf32>
    %73 = vector.shape_cast %72 : vector<16x16x32xf32> to vector<256x32xf32>
    %c2_44 = arith.constant 2 : index
    %c1_45 = arith.constant 1 : index
    %c0_46 = arith.constant 0 : index
    %74 = vector.load %arg13[%c2_44, %c1_45, %c0_46] : memref<18x18x32xf32, #tpu.memory_space<vmem>>, vector<16x16x32xf32>
    %75 = vector.shape_cast %74 : vector<16x16x32xf32> to vector<256x32xf32>
    %c2_47 = arith.constant 2 : index
    %c2_48 = arith.constant 2 : index
    %c0_49 = arith.constant 0 : index
    %76 = vector.load %arg13[%c2_47, %c2_48, %c0_49] : memref<18x18x32xf32, #tpu.memory_space<vmem>>, vector<16x16x32xf32>
    %77 = vector.shape_cast %76 : vector<16x16x32xf32> to vector<256x32xf32>
    %78 = tpu.concatenate %61, %63, %65, %67, %69, %71, %73, %75, %77 in 1 : vector<256x32xf32>, vector<256x32xf32>, vector<256x32xf32>, vector<256x32xf32>, vector<256x32xf32>, vector<256x32xf32>, vector<256x32xf32>, vector<256x32xf32>, vector<256x32xf32> -> vector<256x288xf32>
    %c0_50 = arith.constant 0 : index
    %c0_51 = arith.constant 0 : index
    %79 = vector.load %arg4[%c0_50, %c0_51] : memref<288x64xf32, #tpu.memory_space<vmem>>, vector<288x64xf32>
    %cst_52 = arith.constant dense<0.000000e+00> : vector<256x64xf32>
    %80 = tpu.matmul %78, %79, %cst_52 {dimension_numbers = #tpu.dot_dimension_numbers<[1], [0], [0], [1], [0, 0, 1, 1], [], []>} : vector<256x288xf32>, vector<288x64xf32>, vector<256x64xf32> -> vector<256x64xf32>
    %c0_53 = arith.constant 0 : index
    %c0_54 = arith.constant 0 : index
    %81 = vector.load %arg5[%c0_53, %c0_54] : memref<1x64xf32, #tpu.memory_space<vmem>>, vector<1x64xf32>
    %82 = vector.broadcast %81 : vector<1x64xf32> to vector<256x64xf32>
    %83 = arith.addf %80, %82 : vector<256x64xf32>
    %c0_55 = arith.constant 0 : index
    %c0_56 = arith.constant 0 : index
    %84 = vector.load %arg6[%c0_55, %c0_56] : memref<1x64xf32, #tpu.memory_space<vmem>>, vector<1x64xf32>
    %c0_57 = arith.constant 0 : index
    %c0_58 = arith.constant 0 : index
    %85 = vector.load %arg7[%c0_57, %c0_58] : memref<1x64xf32, #tpu.memory_space<vmem>>, vector<1x64xf32>
    %86 = tpu.iota {dimensions = array<i32: 0>} : vector<64x32xi32>
    %87 = tpu.iota {dimensions = array<i32: 1>} : vector<64x32xi32>
    %c2_i32 = arith.constant 2 : i32
    %88 = vector.broadcast %c2_i32 : i32 to vector<64x32xi32>
    %89 = arith.muli %87, %88 : vector<64x32xi32>
    %90 = arith.cmpi sge, %86, %89 : vector<64x32xi32>
    %c2_i32_59 = arith.constant 2 : i32
    %91 = vector.broadcast %c2_i32_59 : i32 to vector<64x32xi32>
    %92 = arith.addi %89, %91 : vector<64x32xi32>
    %93 = arith.cmpi slt, %86, %92 : vector<64x32xi32>
    %94 = arith.andi %90, %93 : vector<64x32xi1>
    %95 = arith.extui %94 : vector<64x32xi1> to vector<64x32xi32>
    %96 = arith.sitofp %95 : vector<64x32xi32> to vector<64x32xf32>
    %97 = tpu.iota {dimensions = array<i32: 1>} : vector<32x64xi32>
    %98 = tpu.iota {dimensions = array<i32: 0>} : vector<32x64xi32>
    %c2_i32_60 = arith.constant 2 : i32
    %99 = vector.broadcast %c2_i32_60 : i32 to vector<32x64xi32>
    %100 = arith.muli %98, %99 : vector<32x64xi32>
    %101 = arith.cmpi sge, %97, %100 : vector<32x64xi32>
    %c2_i32_61 = arith.constant 2 : i32
    %102 = vector.broadcast %c2_i32_61 : i32 to vector<32x64xi32>
    %103 = arith.addi %100, %102 : vector<32x64xi32>
    %104 = arith.cmpi slt, %97, %103 : vector<32x64xi32>
    %105 = arith.andi %101, %104 : vector<32x64xi1>
    %106 = arith.extui %105 : vector<32x64xi1> to vector<32x64xi32>
    %107 = arith.sitofp %106 : vector<32x64xi32> to vector<32x64xf32>
    %cst_62 = arith.constant dense<0.000000e+00> : vector<64xf32>
    %108 = vector.multi_reduction <add>, %83, %cst_62 [0] : vector<256x64xf32> to vector<64xf32>
    %109 = vector.shape_cast %108 : vector<64xf32> to vector<1x64xf32>
    %cst_63 = arith.constant dense<0.000000e+00> : vector<1x32xf32>
    %110 = tpu.matmul %109, %96, %cst_63 {dimension_numbers = #tpu.dot_dimension_numbers<[1], [0], [0], [1], [0, 0, 1, 1], [], []>} : vector<1x64xf32>, vector<64x32xf32>, vector<1x32xf32> -> vector<1x32xf32>
    %cst_64 = arith.constant 5.120000e+02 : f32
    %111 = vector.broadcast %cst_64 : f32 to vector<1x32xf32>
    %112 = arith.divf %110, %111 : vector<1x32xf32>
    %cst_65 = arith.constant dense<0.000000e+00> : vector<1x64xf32>
    %113 = tpu.matmul %112, %107, %cst_65 {dimension_numbers = #tpu.dot_dimension_numbers<[1], [0], [0], [1], [0, 0, 1, 1], [], []>} : vector<1x32xf32>, vector<32x64xf32>, vector<1x64xf32> -> vector<1x64xf32>
    %114 = vector.broadcast %113 : vector<1x64xf32> to vector<256x64xf32>
    %115 = arith.subf %83, %114 : vector<256x64xf32>
    %116 = arith.mulf %115, %115 : vector<256x64xf32>
    %cst_66 = arith.constant dense<0.000000e+00> : vector<64xf32>
    %117 = vector.multi_reduction <add>, %116, %cst_66 [0] : vector<256x64xf32> to vector<64xf32>
    %118 = vector.shape_cast %117 : vector<64xf32> to vector<1x64xf32>
    %cst_67 = arith.constant dense<0.000000e+00> : vector<1x32xf32>
    %119 = tpu.matmul %118, %96, %cst_67 {dimension_numbers = #tpu.dot_dimension_numbers<[1], [0], [0], [1], [0, 0, 1, 1], [], []>} : vector<1x64xf32>, vector<64x32xf32>, vector<1x32xf32> -> vector<1x32xf32>
    %cst_68 = arith.constant 5.120000e+02 : f32
    %120 = vector.broadcast %cst_68 : f32 to vector<1x32xf32>
    %121 = arith.divf %119, %120 : vector<1x32xf32>
    %cst_69 = arith.constant 9.99999974E-6 : f32
    %122 = vector.broadcast %cst_69 : f32 to vector<1x32xf32>
    %123 = arith.addf %121, %122 : vector<1x32xf32>
    %124 = math.rsqrt %123 : vector<1x32xf32>
    %cst_70 = arith.constant dense<0.000000e+00> : vector<1x64xf32>
    %125 = tpu.matmul %124, %107, %cst_70 {dimension_numbers = #tpu.dot_dimension_numbers<[1], [0], [0], [1], [0, 0, 1, 1], [], []>} : vector<1x32xf32>, vector<32x64xf32>, vector<1x64xf32> -> vector<1x64xf32>
    %126 = arith.mulf %125, %84 : vector<1x64xf32>
    %127 = vector.broadcast %126 : vector<1x64xf32> to vector<256x64xf32>
    %128 = arith.mulf %115, %127 : vector<256x64xf32>
    %129 = vector.broadcast %85 : vector<1x64xf32> to vector<256x64xf32>
    %130 = arith.addf %128, %129 : vector<256x64xf32>
    %131 = arith.negf %130 : vector<256x64xf32>
    %132 = math.exp %131 : vector<256x64xf32>
    %cst_71 = arith.constant 1.000000e+00 : f32
    %133 = vector.broadcast %cst_71 : f32 to vector<256x64xf32>
    %134 = arith.addf %133, %132 : vector<256x64xf32>
    %135 = arith.divf %133, %134 : vector<256x64xf32>
    %136 = arith.mulf %130, %135 : vector<256x64xf32>
    %cst_72 = arith.constant 0.000000e+00 : f32
    %137 = vector.broadcast %cst_72 : f32 to vector<18x18x64xf32>
    %c0_73 = arith.constant 0 : index
    %c0_74 = arith.constant 0 : index
    %c0_75 = arith.constant 0 : index
    %138 = vector.load %arg14[%c0_73, %c0_74, %c0_75] : memref<18x18x64xf32, #tpu.memory_space<vmem>>, vector<18x18x64xf32>
    tpu.vector_store %arg14[%c0_73, %c0_74, %c0_75], %137 {strides = array<i32>} : memref<18x18x64xf32, #tpu.memory_space<vmem>>, vector<18x18x64xf32>,
    %139 = vector.shape_cast %136 : vector<256x64xf32> to vector<16x16x64xf32>
    %c1_76 = arith.constant 1 : index
    %c1_77 = arith.constant 1 : index
    %c0_78 = arith.constant 0 : index
    %140 = vector.load %arg14[%c1_76, %c1_77, %c0_78] : memref<18x18x64xf32, #tpu.memory_space<vmem>>, vector<16x16x64xf32>
    tpu.vector_store %arg14[%c1_76, %c1_77, %c0_78], %139 {strides = array<i32>} : memref<18x18x64xf32, #tpu.memory_space<vmem>>, vector<16x16x64xf32>,
    %c0_79 = arith.constant 0 : index
    %c0_80 = arith.constant 0 : index
    %c0_81 = arith.constant 0 : index
    %141 = vector.load %arg14[%c0_79, %c0_80, %c0_81] : memref<18x18x64xf32, #tpu.memory_space<vmem>>, vector<16x16x64xf32>
    %142 = vector.shape_cast %141 : vector<16x16x64xf32> to vector<256x64xf32>
    %c0_82 = arith.constant 0 : index
    %c1_83 = arith.constant 1 : index
    %c0_84 = arith.constant 0 : index
    %143 = vector.load %arg14[%c0_82, %c1_83, %c0_84] : memref<18x18x64xf32, #tpu.memory_space<vmem>>, vector<16x16x64xf32>
    %144 = vector.shape_cast %143 : vector<16x16x64xf32> to vector<256x64xf32>
    %c0_85 = arith.constant 0 : index
    %c2_86 = arith.constant 2 : index
    %c0_87 = arith.constant 0 : index
    %145 = vector.load %arg14[%c0_85, %c2_86, %c0_87] : memref<18x18x64xf32, #tpu.memory_space<vmem>>, vector<16x16x64xf32>
    %146 = vector.shape_cast %145 : vector<16x16x64xf32> to vector<256x64xf32>
    %c1_88 = arith.constant 1 : index
    %c0_89 = arith.constant 0 : index
    %c0_90 = arith.constant 0 : index
    %147 = vector.load %arg14[%c1_88, %c0_89, %c0_90] : memref<18x18x64xf32, #tpu.memory_space<vmem>>, vector<16x16x64xf32>
    %148 = vector.shape_cast %147 : vector<16x16x64xf32> to vector<256x64xf32>
    %c1_91 = arith.constant 1 : index
    %c1_92 = arith.constant 1 : index
    %c0_93 = arith.constant 0 : index
    %149 = vector.load %arg14[%c1_91, %c1_92, %c0_93] : memref<18x18x64xf32, #tpu.memory_space<vmem>>, vector<16x16x64xf32>
    %150 = vector.shape_cast %149 : vector<16x16x64xf32> to vector<256x64xf32>
    %c1_94 = arith.constant 1 : index
    %c2_95 = arith.constant 2 : index
    %c0_96 = arith.constant 0 : index
    %151 = vector.load %arg14[%c1_94, %c2_95, %c0_96] : memref<18x18x64xf32, #tpu.memory_space<vmem>>, vector<16x16x64xf32>
    %152 = vector.shape_cast %151 : vector<16x16x64xf32> to vector<256x64xf32>
    %c2_97 = arith.constant 2 : index
    %c0_98 = arith.constant 0 : index
    %c0_99 = arith.constant 0 : index
    %153 = vector.load %arg14[%c2_97, %c0_98, %c0_99] : memref<18x18x64xf32, #tpu.memory_space<vmem>>, vector<16x16x64xf32>
    %154 = vector.shape_cast %153 : vector<16x16x64xf32> to vector<256x64xf32>
    %c2_100 = arith.constant 2 : index
    %c1_101 = arith.constant 1 : index
    %c0_102 = arith.constant 0 : index
    %155 = vector.load %arg14[%c2_100, %c1_101, %c0_102] : memref<18x18x64xf32, #tpu.memory_space<vmem>>, vector<16x16x64xf32>
    %156 = vector.shape_cast %155 : vector<16x16x64xf32> to vector<256x64xf32>
    %c2_103 = arith.constant 2 : index
    %c2_104 = arith.constant 2 : index
    %c0_105 = arith.constant 0 : index
    %157 = vector.load %arg14[%c2_103, %c2_104, %c0_105] : memref<18x18x64xf32, #tpu.memory_space<vmem>>, vector<16x16x64xf32>
    %158 = vector.shape_cast %157 : vector<16x16x64xf32> to vector<256x64xf32>
    %159 = tpu.concatenate %142, %144, %146, %148, %150, %152, %154, %156, %158 in 1 : vector<256x64xf32>, vector<256x64xf32>, vector<256x64xf32>, vector<256x64xf32>, vector<256x64xf32>, vector<256x64xf32>, vector<256x64xf32>, vector<256x64xf32>, vector<256x64xf32> -> vector<256x576xf32>
    %c0_106 = arith.constant 0 : index
    %c0_107 = arith.constant 0 : index
    %160 = vector.load %arg8[%c0_106, %c0_107] : memref<576x64xf32, #tpu.memory_space<vmem>>, vector<576x64xf32>
    %cst_108 = arith.constant dense<0.000000e+00> : vector<256x64xf32>
    %161 = tpu.matmul %159, %160, %cst_108 {dimension_numbers = #tpu.dot_dimension_numbers<[1], [0], [0], [1], [0, 0, 1, 1], [], []>} : vector<256x576xf32>, vector<576x64xf32>, vector<256x64xf32> -> vector<256x64xf32>
    %c0_109 = arith.constant 0 : index
    %c0_110 = arith.constant 0 : index
    %162 = vector.load %arg9[%c0_109, %c0_110] : memref<1x64xf32, #tpu.memory_space<vmem>>, vector<1x64xf32>
    %163 = vector.broadcast %162 : vector<1x64xf32> to vector<256x64xf32>
    %164 = arith.addf %161, %163 : vector<256x64xf32>
    %c0_111 = arith.constant 0 : index
    %c0_112 = arith.constant 0 : index
    %165 = vector.load %arg10[%c0_111, %c0_112] : memref<32x64xf32, #tpu.memory_space<vmem>>, vector<32x64xf32>
    %cst_113 = arith.constant dense<0.000000e+00> : vector<256x64xf32>
    %166 = tpu.matmul %2, %165, %cst_113 {dimension_numbers = #tpu.dot_dimension_numbers<[1], [0], [0], [1], [0, 0, 1, 1], [], []>} : vector<256x32xf32>, vector<32x64xf32>, vector<256x64xf32> -> vector<256x64xf32>
    %c0_114 = arith.constant 0 : index
    %c0_115 = arith.constant 0 : index
    %167 = vector.load %arg11[%c0_114, %c0_115] : memref<1x64xf32, #tpu.memory_space<vmem>>, vector<1x64xf32>
    %168 = vector.broadcast %167 : vector<1x64xf32> to vector<256x64xf32>
    %169 = arith.addf %166, %168 : vector<256x64xf32>
    %170 = arith.addf %164, %169 : vector<256x64xf32>
    %cst_116 = arith.constant 0.707106769 : f32
    %171 = vector.broadcast %cst_116 : f32 to vector<256x64xf32>
    %172 = arith.mulf %170, %171 : vector<256x64xf32>
    %173 = tpu.transpose %172, [1, 0] : vector<256x64xf32> -> vector<64x256xf32>
    %174 = vector.shape_cast %173 : vector<64x256xf32> to vector<1x64x256xf32>
    %c0_117 = arith.constant 0 : index
    %c0_118 = arith.constant 0 : index
    %c0_119 = arith.constant 0 : index
    %175 = vector.load %arg12[%c0_117, %c0_118, %c0_119] : memref<1x64x256xf32, #tpu.memory_space<vmem>>, vector<1x64x256xf32>
    tpu.vector_store %arg12[%c0_117, %c0_118, %c0_119], %174 {strides = array<i32>} : memref<1x64x256xf32, #tpu.memory_space<vmem>>, vector<1x64x256xf32>,
    return
  }
  func.func @transform_0(%arg0: i32) -> (i32, i32, i32) {
    %c0_i32 = arith.constant 0 : i32
    %c0_i32_0 = arith.constant 0 : i32
    %c0_i32_1 = arith.constant 0 : i32
    return %arg0, %c0_i32, %c0_i32_0 : i32, i32, i32
  }
  func.func @transform_1(%arg0: i32) -> (i32, i32) {
    %c0_i32 = arith.constant 0 : i32
    %c0_i32_0 = arith.constant 0 : i32
    %c0_i32_1 = arith.constant 0 : i32
    return %c0_i32, %c0_i32_0 : i32, i32
  }
  func.func @transform_2(%arg0: i32) -> (i32, i32) {
    %c0_i32 = arith.constant 0 : i32
    %c0_i32_0 = arith.constant 0 : i32
    %c0_i32_1 = arith.constant 0 : i32
    return %c0_i32, %c0_i32_0 : i32, i32
  }
  func.func @transform_3(%arg0: i32) -> (i32, i32) {
    %c0_i32 = arith.constant 0 : i32
    %c0_i32_0 = arith.constant 0 : i32
    %c0_i32_1 = arith.constant 0 : i32
    return %c0_i32, %c0_i32_0 : i32, i32
  }
  func.func @transform_4(%arg0: i32) -> (i32, i32) {
    %c0_i32 = arith.constant 0 : i32
    %c0_i32_0 = arith.constant 0 : i32
    %c0_i32_1 = arith.constant 0 : i32
    return %c0_i32, %c0_i32_0 : i32, i32
  }
  func.func @transform_5(%arg0: i32) -> (i32, i32) {
    %c0_i32 = arith.constant 0 : i32
    %c0_i32_0 = arith.constant 0 : i32
    %c0_i32_1 = arith.constant 0 : i32
    return %c0_i32, %c0_i32_0 : i32, i32
  }
  func.func @transform_6(%arg0: i32) -> (i32, i32) {
    %c0_i32 = arith.constant 0 : i32
    %c0_i32_0 = arith.constant 0 : i32
    %c0_i32_1 = arith.constant 0 : i32
    return %c0_i32, %c0_i32_0 : i32, i32
  }
  func.func @transform_7(%arg0: i32) -> (i32, i32) {
    %c0_i32 = arith.constant 0 : i32
    %c0_i32_0 = arith.constant 0 : i32
    %c0_i32_1 = arith.constant 0 : i32
    return %c0_i32, %c0_i32_0 : i32, i32
  }
  func.func @transform_8(%arg0: i32) -> (i32, i32) {
    %c0_i32 = arith.constant 0 : i32
    %c0_i32_0 = arith.constant 0 : i32
    %c0_i32_1 = arith.constant 0 : i32
    return %c0_i32, %c0_i32_0 : i32, i32
  }
  func.func @transform_9(%arg0: i32) -> (i32, i32) {
    %c0_i32 = arith.constant 0 : i32
    %c0_i32_0 = arith.constant 0 : i32
    %c0_i32_1 = arith.constant 0 : i32
    return %c0_i32, %c0_i32_0 : i32, i32
  }
  func.func @transform_10(%arg0: i32) -> (i32, i32) {
    %c0_i32 = arith.constant 0 : i32
    %c0_i32_0 = arith.constant 0 : i32
    %c0_i32_1 = arith.constant 0 : i32
    return %c0_i32, %c0_i32_0 : i32, i32
  }
  func.func @transform_11(%arg0: i32) -> (i32, i32, i32) {
    %c0_i32 = arith.constant 0 : i32
    %c0_i32_0 = arith.constant 0 : i32
    %c0_i32_1 = arith.constant 0 : i32
    return %arg0, %c0_i32, %c0_i32_0 : i32, i32, i32
  }
}

</mosaic_0001>

<llo_original>
// kernel: tpu_custom_call.1
$region0: #{tpu_custom_call.1}
  #allocation0 [shape = 'u32[]', space=smem, size = 0x4, offset = 0x4, fixed_abs, tag = 'smem constant byte address 0x4 - core index']
  #allocation1 [shape = 'u32[144,128]{1,0:T(1,128)}', space=vmem, size = 0x12000, scoped, tag = 'internal scratch']
  #allocation2 [shape = 'f32[18,18,32]{2,1,0:T(8,128)}', space=vmem, size = 0x36000, scoped, tag = 'scratch operand']
  #allocation3 [shape = 'f32[18,18,64]{2,1,0:T(8,128)}', space=vmem, size = 0x36000, scoped, tag = 'scratch operand']
  %s0 = inlined_call_operand.vmem [shape: f32[2,32,256], index: 0, kind: input, shape index: {}]
  %s1 = inlined_call_operand.vmem [shape: f32[1,32], index: 1, kind: input, shape index: {}]
  %s2 = inlined_call_operand.vmem [shape: f32[1,32], index: 2, kind: input, shape index: {}]
  %s3 = inlined_call_operand.vmem [shape: f32[288,64], index: 3, kind: input, shape index: {}]
  %s4 = inlined_call_operand.vmem [shape: f32[1,64], index: 4, kind: input, shape index: {}]
  %s5 = inlined_call_operand.vmem [shape: f32[1,64], index: 5, kind: input, shape index: {}]
  %s6 = inlined_call_operand.vmem [shape: f32[1,64], index: 6, kind: input, shape index: {}]
  %s7 = inlined_call_operand.vmem [shape: f32[576,64], index: 7, kind: input, shape index: {}]
  %s8 = inlined_call_operand.vmem [shape: f32[1,64], index: 8, kind: input, shape index: {}]
  %s9 = inlined_call_operand.vmem [shape: f32[32,64], index: 9, kind: input, shape index: {}]
  %s10 = inlined_call_operand.vmem [shape: f32[1,64], index: 10, kind: input, shape index: {}]
  %s11 = inlined_call_operand.hbm [shape: f32[2,64,256], index: 11, kind: output, shape index: {}]
  %s12 = sld [smem:[#allocation0]]
  $region77: #{tpu_custom_call.1} parent=0
    _
  %s14 = ssub.s32 1, %s12
  %s15 = scalar_select 0, %s14, %s12
  $region1: #{tpu_custom_call.1} parent=0
    #allocation4 [shape = 'u8[131072]{0}', space=vmem, size = 0x20000, scoped, tag = 'output window, operand 0']
    #allocation5 [shape = 's32[2]{0}', space=sflag, size = 0x8, scoped, tag = 'scoped memory for tpu_custom_call.1']
    %16 = vsyncpa [#allocation5], 0
    %s17 = scalar_lea.sflag [#allocation5], 1
    %18 = vsyncpa %s17, 0
    loop: start=0, step=1, limit=4
    $region2: #{tpu_custom_call.1} parent=1 // loop_pre_header
      _
    $region3: #{tpu_custom_call.1} parent=1 // loop_header
      %s20 = sphi 0, %s24
      %p21 = scmp.ge.s32.totalorder %s20, 4
      %s30 = sphi 0, %s32
      %s33 = sphi 0, %s30
      %s34 = sphi 0, %s33
      %s50 = sphi 0, %s34
      %s54 = sphi 0, %s54
      %s56 = sphi 0, %s54
      %s57 = sphi 0, %s56
      %s71 = sphi 0, %s57
      %s75 = sphi 0, %s75
      %s77 = sphi 0, %s75
      %s78 = sphi 0, %s77
      %s92 = sphi 0, %s78
      %s96 = sphi 0, %s96
      %s98 = sphi 0, %s96
      %s99 = sphi 0, %s98
      %s113 = sphi 0, %s99
      %s117 = sphi 0, %s117
      %s119 = sphi 0, %s117
      %s120 = sphi 0, %s119
      %s134 = sphi 0, %s120
      %s138 = sphi 0, %s138
      %s140 = sphi 0, %s138
      %s141 = sphi 0, %s140
      %s155 = sphi 0, %s141
      %s159 = sphi 0, %s159
      %s161 = sphi 0, %s159
      %s162 = sphi 0, %s161
      %s176 = sphi 0, %s162
      %s180 = sphi 0, %s180
      %s182 = sphi 0, %s180
      %s183 = sphi 0, %s182
      %s197 = sphi 0, %s183
      %s201 = sphi 0, %s201
      %s203 = sphi 0, %s201
      %s204 = sphi 0, %s203
      %s218 = sphi 0, %s204
      %s222 = sphi 0, %s222
      %s224 = sphi 0, %s222
      %s225 = sphi 0, %s224
      %s239 = sphi 0, %s225
      %s243 = sphi 0, %s243
      %s245 = sphi 0, %s243
      %s246 = sphi 0, %s245
      %s260 = sphi 0, %s246
      %s266 = sphi 0, %s268
      %s269 = sphi 0, %s266
      %s270 = sphi 0, %s269
      %s286 = sphi 0, %s270
    $region4: #{tpu_custom_call.1} parent=1 // loop_header_branch
      %23 = sbr.rel (%p21) target = $region8
    $region5: #{tpu_custom_call.1} parent=1 // loop_body
      %s25 = ssub.s32 %s20, 1
      %s26 = ssub.s32 %s20, 2
      %s27 = sadd.s32 %s20, 1
      %s28 = ssub.s32 %s20, %s27
      %p29 = scmp.eq.s32.totalorder %s28, 0
      %s31 = sadd.s32 %s30, 1
      %s32 = scalar_select %p29, %s30, %s31
      %p35 = pneg %p29
      %p36 = scmp.eq.s32.totalorder %s20, 1
      %p37 = por %p35, %p36
      %p38 = scmp.ne.s32.totalorder %s30, %s33
      %p39 = scmp.eq.s32.totalorder %s20, 0
      %p40 = por %p38, %p39
      %p41 = scmp.ne.s32.totalorder %s30, %s33
      %p42 = scmp.eq.s32.totalorder %s25, 1
      %p43 = por %p41, %p42
      %p44 = scmp.ne.s32.totalorder %s33, %s34
      %p45 = scmp.eq.s32.totalorder %s25, 0
      %p46 = por %p44, %p45
      %p47 = scmp.ne.s32.totalorder %s33, %s34
      %p48 = scmp.eq.s32.totalorder %s26, 1
      %p49 = por %p47, %p48
      %p51 = scmp.ne.s32.totalorder %s34, %s50
      %p52 = scmp.eq.s32.totalorder %s26, 0
      %p53 = por %p51, %p52
      %s55 = sadd.s32 %s54, 1
      %p58 = scmp.eq.s32.totalorder %s20, 1
      %p59 = scmp.ne.s32.totalorder %s54, %s56
      %p60 = scmp.eq.s32.totalorder %s20, 0
      %p61 = por %p59, %p60
      %p62 = scmp.ne.s32.totalorder %s54, %s56
      %p63 = scmp.eq.s32.totalorder %s25, 1
      %p64 = por %p62, %p63
      %p65 = scmp.ne.s32.totalorder %s56, %s57
      %p66 = scmp.eq.s32.totalorder %s25, 0
      %p67 = por %p65, %p66
      %p68 = scmp.ne.s32.totalorder %s56, %s57
      %p69 = scmp.eq.s32.totalorder %s26, 1
      %p70 = por %p68, %p69
      %p72 = scmp.ne.s32.totalorder %s57, %s71
      %p73 = scmp.eq.s32.totalorder %s26, 0
      %p74 = por %p72, %p73
      %s76 = sadd.s32 %s75, 1
      %p79 = scmp.eq.s32.totalorder %s20, 1
      %p80 = scmp.ne.s32.totalorder %s75, %s77
      %p81 = scmp.eq.s32.totalorder %s20, 0
      %p82 = por %p80, %p81
      %p83 = scmp.ne.s32.totalorder %s75, %s77
      %p84 = scmp.eq.s32.totalorder %s25, 1
      %p85 = por %p83, %p84
      %p86 = scmp.ne.s32.totalorder %s77, %s78
      %p87 = scmp.eq.s32.totalorder %s25, 0
      %p88 = por %p86, %p87
      %p89 = scmp.ne.s32.totalorder %s77, %s78
      %p90 = scmp.eq.s32.totalorder %s26, 1
      %p91 = por %p89, %p90
      %p93 = scmp.ne.s32.totalorder %s78, %s92
      %p94 = scmp.eq.s32.totalorder %s26, 0
      %p95 = por %p93, %p94
      %s97 = sadd.s32 %s96, 1
      %p100 = scmp.eq.s32.totalorder %s20, 1
      %p101 = scmp.ne.s32.totalorder %s96, %s98
      %p102 = scmp.eq.s32.totalorder %s20, 0
      %p103 = por %p101, %p102
      %p104 = scmp.ne.s32.totalorder %s96, %s98
      %p105 = scmp.eq.s32.totalorder %s25, 1
      %p106 = por %p104, %p105
      %p107 = scmp.ne.s32.totalorder %s98, %s99
      %p108 = scmp.eq.s32.totalorder %s25, 0
      %p109 = por %p107, %p108
      %p110 = scmp.ne.s32.totalorder %s98, %s99
      %p111 = scmp.eq.s32.totalorder %s26, 1
      %p112 = por %p110, %p111
      %p114 = scmp.ne.s32.totalorder %s99, %s113
      %p115 = scmp.eq.s32.totalorder %s26, 0
      %p116 = por %p114, %p115
      %s118 = sadd.s32 %s117, 1
      %p121 = scmp.eq.s32.totalorder %s20, 1
      %p122 = scmp.ne.s32.totalorder %s117, %s119
      %p123 = scmp.eq.s32.totalorder %s20, 0
      %p124 = por %p122, %p123
      %p125 = scmp.ne.s32.totalorder %s117, %s119
      %p126 = scmp.eq.s32.totalorder %s25, 1
      %p127 = por %p125, %p126
      %p128 = scmp.ne.s32.totalorder %s119, %s120
      %p129 = scmp.eq.s32.totalorder %s25, 0
      %p130 = por %p128, %p129
      %p131 = scmp.ne.s32.totalorder %s119, %s120
      %p132 = scmp.eq.s32.totalorder %s26, 1
      %p133 = por %p131, %p132
      %p135 = scmp.ne.s32.totalorder %s120, %s134
      %p136 = scmp.eq.s32.totalorder %s26, 0
      %p137 = por %p135, %p136
      %s139 = sadd.s32 %s138, 1
      %p142 = scmp.eq.s32.totalorder %s20, 1
      %p143 = scmp.ne.s32.totalorder %s138, %s140
      %p144 = scmp.eq.s32.totalorder %s20, 0
      %p145 = por %p143, %p144
      %p146 = scmp.ne.s32.totalorder %s138, %s140
      %p147 = scmp.eq.s32.totalorder %s25, 1
      %p148 = por %p146, %p147
      %p149 = scmp.ne.s32.totalorder %s140, %s141
      %p150 = scmp.eq.s32.totalorder %s25, 0
      %p151 = por %p149, %p150
      %p152 = scmp.ne.s32.totalorder %s140, %s141
      %p153 = scmp.eq.s32.totalorder %s26, 1
      %p154 = por %p152, %p153
      %p156 = scmp.ne.s32.totalorder %s141, %s155
      %p157 = scmp.eq.s32.totalorder %s26, 0
      %p158 = por %p156, %p157
      %s160 = sadd.s32 %s159, 1
      %p163 = scmp.eq.s32.totalorder %s20, 1
      %p164 = scmp.ne.s32.totalorder %s159, %s161
      %p165 = scmp.eq.s32.totalorder %s20, 0
      %p166 = por %p164, %p165
      %p167 = scmp.ne.s32.totalorder %s159, %s161
      %p168 = scmp.eq.s32.totalorder %s25, 1
      %p169 = por %p167, %p168
      %p170 = scmp.ne.s32.totalorder %s161, %s162
      %p171 = scmp.eq.s32.totalorder %s25, 0
      %p172 = por %p170, %p171
      %p173 = scmp.ne.s32.totalorder %s161, %s162
      %p174 = scmp.eq.s32.totalorder %s26, 1
      %p175 = por %p173, %p174
      %p177 = scmp.ne.s32.totalorder %s162, %s176
      %p178 = scmp.eq.s32.totalorder %s26, 0
      %p179 = por %p177, %p178
      %s181 = sadd.s32 %s180, 1
      %p184 = scmp.eq.s32.totalorder %s20, 1
      %p185 = scmp.ne.s32.totalorder %s180, %s182
      %p186 = scmp.eq.s32.totalorder %s20, 0
      %p187 = por %p185, %p186
      %p188 = scmp.ne.s32.totalorder %s180, %s182
      %p189 = scmp.eq.s32.totalorder %s25, 1
      %p190 = por %p188, %p189
      %p191 = scmp.ne.s32.totalorder %s182, %s183
      %p192 = scmp.eq.s32.totalorder %s25, 0
      %p193 = por %p191, %p192
      %p194 = scmp.ne.s32.totalorder %s182, %s183
      %p195 = scmp.eq.s32.totalorder %s26, 1
      %p196 = por %p194, %p195
      %p198 = scmp.ne.s32.totalorder %s183, %s197
      %p199 = scmp.eq.s32.totalorder %s26, 0
      %p200 = por %p198, %p199
      %s202 = sadd.s32 %s201, 1
      %p205 = scmp.eq.s32.totalorder %s20, 1
      %p206 = scmp.ne.s32.totalorder %s201, %s203
      %p207 = scmp.eq.s32.totalorder %s20, 0
      %p208 = por %p206, %p207
      %p209 = scmp.ne.s32.totalorder %s201, %s203
      %p210 = scmp.eq.s32.totalorder %s25, 1
      %p211 = por %p209, %p210
      %p212 = scmp.ne.s32.totalorder %s203, %s204
      %p213 = scmp.eq.s32.totalorder %s25, 0
      %p214 = por %p212, %p213
      %p215 = scmp.ne.s32.totalorder %s203, %s204
      %p216 = scmp.eq.s32.totalorder %s26, 1
      %p217 = por %p215, %p216
      %p219 = scmp.ne.s32.totalorder %s204, %s218
      %p220 = scmp.eq.s32.totalorder %s26, 0
      %p221 = por %p219, %p220
      %s223 = sadd.s32 %s222, 1
      %p226 = scmp.eq.s32.totalorder %s20, 1
      %p227 = scmp.ne.s32.totalorder %s222, %s224
      %p228 = scmp.eq.s32.totalorder %s20, 0
      %p229 = por %p227, %p228
      %p230 = scmp.ne.s32.totalorder %s222, %s224
      %p231 = scmp.eq.s32.totalorder %s25, 1
      %p232 = por %p230, %p231
      %p233 = scmp.ne.s32.totalorder %s224, %s225
      %p234 = scmp.eq.s32.totalorder %s25, 0
      %p235 = por %p233, %p234
      %p236 = scmp.ne.s32.totalorder %s224, %s225
      %p237 = scmp.eq.s32.totalorder %s26, 1
      %p238 = por %p236, %p237
      %p240 = scmp.ne.s32.totalorder %s225, %s239
      %p241 = scmp.eq.s32.totalorder %s26, 0
      %p242 = por %p240, %p241
      %s244 = sadd.s32 %s243, 1
      %p247 = scmp.eq.s32.totalorder %s20, 1
      %p248 = scmp.ne.s32.totalorder %s243, %s245
      %p249 = scmp.eq.s32.totalorder %s20, 0
      %p250 = por %p248, %p249
      %p251 = scmp.ne.s32.totalorder %s243, %s245
      %p252 = scmp.eq.s32.totalorder %s25, 1
      %p253 = por %p251, %p252
      %p254 = scmp.ne.s32.totalorder %s245, %s246
      %p255 = scmp.eq.s32.totalorder %s25, 0
      %p256 = por %p254, %p255
      %p257 = scmp.ne.s32.totalorder %s245, %s246
      %p258 = scmp.eq.s32.totalorder %s26, 1
      %p259 = por %p257, %p258
      %p261 = scmp.ne.s32.totalorder %s246, %s260
      %p262 = scmp.eq.s32.totalorder %s26, 0
      %p263 = por %p261, %p262
      %s264 = ssub.s32 %s20, %s27
      %p265 = scmp.eq.s32.totalorder %s264, 0
      %s267 = sadd.s32 %s266, 1
      %s268 = scalar_select %p265, %s266, %s267
      %p271 = pneg %p265
      %p272 = scmp.eq.s32.totalorder %s20, 1
      %p273 = por %p271, %p272
      %p274 = scmp.ne.s32.totalorder %s266, %s269
      %p275 = scmp.eq.s32.totalorder %s20, 0
      %p276 = por %p274, %p275
      %p277 = scmp.ne.s32.totalorder %s266, %s269
      %p278 = scmp.eq.s32.totalorder %s25, 1
      %p279 = por %p277, %p278
      %p280 = scmp.ne.s32.totalorder %s269, %s270
      %p281 = scmp.eq.s32.totalorder %s25, 0
      %p282 = por %p280, %p281
      %p283 = scmp.ne.s32.totalorder %s269, %s270
      %p284 = scmp.eq.s32.totalorder %s26, 1
      %p285 = por %p283, %p284
      %p287 = scmp.ne.s32.totalorder %s270, %s286
      %p288 = scmp.eq.s32.totalorder %s26, 0
      %p289 = por %p287, %p288
      %p290 = scmp.le.s32.totalorder 1, %s20
      %p291 = scmp.lt.s32.totalorder %s20, 3
      %p292 = pnand %p290, %p291
      %p293 = pneg %p292
      // Predicated region
      $region9: #{tpu_custom_call.1} parent=5 // pred_check
        _
      $region10: #{tpu_custom_call.1} parent=5 // pred_check_branch
        %295 = sbr.rel (%p292) target = $region12
      $region11: #{tpu_custom_call.1} parent=5 // pred_region
        %s296 = ssub.s32 %s20, 1
        // Predicated region
        $region13: #{tpu_custom_call.1} parent=11 // pred_check
          %p297 = pneg %p67
        $region14: #{tpu_custom_call.1} parent=11 // pred_check_branch
          %299 = sbr.rel (%p297) target = $region16
        $region15: #{tpu_custom_call.1} parent=11 // pred_region
          _
        $region16: #{tpu_custom_call.1} parent=11 // pred_fallthru
          _
        // Predicated region
        $region17: #{tpu_custom_call.1} parent=11 // pred_check
          %p300 = pneg %p88
        $region18: #{tpu_custom_call.1} parent=11 // pred_check_branch
          %302 = sbr.rel (%p300) target = $region20
        $region19: #{tpu_custom_call.1} parent=11 // pred_region
          _
        $region20: #{tpu_custom_call.1} parent=11 // pred_fallthru
          _
        // Predicated region
        $region21: #{tpu_custom_call.1} parent=11 // pred_check
          %p303 = pneg %p109
        $region22: #{tpu_custom_call.1} parent=11 // pred_check_branch
          %305 = sbr.rel (%p303) target = $region24
        $region23: #{tpu_custom_call.1} parent=11 // pred_region
          _
        $region24: #{tpu_custom_call.1} parent=11 // pred_fallthru
          _
        // Predicated region
        $region25: #{tpu_custom_call.1} parent=11 // pred_check
          %p306 = pneg %p130
        $region26: #{tpu_custom_call.1} parent=11 // pred_check_branch
          %308 = sbr.rel (%p306) target = $region28
        $region27: #{tpu_custom_call.1} parent=11 // pred_region
          _
        $region28: #{tpu_custom_call.1} parent=11 // pred_fallthru
          _
        // Predicated region
        $region29: #{tpu_custom_call.1} parent=11 // pred_check
          %p309 = pneg %p151
        $region30: #{tpu_custom_call.1} parent=11 // pred_check_branch
          %311 = sbr.rel (%p309) target = $region32
        $region31: #{tpu_custom_call.1} parent=11 // pred_region
          _
        $region32: #{tpu_custom_call.1} parent=11 // pred_fallthru
          _
        // Predicated region
        $region33: #{tpu_custom_call.1} parent=11 // pred_check
          %p312 = pneg %p172
        $region34: #{tpu_custom_call.1} parent=11 // pred_check_branch
          %314 = sbr.rel (%p312) target = $region36
        $region35: #{tpu_custom_call.1} parent=11 // pred_region
          _
        $region36: #{tpu_custom_call.1} parent=11 // pred_fallthru
          _
        // Predicated region
        $region37: #{tpu_custom_call.1} parent=11 // pred_check
          %p315 = pneg %p193
        $region38: #{tpu_custom_call.1} parent=11 // pred_check_branch
          %317 = sbr.rel (%p315) target = $region40
        $region39: #{tpu_custom_call.1} parent=11 // pred_region
          _
        $region40: #{tpu_custom_call.1} parent=11 // pred_fallthru
          _
        // Predicated region
        $region41: #{tpu_custom_call.1} parent=11 // pred_check
          %p318 = pneg %p214
        $region42: #{tpu_custom_call.1} parent=11 // pred_check_branch
          %320 = sbr.rel (%p318) target = $region44
        $region43: #{tpu_custom_call.1} parent=11 // pred_region
          _
        $region44: #{tpu_custom_call.1} parent=11 // pred_fallthru
          _
        // Predicated region
        $region45: #{tpu_custom_call.1} parent=11 // pred_check
          %p321 = pneg %p235
        $region46: #{tpu_custom_call.1} parent=11 // pred_check_branch
          %323 = sbr.rel (%p321) target = $region48
        $region47: #{tpu_custom_call.1} parent=11 // pred_region
          _
        $region48: #{tpu_custom_call.1} parent=11 // pred_fallthru
          _
        // Predicated region
        $region49: #{tpu_custom_call.1} parent=11 // pred_check
          %p324 = pneg %p256
        $region50: #{tpu_custom_call.1} parent=11 // pred_check_branch
          %326 = sbr.rel (%p324) target = $region52
        $region51: #{tpu_custom_call.1} parent=11 // pred_region
          _
        $region52: #{tpu_custom_call.1} parent=11 // pred_fallthru
          _
      $region12: #{tpu_custom_call.1} parent=5 // pred_fallthru
        _
      %p327 = scmp.lt.s32.totalorder %s20, 2
      // Predicated region
      $region53: #{tpu_custom_call.1} parent=5 // pred_check
        %p328 = pneg %p327
      $region54: #{tpu_custom_call.1} parent=5 // pred_check_branch
        %330 = sbr.rel (%p328) target = $region56
      $region55: #{tpu_custom_call.1} parent=5 // pred_region
        // Predicated region
        $region57: #{tpu_custom_call.1} parent=55 // pred_check
          %p331 = pneg %p40
        $region58: #{tpu_custom_call.1} parent=55 // pred_check_branch
          %333 = sbr.rel (%p331) target = $region60
        $region59: #{tpu_custom_call.1} parent=55 // pred_region
          %p334 = scmp.lt.s32.totalorder %s20, 1
          %s335 = scalar_select %p334, %s20, 1
          %s336 = smul.addr %s335, 8
          %s337 = smul.addr %s336, 8
          %s338 = scalar_lea.vmem %s0, %s337
        $region60: #{tpu_custom_call.1} parent=55 // pred_fallthru
          _
      $region56: #{tpu_custom_call.1} parent=5 // pred_fallthru
        _
      %p339 = scmp.le.s32.totalorder 1, %s20
      %p340 = scmp.lt.s32.totalorder %s20, 3
      %p341 = pnand %p339, %p340
      %p342 = pneg %p341
      // Predicated region
      $region61: #{tpu_custom_call.1} parent=5 // pred_check
        _
      $region62: #{tpu_custom_call.1} parent=5 // pred_check_branch
        %344 = sbr.rel (%p341) target = $region64
      $region63: #{tpu_custom_call.1} parent=5 // pred_region
        %s345 = ssub.s32 %s20, 1
        %p346 = scmp.lt.s32.totalorder %s25, 1
        %s347 = scalar_select %p346, %s25, 1
        %s348 = smul.addr %s347, 8
        %s349 = smul.addr %s348, 8
        %s350 = scalar_lea.vmem %s0, %s349
        %p351 = pneg %p46
        %p352 = pneg %p43
        %p353 = pneg %p67
        %p354 = pneg %p64
        %p355 = pneg %p88
        %p356 = pneg %p85
        %p357 = pneg %p109
        %p358 = pneg %p106
        %p359 = pneg %p130
        %p360 = pneg %p127
        %p361 = pneg %p151
        %p362 = pneg %p148
        %p363 = pneg %p172
        %p364 = pneg %p169
        %p365 = pneg %p193
        %p366 = pneg %p190
        %p367 = pneg %p214
        %p368 = pneg %p211
        %p369 = pneg %p235
        %p370 = pneg %p232
        %p371 = pneg %p256
        %p372 = pneg %p253
        %p373 = pneg %p282
        %p374 = pneg %p279
        %s375 = sand.u32 %s269, 1
        %s376 = scalar_lea.sflag [#allocation5], %s375
        %s377 = sand.u32 %s269, 1
        %s378 = smul.addr %s377, 128
        %s379 = scalar_lea.vmem [#allocation4], %s378
        %p380 = scmp.lt.s32.totalorder %s25, 1
        %s381 = scalar_select %p380, %s25, 1
        %s382 = smul.addr %s381, 8
        %s383 = smul.addr %s382, 8
        %s384 = scalar_lea.vmem %s0, %s383
        %v385 = vld [vmem:[%s384] sm:$0xff]
        %v386 = vld [vmem:[%s384 + $0x8] sm:$0xff]
        %v387 = vld [vmem:[%s384 + $0x10] sm:$0xff]
        %v388 = vld [vmem:[%s384 + $0x18] sm:$0xff]
        %v389 = vld [vmem:[%s384 + $0x20] sm:$0xff]
        %v390 = vld [vmem:[%s384 + $0x28] sm:$0xff]
        %v391 = vld [vmem:[%s384 + $0x30] sm:$0xff]
        %v392 = vld [vmem:[%s384 + $0x38] sm:$0xff]
        %393 = vxpose.xlu0.b32.start [1/16] %v385, 128
        %394 = vxpose.xlu0.b32.cont [2/16] %v387, 128
        %395 = vxpose.xlu0.b32.cont [3/16] %v389, 128
        %396 = vxpose.xlu0.b32.cont [4/16] %v391, 128
        %397 = vxpose.xlu0.b32.cont [5/16] 0.0, 128
        %398 = vxpose.xlu0.b32.cont [6/16] 0.0, 128
        %399 = vxpose.xlu0.b32.cont [7/16] 0.0, 128
        %400 = vxpose.xlu0.b32.cont [8/16] 0.0, 128
        %401 = vxpose.xlu0.b32.cont [9/16] 0.0, 128
        %402 = vxpose.xlu0.b32.cont [10/16] 0.0, 128
        %403 = vxpose.xlu0.b32.cont [11/16] 0.0, 128
        %404 = vxpose.xlu0.b32.cont [12/16] 0.0, 128
        %405 = vxpose.xlu0.b32.cont [13/16] 0.0, 128
        %406 = vxpose.xlu0.b32.cont [14/16] 0.0, 128
        %407 = vxpose.xlu0.b32.cont [15/16] 0.0, 128
        %408 = vxpose.xlu0.b32.end [16/16] 0.0, 128
        %v409 = vpop.trf.xlu0
        %v410 = vpop.trf.xlu0
        %v411 = vpop.trf.xlu0
        %v412 = vpop.trf.xlu0
        %v413 = vpop.trf.xlu0
        %v414 = vpop.trf.xlu0
        %v415 = vpop.trf.xlu0
        %v416 = vpop.trf.xlu0
        %v417 = vpop.trf.xlu0
        %v418 = vpop.trf.xlu0
        %v419 = vpop.trf.xlu0
        %v420 = vpop.trf.xlu0
        %v421 = vpop.trf.xlu0
        %v422 = vpop.trf.xlu0
        %v423 = vpop.trf.xlu0
        %v424 = vpop.trf.xlu0
        %425 = vxpose.xlu0.b32.start [1/16] %v386, 128
        %426 = vxpose.xlu0.b32.cont [2/16] %v388, 128
        %427 = vxpose.xlu0.b32.cont [3/16] %v390, 128
        %428 = vxpose.xlu0.b32.cont [4/16] %v392, 128
        %429 = vxpose.xlu0.b32.cont [5/16] 0.0, 128
        %430 = vxpose.xlu0.b32.cont [6/16] 0.0, 128
        %431 = vxpose.xlu0.b32.cont [7/16] 0.0, 128
        %432 = vxpose.xlu0.b32.cont [8/16] 0.0, 128
        %433 = vxpose.xlu0.b32.cont [9/16] 0.0, 128
        %434 = vxpose.xlu0.b32.cont [10/16] 0.0, 128
        %435 = vxpose.xlu0.b32.cont [11/16] 0.0, 128
        %436 = vxpose.xlu0.b32.cont [12/16] 0.0, 128
        %437 = vxpose.xlu0.b32.cont [13/16] 0.0, 128
        %438 = vxpose.xlu0.b32.cont [14/16] 0.0, 128
        %439 = vxpose.xlu0.b32.cont [15/16] 0.0, 128
        %440 = vxpose.xlu0.b32.end [16/16] 0.0, 128
        %v441 = vpop.trf.xlu0
        %v442 = vpop.trf.xlu0
        %v443 = vpop.trf.xlu0
        %v444 = vpop.trf.xlu0
        %v445 = vpop.trf.xlu0
        %v446 = vpop.trf.xlu0
        %v447 = vpop.trf.xlu0
        %v448 = vpop.trf.xlu0
        %v449 = vpop.trf.xlu0
        %v450 = vpop.trf.xlu0
        %v451 = vpop.trf.xlu0
        %v452 = vpop.trf.xlu0
        %v453 = vpop.trf.xlu0
        %v454 = vpop.trf.xlu0
        %v455 = vpop.trf.xlu0
        %v456 = vpop.trf.xlu0
        %v457 = vld [vmem:[%s1] sm:$0x1]
        %v458 = vld [vmem:[%s2] sm:$0x1]
        %v459 = vlaneseq
        %v460 = vshrl.u32 %v459, 7
        %v461 = vadd.s32 %v460, 8
        %v462 = vadd.s32 %v460, 16
        %v463 = vadd.s32 %v460, 24
        %v464 = vlaneseq
        %v465 = vand.u32 %v464, 127
        %vm466 = vcmp.ge.s32.totalorder %v460, %v465
        %vm467 = vcmp.ge.s32.totalorder %v461, %v465
        %vm468 = vcmp.ge.s32.totalorder %v462, %v465
        %vm469 = vcmp.ge.s32.totalorder %v463, %v465
        %v470 = vadd.s32 %v465, 1
        %vm471 = vcmp.lt.s32.totalorder %v460, %v470
        %vm472 = vcmp.lt.s32.totalorder %v461, %v470
        %vm473 = vcmp.lt.s32.totalorder %v462, %v470
        %vm474 = vcmp.lt.s32.totalorder %v463, %v470
        %vm475 = vmand %vm466, %vm471
        %vm476 = vmand %vm467, %vm472
        %vm477 = vmand %vm468, %vm473
        %vm478 = vmand %vm469, %vm474
        %v479 = vsel %vm475, 1, 0
        %v480 = vsel %vm476, 1, 0
        %v481 = vsel %vm477, 1, 0
        %v482 = vsel %vm478, 1, 0
        %v483 = vcvt.s32.f32 %v479
        %v484 = vcvt.s32.f32 %v480
        %v485 = vcvt.s32.f32 %v481
        %v486 = vcvt.s32.f32 %v482
        %vm487 = vcmp.ge.s32.totalorder %v465, %v460
        %vm488 = vcmp.ge.s32.totalorder %v465, %v461
        %vm489 = vcmp.ge.s32.totalorder %v465, %v462
        %vm490 = vcmp.ge.s32.totalorder %v465, %v463
        %v491 = vadd.s32 %v460, 1
        %v492 = vadd.s32 %v461, 1
        %v493 = vadd.s32 %v462, 1
        %v494 = vadd.s32 %v463, 1
        %vm495 = vcmp.lt.s32.totalorder %v465, %v491
        %vm496 = vcmp.lt.s32.totalorder %v465, %v492
        %vm497 = vcmp.lt.s32.totalorder %v465, %v493
        %vm498 = vcmp.lt.s32.totalorder %v465, %v494
        %vm499 = vmand %vm487, %vm495
        %vm500 = vmand %vm488, %vm496
        %vm501 = vmand %vm489, %vm497
        %vm502 = vmand %vm490, %vm498
        %v503 = vsel %vm499, 1, 0
        %v504 = vsel %vm500, 1, 0
        %v505 = vsel %vm501, 1, 0
        %v506 = vsel %vm502, 1, 0
        %v507 = vcvt.s32.f32 %v503
        %v508 = vcvt.s32.f32 %v504
        %v509 = vcvt.s32.f32 %v505
        %v510 = vcvt.s32.f32 %v506
        %vm511 = vcmask 261120
        %v512 = vsel %vm511, %v409, 0.0
        %v513 = vsel %vm511, %v410, 0.0
        %v514 = vadd.f32 %v512, %v513
        %v515 = vsel %vm511, %v411, 0.0
        %v516 = vadd.f32 %v514, %v515
        %v517 = vsel %vm511, %v412, 0.0
        %v518 = vadd.f32 %v516, %v517
        %v519 = vsel %vm511, %v413, 0.0
        %v520 = vadd.f32 %v518, %v519
        %v521 = vsel %vm511, %v414, 0.0
        %v522 = vadd.f32 %v520, %v521
        %v523 = vsel %vm511, %v415, 0.0
        %v524 = vadd.f32 %v522, %v523
        %v525 = vsel %vm511, %v416, 0.0
        %v526 = vadd.f32 %v524, %v525
        %v527 = vsel %vm511, %v417, 0.0
        %v528 = vadd.f32 %v526, %v527
        %v529 = vsel %vm511, %v418, 0.0
        %v530 = vadd.f32 %v528, %v529
        %v531 = vsel %vm511, %v419, 0.0
        %v532 = vadd.f32 %v530, %v531
        %v533 = vsel %vm511, %v420, 0.0
        %v534 = vadd.f32 %v532, %v533
        %v535 = vsel %vm511, %v421, 0.0
        %v536 = vadd.f32 %v534, %v535
        %v537 = vsel %vm511, %v422, 0.0
        %v538 = vadd.f32 %v536, %v537
        %v539 = vsel %vm511, %v423, 0.0
        %v540 = vadd.f32 %v538, %v539
        %v541 = vsel %vm511, %v424, 0.0
        %v542 = vadd.f32 %v540, %v541
        %v543 = vsel %vm511, %v441, 0.0
        %v544 = vadd.f32 %v542, %v543
        %v545 = vsel %vm511, %v442, 0.0
        %v546 = vadd.f32 %v544, %v545
        %v547 = vsel %vm511, %v443, 0.0
        %v548 = vadd.f32 %v546, %v547
        %v549 = vsel %vm511, %v444, 0.0
        %v550 = vadd.f32 %v548, %v549
        %v551 = vsel %vm511, %v445, 0.0
        %v552 = vadd.f32 %v550, %v551
        %v553 = vsel %vm511, %v446, 0.0
        %v554 = vadd.f32 %v552, %v553
        %v555 = vsel %vm511, %v447, 0.0
        %v556 = vadd.f32 %v554, %v555
        %v557 = vsel %vm511, %v448, 0.0
        %v558 = vadd.f32 %v556, %v557
        %v559 = vsel %vm511, %v449, 0.0
        %v560 = vadd.f32 %v558, %v559
        %v561 = vsel %vm511, %v450, 0.0
        %v562 = vadd.f32 %v560, %v561
        %v563 = vsel %vm511, %v451, 0.0
        %v564 = vadd.f32 %v562, %v563
        %v565 = vsel %vm511, %v452, 0.0
        %v566 = vadd.f32 %v564, %v565
        %v567 = vsel %vm511, %v453, 0.0
        %v568 = vadd.f32 %v566, %v567
        %v569 = vsel %vm511, %v454, 0.0
        %v570 = vadd.f32 %v568, %v569
        %v571 = vsel %vm511, %v455, 0.0
        %v572 = vadd.f32 %v570, %v571
        %v573 = vsel %vm511, %v456, 0.0
        %v574 = vadd.f32 %v572, %v573
        %v575 = vrot.slane %v574, 4
        %v576 = vadd.f32 %v574, %v575
        %v577 = vrot.slane %v576, 2
        %v578 = vadd.f32 %v576, %v577
        %v579 = vrot.slane %v578, 1
        %v580 = vadd.f32 %v578, %v579
        %v582 = vsel %vm511, %v580, 0
        %584 = vmatprep.subr.mxu0 0.0
        %585 = vmatpush1.msra.mxu0 %v483
        %586 = vmatprep.subr.mxu0 0.0
        %587 = vmatpush1.msra.mxu0 %v484
        %588 = vmatprep.subr.mxu0 0.0
        %589 = vmatpush1.msra.mxu0 %v485
        %590 = vmatprep.subr.mxu0 0.0
        %591 = vmatpush1.msra.mxu0 %v486
        %592 = vmatprep.subr.mxu0 0.0
        %593 = vmatpush1.msra.mxu0 0.0
        %594 = vmatprep.subr.mxu0 0.0
        %595 = vmatpush1.msra.mxu0 0.0
        %596 = vmatprep.subr.mxu0 0.0
        %597 = vmatpush1.msra.mxu0 0.0
        %598 = vmatprep.subr.mxu0 0.0
        %599 = vmatpush1.msra.mxu0 0.0
        %600 = vmatprep.subr.mxu0 0.0
        %601 = vmatpush1.msra.mxu0 0.0
        %602 = vmatprep.subr.mxu0 0.0
        %603 = vmatpush1.msra.mxu0 0.0
        %604 = vmatprep.subr.mxu0 0.0
        %605 = vmatpush1.msra.mxu0 0.0
        %606 = vmatprep.subr.mxu0 0.0
        %607 = vmatpush1.msra.mxu0 0.0
        %608 = vmatprep.subr.mxu0 0.0
        %609 = vmatpush1.msra.mxu0 0.0
        %610 = vmatprep.subr.mxu0 0.0
        %611 = vmatpush1.msra.mxu0 0.0
        %612 = vmatprep.subr.mxu0 0.0
        %613 = vmatpush1.msra.mxu0 0.0
        %614 = vmatprep.subr.mxu0 0.0
        %615 = vmatpush1.msra.mxu0 0.0
        %616 = vmatprep.subr.mxu0 0.0
        %617 = vmatpush1.msra.mxu0 0.0
        %618 = vmatprep.subr.mxu0 0.0
        %619 = vmatpush1.msra.mxu0 0.0
        %620 = vmatprep.subr.mxu0 0.0
        %621 = vmatpush1.msra.mxu0 0.0
        %622 = vmatprep.subr.mxu0 0.0
        %623 = vmatpush1.msra.mxu0 0.0
        %624 = vmatprep.subr.mxu0 0.0
        %625 = vmatpush1.msra.mxu0 0.0
        %626 = vmatprep.subr.mxu0 0.0
        %627 = vmatpush1.msra.mxu0 0.0
        %628 = vmatprep.subr.mxu0 0.0
        %629 = vmatpush1.msra.mxu0 0.0
        %630 = vmatprep.subr.mxu0 0.0
        %631 = vmatpush1.msra.mxu0 0.0
        %632 = vmatprep.subr.mxu0 0.0
        %633 = vmatpush1.msra.mxu0 0.0
        %634 = vmatprep.subr.mxu0 0.0
        %635 = vmatpush1.msra.mxu0 0.0
        %636 = vmatprep.subr.mxu0 0.0
        %637 = vmatpush1.msra.mxu0 0.0
        %638 = vmatprep.subr.mxu0 0.0
        %639 = vmatpush1.msra.mxu0 0.0
        %640 = vmatprep.subr.mxu0 0.0
        %641 = vmatpush1.msra.mxu0 0.0
        %642 = vmatprep.subr.mxu0 0.0
        %643 = vmatpush1.msra.mxu0 0.0
        %644 = vmatprep.subr.mxu0 0.0
        %645 = vmatpush1.msra.mxu0 0.0
        %646 = vmatprep.subr.mxu0 0.0
        %647 = vmatpush1.msra.mxu0 0.0
        %648 = vmatprep.mubr.f32.mxu0 0.0
        %649 = vmatmul.mubr.f32.gmra.mrb[0].mxu0 %v582
        %v650 = vpop.f32.mrb[0].mxu0
        %v651 = vadd.f32 0.0, %v650
        %v652 = vpop.f32.mrb[0].mxu0
        %653 = vdwg.mxu0
        %v654 = vrcp.pop 256.0
        %v655 = vmul.f32 %v651, %v654
        %v657 = vsel %vm511, %v655, 0
        %659 = vmatprep.subr.mxu0 0.0
        %660 = vmatpush1.msra.mxu0 %v507
        %661 = vmatprep.subr.mxu0 0.0
        %662 = vmatpush1.msra.mxu0 %v508
        %663 = vmatprep.subr.mxu0 0.0
        %664 = vmatpush1.msra.mxu0 %v509
        %665 = vmatprep.subr.mxu0 0.0
        %666 = vmatpush1.msra.mxu0 %v510
        %667 = vmatprep.subr.mxu0 0.0
        %668 = vmatpush1.msra.mxu0 0.0
        %669 = vmatprep.subr.mxu0 0.0
        %670 = vmatpush1.msra.mxu0 0.0
        %671 = vmatprep.subr.mxu0 0.0
        %672 = vmatpush1.msra.mxu0 0.0
        %673 = vmatprep.subr.mxu0 0.0
        %674 = vmatpush1.msra.mxu0 0.0
        %675 = vmatprep.subr.mxu0 0.0
        %676 = vmatpush1.msra.mxu0 0.0
        %677 = vmatprep.subr.mxu0 0.0
        %678 = vmatpush1.msra.mxu0 0.0
        %679 = vmatprep.subr.mxu0 0.0
        %680 = vmatpush1.msra.mxu0 0.0
        %681 = vmatprep.subr.mxu0 0.0
        %682 = vmatpush1.msra.mxu0 0.0
        %683 = vmatprep.subr.mxu0 0.0
        %684 = vmatpush1.msra.mxu0 0.0
        %685 = vmatprep.subr.mxu0 0.0
        %686 = vmatpush1.msra.mxu0 0.0
        %687 = vmatprep.subr.mxu0 0.0
        %688 = vmatpush1.msra.mxu0 0.0
        %689 = vmatprep.subr.mxu0 0.0
        %690 = vmatpush1.msra.mxu0 0.0
        %691 = vmatprep.subr.mxu0 0.0
        %692 = vmatpush1.msra.mxu0 0.0
        %693 = vmatprep.subr.mxu0 0.0
        %694 = vmatpush1.msra.mxu0 0.0
        %695 = vmatprep.subr.mxu0 0.0
        %696 = vmatpush1.msra.mxu0 0.0
        %697 = vmatprep.subr.mxu0 0.0
        %698 = vmatpush1.msra.mxu0 0.0
        %699 = vmatprep.subr.mxu0 0.0
        %700 = vmatpush1.msra.mxu0 0.0
        %701 = vmatprep.subr.mxu0 0.0
        %702 = vmatpush1.msra.mxu0 0.0
        %703 = vmatprep.subr.mxu0 0.0
        %704 = vmatpush1.msra.mxu0 0.0
        %705 = vmatprep.subr.mxu0 0.0
        %706 = vmatpush1.msra.mxu0 0.0
        %707 = vmatprep.subr.mxu0 0.0
        %708 = vmatpush1.msra.mxu0 0.0
        %709 = vmatprep.subr.mxu0 0.0
        %710 = vmatpush1.msra.mxu0 0.0
        %711 = vmatprep.subr.mxu0 0.0
        %712 = vmatpush1.msra.mxu0 0.0
        %713 = vmatprep.subr.mxu0 0.0
        %714 = vmatpush1.msra.mxu0 0.0
        %715 = vmatprep.subr.mxu0 0.0
        %716 = vmatpush1.msra.mxu0 0.0
        %717 = vmatprep.subr.mxu0 0.0
        %718 = vmatpush1.msra.mxu0 0.0
        %719 = vmatprep.subr.mxu0 0.0
        %720 = vmatpush1.msra.mxu0 0.0
        %721 = vmatprep.subr.mxu0 0.0
        %722 = vmatpush1.msra.mxu0 0.0
        %723 = vmatprep.mubr.f32.mxu0 0.0
        %724 = vmatmul.mubr.f32.gmra.mrb[0].mxu0 %v657
        %v725 = vpop.f32.mrb[0].mxu0
        %v726 = vadd.f32 0.0, %v725
        %v727 = vpop.f32.mrb[0].mxu0
        %728 = vdwg.mxu0
        %v729 = vlaneseq
        %v730 = vshrl.u32 %v729, 7
        %v731 = vsub.s32 0, %v730
        %v732 = vrot.slane %v726, %v731
        %v733 = vsub.f32 %v409, %v732
        %v734 = vsub.f32 %v410, %v732
        %v735 = vsub.f32 %v411, %v732
        %v736 = vsub.f32 %v412, %v732
        %v737 = vsub.f32 %v413, %v732
        %v738 = vsub.f32 %v414, %v732
        %v739 = vsub.f32 %v415, %v732
        %v740 = vsub.f32 %v416, %v732
        %v741 = vsub.f32 %v417, %v732
        %v742 = vsub.f32 %v418, %v732
        %v743 = vsub.f32 %v419, %v732
        %v744 = vsub.f32 %v420, %v732
        %v745 = vsub.f32 %v421, %v732
        %v746 = vsub.f32 %v422, %v732
        %v747 = vsub.f32 %v423, %v732
        %v748 = vsub.f32 %v424, %v732
        %v749 = vsub.f32 %v441, %v732
        %v750 = vsub.f32 %v442, %v732
        %v751 = vsub.f32 %v443, %v732
        %v752 = vsub.f32 %v444, %v732
        %v753 = vsub.f32 %v445, %v732
        %v754 = vsub.f32 %v446, %v732
        %v755 = vsub.f32 %v447, %v732
        %v756 = vsub.f32 %v448, %v732
        %v757 = vsub.f32 %v449, %v732
        %v758 = vsub.f32 %v450, %v732
        %v759 = vsub.f32 %v451, %v732
        %v760 = vsub.f32 %v452, %v732
        %v761 = vsub.f32 %v453, %v732
        %v762 = vsub.f32 %v454, %v732
        %v763 = vsub.f32 %v455, %v732
        %v764 = vsub.f32 %v456, %v732
        %v765 = vmul.f32 %v733, %v733
        %v766 = vmul.f32 %v734, %v734
        %v767 = vmul.f32 %v735, %v735
        %v768 = vmul.f32 %v736, %v736
        %v769 = vmul.f32 %v737, %v737
        %v770 = vmul.f32 %v738, %v738
        %v771 = vmul.f32 %v739, %v739
        %v772 = vmul.f32 %v740, %v740
        %v773 = vmul.f32 %v741, %v741
        %v774 = vmul.f32 %v742, %v742
        %v775 = vmul.f32 %v743, %v743
        %v776 = vmul.f32 %v744, %v744
        %v777 = vmul.f32 %v745, %v745
        %v778 = vmul.f32 %v746, %v746
        %v779 = vmul.f32 %v747, %v747
        %v780 = vmul.f32 %v748, %v748
        %v781 = vmul.f32 %v749, %v749
        %v782 = vmul.f32 %v750, %v750
        %v783 = vmul.f32 %v751, %v751
        %v784 = vmul.f32 %v752, %v752
        %v785 = vmul.f32 %v753, %v753
        %v786 = vmul.f32 %v754, %v754
        %v787 = vmul.f32 %v755, %v755
        %v788 = vmul.f32 %v756, %v756
        %v789 = vmul.f32 %v757, %v757
        %v790 = vmul.f32 %v758, %v758
        %v791 = vmul.f32 %v759, %v759
        %v792 = vmul.f32 %v760, %v760
        %v793 = vmul.f32 %v761, %v761
        %v794 = vmul.f32 %v762, %v762
        %v795 = vmul.f32 %v763, %v763
        %v796 = vmul.f32 %v764, %v764
        %v797 = vsel %vm511, %v765, 0.0
        %v798 = vsel %vm511, %v766, 0.0
        %v799 = vadd.f32 %v797, %v798
        %v800 = vsel %vm511, %v767, 0.0
        %v801 = vadd.f32 %v799, %v800
        %v802 = vsel %vm511, %v768, 0.0
        %v803 = vadd.f32 %v801, %v802
        %v804 = vsel %vm511, %v769, 0.0
        %v805 = vadd.f32 %v803, %v804
        %v806 = vsel %vm511, %v770, 0.0
        %v807 = vadd.f32 %v805, %v806
        %v808 = vsel %vm511, %v771, 0.0
        %v809 = vadd.f32 %v807, %v808
        %v810 = vsel %vm511, %v772, 0.0
        %v811 = vadd.f32 %v809, %v810
        %v812 = vsel %vm511, %v773, 0.0
        %v813 = vadd.f32 %v811, %v812
        %v814 = vsel %vm511, %v774, 0.0
        %v815 = vadd.f32 %v813, %v814
        %v816 = vsel %vm511, %v775, 0.0
        %v817 = vadd.f32 %v815, %v816
        %v818 = vsel %vm511, %v776, 0.0
        %v819 = vadd.f32 %v817, %v818
        %v820 = vsel %vm511, %v777, 0.0
        %v821 = vadd.f32 %v819, %v820
        %v822 = vsel %vm511, %v778, 0.0
        %v823 = vadd.f32 %v821, %v822
        %v824 = vsel %vm511, %v779, 0.0
        %v825 = vadd.f32 %v823, %v824
        %v826 = vsel %vm511, %v780, 0.0
        %v827 = vadd.f32 %v825, %v826
        %v828 = vsel %vm511, %v781, 0.0
        %v829 = vadd.f32 %v827, %v828
        %v830 = vsel %vm511, %v782, 0.0
        %v831 = vadd.f32 %v829, %v830
        %v832 = vsel %vm511, %v783, 0.0
        %v833 = vadd.f32 %v831, %v832
        %v834 = vsel %vm511, %v784, 0.0
        %v835 = vadd.f32 %v833, %v834
        %v836 = vsel %vm511, %v785, 0.0
        %v837 = vadd.f32 %v835, %v836
        %v838 = vsel %vm511, %v786, 0.0
        %v839 = vadd.f32 %v837, %v838
        %v840 = vsel %vm511, %v787, 0.0
        %v841 = vadd.f32 %v839, %v840
        %v842 = vsel %vm511, %v788, 0.0
        %v843 = vadd.f32 %v841, %v842
        %v844 = vsel %vm511, %v789, 0.0
        %v845 = vadd.f32 %v843, %v844
        %v846 = vsel %vm511, %v790, 0.0
        %v847 = vadd.f32 %v845, %v846
        %v848 = vsel %vm511, %v791, 0.0
        %v849 = vadd.f32 %v847, %v848
        %v850 = vsel %vm511, %v792, 0.0
        %v851 = vadd.f32 %v849, %v850
        %v852 = vsel %vm511, %v793, 0.0
        %v853 = vadd.f32 %v851, %v852
        %v854 = vsel %vm511, %v794, 0.0
        %v855 = vadd.f32 %v853, %v854
        %v856 = vsel %vm511, %v795, 0.0
        %v857 = vadd.f32 %v855, %v856
        %v858 = vsel %vm511, %v796, 0.0
        %v859 = vadd.f32 %v857, %v858
        %v860 = vrot.slane %v859, 4
        %v861 = vadd.f32 %v859, %v860
        %v862 = vrot.slane %v861, 2
        %v863 = vadd.f32 %v861, %v862
        %v864 = vrot.slane %v863, 1
        %v865 = vadd.f32 %v863, %v864
        %v867 = vsel %vm511, %v865, 0
        %869 = vmatprep.subr.mxu0 0.0
        %870 = vmatpush1.msra.mxu0 %v483
        %871 = vmatprep.subr.mxu0 0.0
        %872 = vmatpush1.msra.mxu0 %v484
        %873 = vmatprep.subr.mxu0 0.0
        %874 = vmatpush1.msra.mxu0 %v485
        %875 = vmatprep.subr.mxu0 0.0
        %876 = vmatpush1.msra.mxu0 %v486
        %877 = vmatprep.subr.mxu0 0.0
        %878 = vmatpush1.msra.mxu0 0.0
        %879 = vmatprep.subr.mxu0 0.0
        %880 = vmatpush1.msra.mxu0 0.0
        %881 = vmatprep.subr.mxu0 0.0
        %882 = vmatpush1.msra.mxu0 0.0
        %883 = vmatprep.subr.mxu0 0.0
        %884 = vmatpush1.msra.mxu0 0.0
        %885 = vmatprep.subr.mxu0 0.0
        %886 = vmatpush1.msra.mxu0 0.0
        %887 = vmatprep.subr.mxu0 0.0
        %888 = vmatpush1.msra.mxu0 0.0
        %889 = vmatprep.subr.mxu0 0.0
        %890 = vmatpush1.msra.mxu0 0.0
        %891 = vmatprep.subr.mxu0 0.0
        %892 = vmatpush1.msra.mxu0 0.0
        %893 = vmatprep.subr.mxu0 0.0
        %894 = vmatpush1.msra.mxu0 0.0
        %895 = vmatprep.subr.mxu0 0.0
        %896 = vmatpush1.msra.mxu0 0.0
        %897 = vmatprep.subr.mxu0 0.0
        %898 = vmatpush1.msra.mxu0 0.0
        %899 = vmatprep.subr.mxu0 0.0
        %900 = vmatpush1.msra.mxu0 0.0
        %901 = vmatprep.subr.mxu0 0.0
        %902 = vmatpush1.msra.mxu0 0.0
        %903 = vmatprep.subr.mxu0 0.0
        %904 = vmatpush1.msra.mxu0 0.0
        %905 = vmatprep.subr.mxu0 0.0
        %906 = vmatpush1.msra.mxu0 0.0
        %907 = vmatprep.subr.mxu0 0.0
        %908 = vmatpush1.msra.mxu0 0.0
        %909 = vmatprep.subr.mxu0 0.0
        %910 = vmatpush1.msra.mxu0 0.0
        %911 = vmatprep.subr.mxu0 0.0
        %912 = vmatpush1.msra.mxu0 0.0
        %913 = vmatprep.subr.mxu0 0.0
        %914 = vmatpush1.msra.mxu0 0.0
        %915 = vmatprep.subr.mxu0 0.0
        %916 = vmatpush1.msra.mxu0 0.0
        %917 = vmatprep.subr.mxu0 0.0
        %918 = vmatpush1.msra.mxu0 0.0
        %919 = vmatprep.subr.mxu0 0.0
        %920 = vmatpush1.msra.mxu0 0.0
        %921 = vmatprep.subr.mxu0 0.0
        %922 = vmatpush1.msra.mxu0 0.0
        %923 = vmatprep.subr.mxu0 0.0
        %924 = vmatpush1.msra.mxu0 0.0
        %925 = vmatprep.subr.mxu0 0.0
        %926 = vmatpush1.msra.mxu0 0.0
        %927 = vmatprep.subr.mxu0 0.0
        %928 = vmatpush1.msra.mxu0 0.0
        %929 = vmatprep.subr.mxu0 0.0
        %930 = vmatpush1.msra.mxu0 0.0
        %931 = vmatprep.subr.mxu0 0.0
        %932 = vmatpush1.msra.mxu0 0.0
        %933 = vmatprep.mubr.f32.mxu0 0.0
        %934 = vmatmul.mubr.f32.gmra.mrb[0].mxu0 %v867
        %v935 = vpop.f32.mrb[0].mxu0
        %v936 = vadd.f32 0.0, %v935
        %v937 = vpop.f32.mrb[0].mxu0
        %938 = vdwg.mxu0
        %v939 = vmul.f32 %v936, %v654
        %v940 = vadd.f32 %v939, 1e-05
        %v941 = vrsqrt.pop %v940
        %v943 = vsel %vm511, %v941, 0
        %945 = vmatprep.subr.mxu0 0.0
        %946 = vmatpush1.msra.mxu0 %v507
        %947 = vmatprep.subr.mxu0 0.0
        %948 = vmatpush1.msra.mxu0 %v508
        %949 = vmatprep.subr.mxu0 0.0
        %950 = vmatpush1.msra.mxu0 %v509
        %951 = vmatprep.subr.mxu0 0.0
        %952 = vmatpush1.msra.mxu0 %v510
        %953 = vmatprep.subr.mxu0 0.0
        %954 = vmatpush1.msra.mxu0 0.0
        %955 = vmatprep.subr.mxu0 0.0
        %956 = vmatpush1.msra.mxu0 0.0
        %957 = vmatprep.subr.mxu0 0.0
        %958 = vmatpush1.msra.mxu0 0.0
        %959 = vmatprep.subr.mxu0 0.0
        %960 = vmatpush1.msra.mxu0 0.0
        %961 = vmatprep.subr.mxu0 0.0
        %962 = vmatpush1.msra.mxu0 0.0
        %963 = vmatprep.subr.mxu0 0.0
        %964 = vmatpush1.msra.mxu0 0.0
        %965 = vmatprep.subr.mxu0 0.0
        %966 = vmatpush1.msra.mxu0 0.0
        %967 = vmatprep.subr.mxu0 0.0
        %968 = vmatpush1.msra.mxu0 0.0
        %969 = vmatprep.subr.mxu0 0.0
        %970 = vmatpush1.msra.mxu0 0.0
        %971 = vmatprep.subr.mxu0 0.0
        %972 = vmatpush1.msra.mxu0 0.0
        %973 = vmatprep.subr.mxu0 0.0
        %974 = vmatpush1.msra.mxu0 0.0
        %975 = vmatprep.subr.mxu0 0.0
        %976 = vmatpush1.msra.mxu0 0.0
        %977 = vmatprep.subr.mxu0 0.0
        %978 = vmatpush1.msra.mxu0 0.0
        %979 = vmatprep.subr.mxu0 0.0
        %980 = vmatpush1.msra.mxu0 0.0
        %981 = vmatprep.subr.mxu0 0.0
        %982 = vmatpush1.msra.mxu0 0.0
        %983 = vmatprep.subr.mxu0 0.0
        %984 = vmatpush1.msra.mxu0 0.0
        %985 = vmatprep.subr.mxu0 0.0
        %986 = vmatpush1.msra.mxu0 0.0
        %987 = vmatprep.subr.mxu0 0.0
        %988 = vmatpush1.msra.mxu0 0.0
        %989 = vmatprep.subr.mxu0 0.0
        %990 = vmatpush1.msra.mxu0 0.0
        %991 = vmatprep.subr.mxu0 0.0
        %992 = vmatpush1.msra.mxu0 0.0
        %993 = vmatprep.subr.mxu0 0.0
        %994 = vmatpush1.msra.mxu0 0.0
        %995 = vmatprep.subr.mxu0 0.0
        %996 = vmatpush1.msra.mxu0 0.0
        %997 = vmatprep.subr.mxu0 0.0
        %998 = vmatpush1.msra.mxu0 0.0
        %999 = vmatprep.subr.mxu0 0.0
        %1000 = vmatpush1.msra.mxu0 0.0
        %1001 = vmatprep.subr.mxu0 0.0
        %1002 = vmatpush1.msra.mxu0 0.0
        %1003 = vmatprep.subr.mxu0 0.0
        %1004 = vmatpush1.msra.mxu0 0.0
        %1005 = vmatprep.subr.mxu0 0.0
        %1006 = vmatpush1.msra.mxu0 0.0
        %1007 = vmatprep.subr.mxu0 0.0
        %1008 = vmatpush1.msra.mxu0 0.0
        %1009 = vmatprep.mubr.f32.mxu0 0.0
        %1010 = vmatmul.mubr.f32.gmra.mrb[0].mxu0 %v943
        %v1011 = vpop.f32.mrb[0].mxu0
        %v1012 = vadd.f32 0.0, %v1011
        %v1013 = vpop.f32.mrb[0].mxu0
        %1014 = vdwg.mxu0
        %v1015 = vmul.f32 %v1012, %v457
        %v1016 = vlaneseq
        %v1017 = vshrl.u32 %v1016, 7
        %v1018 = vsub.s32 0, %v1017
        %v1019 = vrot.slane %v1015, %v1018
        %v1020 = vmul.f32 %v733, %v1019
        %v1021 = vmul.f32 %v734, %v1019
        %v1022 = vmul.f32 %v735, %v1019
        %v1023 = vmul.f32 %v736, %v1019
        %v1024 = vmul.f32 %v737, %v1019
        %v1025 = vmul.f32 %v738, %v1019
        %v1026 = vmul.f32 %v739, %v1019
        %v1027 = vmul.f32 %v740, %v1019
        %v1028 = vmul.f32 %v741, %v1019
        %v1029 = vmul.f32 %v742, %v1019
        %v1030 = vmul.f32 %v743, %v1019
        %v1031 = vmul.f32 %v744, %v1019
        %v1032 = vmul.f32 %v745, %v1019
        %v1033 = vmul.f32 %v746, %v1019
        %v1034 = vmul.f32 %v747, %v1019
        %v1035 = vmul.f32 %v748, %v1019
        %v1036 = vmul.f32 %v749, %v1019
        %v1037 = vmul.f32 %v750, %v1019
        %v1038 = vmul.f32 %v751, %v1019
        %v1039 = vmul.f32 %v752, %v1019
        %v1040 = vmul.f32 %v753, %v1019
        %v1041 = vmul.f32 %v754, %v1019
        %v1042 = vmul.f32 %v755, %v1019
        %v1043 = vmul.f32 %v756, %v1019
        %v1044 = vmul.f32 %v757, %v1019
        %v1045 = vmul.f32 %v758, %v1019
        %v1046 = vmul.f32 %v759, %v1019
        %v1047 = vmul.f32 %v760, %v1019
        %v1048 = vmul.f32 %v761, %v1019
        %v1049 = vmul.f32 %v762, %v1019
        %v1050 = vmul.f32 %v763, %v1019
        %v1051 = vmul.f32 %v764, %v1019
        %v1053 = vlaneseq
        %v1054 = vshrl.u32 %v1053, 7
        %v1055 = vsub.s32 0, %v1054
        %v1056 = vrot.slane %v458, %v1055
        %v1058 = vadd.f32 %v1020, %v1056
        %v1059 = vadd.f32 %v1021, %v1056
        %v1060 = vadd.f32 %v1022, %v1056
        %v1061 = vadd.f32 %v1023, %v1056
        %v1062 = vadd.f32 %v1024, %v1056
        %v1063 = vadd.f32 %v1025, %v1056
        %v1064 = vadd.f32 %v1026, %v1056
        %v1065 = vadd.f32 %v1027, %v1056
        %v1066 = vadd.f32 %v1028, %v1056
        %v1067 = vadd.f32 %v1029, %v1056
        %v1068 = vadd.f32 %v1030, %v1056
        %v1069 = vadd.f32 %v1031, %v1056
        %v1070 = vadd.f32 %v1032, %v1056
        %v1071 = vadd.f32 %v1033, %v1056
        %v1072 = vadd.f32 %v1034, %v1056
        %v1073 = vadd.f32 %v1035, %v1056
        %v1074 = vadd.f32 %v1036, %v1056
        %v1075 = vadd.f32 %v1037, %v1056
        %v1076 = vadd.f32 %v1038, %v1056
        %v1077 = vadd.f32 %v1039, %v1056
        %v1078 = vadd.f32 %v1040, %v1056
        %v1079 = vadd.f32 %v1041, %v1056
        %v1080 = vadd.f32 %v1042, %v1056
        %v1081 = vadd.f32 %v1043, %v1056
        %v1082 = vadd.f32 %v1044, %v1056
        %v1083 = vadd.f32 %v1045, %v1056
        %v1084 = vadd.f32 %v1046, %v1056
        %v1085 = vadd.f32 %v1047, %v1056
        %v1086 = vadd.f32 %v1048, %v1056
        %v1087 = vadd.f32 %v1049, %v1056
        %v1088 = vadd.f32 %v1050, %v1056
        %v1089 = vadd.f32 %v1051, %v1056
        %v1090 = vxor.u32 %v1058, 2147483648
        %v1091 = vxor.u32 %v1059, 2147483648
        %v1092 = vxor.u32 %v1060, 2147483648
        %v1093 = vxor.u32 %v1061, 2147483648
        %v1094 = vxor.u32 %v1062, 2147483648
        %v1095 = vxor.u32 %v1063, 2147483648
        %v1096 = vxor.u32 %v1064, 2147483648
        %v1097 = vxor.u32 %v1065, 2147483648
        %v1098 = vxor.u32 %v1066, 2147483648
        %v1099 = vxor.u32 %v1067, 2147483648
        %v1100 = vxor.u32 %v1068, 2147483648
        %v1101 = vxor.u32 %v1069, 2147483648
        %v1102 = vxor.u32 %v1070, 2147483648
        %v1103 = vxor.u32 %v1071, 2147483648
        %v1104 = vxor.u32 %v1072, 2147483648
        %v1105 = vxor.u32 %v1073, 2147483648
        %v1106 = vxor.u32 %v1074, 2147483648
        %v1107 = vxor.u32 %v1075, 2147483648
        %v1108 = vxor.u32 %v1076, 2147483648
        %v1109 = vxor.u32 %v1077, 2147483648
        %v1110 = vxor.u32 %v1078, 2147483648
        %v1111 = vxor.u32 %v1079, 2147483648
        %v1112 = vxor.u32 %v1080, 2147483648
        %v1113 = vxor.u32 %v1081, 2147483648
        %v1114 = vxor.u32 %v1082, 2147483648
        %v1115 = vxor.u32 %v1083, 2147483648
        %v1116 = vxor.u32 %v1084, 2147483648
        %v1117 = vxor.u32 %v1085, 2147483648
        %v1118 = vxor.u32 %v1086, 2147483648
        %v1119 = vxor.u32 %v1087, 2147483648
        %v1120 = vxor.u32 %v1088, 2147483648
        %v1121 = vxor.u32 %v1089, 2147483648
        %v1122 = vmul.f32 %v1090, 1.442695
        %v1123 = vpow.pop %v1122
        %v1124 = vmul.f32 %v1091, 1.442695
        %v1125 = vpow.pop %v1124
        %v1126 = vmul.f32 %v1092, 1.442695
        %v1127 = vpow.pop %v1126
        %v1128 = vmul.f32 %v1093, 1.442695
        %v1129 = vpow.pop %v1128
        %v1130 = vmul.f32 %v1094, 1.442695
        %v1131 = vpow.pop %v1130
        %v1132 = vmul.f32 %v1095, 1.442695
        %v1133 = vpow.pop %v1132
        %v1134 = vmul.f32 %v1096, 1.442695
        %v1135 = vpow.pop %v1134
        %v1136 = vmul.f32 %v1097, 1.442695
        %v1137 = vpow.pop %v1136
        %v1138 = vmul.f32 %v1098, 1.442695
        %v1139 = vpow.pop %v1138
        %v1140 = vmul.f32 %v1099, 1.442695
        %v1141 = vpow.pop %v1140
        %v1142 = vmul.f32 %v1100, 1.442695
        %v1143 = vpow.pop %v1142
        %v1144 = vmul.f32 %v1101, 1.442695
        %v1145 = vpow.pop %v1144
        %v1146 = vmul.f32 %v1102, 1.442695
        %v1147 = vpow.pop %v1146
        %v1148 = vmul.f32 %v1103, 1.442695
        %v1149 = vpow.pop %v1148
        %v1150 = vmul.f32 %v1104, 1.442695
        %v1151 = vpow.pop %v1150
        %v1152 = vmul.f32 %v1105, 1.442695
        %v1153 = vpow.pop %v1152
        %v1154 = vmul.f32 %v1106, 1.442695
        %v1155 = vpow.pop %v1154
        %v1156 = vmul.f32 %v1107, 1.442695
        %v1157 = vpow.pop %v1156
        %v1158 = vmul.f32 %v1108, 1.442695
        %v1159 = vpow.pop %v1158
        %v1160 = vmul.f32 %v1109, 1.442695
        %v1161 = vpow.pop %v1160
        %v1162 = vmul.f32 %v1110, 1.442695
        %v1163 = vpow.pop %v1162
        %v1164 = vmul.f32 %v1111, 1.442695
        %v1165 = vpow.pop %v1164
        %v1166 = vmul.f32 %v1112, 1.442695
        %v1167 = vpow.pop %v1166
        %v1168 = vmul.f32 %v1113, 1.442695
        %v1169 = vpow.pop %v1168
        %v1170 = vmul.f32 %v1114, 1.442695
        %v1171 = vpow.pop %v1170
        %v1172 = vmul.f32 %v1115, 1.442695
        %v1173 = vpow.pop %v1172
        %v1174 = vmul.f32 %v1116, 1.442695
        %v1175 = vpow.pop %v1174
        %v1176 = vmul.f32 %v1117, 1.442695
        %v1177 = vpow.pop %v1176
        %v1178 = vmul.f32 %v1118, 1.442695
        %v1179 = vpow.pop %v1178
        %v1180 = vmul.f32 %v1119, 1.442695
        %v1181 = vpow.pop %v1180
        %v1182 = vmul.f32 %v1120, 1.442695
        %v1183 = vpow.pop %v1182
        %v1184 = vmul.f32 %v1121, 1.442695
        %v1185 = vpow.pop %v1184
        %v1186 = vadd.f32 %v1123, 1.0
        %v1187 = vadd.f32 %v1125, 1.0
        %v1188 = vadd.f32 %v1127, 1.0
        %v1189 = vadd.f32 %v1129, 1.0
        %v1190 = vadd.f32 %v1131, 1.0
        %v1191 = vadd.f32 %v1133, 1.0
        %v1192 = vadd.f32 %v1135, 1.0
        %v1193 = vadd.f32 %v1137, 1.0
        %v1194 = vadd.f32 %v1139, 1.0
        %v1195 = vadd.f32 %v1141, 1.0
        %v1196 = vadd.f32 %v1143, 1.0
        %v1197 = vadd.f32 %v1145, 1.0
        %v1198 = vadd.f32 %v1147, 1.0
        %v1199 = vadd.f32 %v1149, 1.0
        %v1200 = vadd.f32 %v1151, 1.0
        %v1201 = vadd.f32 %v1153, 1.0
        %v1202 = vadd.f32 %v1155, 1.0
        %v1203 = vadd.f32 %v1157, 1.0
        %v1204 = vadd.f32 %v1159, 1.0
        %v1205 = vadd.f32 %v1161, 1.0
        %v1206 = vadd.f32 %v1163, 1.0
        %v1207 = vadd.f32 %v1165, 1.0
        %v1208 = vadd.f32 %v1167, 1.0
        %v1209 = vadd.f32 %v1169, 1.0
        %v1210 = vadd.f32 %v1171, 1.0
        %v1211 = vadd.f32 %v1173, 1.0
        %v1212 = vadd.f32 %v1175, 1.0
        %v1213 = vadd.f32 %v1177, 1.0
        %v1214 = vadd.f32 %v1179, 1.0
        %v1215 = vadd.f32 %v1181, 1.0
        %v1216 = vadd.f32 %v1183, 1.0
        %v1217 = vadd.f32 %v1185, 1.0
        %v1218 = vrcp.pop %v1186
        %v1219 = vmul.f32 1.0, %v1218
        %v1220 = vrcp.pop %v1187
        %v1221 = vmul.f32 1.0, %v1220
        %v1222 = vrcp.pop %v1188
        %v1223 = vmul.f32 1.0, %v1222
        %v1224 = vrcp.pop %v1189
        %v1225 = vmul.f32 1.0, %v1224
        %v1226 = vrcp.pop %v1190
        %v1227 = vmul.f32 1.0, %v1226
        %v1228 = vrcp.pop %v1191
        %v1229 = vmul.f32 1.0, %v1228
        %v1230 = vrcp.pop %v1192
        %v1231 = vmul.f32 1.0, %v1230
        %v1232 = vrcp.pop %v1193
        %v1233 = vmul.f32 1.0, %v1232
        %v1234 = vrcp.pop %v1194
        %v1235 = vmul.f32 1.0, %v1234
        %v1236 = vrcp.pop %v1195
        %v1237 = vmul.f32 1.0, %v1236
        %v1238 = vrcp.pop %v1196
        %v1239 = vmul.f32 1.0, %v1238
        %v1240 = vrcp.pop %v1197
        %v1241 = vmul.f32 1.0, %v1240
        %v1242 = vrcp.pop %v1198
        %v1243 = vmul.f32 1.0, %v1242
        %v1244 = vrcp.pop %v1199
        %v1245 = vmul.f32 1.0, %v1244
        %v1246 = vrcp.pop %v1200
        %v1247 = vmul.f32 1.0, %v1246
        %v1248 = vrcp.pop %v1201
        %v1249 = vmul.f32 1.0, %v1248
        %v1250 = vrcp.pop %v1202
        %v1251 = vmul.f32 1.0, %v1250
        %v1252 = vrcp.pop %v1203
        %v1253 = vmul.f32 1.0, %v1252
        %v1254 = vrcp.pop %v1204
        %v1255 = vmul.f32 1.0, %v1254
        %v1256 = vrcp.pop %v1205
        %v1257 = vmul.f32 1.0, %v1256
        %v1258 = vrcp.pop %v1206
        %v1259 = vmul.f32 1.0, %v1258
        %v1260 = vrcp.pop %v1207
        %v1261 = vmul.f32 1.0, %v1260
        %v1262 = vrcp.pop %v1208
        %v1263 = vmul.f32 1.0, %v1262
        %v1264 = vrcp.pop %v1209
        %v1265 = vmul.f32 1.0, %v1264
        %v1266 = vrcp.pop %v1210
        %v1267 = vmul.f32 1.0, %v1266
        %v1268 = vrcp.pop %v1211
        %v1269 = vmul.f32 1.0, %v1268
        %v1270 = vrcp.pop %v1212
        %v1271 = vmul.f32 1.0, %v1270
        %v1272 = vrcp.pop %v1213
        %v1273 = vmul.f32 1.0, %v1272
        %v1274 = vrcp.pop %v1214
        %v1275 = vmul.f32 1.0, %v1274
        %v1276 = vrcp.pop %v1215
        %v1277 = vmul.f32 1.0, %v1276
        %v1278 = vrcp.pop %v1216
        %v1279 = vmul.f32 1.0, %v1278
        %v1280 = vrcp.pop %v1217
        %v1281 = vmul.f32 1.0, %v1280
        %v1282 = vmul.f32 %v1058, %v1219
        %v1283 = vmul.f32 %v1059, %v1221
        %v1284 = vmul.f32 %v1060, %v1223
        %v1285 = vmul.f32 %v1061, %v1225
        %v1286 = vmul.f32 %v1062, %v1227
        %v1287 = vmul.f32 %v1063, %v1229
        %v1288 = vmul.f32 %v1064, %v1231
        %v1289 = vmul.f32 %v1065, %v1233
        %v1290 = vmul.f32 %v1066, %v1235
        %v1291 = vmul.f32 %v1067, %v1237
        %v1292 = vmul.f32 %v1068, %v1239
        %v1293 = vmul.f32 %v1069, %v1241
        %v1294 = vmul.f32 %v1070, %v1243
        %v1295 = vmul.f32 %v1071, %v1245
        %v1296 = vmul.f32 %v1072, %v1247
        %v1297 = vmul.f32 %v1073, %v1249
        %v1298 = vmul.f32 %v1074, %v1251
        %v1299 = vmul.f32 %v1075, %v1253
        %v1300 = vmul.f32 %v1076, %v1255
        %v1301 = vmul.f32 %v1077, %v1257
        %v1302 = vmul.f32 %v1078, %v1259
        %v1303 = vmul.f32 %v1079, %v1261
        %v1304 = vmul.f32 %v1080, %v1263
        %v1305 = vmul.f32 %v1081, %v1265
        %v1306 = vmul.f32 %v1082, %v1267
        %v1307 = vmul.f32 %v1083, %v1269
        %v1308 = vmul.f32 %v1084, %v1271
        %v1309 = vmul.f32 %v1085, %v1273
        %v1310 = vmul.f32 %v1086, %v1275
        %v1311 = vmul.f32 %v1087, %v1277
        %v1312 = vmul.f32 %v1088, %v1279
        %v1313 = vmul.f32 %v1089, %v1281
        %1314 = vst.msk [vmem:[#allocation2] sm:$0xff] %vm511, 0.0
        %1315 = vst.msk [vmem:[#allocation2 + $0x8] sm:$0xff] %vm511, 0.0
        %vm1316 = vcmask 254976
        %1317 = vst.msk [vmem:[#allocation2 + $0x10] sm:$0x3] %vm1316, 0.0
        %1318 = vst.msk [vmem:[#allocation2 + $0x18] sm:$0xff] %vm511, 0.0
        %1319 = vst.msk [vmem:[#allocation2 + $0x20] sm:$0xff] %vm511, 0.0
        %1320 = vst.msk [vmem:[#allocation2 + $0x28] sm:$0x3] %vm1316, 0.0
        %1321 = vst.msk [vmem:[#allocation2 + $0x30] sm:$0xff] %vm511, 0.0
        %1322 = vst.msk [vmem:[#allocation2 + $0x38] sm:$0xff] %vm511, 0.0
        %1323 = vst.msk [vmem:[#allocation2 + $0x40] sm:$0x3] %vm1316, 0.0
        %1324 = vst.msk [vmem:[#allocation2 + $0x48] sm:$0xff] %vm511, 0.0
        %1325 = vst.msk [vmem:[#allocation2 + $0x50] sm:$0xff] %vm511, 0.0
        %1326 = vst.msk [vmem:[#allocation2 + $0x58] sm:$0x3] %vm1316, 0.0
        %1327 = vst.msk [vmem:[#allocation2 + $0x60] sm:$0xff] %vm511, 0.0
        %1328 = vst.msk [vmem:[#allocation2 + $0x68] sm:$0xff] %vm511, 0.0
        %1329 = vst.msk [vmem:[#allocation2 + $0x70] sm:$0x3] %vm1316, 0.0
        %1330 = vst.msk [vmem:[#allocation2 + $0x78] sm:$0xff] %vm511, 0.0
        %1331 = vst.msk [vmem:[#allocation2 + $0x80] sm:$0xff] %vm511, 0.0
        %1332 = vst.msk [vmem:[#allocation2 + $0x88] sm:$0x3] %vm1316, 0.0
        %1333 = vst.msk [vmem:[#allocation2 + $0x90] sm:$0xff] %vm511, 0.0
        %1334 = vst.msk [vmem:[#allocation2 + $0x98] sm:$0xff] %vm511, 0.0
        %1335 = vst.msk [vmem:[#allocation2 + $0xa0] sm:$0x3] %vm1316, 0.0
        %1336 = vst.msk [vmem:[#allocation2 + $0xa8] sm:$0xff] %vm511, 0.0
        %1337 = vst.msk [vmem:[#allocation2 + $0xb0] sm:$0xff] %vm511, 0.0
        %1338 = vst.msk [vmem:[#allocation2 + $0xb8] sm:$0x3] %vm1316, 0.0
        %1339 = vst.msk [vmem:[#allocation2 + $0xc0] sm:$0xff] %vm511, 0.0
        %1340 = vst.msk [vmem:[#allocation2 + $0xc8] sm:$0xff] %vm511, 0.0
        %1341 = vst.msk [vmem:[#allocation2 + $0xd0] sm:$0x3] %vm1316, 0.0
        %1342 = vst.msk [vmem:[#allocation2 + $0xd8] sm:$0xff] %vm511, 0.0
        %1343 = vst.msk [vmem:[#allocation2 + $0xe0] sm:$0xff] %vm511, 0.0
        %1344 = vst.msk [vmem:[#allocation2 + $0xe8] sm:$0x3] %vm1316, 0.0
        %1345 = vst.msk [vmem:[#allocation2 + $0xf0] sm:$0xff] %vm511, 0.0
        %1346 = vst.msk [vmem:[#allocation2 + $0xf8] sm:$0xff] %vm511, 0.0
        %1347 = vst.msk [vmem:[#allocation2 + $0x100] sm:$0x3] %vm1316, 0.0
        %1348 = vst.msk [vmem:[#allocation2 + $0x108] sm:$0xff] %vm511, 0.0
        %1349 = vst.msk [vmem:[#allocation2 + $0x110] sm:$0xff] %vm511, 0.0
        %1350 = vst.msk [vmem:[#allocation2 + $0x118] sm:$0x3] %vm1316, 0.0
        %1351 = vst.msk [vmem:[#allocation2 + $0x120] sm:$0xff] %vm511, 0.0
        %1352 = vst.msk [vmem:[#allocation2 + $0x128] sm:$0xff] %vm511, 0.0
        %1353 = vst.msk [vmem:[#allocation2 + $0x130] sm:$0x3] %vm1316, 0.0
        %1354 = vst.msk [vmem:[#allocation2 + $0x138] sm:$0xff] %vm511, 0.0
        %1355 = vst.msk [vmem:[#allocation2 + $0x140] sm:$0xff] %vm511, 0.0
        %1356 = vst.msk [vmem:[#allocation2 + $0x148] sm:$0x3] %vm1316, 0.0
        %1357 = vst.msk [vmem:[#allocation2 + $0x150] sm:$0xff] %vm511, 0.0
        %1358 = vst.msk [vmem:[#allocation2 + $0x158] sm:$0xff] %vm511, 0.0
        %1359 = vst.msk [vmem:[#allocation2 + $0x160] sm:$0x3] %vm1316, 0.0
        %1360 = vst.msk [vmem:[#allocation2 + $0x168] sm:$0xff] %vm511, 0.0
        %1361 = vst.msk [vmem:[#allocation2 + $0x170] sm:$0xff] %vm511, 0.0
        %1362 = vst.msk [vmem:[#allocation2 + $0x178] sm:$0x3] %vm1316, 0.0
        %1363 = vst.msk [vmem:[#allocation2 + $0x180] sm:$0xff] %vm511, 0.0
        %1364 = vst.msk [vmem:[#allocation2 + $0x188] sm:$0xff] %vm511, 0.0
        %1365 = vst.msk [vmem:[#allocation2 + $0x190] sm:$0x3] %vm1316, 0.0
        %1366 = vst.msk [vmem:[#allocation2 + $0x198] sm:$0xff] %vm511, 0.0
        %1367 = vst.msk [vmem:[#allocation2 + $0x1a0] sm:$0xff] %vm511, 0.0
        %1368 = vst.msk [vmem:[#allocation2 + $0x1a8] sm:$0x3] %vm1316, 0.0
        %s1369 = scalar_lea.vmem [#allocation2], 24
        %1370 = vst.msk [vmem:[%s1369 + $0x1] sm:$0xff] %vm511, %v1282
        %1371 = vst.msk [vmem:[%s1369 + $0x9] sm:$0xff] %vm511, %v1283
        %1372 = vst.msk [vmem:[%s1369 + $0x19] sm:$0xff] %vm511, %v1284
        %1373 = vst.msk [vmem:[%s1369 + $0x21] sm:$0xff] %vm511, %v1285
        %1374 = vst.msk [vmem:[%s1369 + $0x31] sm:$0xff] %vm511, %v1286
        %1375 = vst.msk [vmem:[%s1369 + $0x39] sm:$0xff] %vm511, %v1287
        %1376 = vst.msk [vmem:[%s1369 + $0x49] sm:$0xff] %vm511, %v1288
        %1377 = vst.msk [vmem:[%s1369 + $0x51] sm:$0xff] %vm511, %v1289
        %1378 = vst.msk [vmem:[%s1369 + $0x61] sm:$0xff] %vm511, %v1290
        %1379 = vst.msk [vmem:[%s1369 + $0x69] sm:$0xff] %vm511, %v1291
        %1380 = vst.msk [vmem:[%s1369 + $0x79] sm:$0xff] %vm511, %v1292
        %1381 = vst.msk [vmem:[%s1369 + $0x81] sm:$0xff] %vm511, %v1293
        %1382 = vst.msk [vmem:[%s1369 + $0x91] sm:$0xff] %vm511, %v1294
        %1383 = vst.msk [vmem:[%s1369 + $0x99] sm:$0xff] %vm511, %v1295
        %1384 = vst.msk [vmem:[%s1369 + $0xa9] sm:$0xff] %vm511, %v1296
        %1385 = vst.msk [vmem:[%s1369 + $0xb1] sm:$0xff] %vm511, %v1297
        %1386 = vst.msk [vmem:[%s1369 + $0xc1] sm:$0xff] %vm511, %v1298
        %1387 = vst.msk [vmem:[%s1369 + $0xc9] sm:$0xff] %vm511, %v1299
        %1388 = vst.msk [vmem:[%s1369 + $0xd9] sm:$0xff] %vm511, %v1300
        %1389 = vst.msk [vmem:[%s1369 + $0xe1] sm:$0xff] %vm511, %v1301
        %1390 = vst.msk [vmem:[%s1369 + $0xf1] sm:$0xff] %vm511, %v1302
        %1391 = vst.msk [vmem:[%s1369 + $0xf9] sm:$0xff] %vm511, %v1303
        %1392 = vst.msk [vmem:[%s1369 + $0x109] sm:$0xff] %vm511, %v1304
        %1393 = vst.msk [vmem:[%s1369 + $0x111] sm:$0xff] %vm511, %v1305
        %1394 = vst.msk [vmem:[%s1369 + $0x121] sm:$0xff] %vm511, %v1306
        %1395 = vst.msk [vmem:[%s1369 + $0x129] sm:$0xff] %vm511, %v1307
        %1396 = vst.msk [vmem:[%s1369 + $0x139] sm:$0xff] %vm511, %v1308
        %1397 = vst.msk [vmem:[%s1369 + $0x141] sm:$0xff] %vm511, %v1309
        %1398 = vst.msk [vmem:[%s1369 + $0x151] sm:$0xff] %vm511, %v1310
        %1399 = vst.msk [vmem:[%s1369 + $0x159] sm:$0xff] %vm511, %v1311
        %1400 = vst.msk [vmem:[%s1369 + $0x169] sm:$0xff] %vm511, %v1312
        %1401 = vst.msk [vmem:[%s1369 + $0x171] sm:$0xff] %vm511, %v1313
        %v1402 = vld [vmem:[#allocation2] sm:$0xff]
        %v1403 = vld [vmem:[#allocation2 + $0x8] sm:$0xff]
        %v1404 = vld [vmem:[#allocation2 + $0x18] sm:$0xff]
        %v1405 = vld [vmem:[#allocation2 + $0x20] sm:$0xff]
        %v1406 = vld [vmem:[#allocation2 + $0x30] sm:$0xff]
        %v1407 = vld [vmem:[#allocation2 + $0x38] sm:$0xff]
        %v1408 = vld [vmem:[#allocation2 + $0x48] sm:$0xff]
        %v1409 = vld [vmem:[#allocation2 + $0x50] sm:$0xff]
        %v1410 = vld [vmem:[#allocation2 + $0x60] sm:$0xff]
        %v1411 = vld [vmem:[#allocation2 + $0x68] sm:$0xff]
        %v1412 = vld [vmem:[#allocation2 + $0x78] sm:$0xff]
        %v1413 = vld [vmem:[#allocation2 + $0x80] sm:$0xff]
        %v1414 = vld [vmem:[#allocation2 + $0x90] sm:$0xff]
        %v1415 = vld [vmem:[#allocation2 + $0x98] sm:$0xff]
        %v1416 = vld [vmem:[#allocation2 + $0xa8] sm:$0xff]
        %v1417 = vld [vmem:[#allocation2 + $0xb0] sm:$0xff]
        %v1418 = vld [vmem:[#allocation2 + $0xc0] sm:$0xff]
        %v1419 = vld [vmem:[#allocation2 + $0xc8] sm:$0xff]
        %v1420 = vld [vmem:[#allocation2 + $0xd8] sm:$0xff]
        %v1421 = vld [vmem:[#allocation2 + $0xe0] sm:$0xff]
        %v1422 = vld [vmem:[#allocation2 + $0xf0] sm:$0xff]
        %v1423 = vld [vmem:[#allocation2 + $0xf8] sm:$0xff]
        %v1424 = vld [vmem:[#allocation2 + $0x108] sm:$0xff]
        %v1425 = vld [vmem:[#allocation2 + $0x110] sm:$0xff]
        %v1426 = vld [vmem:[#allocation2 + $0x120] sm:$0xff]
        %v1427 = vld [vmem:[#allocation2 + $0x128] sm:$0xff]
        %v1428 = vld [vmem:[#allocation2 + $0x138] sm:$0xff]
        %v1429 = vld [vmem:[#allocation2 + $0x140] sm:$0xff]
        %v1430 = vld [vmem:[#allocation2 + $0x150] sm:$0xff]
        %v1431 = vld [vmem:[#allocation2 + $0x158] sm:$0xff]
        %v1432 = vld [vmem:[#allocation2 + $0x168] sm:$0xff]
        %v1433 = vld [vmem:[#allocation2 + $0x170] sm:$0xff]
        %v1434 = vld [vmem:[#allocation2 + $0x1] sm:$0xff]
        %v1435 = vld [vmem:[#allocation2 + $0x9] sm:$0xff]
        %v1436 = vld [vmem:[#allocation2 + $0x19] sm:$0xff]
        %v1437 = vld [vmem:[#allocation2 + $0x21] sm:$0xff]
        %v1438 = vld [vmem:[#allocation2 + $0x31] sm:$0xff]
        %v1439 = vld [vmem:[#allocation2 + $0x39] sm:$0xff]
        %v1440 = vld [vmem:[#allocation2 + $0x49] sm:$0xff]
        %v1441 = vld [vmem:[#allocation2 + $0x51] sm:$0xff]
        %v1442 = vld [vmem:[#allocation2 + $0x61] sm:$0xff]
        %v1443 = vld [vmem:[#allocation2 + $0x69] sm:$0xff]
        %v1444 = vld [vmem:[#allocation2 + $0x79] sm:$0xff]
        %v1445 = vld [vmem:[#allocation2 + $0x81] sm:$0xff]
        %v1446 = vld [vmem:[#allocation2 + $0x91] sm:$0xff]
        %v1447 = vld [vmem:[#allocation2 + $0x99] sm:$0xff]
        %v1448 = vld [vmem:[#allocation2 + $0xa9] sm:$0xff]
        %v1449 = vld [vmem:[#allocation2 + $0xb1] sm:$0xff]
        %v1450 = vld [vmem:[#allocation2 + $0xc1] sm:$0xff]
        %v1451 = vld [vmem:[#allocation2 + $0xc9] sm:$0xff]
        %v1452 = vld [vmem:[#allocation2 + $0xd9] sm:$0xff]
        %v1453 = vld [vmem:[#allocation2 + $0xe1] sm:$0xff]
        %v1454 = vld [vmem:[#allocation2 + $0xf1] sm:$0xff]
        %v1455 = vld [vmem:[#allocation2 + $0xf9] sm:$0xff]
        %v1456 = vld [vmem:[#allocation2 + $0x109] sm:$0xff]
        %v1457 = vld [vmem:[#allocation2 + $0x111] sm:$0xff]
        %v1458 = vld [vmem:[#allocation2 + $0x121] sm:$0xff]
        %v1459 = vld [vmem:[#allocation2 + $0x129] sm:$0xff]
        %v1460 = vld [vmem:[#allocation2 + $0x139] sm:$0xff]
        %v1461 = vld [vmem:[#allocation2 + $0x141] sm:$0xff]
        %v1462 = vld [vmem:[#allocation2 + $0x151] sm:$0xff]
        %v1463 = vld [vmem:[#allocation2 + $0x159] sm:$0xff]
        %v1464 = vld [vmem:[#allocation2 + $0x169] sm:$0xff]
        %v1465 = vld [vmem:[#allocation2 + $0x171] sm:$0xff]
        %v1466 = vld [vmem:[#allocation2 + $0x2] sm:$0xff]
        %v1467 = vld [vmem:[#allocation2 + $0xa] sm:$0xff]
        %v1468 = vld [vmem:[#allocation2 + $0x1a] sm:$0xff]
        %v1469 = vld [vmem:[#allocation2 + $0x22] sm:$0xff]
        %v1470 = vld [vmem:[#allocation2 + $0x32] sm:$0xff]
        %v1471 = vld [vmem:[#allocation2 + $0x3a] sm:$0xff]
        %v1472 = vld [vmem:[#allocation2 + $0x4a] sm:$0xff]
        %v1473 = vld [vmem:[#allocation2 + $0x52] sm:$0xff]
        %v1474 = vld [vmem:[#allocation2 + $0x62] sm:$0xff]
        %v1475 = vld [vmem:[#allocation2 + $0x6a] sm:$0xff]
        %v1476 = vld [vmem:[#allocation2 + $0x7a] sm:$0xff]
        %v1477 = vld [vmem:[#allocation2 + $0x82] sm:$0xff]
        %v1478 = vld [vmem:[#allocation2 + $0x92] sm:$0xff]
        %v1479 = vld [vmem:[#allocation2 + $0x9a] sm:$0xff]
        %v1480 = vld [vmem:[#allocation2 + $0xaa] sm:$0xff]
        %v1481 = vld [vmem:[#allocation2 + $0xb2] sm:$0xff]
        %v1482 = vld [vmem:[#allocation2 + $0xc2] sm:$0xff]
        %v1483 = vld [vmem:[#allocation2 + $0xca] sm:$0xff]
        %v1484 = vld [vmem:[#allocation2 + $0xda] sm:$0xff]
        %v1485 = vld [vmem:[#allocation2 + $0xe2] sm:$0xff]
        %v1486 = vld [vmem:[#allocation2 + $0xf2] sm:$0xff]
        %v1487 = vld [vmem:[#allocation2 + $0xfa] sm:$0xff]
        %v1488 = vld [vmem:[#allocation2 + $0x10a] sm:$0xff]
        %v1489 = vld [vmem:[#allocation2 + $0x112] sm:$0xff]
        %v1490 = vld [vmem:[#allocation2 + $0x122] sm:$0xff]
        %v1491 = vld [vmem:[#allocation2 + $0x12a] sm:$0xff]
        %v1492 = vld [vmem:[#allocation2 + $0x13a] sm:$0xff]
        %v1493 = vld [vmem:[#allocation2 + $0x142] sm:$0xff]
        %v1494 = vld [vmem:[#allocation2 + $0x152] sm:$0xff]
        %v1495 = vld [vmem:[#allocation2 + $0x15a] sm:$0xff]
        %v1496 = vld [vmem:[#allocation2 + $0x16a] sm:$0xff]
        %v1497 = vld [vmem:[#allocation2 + $0x172] sm:$0xff]
        %v1498 = vld [vmem:[%s1369] sm:$0xff]
        %v1499 = vld [vmem:[%s1369 + $0x8] sm:$0xff]
        %v1500 = vld [vmem:[%s1369 + $0x18] sm:$0xff]
        %v1501 = vld [vmem:[%s1369 + $0x20] sm:$0xff]
        %v1502 = vld [vmem:[%s1369 + $0x30] sm:$0xff]
        %v1503 = vld [vmem:[%s1369 + $0x38] sm:$0xff]
        %v1504 = vld [vmem:[%s1369 + $0x48] sm:$0xff]
        %v1505 = vld [vmem:[%s1369 + $0x50] sm:$0xff]
        %v1506 = vld [vmem:[%s1369 + $0x60] sm:$0xff]
        %v1507 = vld [vmem:[%s1369 + $0x68] sm:$0xff]
        %v1508 = vld [vmem:[%s1369 + $0x78] sm:$0xff]
        %v1509 = vld [vmem:[%s1369 + $0x80] sm:$0xff]
        %v1510 = vld [vmem:[%s1369 + $0x90] sm:$0xff]
        %v1511 = vld [vmem:[%s1369 + $0x98] sm:$0xff]
        %v1512 = vld [vmem:[%s1369 + $0xa8] sm:$0xff]
        %v1513 = vld [vmem:[%s1369 + $0xb0] sm:$0xff]
        %v1514 = vld [vmem:[%s1369 + $0xc0] sm:$0xff]
        %v1515 = vld [vmem:[%s1369 + $0xc8] sm:$0xff]
        %v1516 = vld [vmem:[%s1369 + $0xd8] sm:$0xff]
        %v1517 = vld [vmem:[%s1369 + $0xe0] sm:$0xff]
        %v1518 = vld [vmem:[%s1369 + $0xf0] sm:$0xff]
        %v1519 = vld [vmem:[%s1369 + $0xf8] sm:$0xff]
        %v1520 = vld [vmem:[%s1369 + $0x108] sm:$0xff]
        %v1521 = vld [vmem:[%s1369 + $0x110] sm:$0xff]
        %v1522 = vld [vmem:[%s1369 + $0x120] sm:$0xff]
        %v1523 = vld [vmem:[%s1369 + $0x128] sm:$0xff]
        %v1524 = vld [vmem:[%s1369 + $0x138] sm:$0xff]
        %v1525 = vld [vmem:[%s1369 + $0x140] sm:$0xff]
        %v1526 = vld [vmem:[%s1369 + $0x150] sm:$0xff]
        %v1527 = vld [vmem:[%s1369 + $0x158] sm:$0xff]
        %v1528 = vld [vmem:[%s1369 + $0x168] sm:$0xff]
        %v1529 = vld [vmem:[%s1369 + $0x170] sm:$0xff]
        %v1530 = vld [vmem:[%s1369 + $0x1] sm:$0xff]
        %v1531 = vld [vmem:[%s1369 + $0x9] sm:$0xff]
        %v1532 = vld [vmem:[%s1369 + $0x19] sm:$0xff]
        %v1533 = vld [vmem:[%s1369 + $0x21] sm:$0xff]
        %v1534 = vld [vmem:[%s1369 + $0x31] sm:$0xff]
        %v1535 = vld [vmem:[%s1369 + $0x39] sm:$0xff]
        %v1536 = vld [vmem:[%s1369 + $0x49] sm:$0xff]
        %v1537 = vld [vmem:[%s1369 + $0x51] sm:$0xff]
        %v1538 = vld [vmem:[%s1369 + $0x61] sm:$0xff]
        %v1539 = vld [vmem:[%s1369 + $0x69] sm:$0xff]
        %v1540 = vld [vmem:[%s1369 + $0x79] sm:$0xff]
        %v1541 = vld [vmem:[%s1369 + $0x81] sm:$0xff]
        %v1542 = vld [vmem:[%s1369 + $0x91] sm:$0xff]
        %v1543 = vld [vmem:[%s1369 + $0x99] sm:$0xff]
        %v1544 = vld [vmem:[%s1369 + $0xa9] sm:$0xff]
        %v1545 = vld [vmem:[%s1369 + $0xb1] sm:$0xff]
        %v1546 = vld [vmem:[%s1369 + $0xc1] sm:$0xff]
        %v1547 = vld [vmem:[%s1369 + $0xc9] sm:$0xff]
        %v1548 = vld [vmem:[%s1369 + $0xd9] sm:$0xff]
        %v1549 = vld [vmem:[%s1369 + $0xe1] sm:$0xff]
        %v1550 = vld [vmem:[%s1369 + $0xf1] sm:$0xff]
        %v1551 = vld [vmem:[%s1369 + $0xf9] sm:$0xff]
        %v1552 = vld [vmem:[%s1369 + $0x109] sm:$0xff]
        %v1553 = vld [vmem:[%s1369 + $0x111] sm:$0xff]
        %v1554 = vld [vmem:[%s1369 + $0x121] sm:$0xff]
        %v1555 = vld [vmem:[%s1369 + $0x129] sm:$0xff]
        %v1556 = vld [vmem:[%s1369 + $0x139] sm:$0xff]
        %v1557 = vld [vmem:[%s1369 + $0x141] sm:$0xff]
        %v1558 = vld [vmem:[%s1369 + $0x151] sm:$0xff]
        %v1559 = vld [vmem:[%s1369 + $0x159] sm:$0xff]
        %v1560 = vld [vmem:[%s1369 + $0x169] sm:$0xff]
        %v1561 = vld [vmem:[%s1369 + $0x171] sm:$0xff]
        %v1562 = vld [vmem:[%s1369 + $0x2] sm:$0xff]
        %v1563 = vld [vmem:[%s1369 + $0xa] sm:$0xff]
        %v1564 = vld [vmem:[%s1369 + $0x1a] sm:$0xff]
        %v1565 = vld [vmem:[%s1369 + $0x22] sm:$0xff]
        %v1566 = vld [vmem:[%s1369 + $0x32] sm:$0xff]
        %v1567 = vld [vmem:[%s1369 + $0x3a] sm:$0xff]
        %v1568 = vld [vmem:[%s1369 + $0x4a] sm:$0xff]
        %v1569 = vld [vmem:[%s1369 + $0x52] sm:$0xff]
        %v1570 = vld [vmem:[%s1369 + $0x62] sm:$0xff]
        %v1571 = vld [vmem:[%s1369 + $0x6a] sm:$0xff]
        %v1572 = vld [vmem:[%s1369 + $0x7a] sm:$0xff]
        %v1573 = vld [vmem:[%s1369 + $0x82] sm:$0xff]
        %v1574 = vld [vmem:[%s1369 + $0x92] sm:$0xff]
        %v1575 = vld [vmem:[%s1369 + $0x9a] sm:$0xff]
        %v1576 = vld [vmem:[%s1369 + $0xaa] sm:$0xff]
        %v1577 = vld [vmem:[%s1369 + $0xb2] sm:$0xff]
        %v1578 = vld [vmem:[%s1369 + $0xc2] sm:$0xff]
        %v1579 = vld [vmem:[%s1369 + $0xca] sm:$0xff]
        %v1580 = vld [vmem:[%s1369 + $0xda] sm:$0xff]
        %v1581 = vld [vmem:[%s1369 + $0xe2] sm:$0xff]
        %v1582 = vld [vmem:[%s1369 + $0xf2] sm:$0xff]
        %v1583 = vld [vmem:[%s1369 + $0xfa] sm:$0xff]
        %v1584 = vld [vmem:[%s1369 + $0x10a] sm:$0xff]
        %v1585 = vld [vmem:[%s1369 + $0x112] sm:$0xff]
        %v1586 = vld [vmem:[%s1369 + $0x122] sm:$0xff]
        %v1587 = vld [vmem:[%s1369 + $0x12a] sm:$0xff]
        %v1588 = vld [vmem:[%s1369 + $0x13a] sm:$0xff]
        %v1589 = vld [vmem:[%s1369 + $0x142] sm:$0xff]
        %v1590 = vld [vmem:[%s1369 + $0x152] sm:$0xff]
        %v1591 = vld [vmem:[%s1369 + $0x15a] sm:$0xff]
        %v1592 = vld [vmem:[%s1369 + $0x16a] sm:$0xff]
        %v1593 = vld [vmem:[%s1369 + $0x172] sm:$0xff]
        %s1594 = scalar_lea.vmem [#allocation2], 48
        %v1595 = vld [vmem:[%s1594] sm:$0xff]
        %v1596 = vld [vmem:[%s1594 + $0x8] sm:$0xff]
        %v1597 = vld [vmem:[%s1594 + $0x18] sm:$0xff]
        %v1598 = vld [vmem:[%s1594 + $0x20] sm:$0xff]
        %v1599 = vld [vmem:[%s1594 + $0x30] sm:$0xff]
        %v1600 = vld [vmem:[%s1594 + $0x38] sm:$0xff]
        %v1601 = vld [vmem:[%s1594 + $0x48] sm:$0xff]
        %v1602 = vld [vmem:[%s1594 + $0x50] sm:$0xff]
        %v1603 = vld [vmem:[%s1594 + $0x60] sm:$0xff]
        %v1604 = vld [vmem:[%s1594 + $0x68] sm:$0xff]
        %v1605 = vld [vmem:[%s1594 + $0x78] sm:$0xff]
        %v1606 = vld [vmem:[%s1594 + $0x80] sm:$0xff]
        %v1607 = vld [vmem:[%s1594 + $0x90] sm:$0xff]
        %v1608 = vld [vmem:[%s1594 + $0x98] sm:$0xff]
        %v1609 = vld [vmem:[%s1594 + $0xa8] sm:$0xff]
        %v1610 = vld [vmem:[%s1594 + $0xb0] sm:$0xff]
        %v1611 = vld [vmem:[%s1594 + $0xc0] sm:$0xff]
        %v1612 = vld [vmem:[%s1594 + $0xc8] sm:$0xff]
        %v1613 = vld [vmem:[%s1594 + $0xd8] sm:$0xff]
        %v1614 = vld [vmem:[%s1594 + $0xe0] sm:$0xff]
        %v1615 = vld [vmem:[%s1594 + $0xf0] sm:$0xff]
        %v1616 = vld [vmem:[%s1594 + $0xf8] sm:$0xff]
        %v1617 = vld [vmem:[%s1594 + $0x108] sm:$0xff]
        %v1618 = vld [vmem:[%s1594 + $0x110] sm:$0xff]
        %v1619 = vld [vmem:[%s1594 + $0x120] sm:$0xff]
        %v1620 = vld [vmem:[%s1594 + $0x128] sm:$0xff]
        %v1621 = vld [vmem:[%s1594 + $0x138] sm:$0xff]
        %v1622 = vld [vmem:[%s1594 + $0x140] sm:$0xff]
        %v1623 = vld [vmem:[%s1594 + $0x150] sm:$0xff]
        %v1624 = vld [vmem:[%s1594 + $0x158] sm:$0xff]
        %v1625 = vld [vmem:[%s1594 + $0x168] sm:$0xff]
        %v1626 = vld [vmem:[%s1594 + $0x170] sm:$0xff]
        %v1627 = vld [vmem:[%s1594 + $0x1] sm:$0xff]
        %v1628 = vld [vmem:[%s1594 + $0x9] sm:$0xff]
        %v1629 = vld [vmem:[%s1594 + $0x19] sm:$0xff]
        %v1630 = vld [vmem:[%s1594 + $0x21] sm:$0xff]
        %v1631 = vld [vmem:[%s1594 + $0x31] sm:$0xff]
        %v1632 = vld [vmem:[%s1594 + $0x39] sm:$0xff]
        %v1633 = vld [vmem:[%s1594 + $0x49] sm:$0xff]
        %v1634 = vld [vmem:[%s1594 + $0x51] sm:$0xff]
        %v1635 = vld [vmem:[%s1594 + $0x61] sm:$0xff]
        %v1636 = vld [vmem:[%s1594 + $0x69] sm:$0xff]
        %v1637 = vld [vmem:[%s1594 + $0x79] sm:$0xff]
        %v1638 = vld [vmem:[%s1594 + $0x81] sm:$0xff]
        %v1639 = vld [vmem:[%s1594 + $0x91] sm:$0xff]
        %v1640 = vld [vmem:[%s1594 + $0x99] sm:$0xff]
        %v1641 = vld [vmem:[%s1594 + $0xa9] sm:$0xff]
        %v1642 = vld [vmem:[%s1594 + $0xb1] sm:$0xff]
        %v1643 = vld [vmem:[%s1594 + $0xc1] sm:$0xff]
        %v1644 = vld [vmem:[%s1594 + $0xc9] sm:$0xff]
        %v1645 = vld [vmem:[%s1594 + $0xd9] sm:$0xff]
        %v1646 = vld [vmem:[%s1594 + $0xe1] sm:$0xff]
        %v1647 = vld [vmem:[%s1594 + $0xf1] sm:$0xff]
        %v1648 = vld [vmem:[%s1594 + $0xf9] sm:$0xff]
        %v1649 = vld [vmem:[%s1594 + $0x109] sm:$0xff]
        %v1650 = vld [vmem:[%s1594 + $0x111] sm:$0xff]
        %v1651 = vld [vmem:[%s1594 + $0x121] sm:$0xff]
        %v1652 = vld [vmem:[%s1594 + $0x129] sm:$0xff]
        %v1653 = vld [vmem:[%s1594 + $0x139] sm:$0xff]
        %v1654 = vld [vmem:[%s1594 + $0x141] sm:$0xff]
        %v1655 = vld [vmem:[%s1594 + $0x151] sm:$0xff]
        %v1656 = vld [vmem:[%s1594 + $0x159] sm:$0xff]
        %v1657 = vld [vmem:[%s1594 + $0x169] sm:$0xff]
        %v1658 = vld [vmem:[%s1594 + $0x171] sm:$0xff]
        %v1659 = vld [vmem:[%s1594 + $0x2] sm:$0xff]
        %v1660 = vld [vmem:[%s1594 + $0xa] sm:$0xff]
        %v1661 = vld [vmem:[%s1594 + $0x1a] sm:$0xff]
        %v1662 = vld [vmem:[%s1594 + $0x22] sm:$0xff]
        %v1663 = vld [vmem:[%s1594 + $0x32] sm:$0xff]
        %v1664 = vld [vmem:[%s1594 + $0x3a] sm:$0xff]
        %v1665 = vld [vmem:[%s1594 + $0x4a] sm:$0xff]
        %v1666 = vld [vmem:[%s1594 + $0x52] sm:$0xff]
        %v1667 = vld [vmem:[%s1594 + $0x62] sm:$0xff]
        %v1668 = vld [vmem:[%s1594 + $0x6a] sm:$0xff]
        %v1669 = vld [vmem:[%s1594 + $0x7a] sm:$0xff]
        %v1670 = vld [vmem:[%s1594 + $0x82] sm:$0xff]
        %v1671 = vld [vmem:[%s1594 + $0x92] sm:$0xff]
        %v1672 = vld [vmem:[%s1594 + $0x9a] sm:$0xff]
        %v1673 = vld [vmem:[%s1594 + $0xaa] sm:$0xff]
        %v1674 = vld [vmem:[%s1594 + $0xb2] sm:$0xff]
        %v1675 = vld [vmem:[%s1594 + $0xc2] sm:$0xff]
        %v1676 = vld [vmem:[%s1594 + $0xca] sm:$0xff]
        %v1677 = vld [vmem:[%s1594 + $0xda] sm:$0xff]
        %v1678 = vld [vmem:[%s1594 + $0xe2] sm:$0xff]
        %v1679 = vld [vmem:[%s1594 + $0xf2] sm:$0xff]
        %v1680 = vld [vmem:[%s1594 + $0xfa] sm:$0xff]
        %v1681 = vld [vmem:[%s1594 + $0x10a] sm:$0xff]
        %v1682 = vld [vmem:[%s1594 + $0x112] sm:$0xff]
        %v1683 = vld [vmem:[%s1594 + $0x122] sm:$0xff]
        %v1684 = vld [vmem:[%s1594 + $0x12a] sm:$0xff]
        %v1685 = vld [vmem:[%s1594 + $0x13a] sm:$0xff]
        %v1686 = vld [vmem:[%s1594 + $0x142] sm:$0xff]
        %v1687 = vld [vmem:[%s1594 + $0x152] sm:$0xff]
        %v1688 = vld [vmem:[%s1594 + $0x15a] sm:$0xff]
        %v1689 = vld [vmem:[%s1594 + $0x16a] sm:$0xff]
        %v1690 = vld [vmem:[%s1594 + $0x172] sm:$0xff]
        %1723 = vrot.lane.b32.xlu0 %v1434, 32
        %v1724 = vpop.permute.xlu0 %1723
        %1725 = vrot.lane.b32.xlu0 %v1435, 32
        %v1726 = vpop.permute.xlu0 %1725
        %1727 = vrot.lane.b32.xlu0 %v1436, 32
        %v1728 = vpop.permute.xlu0 %1727
        %1729 = vrot.lane.b32.xlu0 %v1437, 32
        %v1730 = vpop.permute.xlu0 %1729
        %1731 = vrot.lane.b32.xlu0 %v1438, 32
        %v1732 = vpop.permute.xlu0 %1731
        %1733 = vrot.lane.b32.xlu0 %v1439, 32
        %v1734 = vpop.permute.xlu0 %1733
        %1735 = vrot.lane.b32.xlu0 %v1440, 32
        %v1736 = vpop.permute.xlu0 %1735
        %1737 = vrot.lane.b32.xlu0 %v1441, 32
        %v1738 = vpop.permute.xlu0 %1737
        %1739 = vrot.lane.b32.xlu0 %v1442, 32
        %v1740 = vpop.permute.xlu0 %1739
        %1741 = vrot.lane.b32.xlu0 %v1443, 32
        %v1742 = vpop.permute.xlu0 %1741
        %1743 = vrot.lane.b32.xlu0 %v1444, 32
        %v1744 = vpop.permute.xlu0 %1743
        %1745 = vrot.lane.b32.xlu0 %v1445, 32
        %v1746 = vpop.permute.xlu0 %1745
        %1747 = vrot.lane.b32.xlu0 %v1446, 32
        %v1748 = vpop.permute.xlu0 %1747
        %1749 = vrot.lane.b32.xlu0 %v1447, 32
        %v1750 = vpop.permute.xlu0 %1749
        %1751 = vrot.lane.b32.xlu0 %v1448, 32
        %v1752 = vpop.permute.xlu0 %1751
        %1753 = vrot.lane.b32.xlu0 %v1449, 32
        %v1754 = vpop.permute.xlu0 %1753
        %1755 = vrot.lane.b32.xlu0 %v1450, 32
        %v1756 = vpop.permute.xlu0 %1755
        %1757 = vrot.lane.b32.xlu0 %v1451, 32
        %v1758 = vpop.permute.xlu0 %1757
        %1759 = vrot.lane.b32.xlu0 %v1452, 32
        %v1760 = vpop.permute.xlu0 %1759
        %1761 = vrot.lane.b32.xlu0 %v1453, 32
        %v1762 = vpop.permute.xlu0 %1761
        %1763 = vrot.lane.b32.xlu0 %v1454, 32
        %v1764 = vpop.permute.xlu0 %1763
        %1765 = vrot.lane.b32.xlu0 %v1455, 32
        %v1766 = vpop.permute.xlu0 %1765
        %1767 = vrot.lane.b32.xlu0 %v1456, 32
        %v1768 = vpop.permute.xlu0 %1767
        %1769 = vrot.lane.b32.xlu0 %v1457, 32
        %v1770 = vpop.permute.xlu0 %1769
        %1771 = vrot.lane.b32.xlu0 %v1458, 32
        %v1772 = vpop.permute.xlu0 %1771
        %1773 = vrot.lane.b32.xlu0 %v1459, 32
        %v1774 = vpop.permute.xlu0 %1773
        %1775 = vrot.lane.b32.xlu0 %v1460, 32
        %v1776 = vpop.permute.xlu0 %1775
        %1777 = vrot.lane.b32.xlu0 %v1461, 32
        %v1778 = vpop.permute.xlu0 %1777
        %1779 = vrot.lane.b32.xlu0 %v1462, 32
        %v1780 = vpop.permute.xlu0 %1779
        %1781 = vrot.lane.b32.xlu0 %v1463, 32
        %v1782 = vpop.permute.xlu0 %1781
        %1783 = vrot.lane.b32.xlu0 %v1464, 32
        %v1784 = vpop.permute.xlu0 %1783
        %1785 = vrot.lane.b32.xlu0 %v1465, 32
        %v1786 = vpop.permute.xlu0 %1785
        %1851 = vrot.lane.b32.xlu0 %v1466, 64
        %v1852 = vpop.permute.xlu0 %1851
        %1853 = vrot.lane.b32.xlu0 %v1467, 64
        %v1854 = vpop.permute.xlu0 %1853
        %1855 = vrot.lane.b32.xlu0 %v1468, 64
        %v1856 = vpop.permute.xlu0 %1855
        %1857 = vrot.lane.b32.xlu0 %v1469, 64
        %v1858 = vpop.permute.xlu0 %1857
        %1859 = vrot.lane.b32.xlu0 %v1470, 64
        %v1860 = vpop.permute.xlu0 %1859
        %1861 = vrot.lane.b32.xlu0 %v1471, 64
        %v1862 = vpop.permute.xlu0 %1861
        %1863 = vrot.lane.b32.xlu0 %v1472, 64
        %v1864 = vpop.permute.xlu0 %1863
        %1865 = vrot.lane.b32.xlu0 %v1473, 64
        %v1866 = vpop.permute.xlu0 %1865
        %1867 = vrot.lane.b32.xlu0 %v1474, 64
        %v1868 = vpop.permute.xlu0 %1867
        %1869 = vrot.lane.b32.xlu0 %v1475, 64
        %v1870 = vpop.permute.xlu0 %1869
        %1871 = vrot.lane.b32.xlu0 %v1476, 64
        %v1872 = vpop.permute.xlu0 %1871
        %1873 = vrot.lane.b32.xlu0 %v1477, 64
        %v1874 = vpop.permute.xlu0 %1873
        %1875 = vrot.lane.b32.xlu0 %v1478, 64
        %v1876 = vpop.permute.xlu0 %1875
        %1877 = vrot.lane.b32.xlu0 %v1479, 64
        %v1878 = vpop.permute.xlu0 %1877
        %1879 = vrot.lane.b32.xlu0 %v1480, 64
        %v1880 = vpop.permute.xlu0 %1879
        %1881 = vrot.lane.b32.xlu0 %v1481, 64
        %v1882 = vpop.permute.xlu0 %1881
        %1883 = vrot.lane.b32.xlu0 %v1482, 64
        %v1884 = vpop.permute.xlu0 %1883
        %1885 = vrot.lane.b32.xlu0 %v1483, 64
        %v1886 = vpop.permute.xlu0 %1885
        %1887 = vrot.lane.b32.xlu0 %v1484, 64
        %v1888 = vpop.permute.xlu0 %1887
        %1889 = vrot.lane.b32.xlu0 %v1485, 64
        %v1890 = vpop.permute.xlu0 %1889
        %1891 = vrot.lane.b32.xlu0 %v1486, 64
        %v1892 = vpop.permute.xlu0 %1891
        %1893 = vrot.lane.b32.xlu0 %v1487, 64
        %v1894 = vpop.permute.xlu0 %1893
        %1895 = vrot.lane.b32.xlu0 %v1488, 64
        %v1896 = vpop.permute.xlu0 %1895
        %1897 = vrot.lane.b32.xlu0 %v1489, 64
        %v1898 = vpop.permute.xlu0 %1897
        %1899 = vrot.lane.b32.xlu0 %v1490, 64
        %v1900 = vpop.permute.xlu0 %1899
        %1901 = vrot.lane.b32.xlu0 %v1491, 64
        %v1902 = vpop.permute.xlu0 %1901
        %1903 = vrot.lane.b32.xlu0 %v1492, 64
        %v1904 = vpop.permute.xlu0 %1903
        %1905 = vrot.lane.b32.xlu0 %v1493, 64
        %v1906 = vpop.permute.xlu0 %1905
        %1907 = vrot.lane.b32.xlu0 %v1494, 64
        %v1908 = vpop.permute.xlu0 %1907
        %1909 = vrot.lane.b32.xlu0 %v1495, 64
        %v1910 = vpop.permute.xlu0 %1909
        %1911 = vrot.lane.b32.xlu0 %v1496, 64
        %v1912 = vpop.permute.xlu0 %1911
        %1913 = vrot.lane.b32.xlu0 %v1497, 64
        %v1914 = vpop.permute.xlu0 %1913
        %1979 = vrot.lane.b32.xlu0 %v1498, 96
        %v1980 = vpop.permute.xlu0 %1979
        %1981 = vrot.lane.b32.xlu0 %v1499, 96
        %v1982 = vpop.permute.xlu0 %1981
        %1983 = vrot.lane.b32.xlu0 %v1500, 96
        %v1984 = vpop.permute.xlu0 %1983
        %1985 = vrot.lane.b32.xlu0 %v1501, 96
        %v1986 = vpop.permute.xlu0 %1985
        %1987 = vrot.lane.b32.xlu0 %v1502, 96
        %v1988 = vpop.permute.xlu0 %1987
        %1989 = vrot.lane.b32.xlu0 %v1503, 96
        %v1990 = vpop.permute.xlu0 %1989
        %1991 = vrot.lane.b32.xlu0 %v1504, 96
        %v1992 = vpop.permute.xlu0 %1991
        %1993 = vrot.lane.b32.xlu0 %v1505, 96
        %v1994 = vpop.permute.xlu0 %1993
        %1995 = vrot.lane.b32.xlu0 %v1506, 96
        %v1996 = vpop.permute.xlu0 %1995
        %1997 = vrot.lane.b32.xlu0 %v1507, 96
        %v1998 = vpop.permute.xlu0 %1997
        %1999 = vrot.lane.b32.xlu0 %v1508, 96
        %v2000 = vpop.permute.xlu0 %1999
        %2001 = vrot.lane.b32.xlu0 %v1509, 96
        %v2002 = vpop.permute.xlu0 %2001
        %2003 = vrot.lane.b32.xlu0 %v1510, 96
        %v2004 = vpop.permute.xlu0 %2003
        %2005 = vrot.lane.b32.xlu0 %v1511, 96
        %v2006 = vpop.permute.xlu0 %2005
        %2007 = vrot.lane.b32.xlu0 %v1512, 96
        %v2008 = vpop.permute.xlu0 %2007
        %2009 = vrot.lane.b32.xlu0 %v1513, 96
        %v2010 = vpop.permute.xlu0 %2009
        %2011 = vrot.lane.b32.xlu0 %v1514, 96
        %v2012 = vpop.permute.xlu0 %2011
        %2013 = vrot.lane.b32.xlu0 %v1515, 96
        %v2014 = vpop.permute.xlu0 %2013
        %2015 = vrot.lane.b32.xlu0 %v1516, 96
        %v2016 = vpop.permute.xlu0 %2015
        %2017 = vrot.lane.b32.xlu0 %v1517, 96
        %v2018 = vpop.permute.xlu0 %2017
        %2019 = vrot.lane.b32.xlu0 %v1518, 96
        %v2020 = vpop.permute.xlu0 %2019
        %2021 = vrot.lane.b32.xlu0 %v1519, 96
        %v2022 = vpop.permute.xlu0 %2021
        %2023 = vrot.lane.b32.xlu0 %v1520, 96
        %v2024 = vpop.permute.xlu0 %2023
        %2025 = vrot.lane.b32.xlu0 %v1521, 96
        %v2026 = vpop.permute.xlu0 %2025
        %2027 = vrot.lane.b32.xlu0 %v1522, 96
        %v2028 = vpop.permute.xlu0 %2027
        %2029 = vrot.lane.b32.xlu0 %v1523, 96
        %v2030 = vpop.permute.xlu0 %2029
        %2031 = vrot.lane.b32.xlu0 %v1524, 96
        %v2032 = vpop.permute.xlu0 %2031
        %2033 = vrot.lane.b32.xlu0 %v1525, 96
        %v2034 = vpop.permute.xlu0 %2033
        %2035 = vrot.lane.b32.xlu0 %v1526, 96
        %v2036 = vpop.permute.xlu0 %2035
        %2037 = vrot.lane.b32.xlu0 %v1527, 96
        %v2038 = vpop.permute.xlu0 %2037
        %2039 = vrot.lane.b32.xlu0 %v1528, 96
        %v2040 = vpop.permute.xlu0 %2039
        %2041 = vrot.lane.b32.xlu0 %v1529, 96
        %v2042 = vpop.permute.xlu0 %2041
        %2107 = vrot.lane.b32.xlu0 %v1562, 32
        %v2108 = vpop.permute.xlu0 %2107
        %2109 = vrot.lane.b32.xlu0 %v1563, 32
        %v2110 = vpop.permute.xlu0 %2109
        %2111 = vrot.lane.b32.xlu0 %v1564, 32
        %v2112 = vpop.permute.xlu0 %2111
        %2113 = vrot.lane.b32.xlu0 %v1565, 32
        %v2114 = vpop.permute.xlu0 %2113
        %2115 = vrot.lane.b32.xlu0 %v1566, 32
        %v2116 = vpop.permute.xlu0 %2115
        %2117 = vrot.lane.b32.xlu0 %v1567, 32
        %v2118 = vpop.permute.xlu0 %2117
        %2119 = vrot.lane.b32.xlu0 %v1568, 32
        %v2120 = vpop.permute.xlu0 %2119
        %2121 = vrot.lane.b32.xlu0 %v1569, 32
        %v2122 = vpop.permute.xlu0 %2121
        %2123 = vrot.lane.b32.xlu0 %v1570, 32
        %v2124 = vpop.permute.xlu0 %2123
        %2125 = vrot.lane.b32.xlu0 %v1571, 32
        %v2126 = vpop.permute.xlu0 %2125
        %2127 = vrot.lane.b32.xlu0 %v1572, 32
        %v2128 = vpop.permute.xlu0 %2127
        %2129 = vrot.lane.b32.xlu0 %v1573, 32
        %v2130 = vpop.permute.xlu0 %2129
        %2131 = vrot.lane.b32.xlu0 %v1574, 32
        %v2132 = vpop.permute.xlu0 %2131
        %2133 = vrot.lane.b32.xlu0 %v1575, 32
        %v2134 = vpop.permute.xlu0 %2133
        %2135 = vrot.lane.b32.xlu0 %v1576, 32
        %v2136 = vpop.permute.xlu0 %2135
        %2137 = vrot.lane.b32.xlu0 %v1577, 32
        %v2138 = vpop.permute.xlu0 %2137
        %2139 = vrot.lane.b32.xlu0 %v1578, 32
        %v2140 = vpop.permute.xlu0 %2139
        %2141 = vrot.lane.b32.xlu0 %v1579, 32
        %v2142 = vpop.permute.xlu0 %2141
        %2143 = vrot.lane.b32.xlu0 %v1580, 32
        %v2144 = vpop.permute.xlu0 %2143
        %2145 = vrot.lane.b32.xlu0 %v1581, 32
        %v2146 = vpop.permute.xlu0 %2145
        %2147 = vrot.lane.b32.xlu0 %v1582, 32
        %v2148 = vpop.permute.xlu0 %2147
        %2149 = vrot.lane.b32.xlu0 %v1583, 32
        %v2150 = vpop.permute.xlu0 %2149
        %2151 = vrot.lane.b32.xlu0 %v1584, 32
        %v2152 = vpop.permute.xlu0 %2151
        %2153 = vrot.lane.b32.xlu0 %v1585, 32
        %v2154 = vpop.permute.xlu0 %2153
        %2155 = vrot.lane.b32.xlu0 %v1586, 32
        %v2156 = vpop.permute.xlu0 %2155
        %2157 = vrot.lane.b32.xlu0 %v1587, 32
        %v2158 = vpop.permute.xlu0 %2157
        %2159 = vrot.lane.b32.xlu0 %v1588, 32
        %v2160 = vpop.permute.xlu0 %2159
        %2161 = vrot.lane.b32.xlu0 %v1589, 32
        %v2162 = vpop.permute.xlu0 %2161
        %2163 = vrot.lane.b32.xlu0 %v1590, 32
        %v2164 = vpop.permute.xlu0 %2163
        %2165 = vrot.lane.b32.xlu0 %v1591, 32
        %v2166 = vpop.permute.xlu0 %2165
        %2167 = vrot.lane.b32.xlu0 %v1592, 32
        %v2168 = vpop.permute.xlu0 %2167
        %2169 = vrot.lane.b32.xlu0 %v1593, 32
        %v2170 = vpop.permute.xlu0 %2169
        %2235 = vrot.lane.b32.xlu0 %v1595, 64
        %v2236 = vpop.permute.xlu0 %2235
        %2237 = vrot.lane.b32.xlu0 %v1596, 64
        %v2238 = vpop.permute.xlu0 %2237
        %2239 = vrot.lane.b32.xlu0 %v1597, 64
        %v2240 = vpop.permute.xlu0 %2239
        %2241 = vrot.lane.b32.xlu0 %v1598, 64
        %v2242 = vpop.permute.xlu0 %2241
        %2243 = vrot.lane.b32.xlu0 %v1599, 64
        %v2244 = vpop.permute.xlu0 %2243
        %2245 = vrot.lane.b32.xlu0 %v1600, 64
        %v2246 = vpop.permute.xlu0 %2245
        %2247 = vrot.lane.b32.xlu0 %v1601, 64
        %v2248 = vpop.permute.xlu0 %2247
        %2249 = vrot.lane.b32.xlu0 %v1602, 64
        %v2250 = vpop.permute.xlu0 %2249
        %2251 = vrot.lane.b32.xlu0 %v1603, 64
        %v2252 = vpop.permute.xlu0 %2251
        %2253 = vrot.lane.b32.xlu0 %v1604, 64
        %v2254 = vpop.permute.xlu0 %2253
        %2255 = vrot.lane.b32.xlu0 %v1605, 64
        %v2256 = vpop.permute.xlu0 %2255
        %2257 = vrot.lane.b32.xlu0 %v1606, 64
        %v2258 = vpop.permute.xlu0 %2257
        %2259 = vrot.lane.b32.xlu0 %v1607, 64
        %v2260 = vpop.permute.xlu0 %2259
        %2261 = vrot.lane.b32.xlu0 %v1608, 64
        %v2262 = vpop.permute.xlu0 %2261
        %2263 = vrot.lane.b32.xlu0 %v1609, 64
        %v2264 = vpop.permute.xlu0 %2263
        %2265 = vrot.lane.b32.xlu0 %v1610, 64
        %v2266 = vpop.permute.xlu0 %2265
        %2267 = vrot.lane.b32.xlu0 %v1611, 64
        %v2268 = vpop.permute.xlu0 %2267
        %2269 = vrot.lane.b32.xlu0 %v1612, 64
        %v2270 = vpop.permute.xlu0 %2269
        %2271 = vrot.lane.b32.xlu0 %v1613, 64
        %v2272 = vpop.permute.xlu0 %2271
        %2273 = vrot.lane.b32.xlu0 %v1614, 64
        %v2274 = vpop.permute.xlu0 %2273
        %2275 = vrot.lane.b32.xlu0 %v1615, 64
        %v2276 = vpop.permute.xlu0 %2275
        %2277 = vrot.lane.b32.xlu0 %v1616, 64
        %v2278 = vpop.permute.xlu0 %2277
        %2279 = vrot.lane.b32.xlu0 %v1617, 64
        %v2280 = vpop.permute.xlu0 %2279
        %2281 = vrot.lane.b32.xlu0 %v1618, 64
        %v2282 = vpop.permute.xlu0 %2281
        %2283 = vrot.lane.b32.xlu0 %v1619, 64
        %v2284 = vpop.permute.xlu0 %2283
        %2285 = vrot.lane.b32.xlu0 %v1620, 64
        %v2286 = vpop.permute.xlu0 %2285
        %2287 = vrot.lane.b32.xlu0 %v1621, 64
        %v2288 = vpop.permute.xlu0 %2287
        %2289 = vrot.lane.b32.xlu0 %v1622, 64
        %v2290 = vpop.permute.xlu0 %2289
        %2291 = vrot.lane.b32.xlu0 %v1623, 64
        %v2292 = vpop.permute.xlu0 %2291
        %2293 = vrot.lane.b32.xlu0 %v1624, 64
        %v2294 = vpop.permute.xlu0 %2293
        %2295 = vrot.lane.b32.xlu0 %v1625, 64
        %v2296 = vpop.permute.xlu0 %2295
        %2297 = vrot.lane.b32.xlu0 %v1626, 64
        %v2298 = vpop.permute.xlu0 %2297
        %2363 = vrot.lane.b32.xlu0 %v1627, 96
        %v2364 = vpop.permute.xlu0 %2363
        %2365 = vrot.lane.b32.xlu0 %v1628, 96
        %v2366 = vpop.permute.xlu0 %2365
        %2367 = vrot.lane.b32.xlu0 %v1629, 96
        %v2368 = vpop.permute.xlu0 %2367
        %2369 = vrot.lane.b32.xlu0 %v1630, 96
        %v2370 = vpop.permute.xlu0 %2369
        %2371 = vrot.lane.b32.xlu0 %v1631, 96
        %v2372 = vpop.permute.xlu0 %2371
        %2373 = vrot.lane.b32.xlu0 %v1632, 96
        %v2374 = vpop.permute.xlu0 %2373
        %2375 = vrot.lane.b32.xlu0 %v1633, 96
        %v2376 = vpop.permute.xlu0 %2375
        %2377 = vrot.lane.b32.xlu0 %v1634, 96
        %v2378 = vpop.permute.xlu0 %2377
        %2379 = vrot.lane.b32.xlu0 %v1635, 96
        %v2380 = vpop.permute.xlu0 %2379
        %2381 = vrot.lane.b32.xlu0 %v1636, 96
        %v2382 = vpop.permute.xlu0 %2381
        %2383 = vrot.lane.b32.xlu0 %v1637, 96
        %v2384 = vpop.permute.xlu0 %2383
        %2385 = vrot.lane.b32.xlu0 %v1638, 96
        %v2386 = vpop.permute.xlu0 %2385
        %2387 = vrot.lane.b32.xlu0 %v1639, 96
        %v2388 = vpop.permute.xlu0 %2387
        %2389 = vrot.lane.b32.xlu0 %v1640, 96
        %v2390 = vpop.permute.xlu0 %2389
        %2391 = vrot.lane.b32.xlu0 %v1641, 96
        %v2392 = vpop.permute.xlu0 %2391
        %2393 = vrot.lane.b32.xlu0 %v1642, 96
        %v2394 = vpop.permute.xlu0 %2393
        %2395 = vrot.lane.b32.xlu0 %v1643, 96
        %v2396 = vpop.permute.xlu0 %2395
        %2397 = vrot.lane.b32.xlu0 %v1644, 96
        %v2398 = vpop.permute.xlu0 %2397
        %2399 = vrot.lane.b32.xlu0 %v1645, 96
        %v2400 = vpop.permute.xlu0 %2399
        %2401 = vrot.lane.b32.xlu0 %v1646, 96
        %v2402 = vpop.permute.xlu0 %2401
        %2403 = vrot.lane.b32.xlu0 %v1647, 96
        %v2404 = vpop.permute.xlu0 %2403
        %2405 = vrot.lane.b32.xlu0 %v1648, 96
        %v2406 = vpop.permute.xlu0 %2405
        %2407 = vrot.lane.b32.xlu0 %v1649, 96
        %v2408 = vpop.permute.xlu0 %2407
        %2409 = vrot.lane.b32.xlu0 %v1650, 96
        %v2410 = vpop.permute.xlu0 %2409
        %2411 = vrot.lane.b32.xlu0 %v1651, 96
        %v2412 = vpop.permute.xlu0 %2411
        %2413 = vrot.lane.b32.xlu0 %v1652, 96
        %v2414 = vpop.permute.xlu0 %2413
        %2415 = vrot.lane.b32.xlu0 %v1653, 96
        %v2416 = vpop.permute.xlu0 %2415
        %2417 = vrot.lane.b32.xlu0 %v1654, 96
        %v2418 = vpop.permute.xlu0 %2417
        %2419 = vrot.lane.b32.xlu0 %v1655, 96
        %v2420 = vpop.permute.xlu0 %2419
        %2421 = vrot.lane.b32.xlu0 %v1656, 96
        %v2422 = vpop.permute.xlu0 %2421
        %2423 = vrot.lane.b32.xlu0 %v1657, 96
        %v2424 = vpop.permute.xlu0 %2423
        %2425 = vrot.lane.b32.xlu0 %v1658, 96
        %v2426 = vpop.permute.xlu0 %2425
        %v2459 = vsel %vm511, %v1402, %v1724
        %v2460 = vsel %vm511, %v1403, %v1726
        %v2461 = vsel %vm511, %v1404, %v1728
        %v2462 = vsel %vm511, %v1405, %v1730
        %v2463 = vsel %vm511, %v1406, %v1732
        %v2464 = vsel %vm511, %v1407, %v1734
        %v2465 = vsel %vm511, %v1408, %v1736
        %v2466 = vsel %vm511, %v1409, %v1738
        %v2467 = vsel %vm511, %v1410, %v1740
        %v2468 = vsel %vm511, %v1411, %v1742
        %v2469 = vsel %vm511, %v1412, %v1744
        %v2470 = vsel %vm511, %v1413, %v1746
        %v2471 = vsel %vm511, %v1414, %v1748
        %v2472 = vsel %vm511, %v1415, %v1750
        %v2473 = vsel %vm511, %v1416, %v1752
        %v2474 = vsel %vm511, %v1417, %v1754
        %v2475 = vsel %vm511, %v1418, %v1756
        %v2476 = vsel %vm511, %v1419, %v1758
        %v2477 = vsel %vm511, %v1420, %v1760
        %v2478 = vsel %vm511, %v1421, %v1762
        %v2479 = vsel %vm511, %v1422, %v1764
        %v2480 = vsel %vm511, %v1423, %v1766
        %v2481 = vsel %vm511, %v1424, %v1768
        %v2482 = vsel %vm511, %v1425, %v1770
        %v2483 = vsel %vm511, %v1426, %v1772
        %v2484 = vsel %vm511, %v1427, %v1774
        %v2485 = vsel %vm511, %v1428, %v1776
        %v2486 = vsel %vm511, %v1429, %v1778
        %v2487 = vsel %vm511, %v1430, %v1780
        %v2488 = vsel %vm511, %v1431, %v1782
        %v2489 = vsel %vm511, %v1432, %v1784
        %v2490 = vsel %vm511, %v1433, %v1786
        %vm2491 = vcmask 523264
        %v2492 = vsel %vm2491, %v2459, %v1852
        %v2493 = vsel %vm2491, %v2460, %v1854
        %v2494 = vsel %vm2491, %v2461, %v1856
        %v2495 = vsel %vm2491, %v2462, %v1858
        %v2496 = vsel %vm2491, %v2463, %v1860
        %v2497 = vsel %vm2491, %v2464, %v1862
        %v2498 = vsel %vm2491, %v2465, %v1864
        %v2499 = vsel %vm2491, %v2466, %v1866
        %v2500 = vsel %vm2491, %v2467, %v1868
        %v2501 = vsel %vm2491, %v2468, %v1870
        %v2502 = vsel %vm2491, %v2469, %v1872
        %v2503 = vsel %vm2491, %v2470, %v1874
        %v2504 = vsel %vm2491, %v2471, %v1876
        %v2505 = vsel %vm2491, %v2472, %v1878
        %v2506 = vsel %vm2491, %v2473, %v1880
        %v2507 = vsel %vm2491, %v2474, %v1882
        %v2508 = vsel %vm2491, %v2475, %v1884
        %v2509 = vsel %vm2491, %v2476, %v1886
        %v2510 = vsel %vm2491, %v2477, %v1888
        %v2511 = vsel %vm2491, %v2478, %v1890
        %v2512 = vsel %vm2491, %v2479, %v1892
        %v2513 = vsel %vm2491, %v2480, %v1894
        %v2514 = vsel %vm2491, %v2481, %v1896
        %v2515 = vsel %vm2491, %v2482, %v1898
        %v2516 = vsel %vm2491, %v2483, %v1900
        %v2517 = vsel %vm2491, %v2484, %v1902
        %v2518 = vsel %vm2491, %v2485, %v1904
        %v2519 = vsel %vm2491, %v2486, %v1906
        %v2520 = vsel %vm2491, %v2487, %v1908
        %v2521 = vsel %vm2491, %v2488, %v1910
        %v2522 = vsel %vm2491, %v2489, %v1912
        %v2523 = vsel %vm2491, %v2490, %v1914
        %vm2524 = vcmask 785408
        %v2525 = vsel %vm2524, %v2492, %v1980
        %v2526 = vsel %vm2524, %v2493, %v1982
        %v2527 = vsel %vm2524, %v2494, %v1984
        %v2528 = vsel %vm2524, %v2495, %v1986
        %v2529 = vsel %vm2524, %v2496, %v1988
        %v2530 = vsel %vm2524, %v2497, %v1990
        %v2531 = vsel %vm2524, %v2498, %v1992
        %v2532 = vsel %vm2524, %v2499, %v1994
        %v2533 = vsel %vm2524, %v2500, %v1996
        %v2534 = vsel %vm2524, %v2501, %v1998
        %v2535 = vsel %vm2524, %v2502, %v2000
        %v2536 = vsel %vm2524, %v2503, %v2002
        %v2537 = vsel %vm2524, %v2504, %v2004
        %v2538 = vsel %vm2524, %v2505, %v2006
        %v2539 = vsel %vm2524, %v2506, %v2008
        %v2540 = vsel %vm2524, %v2507, %v2010
        %v2541 = vsel %vm2524, %v2508, %v2012
        %v2542 = vsel %vm2524, %v2509, %v2014
        %v2543 = vsel %vm2524, %v2510, %v2016
        %v2544 = vsel %vm2524, %v2511, %v2018
        %v2545 = vsel %vm2524, %v2512, %v2020
        %v2546 = vsel %vm2524, %v2513, %v2022
        %v2547 = vsel %vm2524, %v2514, %v2024
        %v2548 = vsel %vm2524, %v2515, %v2026
        %v2549 = vsel %vm2524, %v2516, %v2028
        %v2550 = vsel %vm2524, %v2517, %v2030
        %v2551 = vsel %vm2524, %v2518, %v2032
        %v2552 = vsel %vm2524, %v2519, %v2034
        %v2553 = vsel %vm2524, %v2520, %v2036
        %v2554 = vsel %vm2524, %v2521, %v2038
        %v2555 = vsel %vm2524, %v2522, %v2040
        %v2556 = vsel %vm2524, %v2523, %v2042
        %v2557 = vsel %vm511, %v1530, %v2108
        %v2558 = vsel %vm511, %v1531, %v2110
        %v2559 = vsel %vm511, %v1532, %v2112
        %v2560 = vsel %vm511, %v1533, %v2114
        %v2561 = vsel %vm511, %v1534, %v2116
        %v2562 = vsel %vm511, %v1535, %v2118
        %v2563 = vsel %vm511, %v1536, %v2120
        %v2564 = vsel %vm511, %v1537, %v2122
        %v2565 = vsel %vm511, %v1538, %v2124
        %v2566 = vsel %vm511, %v1539, %v2126
        %v2567 = vsel %vm511, %v1540, %v2128
        %v2568 = vsel %vm511, %v1541, %v2130
        %v2569 = vsel %vm511, %v1542, %v2132
        %v2570 = vsel %vm511, %v1543, %v2134
        %v2571 = vsel %vm511, %v1544, %v2136
        %v2572 = vsel %vm511, %v1545, %v2138
        %v2573 = vsel %vm511, %v1546, %v2140
        %v2574 = vsel %vm511, %v1547, %v2142
        %v2575 = vsel %vm511, %v1548, %v2144
        %v2576 = vsel %vm511, %v1549, %v2146
        %v2577 = vsel %vm511, %v1550, %v2148
        %v2578 = vsel %vm511, %v1551, %v2150
        %v2579 = vsel %vm511, %v1552, %v2152
        %v2580 = vsel %vm511, %v1553, %v2154
        %v2581 = vsel %vm511, %v1554, %v2156
        %v2582 = vsel %vm511, %v1555, %v2158
        %v2583 = vsel %vm511, %v1556, %v2160
        %v2584 = vsel %vm511, %v1557, %v2162
        %v2585 = vsel %vm511, %v1558, %v2164
        %v2586 = vsel %vm511, %v1559, %v2166
        %v2587 = vsel %vm511, %v1560, %v2168
        %v2588 = vsel %vm511, %v1561, %v2170
        %v2589 = vsel %vm2491, %v2557, %v2236
        %v2590 = vsel %vm2491, %v2558, %v2238
        %v2591 = vsel %vm2491, %v2559, %v2240
        %v2592 = vsel %vm2491, %v2560, %v2242
        %v2593 = vsel %vm2491, %v2561, %v2244
        %v2594 = vsel %vm2491, %v2562, %v2246
        %v2595 = vsel %vm2491, %v2563, %v2248
        %v2596 = vsel %vm2491, %v2564, %v2250
        %v2597 = vsel %vm2491, %v2565, %v2252
        %v2598 = vsel %vm2491, %v2566, %v2254
        %v2599 = vsel %vm2491, %v2567, %v2256
        %v2600 = vsel %vm2491, %v2568, %v2258
        %v2601 = vsel %vm2491, %v2569, %v2260
        %v2602 = vsel %vm2491, %v2570, %v2262
        %v2603 = vsel %vm2491, %v2571, %v2264
        %v2604 = vsel %vm2491, %v2572, %v2266
        %v2605 = vsel %vm2491, %v2573, %v2268
        %v2606 = vsel %vm2491, %v2574, %v2270
        %v2607 = vsel %vm2491, %v2575, %v2272
        %v2608 = vsel %vm2491, %v2576, %v2274
        %v2609 = vsel %vm2491, %v2577, %v2276
        %v2610 = vsel %vm2491, %v2578, %v2278
        %v2611 = vsel %vm2491, %v2579, %v2280
        %v2612 = vsel %vm2491, %v2580, %v2282
        %v2613 = vsel %vm2491, %v2581, %v2284
        %v2614 = vsel %vm2491, %v2582, %v2286
        %v2615 = vsel %vm2491, %v2583, %v2288
        %v2616 = vsel %vm2491, %v2584, %v2290
        %v2617 = vsel %vm2491, %v2585, %v2292
        %v2618 = vsel %vm2491, %v2586, %v2294
        %v2619 = vsel %vm2491, %v2587, %v2296
        %v2620 = vsel %vm2491, %v2588, %v2298
        %v2621 = vsel %vm2524, %v2589, %v2364
        %v2622 = vsel %vm2524, %v2590, %v2366
        %v2623 = vsel %vm2524, %v2591, %v2368
        %v2624 = vsel %vm2524, %v2592, %v2370
        %v2625 = vsel %vm2524, %v2593, %v2372
        %v2626 = vsel %vm2524, %v2594, %v2374
        %v2627 = vsel %vm2524, %v2595, %v2376
        %v2628 = vsel %vm2524, %v2596, %v2378
        %v2629 = vsel %vm2524, %v2597, %v2380
        %v2630 = vsel %vm2524, %v2598, %v2382
        %v2631 = vsel %vm2524, %v2599, %v2384
        %v2632 = vsel %vm2524, %v2600, %v2386
        %v2633 = vsel %vm2524, %v2601, %v2388
        %v2634 = vsel %vm2524, %v2602, %v2390
        %v2635 = vsel %vm2524, %v2603, %v2392
        %v2636 = vsel %vm2524, %v2604, %v2394
        %v2637 = vsel %vm2524, %v2605, %v2396
        %v2638 = vsel %vm2524, %v2606, %v2398
        %v2639 = vsel %vm2524, %v2607, %v2400
        %v2640 = vsel %vm2524, %v2608, %v2402
        %v2641 = vsel %vm2524, %v2609, %v2404
        %v2642 = vsel %vm2524, %v2610, %v2406
        %v2643 = vsel %vm2524, %v2611, %v2408
        %v2644 = vsel %vm2524, %v2612, %v2410
        %v2645 = vsel %vm2524, %v2613, %v2412
        %v2646 = vsel %vm2524, %v2614, %v2414
        %v2647 = vsel %vm2524, %v2615, %v2416
        %v2648 = vsel %vm2524, %v2616, %v2418
        %v2649 = vsel %vm2524, %v2617, %v2420
        %v2650 = vsel %vm2524, %v2618, %v2422
        %v2651 = vsel %vm2524, %v2619, %v2424
        %v2652 = vsel %vm2524, %v2620, %v2426
        %v2653 = vld [vmem:[%s3] sm:$0xff]
        %v2654 = vld [vmem:[%s3 + $0x8] sm:$0xff]
        %v2655 = vld [vmem:[%s3 + $0x10] sm:$0xff]
        %v2656 = vld [vmem:[%s3 + $0x18] sm:$0xff]
        %v2657 = vld [vmem:[%s3 + $0x20] sm:$0xff]
        %v2658 = vld [vmem:[%s3 + $0x28] sm:$0xff]
        %v2659 = vld [vmem:[%s3 + $0x30] sm:$0xff]
        %v2660 = vld [vmem:[%s3 + $0x38] sm:$0xff]
        %v2661 = vld [vmem:[%s3 + $0x40] sm:$0xff]
        %v2662 = vld [vmem:[%s3 + $0x48] sm:$0xff]
        %v2663 = vld [vmem:[%s3 + $0x50] sm:$0xff]
        %v2664 = vld [vmem:[%s3 + $0x58] sm:$0xff]
        %v2665 = vld [vmem:[%s3 + $0x60] sm:$0xff]
        %v2666 = vld [vmem:[%s3 + $0x68] sm:$0xff]
        %v2667 = vld [vmem:[%s3 + $0x70] sm:$0xff]
        %v2668 = vld [vmem:[%s3 + $0x78] sm:$0xff]
        %v2669 = vld [vmem:[%s3 + $0x80] sm:$0xff]
        %v2670 = vld [vmem:[%s3 + $0x88] sm:$0xff]
        %v2671 = vld [vmem:[%s3 + $0x90] sm:$0xff]
        %v2672 = vld [vmem:[%s3 + $0x98] sm:$0xff]
        %v2673 = vld [vmem:[%s3 + $0xa0] sm:$0xff]
        %v2674 = vld [vmem:[%s3 + $0xa8] sm:$0xff]
        %v2675 = vld [vmem:[%s3 + $0xb0] sm:$0xff]
        %v2676 = vld [vmem:[%s3 + $0xb8] sm:$0xff]
        %v2677 = vld [vmem:[%s3 + $0xc0] sm:$0xff]
        %v2678 = vld [vmem:[%s3 + $0xc8] sm:$0xff]
        %v2679 = vld [vmem:[%s3 + $0xd0] sm:$0xff]
        %v2680 = vld [vmem:[%s3 + $0xd8] sm:$0xff]
        %v2681 = vld [vmem:[%s3 + $0xe0] sm:$0xff]
        %v2682 = vld [vmem:[%s3 + $0xe8] sm:$0xff]
        %v2683 = vld [vmem:[%s3 + $0xf0] sm:$0xff]
        %v2684 = vld [vmem:[%s3 + $0xf8] sm:$0xff]
        %v2685 = vld [vmem:[%s3 + $0x100] sm:$0xff]
        %v2686 = vld [vmem:[%s3 + $0x108] sm:$0xff]
        %v2687 = vld [vmem:[%s3 + $0x110] sm:$0xff]
        %v2688 = vld [vmem:[%s3 + $0x118] sm:$0xff]
        %v2689 = vld [vmem:[%s4] sm:$0x1]
        %v2691 = vlaneseq
        %v2692 = vshrl.u32 %v2691, 7
        %v2693 = vsub.s32 0, %v2692
        %v2694 = vrot.slane %v2689, %v2693
        %v2697 = vsel %vm511, %v1659, 0
        %v2700 = vsel %vm511, %v1660, 0
        %v2703 = vsel %vm511, %v1661, 0
        %v2706 = vsel %vm511, %v1662, 0
        %v2709 = vsel %vm511, %v1663, 0
        %v2712 = vsel %vm511, %v1664, 0
        %v2715 = vsel %vm511, %v1665, 0
        %v2718 = vsel %vm511, %v1666, 0
        %v2721 = vsel %vm511, %v1667, 0
        %v2724 = vsel %vm511, %v1668, 0
        %v2727 = vsel %vm511, %v1669, 0
        %v2730 = vsel %vm511, %v1670, 0
        %v2733 = vsel %vm511, %v1671, 0
        %v2736 = vsel %vm511, %v1672, 0
        %v2739 = vsel %vm511, %v1673, 0
        %v2742 = vsel %vm511, %v1674, 0
        %v2745 = vsel %vm511, %v1675, 0
        %v2748 = vsel %vm511, %v1676, 0
        %v2751 = vsel %vm511, %v1677, 0
        %v2754 = vsel %vm511, %v1678, 0
        %v2757 = vsel %vm511, %v1679, 0
        %v2760 = vsel %vm511, %v1680, 0
        %v2763 = vsel %vm511, %v1681, 0
        %v2766 = vsel %vm511, %v1682, 0
        %v2769 = vsel %vm511, %v1683, 0
        %v2772 = vsel %vm511, %v1684, 0
        %v2775 = vsel %vm511, %v1685, 0
        %v2778 = vsel %vm511, %v1686, 0
        %v2781 = vsel %vm511, %v1687, 0
        %v2784 = vsel %vm511, %v1688, 0
        %v2787 = vsel %vm511, %v1689, 0
        %v2790 = vsel %vm511, %v1690, 0
        %2792 = vmatprep.subr.mxu0 0.0
        %2793 = vmatpush1.msra.mxu0 %v2653
        %2794 = vmatprep.subr.mxu0 0.0
        %2795 = vmatpush1.msra.mxu0 %v2654
        %2796 = vmatprep.subr.mxu0 0.0
        %2797 = vmatpush1.msra.mxu0 %v2655
        %2798 = vmatprep.subr.mxu0 0.0
        %2799 = vmatpush1.msra.mxu0 %v2656
        %2800 = vmatprep.subr.mxu0 0.0
        %2801 = vmatpush1.msra.mxu0 %v2657
        %2802 = vmatprep.subr.mxu0 0.0
        %2803 = vmatpush1.msra.mxu0 %v2658
        %2804 = vmatprep.subr.mxu0 0.0
        %2805 = vmatpush1.msra.mxu0 %v2659
        %2806 = vmatprep.subr.mxu0 0.0
        %2807 = vmatpush1.msra.mxu0 %v2660
        %2808 = vmatprep.subr.mxu0 0.0
        %2809 = vmatpush1.msra.mxu0 %v2661
        %2810 = vmatprep.subr.mxu0 0.0
        %2811 = vmatpush1.msra.mxu0 %v2662
        %2812 = vmatprep.subr.mxu0 0.0
        %2813 = vmatpush1.msra.mxu0 %v2663
        %2814 = vmatprep.subr.mxu0 0.0
        %2815 = vmatpush1.msra.mxu0 %v2664
        %2816 = vmatprep.subr.mxu0 0.0
        %2817 = vmatpush1.msra.mxu0 %v2665
        %2818 = vmatprep.subr.mxu0 0.0
        %2819 = vmatpush1.msra.mxu0 %v2666
        %2820 = vmatprep.subr.mxu0 0.0
        %2821 = vmatpush1.msra.mxu0 %v2667
        %2822 = vmatprep.subr.mxu0 0.0
        %2823 = vmatpush1.msra.mxu0 %v2668
        %2824 = vmatprep.subr.mxu0 0.0
        %2825 = vmatpush1.msra.mxu0 %v2669
        %2826 = vmatprep.subr.mxu0 0.0
        %2827 = vmatpush1.msra.mxu0 %v2670
        %2828 = vmatprep.subr.mxu0 0.0
        %2829 = vmatpush1.msra.mxu0 %v2671
        %2830 = vmatprep.subr.mxu0 0.0
        %2831 = vmatpush1.msra.mxu0 %v2672
        %2832 = vmatprep.subr.mxu0 0.0
        %2833 = vmatpush1.msra.mxu0 %v2673
        %2834 = vmatprep.subr.mxu0 0.0
        %2835 = vmatpush1.msra.mxu0 %v2674
        %2836 = vmatprep.subr.mxu0 0.0
        %2837 = vmatpush1.msra.mxu0 %v2675
        %2838 = vmatprep.subr.mxu0 0.0
        %2839 = vmatpush1.msra.mxu0 %v2676
        %2840 = vmatprep.subr.mxu0 0.0
        %2841 = vmatpush1.msra.mxu0 %v2677
        %2842 = vmatprep.subr.mxu0 0.0
        %2843 = vmatpush1.msra.mxu0 %v2678
        %2844 = vmatprep.subr.mxu0 0.0
        %2845 = vmatpush1.msra.mxu0 %v2679
        %2846 = vmatprep.subr.mxu0 0.0
        %2847 = vmatpush1.msra.mxu0 %v2680
        %2848 = vmatprep.subr.mxu0 0.0
        %2849 = vmatpush1.msra.mxu0 %v2681
        %2850 = vmatprep.subr.mxu0 0.0
        %2851 = vmatpush1.msra.mxu0 %v2682
        %2852 = vmatprep.subr.mxu0 0.0
        %2853 = vmatpush1.msra.mxu0 %v2683
        %2854 = vmatprep.subr.mxu0 0.0
        %2855 = vmatpush1.msra.mxu0 %v2684
        %2856 = vmatprep.mubr.f32.mxu0 %v2621
        %2857 = vmatmul.mubr.f32.gmra.mrb[0].mxu0 %v2525
        %v2858 = vpop.f32.mrb[0].mxu0
        %v2859 = vadd.f32 %v2694, %v2858
        %v2860 = vpop.f32.mrb[0].mxu0
        %2861 = vmatprep.mubr.f32.mxu0 %v2622
        %2862 = vmatmul.mubr.f32.gmra.mrb[0].mxu0 %v2526
        %v2863 = vpop.f32.mrb[0].mxu0
        %v2864 = vadd.f32 %v2694, %v2863
        %v2865 = vpop.f32.mrb[0].mxu0
        %2866 = vmatprep.mubr.f32.mxu0 %v2623
        %2867 = vmatmul.mubr.f32.gmra.mrb[0].mxu0 %v2527
        %v2868 = vpop.f32.mrb[0].mxu0
        %v2869 = vadd.f32 %v2694, %v2868
        %v2870 = vpop.f32.mrb[0].mxu0
        %2871 = vmatprep.mubr.f32.mxu0 %v2624
        %2872 = vmatmul.mubr.f32.gmra.mrb[0].mxu0 %v2528
        %v2873 = vpop.f32.mrb[0].mxu0
        %v2874 = vadd.f32 %v2694, %v2873
        %v2875 = vpop.f32.mrb[0].mxu0
        %2876 = vmatprep.mubr.f32.mxu0 %v2625
        %2877 = vmatmul.mubr.f32.gmra.mrb[0].mxu0 %v2529
        %v2878 = vpop.f32.mrb[0].mxu0
        %v2879 = vadd.f32 %v2694, %v2878
        %v2880 = vpop.f32.mrb[0].mxu0
        %2881 = vmatprep.mubr.f32.mxu0 %v2626
        %2882 = vmatmul.mubr.f32.gmra.mrb[0].mxu0 %v2530
        %v2883 = vpop.f32.mrb[0].mxu0
        %v2884 = vadd.f32 %v2694, %v2883
        %v2885 = vpop.f32.mrb[0].mxu0
        %2886 = vmatprep.mubr.f32.mxu0 %v2627
        %2887 = vmatmul.mubr.f32.gmra.mrb[0].mxu0 %v2531
        %v2888 = vpop.f32.mrb[0].mxu0
        %v2889 = vadd.f32 %v2694, %v2888
        %v2890 = vpop.f32.mrb[0].mxu0
        %2891 = vmatprep.mubr.f32.mxu0 %v2628
        %2892 = vmatmul.mubr.f32.gmra.mrb[0].mxu0 %v2532
        %v2893 = vpop.f32.mrb[0].mxu0
        %v2894 = vadd.f32 %v2694, %v2893
        %v2895 = vpop.f32.mrb[0].mxu0
        %2896 = vmatprep.mubr.f32.mxu0 %v2629
        %2897 = vmatmul.mubr.f32.gmra.mrb[0].mxu0 %v2533
        %v2898 = vpop.f32.mrb[0].mxu0
        %v2899 = vadd.f32 %v2694, %v2898
        %v2900 = vpop.f32.mrb[0].mxu0
        %2901 = vmatprep.mubr.f32.mxu0 %v2630
        %2902 = vmatmul.mubr.f32.gmra.mrb[0].mxu0 %v2534
        %v2903 = vpop.f32.mrb[0].mxu0
        %v2904 = vadd.f32 %v2694, %v2903
        %v2905 = vpop.f32.mrb[0].mxu0
        %2906 = vmatprep.mubr.f32.mxu0 %v2631
        %2907 = vmatmul.mubr.f32.gmra.mrb[0].mxu0 %v2535
        %v2908 = vpop.f32.mrb[0].mxu0
        %v2909 = vadd.f32 %v2694, %v2908
        %v2910 = vpop.f32.mrb[0].mxu0
        %2911 = vmatprep.mubr.f32.mxu0 %v2632
        %2912 = vmatmul.mubr.f32.gmra.mrb[0].mxu0 %v2536
        %v2913 = vpop.f32.mrb[0].mxu0
        %v2914 = vadd.f32 %v2694, %v2913
        %v2915 = vpop.f32.mrb[0].mxu0
        %2916 = vmatprep.mubr.f32.mxu0 %v2633
        %2917 = vmatmul.mubr.f32.gmra.mrb[0].mxu0 %v2537
        %v2918 = vpop.f32.mrb[0].mxu0
        %v2919 = vadd.f32 %v2694, %v2918
        %v2920 = vpop.f32.mrb[0].mxu0
        %2921 = vmatprep.mubr.f32.mxu0 %v2634
        %2922 = vmatmul.mubr.f32.gmra.mrb[0].mxu0 %v2538
        %v2923 = vpop.f32.mrb[0].mxu0
        %v2924 = vadd.f32 %v2694, %v2923
        %v2925 = vpop.f32.mrb[0].mxu0
        %2926 = vmatprep.mubr.f32.mxu0 %v2635
        %2927 = vmatmul.mubr.f32.gmra.mrb[0].mxu0 %v2539
        %v2928 = vpop.f32.mrb[0].mxu0
        %v2929 = vadd.f32 %v2694, %v2928
        %v2930 = vpop.f32.mrb[0].mxu0
        %2931 = vmatprep.mubr.f32.mxu0 %v2636
        %2932 = vmatmul.mubr.f32.gmra.mrb[0].mxu0 %v2540
        %v2933 = vpop.f32.mrb[0].mxu0
        %v2934 = vadd.f32 %v2694, %v2933
        %v2935 = vpop.f32.mrb[0].mxu0
        %2936 = vmatprep.mubr.f32.mxu0 %v2637
        %2937 = vmatmul.mubr.f32.gmra.mrb[0].mxu0 %v2541
        %v2938 = vpop.f32.mrb[0].mxu0
        %v2939 = vadd.f32 %v2694, %v2938
        %v2940 = vpop.f32.mrb[0].mxu0
        %2941 = vmatprep.mubr.f32.mxu0 %v2638
        %2942 = vmatmul.mubr.f32.gmra.mrb[0].mxu0 %v2542
        %v2943 = vpop.f32.mrb[0].mxu0
        %v2944 = vadd.f32 %v2694, %v2943
        %v2945 = vpop.f32.mrb[0].mxu0
        %2946 = vmatprep.mubr.f32.mxu0 %v2639
        %2947 = vmatmul.mubr.f32.gmra.mrb[0].mxu0 %v2543
        %v2948 = vpop.f32.mrb[0].mxu0
        %v2949 = vadd.f32 %v2694, %v2948
        %v2950 = vpop.f32.mrb[0].mxu0
        %2951 = vmatprep.mubr.f32.mxu0 %v2640
        %2952 = vmatmul.mubr.f32.gmra.mrb[0].mxu0 %v2544
        %v2953 = vpop.f32.mrb[0].mxu0
        %v2954 = vadd.f32 %v2694, %v2953
        %v2955 = vpop.f32.mrb[0].mxu0
        %2956 = vmatprep.mubr.f32.mxu0 %v2641
        %2957 = vmatmul.mubr.f32.gmra.mrb[0].mxu0 %v2545
        %v2958 = vpop.f32.mrb[0].mxu0
        %v2959 = vadd.f32 %v2694, %v2958
        %v2960 = vpop.f32.mrb[0].mxu0
        %2961 = vmatprep.mubr.f32.mxu0 %v2642
        %2962 = vmatmul.mubr.f32.gmra.mrb[0].mxu0 %v2546
        %v2963 = vpop.f32.mrb[0].mxu0
        %v2964 = vadd.f32 %v2694, %v2963
        %v2965 = vpop.f32.mrb[0].mxu0
        %2966 = vmatprep.mubr.f32.mxu0 %v2643
        %2967 = vmatmul.mubr.f32.gmra.mrb[0].mxu0 %v2547
        %v2968 = vpop.f32.mrb[0].mxu0
        %v2969 = vadd.f32 %v2694, %v2968
        %v2970 = vpop.f32.mrb[0].mxu0
        %2971 = vmatprep.mubr.f32.mxu0 %v2644
        %2972 = vmatmul.mubr.f32.gmra.mrb[0].mxu0 %v2548
        %v2973 = vpop.f32.mrb[0].mxu0
        %v2974 = vadd.f32 %v2694, %v2973
        %v2975 = vpop.f32.mrb[0].mxu0
        %2976 = vmatprep.mubr.f32.mxu0 %v2645
        %2977 = vmatmul.mubr.f32.gmra.mrb[0].mxu0 %v2549
        %v2978 = vpop.f32.mrb[0].mxu0
        %v2979 = vadd.f32 %v2694, %v2978
        %v2980 = vpop.f32.mrb[0].mxu0
        %2981 = vmatprep.mubr.f32.mxu0 %v2646
        %2982 = vmatmul.mubr.f32.gmra.mrb[0].mxu0 %v2550
        %v2983 = vpop.f32.mrb[0].mxu0
        %v2984 = vadd.f32 %v2694, %v2983
        %v2985 = vpop.f32.mrb[0].mxu0
        %2986 = vmatprep.mubr.f32.mxu0 %v2647
        %2987 = vmatmul.mubr.f32.gmra.mrb[0].mxu0 %v2551
        %v2988 = vpop.f32.mrb[0].mxu0
        %v2989 = vadd.f32 %v2694, %v2988
        %v2990 = vpop.f32.mrb[0].mxu0
        %2991 = vmatprep.mubr.f32.mxu0 %v2648
        %2992 = vmatmul.mubr.f32.gmra.mrb[0].mxu0 %v2552
        %v2993 = vpop.f32.mrb[0].mxu0
        %v2994 = vadd.f32 %v2694, %v2993
        %v2995 = vpop.f32.mrb[0].mxu0
        %2996 = vmatprep.mubr.f32.mxu0 %v2649
        %2997 = vmatmul.mubr.f32.gmra.mrb[0].mxu0 %v2553
        %v2998 = vpop.f32.mrb[0].mxu0
        %v2999 = vadd.f32 %v2694, %v2998
        %v3000 = vpop.f32.mrb[0].mxu0
        %3001 = vmatprep.mubr.f32.mxu0 %v2650
        %3002 = vmatmul.mubr.f32.gmra.mrb[0].mxu0 %v2554
        %v3003 = vpop.f32.mrb[0].mxu0
        %v3004 = vadd.f32 %v2694, %v3003
        %v3005 = vpop.f32.mrb[0].mxu0
        %3006 = vmatprep.mubr.f32.mxu0 %v2651
        %3007 = vmatmul.mubr.f32.gmra.mrb[0].mxu0 %v2555
        %v3008 = vpop.f32.mrb[0].mxu0
        %v3009 = vadd.f32 %v2694, %v3008
        %v3010 = vpop.f32.mrb[0].mxu0
        %3011 = vmatprep.mubr.f32.mxu0 %v2652
        %3012 = vmatmul.mubr.f32.gmra.mrb[0].mxu0 %v2556
        %v3013 = vpop.f32.mrb[0].mxu0
        %v3014 = vadd.f32 %v2694, %v3013
        %v3015 = vpop.f32.mrb[0].mxu0
        %3016 = vdwg.mxu0
        %3017 = vmatprep.subr.mxu0 0.0
        %3018 = vmatpush1.msra.mxu0 %v2685
        %3019 = vmatprep.subr.mxu0 0.0
        %3020 = vmatpush1.msra.mxu0 %v2686
        %3021 = vmatprep.subr.mxu0 0.0
        %3022 = vmatpush1.msra.mxu0 %v2687
        %3023 = vmatprep.subr.mxu0 0.0
        %3024 = vmatpush1.msra.mxu0 %v2688
        %3025 = vmatprep.subr.mxu0 0.0
        %3026 = vmatpush1.msra.mxu0 0.0
        %3027 = vmatprep.subr.mxu0 0.0
        %3028 = vmatpush1.msra.mxu0 0.0
        %3029 = vmatprep.subr.mxu0 0.0
        %3030 = vmatpush1.msra.mxu0 0.0
        %3031 = vmatprep.subr.mxu0 0.0
        %3032 = vmatpush1.msra.mxu0 0.0
        %3033 = vmatprep.subr.mxu0 0.0
        %3034 = vmatpush1.msra.mxu0 0.0
        %3035 = vmatprep.subr.mxu0 0.0
        %3036 = vmatpush1.msra.mxu0 0.0
        %3037 = vmatprep.subr.mxu0 0.0
        %3038 = vmatpush1.msra.mxu0 0.0
        %3039 = vmatprep.subr.mxu0 0.0
        %3040 = vmatpush1.msra.mxu0 0.0
        %3041 = vmatprep.subr.mxu0 0.0
        %3042 = vmatpush1.msra.mxu0 0.0
        %3043 = vmatprep.subr.mxu0 0.0
        %3044 = vmatpush1.msra.mxu0 0.0
        %3045 = vmatprep.subr.mxu0 0.0
        %3046 = vmatpush1.msra.mxu0 0.0
        %3047 = vmatprep.subr.mxu0 0.0
        %3048 = vmatpush1.msra.mxu0 0.0
        %3049 = vmatprep.subr.mxu0 0.0
        %3050 = vmatpush1.msra.mxu0 0.0
        %3051 = vmatprep.subr.mxu0 0.0
        %3052 = vmatpush1.msra.mxu0 0.0
        %3053 = vmatprep.subr.mxu0 0.0
        %3054 = vmatpush1.msra.mxu0 0.0
        %3055 = vmatprep.subr.mxu0 0.0
        %3056 = vmatpush1.msra.mxu0 0.0
        %3057 = vmatprep.subr.mxu0 0.0
        %3058 = vmatpush1.msra.mxu0 0.0
        %3059 = vmatprep.subr.mxu0 0.0
        %3060 = vmatpush1.msra.mxu0 0.0
        %3061 = vmatprep.subr.mxu0 0.0
        %3062 = vmatpush1.msra.mxu0 0.0
        %3063 = vmatprep.subr.mxu0 0.0
        %3064 = vmatpush1.msra.mxu0 0.0
        %3065 = vmatprep.subr.mxu0 0.0
        %3066 = vmatpush1.msra.mxu0 0.0
        %3067 = vmatprep.subr.mxu0 0.0
        %3068 = vmatpush1.msra.mxu0 0.0
        %3069 = vmatprep.subr.mxu0 0.0
        %3070 = vmatpush1.msra.mxu0 0.0
        %3071 = vmatprep.subr.mxu0 0.0
        %3072 = vmatpush1.msra.mxu0 0.0
        %3073 = vmatprep.subr.mxu0 0.0
        %3074 = vmatpush1.msra.mxu0 0.0
        %3075 = vmatprep.subr.mxu0 0.0
        %3076 = vmatpush1.msra.mxu0 0.0
        %3077 = vmatprep.subr.mxu0 0.0
        %3078 = vmatpush1.msra.mxu0 0.0
        %3079 = vmatprep.subr.mxu0 0.0
        %3080 = vmatpush1.msra.mxu0 0.0
        %3081 = vmatprep.mubr.f32.mxu0 0.0
        %3082 = vmatmul.mubr.f32.gmra.mrb[0].mxu0 %v2697
        %v3083 = vpop.f32.mrb[0].mxu0
        %v3084 = vadd.f32 %v2859, %v3083
        %v3085 = vpop.f32.mrb[0].mxu0
        %3086 = vmatprep.mubr.f32.mxu0 0.0
        %3087 = vmatmul.mubr.f32.gmra.mrb[0].mxu0 %v2700
        %v3088 = vpop.f32.mrb[0].mxu0
        %v3089 = vadd.f32 %v2864, %v3088
        %v3090 = vpop.f32.mrb[0].mxu0
        %3091 = vmatprep.mubr.f32.mxu0 0.0
        %3092 = vmatmul.mubr.f32.gmra.mrb[0].mxu0 %v2703
        %v3093 = vpop.f32.mrb[0].mxu0
        %v3094 = vadd.f32 %v2869, %v3093
        %v3095 = vpop.f32.mrb[0].mxu0
        %3096 = vmatprep.mubr.f32.mxu0 0.0
        %3097 = vmatmul.mubr.f32.gmra.mrb[0].mxu0 %v2706
        %v3098 = vpop.f32.mrb[0].mxu0
        %v3099 = vadd.f32 %v2874, %v3098
        %v3100 = vpop.f32.mrb[0].mxu0
        %3101 = vmatprep.mubr.f32.mxu0 0.0
        %3102 = vmatmul.mubr.f32.gmra.mrb[0].mxu0 %v2709
        %v3103 = vpop.f32.mrb[0].mxu0
        %v3104 = vadd.f32 %v2879, %v3103
        %v3105 = vpop.f32.mrb[0].mxu0
        %3106 = vmatprep.mubr.f32.mxu0 0.0
        %3107 = vmatmul.mubr.f32.gmra.mrb[0].mxu0 %v2712
        %v3108 = vpop.f32.mrb[0].mxu0
        %v3109 = vadd.f32 %v2884, %v3108
        %v3110 = vpop.f32.mrb[0].mxu0
        %3111 = vmatprep.mubr.f32.mxu0 0.0
        %3112 = vmatmul.mubr.f32.gmra.mrb[0].mxu0 %v2715
        %v3113 = vpop.f32.mrb[0].mxu0
        %v3114 = vadd.f32 %v2889, %v3113
        %v3115 = vpop.f32.mrb[0].mxu0
        %3116 = vmatprep.mubr.f32.mxu0 0.0
        %3117 = vmatmul.mubr.f32.gmra.mrb[0].mxu0 %v2718
        %v3118 = vpop.f32.mrb[0].mxu0
        %v3119 = vadd.f32 %v2894, %v3118
        %v3120 = vpop.f32.mrb[0].mxu0
        %3121 = vmatprep.mubr.f32.mxu0 0.0
        %3122 = vmatmul.mubr.f32.gmra.mrb[0].mxu0 %v2721
        %v3123 = vpop.f32.mrb[0].mxu0
        %v3124 = vadd.f32 %v2899, %v3123
        %v3125 = vpop.f32.mrb[0].mxu0
        %3126 = vmatprep.mubr.f32.mxu0 0.0
        %3127 = vmatmul.mubr.f32.gmra.mrb[0].mxu0 %v2724
        %v3128 = vpop.f32.mrb[0].mxu0
        %v3129 = vadd.f32 %v2904, %v3128
        %v3130 = vpop.f32.mrb[0].mxu0
        %3131 = vmatprep.mubr.f32.mxu0 0.0
        %3132 = vmatmul.mubr.f32.gmra.mrb[0].mxu0 %v2727
        %v3133 = vpop.f32.mrb[0].mxu0
        %v3134 = vadd.f32 %v2909, %v3133
        %v3135 = vpop.f32.mrb[0].mxu0
        %3136 = vmatprep.mubr.f32.mxu0 0.0
        %3137 = vmatmul.mubr.f32.gmra.mrb[0].mxu0 %v2730
        %v3138 = vpop.f32.mrb[0].mxu0
        %v3139 = vadd.f32 %v2914, %v3138
        %v3140 = vpop.f32.mrb[0].mxu0
        %3141 = vmatprep.mubr.f32.mxu0 0.0
        %3142 = vmatmul.mubr.f32.gmra.mrb[0].mxu0 %v2733
        %v3143 = vpop.f32.mrb[0].mxu0
        %v3144 = vadd.f32 %v2919, %v3143
        %v3145 = vpop.f32.mrb[0].mxu0
        %3146 = vmatprep.mubr.f32.mxu0 0.0
        %3147 = vmatmul.mubr.f32.gmra.mrb[0].mxu0 %v2736
        %v3148 = vpop.f32.mrb[0].mxu0
        %v3149 = vadd.f32 %v2924, %v3148
        %v3150 = vpop.f32.mrb[0].mxu0
        %3151 = vmatprep.mubr.f32.mxu0 0.0
        %3152 = vmatmul.mubr.f32.gmra.mrb[0].mxu0 %v2739
        %v3153 = vpop.f32.mrb[0].mxu0
        %v3154 = vadd.f32 %v2929, %v3153
        %v3155 = vpop.f32.mrb[0].mxu0
        %3156 = vmatprep.mubr.f32.mxu0 0.0
        %3157 = vmatmul.mubr.f32.gmra.mrb[0].mxu0 %v2742
        %v3158 = vpop.f32.mrb[0].mxu0
        %v3159 = vadd.f32 %v2934, %v3158
        %v3160 = vpop.f32.mrb[0].mxu0
        %3161 = vmatprep.mubr.f32.mxu0 0.0
        %3162 = vmatmul.mubr.f32.gmra.mrb[0].mxu0 %v2745
        %v3163 = vpop.f32.mrb[0].mxu0
        %v3164 = vadd.f32 %v2939, %v3163
        %v3165 = vpop.f32.mrb[0].mxu0
        %3166 = vmatprep.mubr.f32.mxu0 0.0
        %3167 = vmatmul.mubr.f32.gmra.mrb[0].mxu0 %v2748
        %v3168 = vpop.f32.mrb[0].mxu0
        %v3169 = vadd.f32 %v2944, %v3168
        %v3170 = vpop.f32.mrb[0].mxu0
        %3171 = vmatprep.mubr.f32.mxu0 0.0
        %3172 = vmatmul.mubr.f32.gmra.mrb[0].mxu0 %v2751
        %v3173 = vpop.f32.mrb[0].mxu0
        %v3174 = vadd.f32 %v2949, %v3173
        %v3175 = vpop.f32.mrb[0].mxu0
        %3176 = vmatprep.mubr.f32.mxu0 0.0
        %3177 = vmatmul.mubr.f32.gmra.mrb[0].mxu0 %v2754
        %v3178 = vpop.f32.mrb[0].mxu0
        %v3179 = vadd.f32 %v2954, %v3178
        %v3180 = vpop.f32.mrb[0].mxu0
        %3181 = vmatprep.mubr.f32.mxu0 0.0
        %3182 = vmatmul.mubr.f32.gmra.mrb[0].mxu0 %v2757
        %v3183 = vpop.f32.mrb[0].mxu0
        %v3184 = vadd.f32 %v2959, %v3183
        %v3185 = vpop.f32.mrb[0].mxu0
        %3186 = vmatprep.mubr.f32.mxu0 0.0
        %3187 = vmatmul.mubr.f32.gmra.mrb[0].mxu0 %v2760
        %v3188 = vpop.f32.mrb[0].mxu0
        %v3189 = vadd.f32 %v2964, %v3188
        %v3190 = vpop.f32.mrb[0].mxu0
        %3191 = vmatprep.mubr.f32.mxu0 0.0
        %3192 = vmatmul.mubr.f32.gmra.mrb[0].mxu0 %v2763
        %v3193 = vpop.f32.mrb[0].mxu0
        %v3194 = vadd.f32 %v2969, %v3193
        %v3195 = vpop.f32.mrb[0].mxu0
        %3196 = vmatprep.mubr.f32.mxu0 0.0
        %3197 = vmatmul.mubr.f32.gmra.mrb[0].mxu0 %v2766
        %v3198 = vpop.f32.mrb[0].mxu0
        %v3199 = vadd.f32 %v2974, %v3198
        %v3200 = vpop.f32.mrb[0].mxu0
        %3201 = vmatprep.mubr.f32.mxu0 0.0
        %3202 = vmatmul.mubr.f32.gmra.mrb[0].mxu0 %v2769
        %v3203 = vpop.f32.mrb[0].mxu0
        %v3204 = vadd.f32 %v2979, %v3203
        %v3205 = vpop.f32.mrb[0].mxu0
        %3206 = vmatprep.mubr.f32.mxu0 0.0
        %3207 = vmatmul.mubr.f32.gmra.mrb[0].mxu0 %v2772
        %v3208 = vpop.f32.mrb[0].mxu0
        %v3209 = vadd.f32 %v2984, %v3208
        %v3210 = vpop.f32.mrb[0].mxu0
        %3211 = vmatprep.mubr.f32.mxu0 0.0
        %3212 = vmatmul.mubr.f32.gmra.mrb[0].mxu0 %v2775
        %v3213 = vpop.f32.mrb[0].mxu0
        %v3214 = vadd.f32 %v2989, %v3213
        %v3215 = vpop.f32.mrb[0].mxu0
        %3216 = vmatprep.mubr.f32.mxu0 0.0
        %3217 = vmatmul.mubr.f32.gmra.mrb[0].mxu0 %v2778
        %v3218 = vpop.f32.mrb[0].mxu0
        %v3219 = vadd.f32 %v2994, %v3218
        %v3220 = vpop.f32.mrb[0].mxu0
        %3221 = vmatprep.mubr.f32.mxu0 0.0
        %3222 = vmatmul.mubr.f32.gmra.mrb[0].mxu0 %v2781
        %v3223 = vpop.f32.mrb[0].mxu0
        %v3224 = vadd.f32 %v2999, %v3223
        %v3225 = vpop.f32.mrb[0].mxu0
        %3226 = vmatprep.mubr.f32.mxu0 0.0
        %3227 = vmatmul.mubr.f32.gmra.mrb[0].mxu0 %v2784
        %v3228 = vpop.f32.mrb[0].mxu0
        %v3229 = vadd.f32 %v3004, %v3228
        %v3230 = vpop.f32.mrb[0].mxu0
        %3231 = vmatprep.mubr.f32.mxu0 0.0
        %3232 = vmatmul.mubr.f32.gmra.mrb[0].mxu0 %v2787
        %v3233 = vpop.f32.mrb[0].mxu0
        %v3234 = vadd.f32 %v3009, %v3233
        %v3235 = vpop.f32.mrb[0].mxu0
        %3236 = vmatprep.mubr.f32.mxu0 0.0
        %3237 = vmatmul.mubr.f32.gmra.mrb[0].mxu0 %v2790
        %v3238 = vpop.f32.mrb[0].mxu0
        %v3239 = vadd.f32 %v3014, %v3238
        %v3240 = vpop.f32.mrb[0].mxu0
        %3241 = vdwg.mxu0
        %v3242 = vld [vmem:[%s5] sm:$0x1]
        %v3243 = vld [vmem:[%s6] sm:$0x1]
        %v3244 = vadd.s32 %v460, 32
        %v3245 = vadd.s32 %v460, 40
        %v3246 = vadd.s32 %v460, 48
        %v3247 = vadd.s32 %v460, 56
        %v3248 = vmul.u32 %v465, 2
        %vm3249 = vcmp.ge.s32.totalorder %v460, %v3248
        %vm3250 = vcmp.ge.s32.totalorder %v461, %v3248
        %vm3251 = vcmp.ge.s32.totalorder %v462, %v3248
        %vm3252 = vcmp.ge.s32.totalorder %v463, %v3248
        %vm3253 = vcmp.ge.s32.totalorder %v3244, %v3248
        %vm3254 = vcmp.ge.s32.totalorder %v3245, %v3248
        %vm3255 = vcmp.ge.s32.totalorder %v3246, %v3248
        %vm3256 = vcmp.ge.s32.totalorder %v3247, %v3248
        %v3257 = vadd.s32 %v3248, 2
        %vm3258 = vcmp.lt.s32.totalorder %v460, %v3257
        %vm3259 = vcmp.lt.s32.totalorder %v461, %v3257
        %vm3260 = vcmp.lt.s32.totalorder %v462, %v3257
        %vm3261 = vcmp.lt.s32.totalorder %v463, %v3257
        %vm3262 = vcmp.lt.s32.totalorder %v3244, %v3257
        %vm3263 = vcmp.lt.s32.totalorder %v3245, %v3257
        %vm3264 = vcmp.lt.s32.totalorder %v3246, %v3257
        %vm3265 = vcmp.lt.s32.totalorder %v3247, %v3257
        %vm3266 = vmand %vm3249, %vm3258
        %vm3267 = vmand %vm3250, %vm3259
        %vm3268 = vmand %vm3251, %vm3260
        %vm3269 = vmand %vm3252, %vm3261
        %vm3270 = vmand %vm3253, %vm3262
        %vm3271 = vmand %vm3254, %vm3263
        %vm3272 = vmand %vm3255, %vm3264
        %vm3273 = vmand %vm3256, %vm3265
        %v3274 = vsel %vm3266, 1, 0
        %v3275 = vsel %vm3267, 1, 0
        %v3276 = vsel %vm3268, 1, 0
        %v3277 = vsel %vm3269, 1, 0
        %v3278 = vsel %vm3270, 1, 0
        %v3279 = vsel %vm3271, 1, 0
        %v3280 = vsel %vm3272, 1, 0
        %v3281 = vsel %vm3273, 1, 0
        %v3282 = vcvt.s32.f32 %v3274
        %v3283 = vcvt.s32.f32 %v3275
        %v3284 = vcvt.s32.f32 %v3276
        %v3285 = vcvt.s32.f32 %v3277
        %v3286 = vcvt.s32.f32 %v3278
        %v3287 = vcvt.s32.f32 %v3279
        %v3288 = vcvt.s32.f32 %v3280
        %v3289 = vcvt.s32.f32 %v3281
        %v3290 = vmul.u32 %v460, 2
        %v3291 = vmul.u32 %v461, 2
        %v3292 = vmul.u32 %v462, 2
        %v3293 = vmul.u32 %v463, 2
        %vm3294 = vcmp.ge.s32.totalorder %v465, %v3290
        %vm3295 = vcmp.ge.s32.totalorder %v465, %v3291
        %vm3296 = vcmp.ge.s32.totalorder %v465, %v3292
        %vm3297 = vcmp.ge.s32.totalorder %v465, %v3293
        %v3298 = vadd.s32 %v3290, 2
        %v3299 = vadd.s32 %v3291, 2
        %v3300 = vadd.s32 %v3292, 2
        %v3301 = vadd.s32 %v3293, 2
        %vm3302 = vcmp.lt.s32.totalorder %v465, %v3298
        %vm3303 = vcmp.lt.s32.totalorder %v465, %v3299
        %vm3304 = vcmp.lt.s32.totalorder %v465, %v3300
        %vm3305 = vcmp.lt.s32.totalorder %v465, %v3301
        %vm3306 = vmand %vm3294, %vm3302
        %vm3307 = vmand %vm3295, %vm3303
        %vm3308 = vmand %vm3296, %vm3304
        %vm3309 = vmand %vm3297, %vm3305
        %v3310 = vsel %vm3306, 1, 0
        %v3311 = vsel %vm3307, 1, 0
        %v3312 = vsel %vm3308, 1, 0
        %v3313 = vsel %vm3309, 1, 0
        %v3314 = vcvt.s32.f32 %v3310
        %v3315 = vcvt.s32.f32 %v3311
        %v3316 = vcvt.s32.f32 %v3312
        %v3317 = vcvt.s32.f32 %v3313
        %v3318 = vsel %vm2491, %v3084, 0.0
        %v3319 = vsel %vm2491, %v3089, 0.0
        %v3320 = vadd.f32 %v3318, %v3319
        %v3321 = vsel %vm2491, %v3094, 0.0
        %v3322 = vadd.f32 %v3320, %v3321
        %v3323 = vsel %vm2491, %v3099, 0.0
        %v3324 = vadd.f32 %v3322, %v3323
        %v3325 = vsel %vm2491, %v3104, 0.0
        %v3326 = vadd.f32 %v3324, %v3325
        %v3327 = vsel %vm2491, %v3109, 0.0
        %v3328 = vadd.f32 %v3326, %v3327
        %v3329 = vsel %vm2491, %v3114, 0.0
        %v3330 = vadd.f32 %v3328, %v3329
        %v3331 = vsel %vm2491, %v3119, 0.0
        %v3332 = vadd.f32 %v3330, %v3331
        %v3333 = vsel %vm2491, %v3124, 0.0
        %v3334 = vadd.f32 %v3332, %v3333
        %v3335 = vsel %vm2491, %v3129, 0.0
        %v3336 = vadd.f32 %v3334, %v3335
        %v3337 = vsel %vm2491, %v3134, 0.0
        %v3338 = vadd.f32 %v3336, %v3337
        %v3339 = vsel %vm2491, %v3139, 0.0
        %v3340 = vadd.f32 %v3338, %v3339
        %v3341 = vsel %vm2491, %v3144, 0.0
        %v3342 = vadd.f32 %v3340, %v3341
        %v3343 = vsel %vm2491, %v3149, 0.0
        %v3344 = vadd.f32 %v3342, %v3343
        %v3345 = vsel %vm2491, %v3154, 0.0
        %v3346 = vadd.f32 %v3344, %v3345
        %v3347 = vsel %vm2491, %v3159, 0.0
        %v3348 = vadd.f32 %v3346, %v3347
        %v3349 = vsel %vm2491, %v3164, 0.0
        %v3350 = vadd.f32 %v3348, %v3349
        %v3351 = vsel %vm2491, %v3169, 0.0
        %v3352 = vadd.f32 %v3350, %v3351
        %v3353 = vsel %vm2491, %v3174, 0.0
        %v3354 = vadd.f32 %v3352, %v3353
        %v3355 = vsel %vm2491, %v3179, 0.0
        %v3356 = vadd.f32 %v3354, %v3355
        %v3357 = vsel %vm2491, %v3184, 0.0
        %v3358 = vadd.f32 %v3356, %v3357
        %v3359 = vsel %vm2491, %v3189, 0.0
        %v3360 = vadd.f32 %v3358, %v3359
        %v3361 = vsel %vm2491, %v3194, 0.0
        %v3362 = vadd.f32 %v3360, %v3361
        %v3363 = vsel %vm2491, %v3199, 0.0
        %v3364 = vadd.f32 %v3362, %v3363
        %v3365 = vsel %vm2491, %v3204, 0.0
        %v3366 = vadd.f32 %v3364, %v3365
        %v3367 = vsel %vm2491, %v3209, 0.0
        %v3368 = vadd.f32 %v3366, %v3367
        %v3369 = vsel %vm2491, %v3214, 0.0
        %v3370 = vadd.f32 %v3368, %v3369
        %v3371 = vsel %vm2491, %v3219, 0.0
        %v3372 = vadd.f32 %v3370, %v3371
        %v3373 = vsel %vm2491, %v3224, 0.0
        %v3374 = vadd.f32 %v3372, %v3373
        %v3375 = vsel %vm2491, %v3229, 0.0
        %v3376 = vadd.f32 %v3374, %v3375
        %v3377 = vsel %vm2491, %v3234, 0.0
        %v3378 = vadd.f32 %v3376, %v3377
        %v3379 = vsel %vm2491, %v3239, 0.0
        %v3380 = vadd.f32 %v3378, %v3379
        %v3381 = vrot.slane %v3380, 4
        %v3382 = vadd.f32 %v3380, %v3381
        %v3383 = vrot.slane %v3382, 2
        %v3384 = vadd.f32 %v3382, %v3383
        %v3385 = vrot.slane %v3384, 1
        %v3386 = vadd.f32 %v3384, %v3385
        %v3388 = vsel %vm2491, %v3386, 0
        %3390 = vmatprep.subr.mxu0 0.0
        %3391 = vmatpush1.msra.mxu0 %v3282
        %3392 = vmatprep.subr.mxu0 0.0
        %3393 = vmatpush1.msra.mxu0 %v3283
        %3394 = vmatprep.subr.mxu0 0.0
        %3395 = vmatpush1.msra.mxu0 %v3284
        %3396 = vmatprep.subr.mxu0 0.0
        %3397 = vmatpush1.msra.mxu0 %v3285
        %3398 = vmatprep.subr.mxu0 0.0
        %3399 = vmatpush1.msra.mxu0 %v3286
        %3400 = vmatprep.subr.mxu0 0.0
        %3401 = vmatpush1.msra.mxu0 %v3287
        %3402 = vmatprep.subr.mxu0 0.0
        %3403 = vmatpush1.msra.mxu0 %v3288
        %3404 = vmatprep.subr.mxu0 0.0
        %3405 = vmatpush1.msra.mxu0 %v3289
        %3406 = vmatprep.subr.mxu0 0.0
        %3407 = vmatpush1.msra.mxu0 0.0
        %3408 = vmatprep.subr.mxu0 0.0
        %3409 = vmatpush1.msra.mxu0 0.0
        %3410 = vmatprep.subr.mxu0 0.0
        %3411 = vmatpush1.msra.mxu0 0.0
        %3412 = vmatprep.subr.mxu0 0.0
        %3413 = vmatpush1.msra.mxu0 0.0
        %3414 = vmatprep.subr.mxu0 0.0
        %3415 = vmatpush1.msra.mxu0 0.0
        %3416 = vmatprep.subr.mxu0 0.0
        %3417 = vmatpush1.msra.mxu0 0.0
        %3418 = vmatprep.subr.mxu0 0.0
        %3419 = vmatpush1.msra.mxu0 0.0
        %3420 = vmatprep.subr.mxu0 0.0
        %3421 = vmatpush1.msra.mxu0 0.0
        %3422 = vmatprep.subr.mxu0 0.0
        %3423 = vmatpush1.msra.mxu0 0.0
        %3424 = vmatprep.subr.mxu0 0.0
        %3425 = vmatpush1.msra.mxu0 0.0
        %3426 = vmatprep.subr.mxu0 0.0
        %3427 = vmatpush1.msra.mxu0 0.0
        %3428 = vmatprep.subr.mxu0 0.0
        %3429 = vmatpush1.msra.mxu0 0.0
        %3430 = vmatprep.subr.mxu0 0.0
        %3431 = vmatpush1.msra.mxu0 0.0
        %3432 = vmatprep.subr.mxu0 0.0
        %3433 = vmatpush1.msra.mxu0 0.0
        %3434 = vmatprep.subr.mxu0 0.0
        %3435 = vmatpush1.msra.mxu0 0.0
        %3436 = vmatprep.subr.mxu0 0.0
        %3437 = vmatpush1.msra.mxu0 0.0
        %3438 = vmatprep.subr.mxu0 0.0
        %3439 = vmatpush1.msra.mxu0 0.0
        %3440 = vmatprep.subr.mxu0 0.0
        %3441 = vmatpush1.msra.mxu0 0.0
        %3442 = vmatprep.subr.mxu0 0.0
        %3443 = vmatpush1.msra.mxu0 0.0
        %3444 = vmatprep.subr.mxu0 0.0
        %3445 = vmatpush1.msra.mxu0 0.0
        %3446 = vmatprep.subr.mxu0 0.0
        %3447 = vmatpush1.msra.mxu0 0.0
        %3448 = vmatprep.subr.mxu0 0.0
        %3449 = vmatpush1.msra.mxu0 0.0
        %3450 = vmatprep.subr.mxu0 0.0
        %3451 = vmatpush1.msra.mxu0 0.0
        %3452 = vmatprep.subr.mxu0 0.0
        %3453 = vmatpush1.msra.mxu0 0.0
        %3454 = vmatprep.mubr.f32.mxu0 0.0
        %3455 = vmatmul.mubr.f32.gmra.mrb[0].mxu0 %v3388
        %v3456 = vpop.f32.mrb[0].mxu0
        %v3457 = vadd.f32 0.0, %v3456
        %v3458 = vpop.f32.mrb[0].mxu0
        %3459 = vdwg.mxu0
        %v3460 = vrcp.pop 512.0
        %v3461 = vmul.f32 %v3457, %v3460
        %v3463 = vsel %vm511, %v3461, 0
        %3465 = vmatprep.subr.mxu0 0.0
        %3466 = vmatpush1.msra.mxu0 %v3314
        %3467 = vmatprep.subr.mxu0 0.0
        %3468 = vmatpush1.msra.mxu0 %v3315
        %3469 = vmatprep.subr.mxu0 0.0
        %3470 = vmatpush1.msra.mxu0 %v3316
        %3471 = vmatprep.subr.mxu0 0.0
        %3472 = vmatpush1.msra.mxu0 %v3317
        %3473 = vmatprep.subr.mxu0 0.0
        %3474 = vmatpush1.msra.mxu0 0.0
        %3475 = vmatprep.subr.mxu0 0.0
        %3476 = vmatpush1.msra.mxu0 0.0
        %3477 = vmatprep.subr.mxu0 0.0
        %3478 = vmatpush1.msra.mxu0 0.0
        %3479 = vmatprep.subr.mxu0 0.0
        %3480 = vmatpush1.msra.mxu0 0.0
        %3481 = vmatprep.subr.mxu0 0.0
        %3482 = vmatpush1.msra.mxu0 0.0
        %3483 = vmatprep.subr.mxu0 0.0
        %3484 = vmatpush1.msra.mxu0 0.0
        %3485 = vmatprep.subr.mxu0 0.0
        %3486 = vmatpush1.msra.mxu0 0.0
        %3487 = vmatprep.subr.mxu0 0.0
        %3488 = vmatpush1.msra.mxu0 0.0
        %3489 = vmatprep.subr.mxu0 0.0
        %3490 = vmatpush1.msra.mxu0 0.0
        %3491 = vmatprep.subr.mxu0 0.0
        %3492 = vmatpush1.msra.mxu0 0.0
        %3493 = vmatprep.subr.mxu0 0.0
        %3494 = vmatpush1.msra.mxu0 0.0
        %3495 = vmatprep.subr.mxu0 0.0
        %3496 = vmatpush1.msra.mxu0 0.0
        %3497 = vmatprep.subr.mxu0 0.0
        %3498 = vmatpush1.msra.mxu0 0.0
        %3499 = vmatprep.subr.mxu0 0.0
        %3500 = vmatpush1.msra.mxu0 0.0
        %3501 = vmatprep.subr.mxu0 0.0
        %3502 = vmatpush1.msra.mxu0 0.0
        %3503 = vmatprep.subr.mxu0 0.0
        %3504 = vmatpush1.msra.mxu0 0.0
        %3505 = vmatprep.subr.mxu0 0.0
        %3506 = vmatpush1.msra.mxu0 0.0
        %3507 = vmatprep.subr.mxu0 0.0
        %3508 = vmatpush1.msra.mxu0 0.0
        %3509 = vmatprep.subr.mxu0 0.0
        %3510 = vmatpush1.msra.mxu0 0.0
        %3511 = vmatprep.subr.mxu0 0.0
        %3512 = vmatpush1.msra.mxu0 0.0
        %3513 = vmatprep.subr.mxu0 0.0
        %3514 = vmatpush1.msra.mxu0 0.0
        %3515 = vmatprep.subr.mxu0 0.0
        %3516 = vmatpush1.msra.mxu0 0.0
        %3517 = vmatprep.subr.mxu0 0.0
        %3518 = vmatpush1.msra.mxu0 0.0
        %3519 = vmatprep.subr.mxu0 0.0
        %3520 = vmatpush1.msra.mxu0 0.0
        %3521 = vmatprep.subr.mxu0 0.0
        %3522 = vmatpush1.msra.mxu0 0.0
        %3523 = vmatprep.subr.mxu0 0.0
        %3524 = vmatpush1.msra.mxu0 0.0
        %3525 = vmatprep.subr.mxu0 0.0
        %3526 = vmatpush1.msra.mxu0 0.0
        %3527 = vmatprep.subr.mxu0 0.0
        %3528 = vmatpush1.msra.mxu0 0.0
        %3529 = vmatprep.mubr.f32.mxu0 0.0
        %3530 = vmatmul.mubr.f32.gmra.mrb[0].mxu0 %v3463
        %v3531 = vpop.f32.mrb[0].mxu0
        %v3532 = vadd.f32 0.0, %v3531
        %v3533 = vpop.f32.mrb[0].mxu0
        %3534 = vdwg.mxu0
        %v3535 = vlaneseq
        %v3536 = vshrl.u32 %v3535, 7
        %v3537 = vsub.s32 0, %v3536
        %v3538 = vrot.slane %v3532, %v3537
        %v3539 = vsub.f32 %v3084, %v3538
        %v3540 = vsub.f32 %v3089, %v3538
        %v3541 = vsub.f32 %v3094, %v3538
        %v3542 = vsub.f32 %v3099, %v3538
        %v3543 = vsub.f32 %v3104, %v3538
        %v3544 = vsub.f32 %v3109, %v3538
        %v3545 = vsub.f32 %v3114, %v3538
        %v3546 = vsub.f32 %v3119, %v3538
        %v3547 = vsub.f32 %v3124, %v3538
        %v3548 = vsub.f32 %v3129, %v3538
        %v3549 = vsub.f32 %v3134, %v3538
        %v3550 = vsub.f32 %v3139, %v3538
        %v3551 = vsub.f32 %v3144, %v3538
        %v3552 = vsub.f32 %v3149, %v3538
        %v3553 = vsub.f32 %v3154, %v3538
        %v3554 = vsub.f32 %v3159, %v3538
        %v3555 = vsub.f32 %v3164, %v3538
        %v3556 = vsub.f32 %v3169, %v3538
        %v3557 = vsub.f32 %v3174, %v3538
        %v3558 = vsub.f32 %v3179, %v3538
        %v3559 = vsub.f32 %v3184, %v3538
        %v3560 = vsub.f32 %v3189, %v3538
        %v3561 = vsub.f32 %v3194, %v3538
        %v3562 = vsub.f32 %v3199, %v3538
        %v3563 = vsub.f32 %v3204, %v3538
        %v3564 = vsub.f32 %v3209, %v3538
        %v3565 = vsub.f32 %v3214, %v3538
        %v3566 = vsub.f32 %v3219, %v3538
        %v3567 = vsub.f32 %v3224, %v3538
        %v3568 = vsub.f32 %v3229, %v3538
        %v3569 = vsub.f32 %v3234, %v3538
        %v3570 = vsub.f32 %v3239, %v3538
        %v3571 = vmul.f32 %v3539, %v3539
        %v3572 = vmul.f32 %v3540, %v3540
        %v3573 = vmul.f32 %v3541, %v3541
        %v3574 = vmul.f32 %v3542, %v3542
        %v3575 = vmul.f32 %v3543, %v3543
        %v3576 = vmul.f32 %v3544, %v3544
        %v3577 = vmul.f32 %v3545, %v3545
        %v3578 = vmul.f32 %v3546, %v3546
        %v3579 = vmul.f32 %v3547, %v3547
        %v3580 = vmul.f32 %v3548, %v3548
        %v3581 = vmul.f32 %v3549, %v3549
        %v3582 = vmul.f32 %v3550, %v3550
        %v3583 = vmul.f32 %v3551, %v3551
        %v3584 = vmul.f32 %v3552, %v3552
        %v3585 = vmul.f32 %v3553, %v3553
        %v3586 = vmul.f32 %v3554, %v3554
        %v3587 = vmul.f32 %v3555, %v3555
        %v3588 = vmul.f32 %v3556, %v3556
        %v3589 = vmul.f32 %v3557, %v3557
        %v3590 = vmul.f32 %v3558, %v3558
        %v3591 = vmul.f32 %v3559, %v3559
        %v3592 = vmul.f32 %v3560, %v3560
        %v3593 = vmul.f32 %v3561, %v3561
        %v3594 = vmul.f32 %v3562, %v3562
        %v3595 = vmul.f32 %v3563, %v3563
        %v3596 = vmul.f32 %v3564, %v3564
        %v3597 = vmul.f32 %v3565, %v3565
        %v3598 = vmul.f32 %v3566, %v3566
        %v3599 = vmul.f32 %v3567, %v3567
        %v3600 = vmul.f32 %v3568, %v3568
        %v3601 = vmul.f32 %v3569, %v3569
        %v3602 = vmul.f32 %v3570, %v3570
        %v3603 = vsel %vm2491, %v3571, 0.0
        %v3604 = vsel %vm2491, %v3572, 0.0
        %v3605 = vadd.f32 %v3603, %v3604
        %v3606 = vsel %vm2491, %v3573, 0.0
        %v3607 = vadd.f32 %v3605, %v3606
        %v3608 = vsel %vm2491, %v3574, 0.0
        %v3609 = vadd.f32 %v3607, %v3608
        %v3610 = vsel %vm2491, %v3575, 0.0
        %v3611 = vadd.f32 %v3609, %v3610
        %v3612 = vsel %vm2491, %v3576, 0.0
        %v3613 = vadd.f32 %v3611, %v3612
        %v3614 = vsel %vm2491, %v3577, 0.0
        %v3615 = vadd.f32 %v3613, %v3614
        %v3616 = vsel %vm2491, %v3578, 0.0
        %v3617 = vadd.f32 %v3615, %v3616
        %v3618 = vsel %vm2491, %v3579, 0.0
        %v3619 = vadd.f32 %v3617, %v3618
        %v3620 = vsel %vm2491, %v3580, 0.0
        %v3621 = vadd.f32 %v3619, %v3620
        %v3622 = vsel %vm2491, %v3581, 0.0
        %v3623 = vadd.f32 %v3621, %v3622
        %v3624 = vsel %vm2491, %v3582, 0.0
        %v3625 = vadd.f32 %v3623, %v3624
        %v3626 = vsel %vm2491, %v3583, 0.0
        %v3627 = vadd.f32 %v3625, %v3626
        %v3628 = vsel %vm2491, %v3584, 0.0
        %v3629 = vadd.f32 %v3627, %v3628
        %v3630 = vsel %vm2491, %v3585, 0.0
        %v3631 = vadd.f32 %v3629, %v3630
        %v3632 = vsel %vm2491, %v3586, 0.0
        %v3633 = vadd.f32 %v3631, %v3632
        %v3634 = vsel %vm2491, %v3587, 0.0
        %v3635 = vadd.f32 %v3633, %v3634
        %v3636 = vsel %vm2491, %v3588, 0.0
        %v3637 = vadd.f32 %v3635, %v3636
        %v3638 = vsel %vm2491, %v3589, 0.0
        %v3639 = vadd.f32 %v3637, %v3638
        %v3640 = vsel %vm2491, %v3590, 0.0
        %v3641 = vadd.f32 %v3639, %v3640
        %v3642 = vsel %vm2491, %v3591, 0.0
        %v3643 = vadd.f32 %v3641, %v3642
        %v3644 = vsel %vm2491, %v3592, 0.0
        %v3645 = vadd.f32 %v3643, %v3644
        %v3646 = vsel %vm2491, %v3593, 0.0
        %v3647 = vadd.f32 %v3645, %v3646
        %v3648 = vsel %vm2491, %v3594, 0.0
        %v3649 = vadd.f32 %v3647, %v3648
        %v3650 = vsel %vm2491, %v3595, 0.0
        %v3651 = vadd.f32 %v3649, %v3650
        %v3652 = vsel %vm2491, %v3596, 0.0
        %v3653 = vadd.f32 %v3651, %v3652
        %v3654 = vsel %vm2491, %v3597, 0.0
        %v3655 = vadd.f32 %v3653, %v3654
        %v3656 = vsel %vm2491, %v3598, 0.0
        %v3657 = vadd.f32 %v3655, %v3656
        %v3658 = vsel %vm2491, %v3599, 0.0
        %v3659 = vadd.f32 %v3657, %v3658
        %v3660 = vsel %vm2491, %v3600, 0.0
        %v3661 = vadd.f32 %v3659, %v3660
        %v3662 = vsel %vm2491, %v3601, 0.0
        %v3663 = vadd.f32 %v3661, %v3662
        %v3664 = vsel %vm2491, %v3602, 0.0
        %v3665 = vadd.f32 %v3663, %v3664
        %v3666 = vrot.slane %v3665, 4
        %v3667 = vadd.f32 %v3665, %v3666
        %v3668 = vrot.slane %v3667, 2
        %v3669 = vadd.f32 %v3667, %v3668
        %v3670 = vrot.slane %v3669, 1
        %v3671 = vadd.f32 %v3669, %v3670
        %v3673 = vsel %vm2491, %v3671, 0
        %3675 = vmatprep.subr.mxu0 0.0
        %3676 = vmatpush1.msra.mxu0 %v3282
        %3677 = vmatprep.subr.mxu0 0.0
        %3678 = vmatpush1.msra.mxu0 %v3283
        %3679 = vmatprep.subr.mxu0 0.0
        %3680 = vmatpush1.msra.mxu0 %v3284
        %3681 = vmatprep.subr.mxu0 0.0
        %3682 = vmatpush1.msra.mxu0 %v3285
        %3683 = vmatprep.subr.mxu0 0.0
        %3684 = vmatpush1.msra.mxu0 %v3286
        %3685 = vmatprep.subr.mxu0 0.0
        %3686 = vmatpush1.msra.mxu0 %v3287
        %3687 = vmatprep.subr.mxu0 0.0
        %3688 = vmatpush1.msra.mxu0 %v3288
        %3689 = vmatprep.subr.mxu0 0.0
        %3690 = vmatpush1.msra.mxu0 %v3289
        %3691 = vmatprep.subr.mxu0 0.0
        %3692 = vmatpush1.msra.mxu0 0.0
        %3693 = vmatprep.subr.mxu0 0.0
        %3694 = vmatpush1.msra.mxu0 0.0
        %3695 = vmatprep.subr.mxu0 0.0
        %3696 = vmatpush1.msra.mxu0 0.0
        %3697 = vmatprep.subr.mxu0 0.0
        %3698 = vmatpush1.msra.mxu0 0.0
        %3699 = vmatprep.subr.mxu0 0.0
        %3700 = vmatpush1.msra.mxu0 0.0
        %3701 = vmatprep.subr.mxu0 0.0
        %3702 = vmatpush1.msra.mxu0 0.0
        %3703 = vmatprep.subr.mxu0 0.0
        %3704 = vmatpush1.msra.mxu0 0.0
        %3705 = vmatprep.subr.mxu0 0.0
        %3706 = vmatpush1.msra.mxu0 0.0
        %3707 = vmatprep.subr.mxu0 0.0
        %3708 = vmatpush1.msra.mxu0 0.0
        %3709 = vmatprep.subr.mxu0 0.0
        %3710 = vmatpush1.msra.mxu0 0.0
        %3711 = vmatprep.subr.mxu0 0.0
        %3712 = vmatpush1.msra.mxu0 0.0
        %3713 = vmatprep.subr.mxu0 0.0
        %3714 = vmatpush1.msra.mxu0 0.0
        %3715 = vmatprep.subr.mxu0 0.0
        %3716 = vmatpush1.msra.mxu0 0.0
        %3717 = vmatprep.subr.mxu0 0.0
        %3718 = vmatpush1.msra.mxu0 0.0
        %3719 = vmatprep.subr.mxu0 0.0
        %3720 = vmatpush1.msra.mxu0 0.0
        %3721 = vmatprep.subr.mxu0 0.0
        %3722 = vmatpush1.msra.mxu0 0.0
        %3723 = vmatprep.subr.mxu0 0.0
        %3724 = vmatpush1.msra.mxu0 0.0
        %3725 = vmatprep.subr.mxu0 0.0
        %3726 = vmatpush1.msra.mxu0 0.0
        %3727 = vmatprep.subr.mxu0 0.0
        %3728 = vmatpush1.msra.mxu0 0.0
        %3729 = vmatprep.subr.mxu0 0.0
        %3730 = vmatpush1.msra.mxu0 0.0
        %3731 = vmatprep.subr.mxu0 0.0
        %3732 = vmatpush1.msra.mxu0 0.0
        %3733 = vmatprep.subr.mxu0 0.0
        %3734 = vmatpush1.msra.mxu0 0.0
        %3735 = vmatprep.subr.mxu0 0.0
        %3736 = vmatpush1.msra.mxu0 0.0
        %3737 = vmatprep.subr.mxu0 0.0
        %3738 = vmatpush1.msra.mxu0 0.0
        %3739 = vmatprep.mubr.f32.mxu0 0.0
        %3740 = vmatmul.mubr.f32.gmra.mrb[0].mxu0 %v3673
        %v3741 = vpop.f32.mrb[0].mxu0
        %v3742 = vadd.f32 0.0, %v3741
        %v3743 = vpop.f32.mrb[0].mxu0
        %3744 = vdwg.mxu0
        %v3745 = vmul.f32 %v3742, %v3460
        %v3746 = vadd.f32 %v3745, 1e-05
        %v3747 = vrsqrt.pop %v3746
        %v3749 = vsel %vm511, %v3747, 0
        %3751 = vmatprep.subr.mxu0 0.0
        %3752 = vmatpush1.msra.mxu0 %v3314
        %3753 = vmatprep.subr.mxu0 0.0
        %3754 = vmatpush1.msra.mxu0 %v3315
        %3755 = vmatprep.subr.mxu0 0.0
        %3756 = vmatpush1.msra.mxu0 %v3316
        %3757 = vmatprep.subr.mxu0 0.0
        %3758 = vmatpush1.msra.mxu0 %v3317
        %3759 = vmatprep.subr.mxu0 0.0
        %3760 = vmatpush1.msra.mxu0 0.0
        %3761 = vmatprep.subr.mxu0 0.0
        %3762 = vmatpush1.msra.mxu0 0.0
        %3763 = vmatprep.subr.mxu0 0.0
        %3764 = vmatpush1.msra.mxu0 0.0
        %3765 = vmatprep.subr.mxu0 0.0
        %3766 = vmatpush1.msra.mxu0 0.0
        %3767 = vmatprep.subr.mxu0 0.0
        %3768 = vmatpush1.msra.mxu0 0.0
        %3769 = vmatprep.subr.mxu0 0.0
        %3770 = vmatpush1.msra.mxu0 0.0
        %3771 = vmatprep.subr.mxu0 0.0
        %3772 = vmatpush1.msra.mxu0 0.0
        %3773 = vmatprep.subr.mxu0 0.0
        %3774 = vmatpush1.msra.mxu0 0.0
        %3775 = vmatprep.subr.mxu0 0.0
        %3776 = vmatpush1.msra.mxu0 0.0
        %3777 = vmatprep.subr.mxu0 0.0
        %3778 = vmatpush1.msra.mxu0 0.0
        %3779 = vmatprep.subr.mxu0 0.0
        %3780 = vmatpush1.msra.mxu0 0.0
        %3781 = vmatprep.subr.mxu0 0.0
        %3782 = vmatpush1.msra.mxu0 0.0
        %3783 = vmatprep.subr.mxu0 0.0
        %3784 = vmatpush1.msra.mxu0 0.0
        %3785 = vmatprep.subr.mxu0 0.0
        %3786 = vmatpush1.msra.mxu0 0.0
        %3787 = vmatprep.subr.mxu0 0.0
        %3788 = vmatpush1.msra.mxu0 0.0
        %3789 = vmatprep.subr.mxu0 0.0
        %3790 = vmatpush1.msra.mxu0 0.0
        %3791 = vmatprep.subr.mxu0 0.0
        %3792 = vmatpush1.msra.mxu0 0.0
        %3793 = vmatprep.subr.mxu0 0.0
        %3794 = vmatpush1.msra.mxu0 0.0
        %3795 = vmatprep.subr.mxu0 0.0
        %3796 = vmatpush1.msra.mxu0 0.0
        %3797 = vmatprep.subr.mxu0 0.0
        %3798 = vmatpush1.msra.mxu0 0.0
        %3799 = vmatprep.subr.mxu0 0.0
        %3800 = vmatpush1.msra.mxu0 0.0
        %3801 = vmatprep.subr.mxu0 0.0
        %3802 = vmatpush1.msra.mxu0 0.0
        %3803 = vmatprep.subr.mxu0 0.0
        %3804 = vmatpush1.msra.mxu0 0.0
        %3805 = vmatprep.subr.mxu0 0.0
        %3806 = vmatpush1.msra.mxu0 0.0
        %3807 = vmatprep.subr.mxu0 0.0
        %3808 = vmatpush1.msra.mxu0 0.0
        %3809 = vmatprep.subr.mxu0 0.0
        %3810 = vmatpush1.msra.mxu0 0.0
        %3811 = vmatprep.subr.mxu0 0.0
        %3812 = vmatpush1.msra.mxu0 0.0
        %3813 = vmatprep.subr.mxu0 0.0
        %3814 = vmatpush1.msra.mxu0 0.0
        %3815 = vmatprep.mubr.f32.mxu0 0.0
        %3816 = vmatmul.mubr.f32.gmra.mrb[0].mxu0 %v3749
        %v3817 = vpop.f32.mrb[0].mxu0
        %v3818 = vadd.f32 0.0, %v3817
        %v3819 = vpop.f32.mrb[0].mxu0
        %3820 = vdwg.mxu0
        %v3821 = vmul.f32 %v3818, %v3242
        %v3822 = vlaneseq
        %v3823 = vshrl.u32 %v3822, 7
        %v3824 = vsub.s32 0, %v3823
        %v3825 = vrot.slane %v3821, %v3824
        %v3826 = vmul.f32 %v3539, %v3825
        %v3827 = vmul.f32 %v3540, %v3825
        %v3828 = vmul.f32 %v3541, %v3825
        %v3829 = vmul.f32 %v3542, %v3825
        %v3830 = vmul.f32 %v3543, %v3825
        %v3831 = vmul.f32 %v3544, %v3825
        %v3832 = vmul.f32 %v3545, %v3825
        %v3833 = vmul.f32 %v3546, %v3825
        %v3834 = vmul.f32 %v3547, %v3825
        %v3835 = vmul.f32 %v3548, %v3825
        %v3836 = vmul.f32 %v3549, %v3825
        %v3837 = vmul.f32 %v3550, %v3825
        %v3838 = vmul.f32 %v3551, %v3825
        %v3839 = vmul.f32 %v3552, %v3825
        %v3840 = vmul.f32 %v3553, %v3825
        %v3841 = vmul.f32 %v3554, %v3825
        %v3842 = vmul.f32 %v3555, %v3825
        %v3843 = vmul.f32 %v3556, %v3825
        %v3844 = vmul.f32 %v3557, %v3825
        %v3845 = vmul.f32 %v3558, %v3825
        %v3846 = vmul.f32 %v3559, %v3825
        %v3847 = vmul.f32 %v3560, %v3825
        %v3848 = vmul.f32 %v3561, %v3825
        %v3849 = vmul.f32 %v3562, %v3825
        %v3850 = vmul.f32 %v3563, %v3825
        %v3851 = vmul.f32 %v3564, %v3825
        %v3852 = vmul.f32 %v3565, %v3825
        %v3853 = vmul.f32 %v3566, %v3825
        %v3854 = vmul.f32 %v3567, %v3825
        %v3855 = vmul.f32 %v3568, %v3825
        %v3856 = vmul.f32 %v3569, %v3825
        %v3857 = vmul.f32 %v3570, %v3825
        %v3859 = vlaneseq
        %v3860 = vshrl.u32 %v3859, 7
        %v3861 = vsub.s32 0, %v3860
        %v3862 = vrot.slane %v3243, %v3861
        %v3864 = vadd.f32 %v3826, %v3862
        %v3865 = vadd.f32 %v3827, %v3862
        %v3866 = vadd.f32 %v3828, %v3862
        %v3867 = vadd.f32 %v3829, %v3862
        %v3868 = vadd.f32 %v3830, %v3862
        %v3869 = vadd.f32 %v3831, %v3862
        %v3870 = vadd.f32 %v3832, %v3862
        %v3871 = vadd.f32 %v3833, %v3862
        %v3872 = vadd.f32 %v3834, %v3862
        %v3873 = vadd.f32 %v3835, %v3862
        %v3874 = vadd.f32 %v3836, %v3862
        %v3875 = vadd.f32 %v3837, %v3862
        %v3876 = vadd.f32 %v3838, %v3862
        %v3877 = vadd.f32 %v3839, %v3862
        %v3878 = vadd.f32 %v3840, %v3862
        %v3879 = vadd.f32 %v3841, %v3862
        %v3880 = vadd.f32 %v3842, %v3862
        %v3881 = vadd.f32 %v3843, %v3862
        %v3882 = vadd.f32 %v3844, %v3862
        %v3883 = vadd.f32 %v3845, %v3862
        %v3884 = vadd.f32 %v3846, %v3862
        %v3885 = vadd.f32 %v3847, %v3862
        %v3886 = vadd.f32 %v3848, %v3862
        %v3887 = vadd.f32 %v3849, %v3862
        %v3888 = vadd.f32 %v3850, %v3862
        %v3889 = vadd.f32 %v3851, %v3862
        %v3890 = vadd.f32 %v3852, %v3862
        %v3891 = vadd.f32 %v3853, %v3862
        %v3892 = vadd.f32 %v3854, %v3862
        %v3893 = vadd.f32 %v3855, %v3862
        %v3894 = vadd.f32 %v3856, %v3862
        %v3895 = vadd.f32 %v3857, %v3862
        %v3896 = vxor.u32 %v3864, 2147483648
        %v3897 = vxor.u32 %v3865, 2147483648
        %v3898 = vxor.u32 %v3866, 2147483648
        %v3899 = vxor.u32 %v3867, 2147483648
        %v3900 = vxor.u32 %v3868, 2147483648
        %v3901 = vxor.u32 %v3869, 2147483648
        %v3902 = vxor.u32 %v3870, 2147483648
        %v3903 = vxor.u32 %v3871, 2147483648
        %v3904 = vxor.u32 %v3872, 2147483648
        %v3905 = vxor.u32 %v3873, 2147483648
        %v3906 = vxor.u32 %v3874, 2147483648
        %v3907 = vxor.u32 %v3875, 2147483648
        %v3908 = vxor.u32 %v3876, 2147483648
        %v3909 = vxor.u32 %v3877, 2147483648
        %v3910 = vxor.u32 %v3878, 2147483648
        %v3911 = vxor.u32 %v3879, 2147483648
        %v3912 = vxor.u32 %v3880, 2147483648
        %v3913 = vxor.u32 %v3881, 2147483648
        %v3914 = vxor.u32 %v3882, 2147483648
        %v3915 = vxor.u32 %v3883, 2147483648
        %v3916 = vxor.u32 %v3884, 2147483648
        %v3917 = vxor.u32 %v3885, 2147483648
        %v3918 = vxor.u32 %v3886, 2147483648
        %v3919 = vxor.u32 %v3887, 2147483648
        %v3920 = vxor.u32 %v3888, 2147483648
        %v3921 = vxor.u32 %v3889, 2147483648
        %v3922 = vxor.u32 %v3890, 2147483648
        %v3923 = vxor.u32 %v3891, 2147483648
        %v3924 = vxor.u32 %v3892, 2147483648
        %v3925 = vxor.u32 %v3893, 2147483648
        %v3926 = vxor.u32 %v3894, 2147483648
        %v3927 = vxor.u32 %v3895, 2147483648
        %v3928 = vmul.f32 %v3896, 1.442695
        %v3929 = vpow.pop %v3928
        %v3930 = vmul.f32 %v3897, 1.442695
        %v3931 = vpow.pop %v3930
        %v3932 = vmul.f32 %v3898, 1.442695
        %v3933 = vpow.pop %v3932
        %v3934 = vmul.f32 %v3899, 1.442695
        %v3935 = vpow.pop %v3934
        %v3936 = vmul.f32 %v3900, 1.442695
        %v3937 = vpow.pop %v3936
        %v3938 = vmul.f32 %v3901, 1.442695
        %v3939 = vpow.pop %v3938
        %v3940 = vmul.f32 %v3902, 1.442695
        %v3941 = vpow.pop %v3940
        %v3942 = vmul.f32 %v3903, 1.442695
        %v3943 = vpow.pop %v3942
        %v3944 = vmul.f32 %v3904, 1.442695
        %v3945 = vpow.pop %v3944
        %v3946 = vmul.f32 %v3905, 1.442695
        %v3947 = vpow.pop %v3946
        %v3948 = vmul.f32 %v3906, 1.442695
        %v3949 = vpow.pop %v3948
        %v3950 = vmul.f32 %v3907, 1.442695
        %v3951 = vpow.pop %v3950
        %v3952 = vmul.f32 %v3908, 1.442695
        %v3953 = vpow.pop %v3952
        %v3954 = vmul.f32 %v3909, 1.442695
        %v3955 = vpow.pop %v3954
        %v3956 = vmul.f32 %v3910, 1.442695
        %v3957 = vpow.pop %v3956
        %v3958 = vmul.f32 %v3911, 1.442695
        %v3959 = vpow.pop %v3958
        %v3960 = vmul.f32 %v3912, 1.442695
        %v3961 = vpow.pop %v3960
        %v3962 = vmul.f32 %v3913, 1.442695
        %v3963 = vpow.pop %v3962
        %v3964 = vmul.f32 %v3914, 1.442695
        %v3965 = vpow.pop %v3964
        %v3966 = vmul.f32 %v3915, 1.442695
        %v3967 = vpow.pop %v3966
        %v3968 = vmul.f32 %v3916, 1.442695
        %v3969 = vpow.pop %v3968
        %v3970 = vmul.f32 %v3917, 1.442695
        %v3971 = vpow.pop %v3970
        %v3972 = vmul.f32 %v3918, 1.442695
        %v3973 = vpow.pop %v3972
        %v3974 = vmul.f32 %v3919, 1.442695
        %v3975 = vpow.pop %v3974
        %v3976 = vmul.f32 %v3920, 1.442695
        %v3977 = vpow.pop %v3976
        %v3978 = vmul.f32 %v3921, 1.442695
        %v3979 = vpow.pop %v3978
        %v3980 = vmul.f32 %v3922, 1.442695
        %v3981 = vpow.pop %v3980
        %v3982 = vmul.f32 %v3923, 1.442695
        %v3983 = vpow.pop %v3982
        %v3984 = vmul.f32 %v3924, 1.442695
        %v3985 = vpow.pop %v3984
        %v3986 = vmul.f32 %v3925, 1.442695
        %v3987 = vpow.pop %v3986
        %v3988 = vmul.f32 %v3926, 1.442695
        %v3989 = vpow.pop %v3988
        %v3990 = vmul.f32 %v3927, 1.442695
        %v3991 = vpow.pop %v3990
        %v3992 = vadd.f32 %v3929, 1.0
        %v3993 = vadd.f32 %v3931, 1.0
        %v3994 = vadd.f32 %v3933, 1.0
        %v3995 = vadd.f32 %v3935, 1.0
        %v3996 = vadd.f32 %v3937, 1.0
        %v3997 = vadd.f32 %v3939, 1.0
        %v3998 = vadd.f32 %v3941, 1.0
        %v3999 = vadd.f32 %v3943, 1.0
        %v4000 = vadd.f32 %v3945, 1.0
        %v4001 = vadd.f32 %v3947, 1.0
        %v4002 = vadd.f32 %v3949, 1.0
        %v4003 = vadd.f32 %v3951, 1.0
        %v4004 = vadd.f32 %v3953, 1.0
        %v4005 = vadd.f32 %v3955, 1.0
        %v4006 = vadd.f32 %v3957, 1.0
        %v4007 = vadd.f32 %v3959, 1.0
        %v4008 = vadd.f32 %v3961, 1.0
        %v4009 = vadd.f32 %v3963, 1.0
        %v4010 = vadd.f32 %v3965, 1.0
        %v4011 = vadd.f32 %v3967, 1.0
        %v4012 = vadd.f32 %v3969, 1.0
        %v4013 = vadd.f32 %v3971, 1.0
        %v4014 = vadd.f32 %v3973, 1.0
        %v4015 = vadd.f32 %v3975, 1.0
        %v4016 = vadd.f32 %v3977, 1.0
        %v4017 = vadd.f32 %v3979, 1.0
        %v4018 = vadd.f32 %v3981, 1.0
        %v4019 = vadd.f32 %v3983, 1.0
        %v4020 = vadd.f32 %v3985, 1.0
        %v4021 = vadd.f32 %v3987, 1.0
        %v4022 = vadd.f32 %v3989, 1.0
        %v4023 = vadd.f32 %v3991, 1.0
        %v4024 = vrcp.pop %v3992
        %v4025 = vmul.f32 1.0, %v4024
        %v4026 = vrcp.pop %v3993
        %v4027 = vmul.f32 1.0, %v4026
        %v4028 = vrcp.pop %v3994
        %v4029 = vmul.f32 1.0, %v4028
        %v4030 = vrcp.pop %v3995
        %v4031 = vmul.f32 1.0, %v4030
        %v4032 = vrcp.pop %v3996
        %v4033 = vmul.f32 1.0, %v4032
        %v4034 = vrcp.pop %v3997
        %v4035 = vmul.f32 1.0, %v4034
        %v4036 = vrcp.pop %v3998
        %v4037 = vmul.f32 1.0, %v4036
        %v4038 = vrcp.pop %v3999
        %v4039 = vmul.f32 1.0, %v4038
        %v4040 = vrcp.pop %v4000
        %v4041 = vmul.f32 1.0, %v4040
        %v4042 = vrcp.pop %v4001
        %v4043 = vmul.f32 1.0, %v4042
        %v4044 = vrcp.pop %v4002
        %v4045 = vmul.f32 1.0, %v4044
        %v4046 = vrcp.pop %v4003
        %v4047 = vmul.f32 1.0, %v4046
        %v4048 = vrcp.pop %v4004
        %v4049 = vmul.f32 1.0, %v4048
        %v4050 = vrcp.pop %v4005
        %v4051 = vmul.f32 1.0, %v4050
        %v4052 = vrcp.pop %v4006
        %v4053 = vmul.f32 1.0, %v4052
        %v4054 = vrcp.pop %v4007
        %v4055 = vmul.f32 1.0, %v4054
        %v4056 = vrcp.pop %v4008
        %v4057 = vmul.f32 1.0, %v4056
        %v4058 = vrcp.pop %v4009
        %v4059 = vmul.f32 1.0, %v4058
        %v4060 = vrcp.pop %v4010
        %v4061 = vmul.f32 1.0, %v4060
        %v4062 = vrcp.pop %v4011
        %v4063 = vmul.f32 1.0, %v4062
        %v4064 = vrcp.pop %v4012
        %v4065 = vmul.f32 1.0, %v4064
        %v4066 = vrcp.pop %v4013
        %v4067 = vmul.f32 1.0, %v4066
        %v4068 = vrcp.pop %v4014
        %v4069 = vmul.f32 1.0, %v4068
        %v4070 = vrcp.pop %v4015
        %v4071 = vmul.f32 1.0, %v4070
        %v4072 = vrcp.pop %v4016
        %v4073 = vmul.f32 1.0, %v4072
        %v4074 = vrcp.pop %v4017
        %v4075 = vmul.f32 1.0, %v4074
        %v4076 = vrcp.pop %v4018
        %v4077 = vmul.f32 1.0, %v4076
        %v4078 = vrcp.pop %v4019
        %v4079 = vmul.f32 1.0, %v4078
        %v4080 = vrcp.pop %v4020
        %v4081 = vmul.f32 1.0, %v4080
        %v4082 = vrcp.pop %v4021
        %v4083 = vmul.f32 1.0, %v4082
        %v4084 = vrcp.pop %v4022
        %v4085 = vmul.f32 1.0, %v4084
        %v4086 = vrcp.pop %v4023
        %v4087 = vmul.f32 1.0, %v4086
        %v4088 = vmul.f32 %v3864, %v4025
        %v4089 = vmul.f32 %v3865, %v4027
        %v4090 = vmul.f32 %v3866, %v4029
        %v4091 = vmul.f32 %v3867, %v4031
        %v4092 = vmul.f32 %v3868, %v4033
        %v4093 = vmul.f32 %v3869, %v4035
        %v4094 = vmul.f32 %v3870, %v4037
        %v4095 = vmul.f32 %v3871, %v4039
        %v4096 = vmul.f32 %v3872, %v4041
        %v4097 = vmul.f32 %v3873, %v4043
        %v4098 = vmul.f32 %v3874, %v4045
        %v4099 = vmul.f32 %v3875, %v4047
        %v4100 = vmul.f32 %v3876, %v4049
        %v4101 = vmul.f32 %v3877, %v4051
        %v4102 = vmul.f32 %v3878, %v4053
        %v4103 = vmul.f32 %v3879, %v4055
        %v4104 = vmul.f32 %v3880, %v4057
        %v4105 = vmul.f32 %v3881, %v4059
        %v4106 = vmul.f32 %v3882, %v4061
        %v4107 = vmul.f32 %v3883, %v4063
        %v4108 = vmul.f32 %v3884, %v4065
        %v4109 = vmul.f32 %v3885, %v4067
        %v4110 = vmul.f32 %v3886, %v4069
        %v4111 = vmul.f32 %v3887, %v4071
        %v4112 = vmul.f32 %v3888, %v4073
        %v4113 = vmul.f32 %v3889, %v4075
        %v4114 = vmul.f32 %v3890, %v4077
        %v4115 = vmul.f32 %v3891, %v4079
        %v4116 = vmul.f32 %v3892, %v4081
        %v4117 = vmul.f32 %v3893, %v4083
        %v4118 = vmul.f32 %v3894, %v4085
        %v4119 = vmul.f32 %v3895, %v4087
        %4120 = vst.msk [vmem:[#allocation3] sm:$0xff] %vm2491, 0.0
        %4121 = vst.msk [vmem:[#allocation3 + $0x8] sm:$0xff] %vm2491, 0.0
        %vm4122 = vcmask 517120
        %4123 = vst.msk [vmem:[#allocation3 + $0x10] sm:$0x3] %vm4122, 0.0
        %4124 = vst.msk [vmem:[#allocation3 + $0x18] sm:$0xff] %vm2491, 0.0
        %4125 = vst.msk [vmem:[#allocation3 + $0x20] sm:$0xff] %vm2491, 0.0
        %4126 = vst.msk [vmem:[#allocation3 + $0x28] sm:$0x3] %vm4122, 0.0
        %4127 = vst.msk [vmem:[#allocation3 + $0x30] sm:$0xff] %vm2491, 0.0
        %4128 = vst.msk [vmem:[#allocation3 + $0x38] sm:$0xff] %vm2491, 0.0
        %4129 = vst.msk [vmem:[#allocation3 + $0x40] sm:$0x3] %vm4122, 0.0
        %4130 = vst.msk [vmem:[#allocation3 + $0x48] sm:$0xff] %vm2491, 0.0
        %4131 = vst.msk [vmem:[#allocation3 + $0x50] sm:$0xff] %vm2491, 0.0
        %4132 = vst.msk [vmem:[#allocation3 + $0x58] sm:$0x3] %vm4122, 0.0
        %4133 = vst.msk [vmem:[#allocation3 + $0x60] sm:$0xff] %vm2491, 0.0
        %4134 = vst.msk [vmem:[#allocation3 + $0x68] sm:$0xff] %vm2491, 0.0
        %4135 = vst.msk [vmem:[#allocation3 + $0x70] sm:$0x3] %vm4122, 0.0
        %4136 = vst.msk [vmem:[#allocation3 + $0x78] sm:$0xff] %vm2491, 0.0
        %4137 = vst.msk [vmem:[#allocation3 + $0x80] sm:$0xff] %vm2491, 0.0
        %4138 = vst.msk [vmem:[#allocation3 + $0x88] sm:$0x3] %vm4122, 0.0
        %4139 = vst.msk [vmem:[#allocation3 + $0x90] sm:$0xff] %vm2491, 0.0
        %4140 = vst.msk [vmem:[#allocation3 + $0x98] sm:$0xff] %vm2491, 0.0
        %4141 = vst.msk [vmem:[#allocation3 + $0xa0] sm:$0x3] %vm4122, 0.0
        %4142 = vst.msk [vmem:[#allocation3 + $0xa8] sm:$0xff] %vm2491, 0.0
        %4143 = vst.msk [vmem:[#allocation3 + $0xb0] sm:$0xff] %vm2491, 0.0
        %4144 = vst.msk [vmem:[#allocation3 + $0xb8] sm:$0x3] %vm4122, 0.0
        %4145 = vst.msk [vmem:[#allocation3 + $0xc0] sm:$0xff] %vm2491, 0.0
        %4146 = vst.msk [vmem:[#allocation3 + $0xc8] sm:$0xff] %vm2491, 0.0
        %4147 = vst.msk [vmem:[#allocation3 + $0xd0] sm:$0x3] %vm4122, 0.0
        %4148 = vst.msk [vmem:[#allocation3 + $0xd8] sm:$0xff] %vm2491, 0.0
        %4149 = vst.msk [vmem:[#allocation3 + $0xe0] sm:$0xff] %vm2491, 0.0
        %4150 = vst.msk [vmem:[#allocation3 + $0xe8] sm:$0x3] %vm4122, 0.0
        %4151 = vst.msk [vmem:[#allocation3 + $0xf0] sm:$0xff] %vm2491, 0.0
        %4152 = vst.msk [vmem:[#allocation3 + $0xf8] sm:$0xff] %vm2491, 0.0
        %4153 = vst.msk [vmem:[#allocation3 + $0x100] sm:$0x3] %vm4122, 0.0
        %4154 = vst.msk [vmem:[#allocation3 + $0x108] sm:$0xff] %vm2491, 0.0
        %4155 = vst.msk [vmem:[#allocation3 + $0x110] sm:$0xff] %vm2491, 0.0
        %4156 = vst.msk [vmem:[#allocation3 + $0x118] sm:$0x3] %vm4122, 0.0
        %4157 = vst.msk [vmem:[#allocation3 + $0x120] sm:$0xff] %vm2491, 0.0
        %4158 = vst.msk [vmem:[#allocation3 + $0x128] sm:$0xff] %vm2491, 0.0
        %4159 = vst.msk [vmem:[#allocation3 + $0x130] sm:$0x3] %vm4122, 0.0
        %4160 = vst.msk [vmem:[#allocation3 + $0x138] sm:$0xff] %vm2491, 0.0
        %4161 = vst.msk [vmem:[#allocation3 + $0x140] sm:$0xff] %vm2491, 0.0
        %4162 = vst.msk [vmem:[#allocation3 + $0x148] sm:$0x3] %vm4122, 0.0
        %4163 = vst.msk [vmem:[#allocation3 + $0x150] sm:$0xff] %vm2491, 0.0
        %4164 = vst.msk [vmem:[#allocation3 + $0x158] sm:$0xff] %vm2491, 0.0
        %4165 = vst.msk [vmem:[#allocation3 + $0x160] sm:$0x3] %vm4122, 0.0
        %4166 = vst.msk [vmem:[#allocation3 + $0x168] sm:$0xff] %vm2491, 0.0
        %4167 = vst.msk [vmem:[#allocation3 + $0x170] sm:$0xff] %vm2491, 0.0
        %4168 = vst.msk [vmem:[#allocation3 + $0x178] sm:$0x3] %vm4122, 0.0
        %4169 = vst.msk [vmem:[#allocation3 + $0x180] sm:$0xff] %vm2491, 0.0
        %4170 = vst.msk [vmem:[#allocation3 + $0x188] sm:$0xff] %vm2491, 0.0
        %4171 = vst.msk [vmem:[#allocation3 + $0x190] sm:$0x3] %vm4122, 0.0
        %4172 = vst.msk [vmem:[#allocation3 + $0x198] sm:$0xff] %vm2491, 0.0
        %4173 = vst.msk [vmem:[#allocation3 + $0x1a0] sm:$0xff] %vm2491, 0.0
        %4174 = vst.msk [vmem:[#allocation3 + $0x1a8] sm:$0x3] %vm4122, 0.0
        %s4175 = scalar_lea.vmem [#allocation3], 24
        %4176 = vst.msk [vmem:[%s4175 + $0x1] sm:$0xff] %vm2491, %v4088
        %4177 = vst.msk [vmem:[%s4175 + $0x9] sm:$0xff] %vm2491, %v4089
        %4178 = vst.msk [vmem:[%s4175 + $0x19] sm:$0xff] %vm2491, %v4090
        %4179 = vst.msk [vmem:[%s4175 + $0x21] sm:$0xff] %vm2491, %v4091
        %4180 = vst.msk [vmem:[%s4175 + $0x31] sm:$0xff] %vm2491, %v4092
        %4181 = vst.msk [vmem:[%s4175 + $0x39] sm:$0xff] %vm2491, %v4093
        %4182 = vst.msk [vmem:[%s4175 + $0x49] sm:$0xff] %vm2491, %v4094
        %4183 = vst.msk [vmem:[%s4175 + $0x51] sm:$0xff] %vm2491, %v4095
        %4184 = vst.msk [vmem:[%s4175 + $0x61] sm:$0xff] %vm2491, %v4096
        %4185 = vst.msk [vmem:[%s4175 + $0x69] sm:$0xff] %vm2491, %v4097
        %4186 = vst.msk [vmem:[%s4175 + $0x79] sm:$0xff] %vm2491, %v4098
        %4187 = vst.msk [vmem:[%s4175 + $0x81] sm:$0xff] %vm2491, %v4099
        %4188 = vst.msk [vmem:[%s4175 + $0x91] sm:$0xff] %vm2491, %v4100
        %4189 = vst.msk [vmem:[%s4175 + $0x99] sm:$0xff] %vm2491, %v4101
        %4190 = vst.msk [vmem:[%s4175 + $0xa9] sm:$0xff] %vm2491, %v4102
        %4191 = vst.msk [vmem:[%s4175 + $0xb1] sm:$0xff] %vm2491, %v4103
        %4192 = vst.msk [vmem:[%s4175 + $0xc1] sm:$0xff] %vm2491, %v4104
        %4193 = vst.msk [vmem:[%s4175 + $0xc9] sm:$0xff] %vm2491, %v4105
        %4194 = vst.msk [vmem:[%s4175 + $0xd9] sm:$0xff] %vm2491, %v4106
        %4195 = vst.msk [vmem:[%s4175 + $0xe1] sm:$0xff] %vm2491, %v4107
        %4196 = vst.msk [vmem:[%s4175 + $0xf1] sm:$0xff] %vm2491, %v4108
        %4197 = vst.msk [vmem:[%s4175 + $0xf9] sm:$0xff] %vm2491, %v4109
        %4198 = vst.msk [vmem:[%s4175 + $0x109] sm:$0xff] %vm2491, %v4110
        %4199 = vst.msk [vmem:[%s4175 + $0x111] sm:$0xff] %vm2491, %v4111
        %4200 = vst.msk [vmem:[%s4175 + $0x121] sm:$0xff] %vm2491, %v4112
        %4201 = vst.msk [vmem:[%s4175 + $0x129] sm:$0xff] %vm2491, %v4113
        %4202 = vst.msk [vmem:[%s4175 + $0x139] sm:$0xff] %vm2491, %v4114
        %4203 = vst.msk [vmem:[%s4175 + $0x141] sm:$0xff] %vm2491, %v4115
        %4204 = vst.msk [vmem:[%s4175 + $0x151] sm:$0xff] %vm2491, %v4116
        %4205 = vst.msk [vmem:[%s4175 + $0x159] sm:$0xff] %vm2491, %v4117
        %4206 = vst.msk [vmem:[%s4175 + $0x169] sm:$0xff] %vm2491, %v4118
        %4207 = vst.msk [vmem:[%s4175 + $0x171] sm:$0xff] %vm2491, %v4119
        %v4208 = vld [vmem:[#allocation3] sm:$0xff]
        %v4209 = vld [vmem:[#allocation3 + $0x8] sm:$0xff]
        %v4210 = vld [vmem:[#allocation3 + $0x18] sm:$0xff]
        %v4211 = vld [vmem:[#allocation3 + $0x20] sm:$0xff]
        %v4212 = vld [vmem:[#allocation3 + $0x30] sm:$0xff]
        %v4213 = vld [vmem:[#allocation3 + $0x38] sm:$0xff]
        %v4214 = vld [vmem:[#allocation3 + $0x48] sm:$0xff]
        %v4215 = vld [vmem:[#allocation3 + $0x50] sm:$0xff]
        %v4216 = vld [vmem:[#allocation3 + $0x60] sm:$0xff]
        %v4217 = vld [vmem:[#allocation3 + $0x68] sm:$0xff]
        %v4218 = vld [vmem:[#allocation3 + $0x78] sm:$0xff]
        %v4219 = vld [vmem:[#allocation3 + $0x80] sm:$0xff]
        %v4220 = vld [vmem:[#allocation3 + $0x90] sm:$0xff]
        %v4221 = vld [vmem:[#allocation3 + $0x98] sm:$0xff]
        %v4222 = vld [vmem:[#allocation3 + $0xa8] sm:$0xff]
        %v4223 = vld [vmem:[#allocation3 + $0xb0] sm:$0xff]
        %v4224 = vld [vmem:[#allocation3 + $0xc0] sm:$0xff]
        %v4225 = vld [vmem:[#allocation3 + $0xc8] sm:$0xff]
        %v4226 = vld [vmem:[#allocation3 + $0xd8] sm:$0xff]
        %v4227 = vld [vmem:[#allocation3 + $0xe0] sm:$0xff]
        %v4228 = vld [vmem:[#allocation3 + $0xf0] sm:$0xff]
        %v4229 = vld [vmem:[#allocation3 + $0xf8] sm:$0xff]
        %v4230 = vld [vmem:[#allocation3 + $0x108] sm:$0xff]
        %v4231 = vld [vmem:[#allocation3 + $0x110] sm:$0xff]
        %v4232 = vld [vmem:[#allocation3 + $0x120] sm:$0xff]
        %v4233 = vld [vmem:[#allocation3 + $0x128] sm:$0xff]
        %v4234 = vld [vmem:[#allocation3 + $0x138] sm:$0xff]
        %v4235 = vld [vmem:[#allocation3 + $0x140] sm:$0xff]
        %v4236 = vld [vmem:[#allocation3 + $0x150] sm:$0xff]
        %v4237 = vld [vmem:[#allocation3 + $0x158] sm:$0xff]
        %v4238 = vld [vmem:[#allocation3 + $0x168] sm:$0xff]
        %v4239 = vld [vmem:[#allocation3 + $0x170] sm:$0xff]
        %v4240 = vld [vmem:[#allocation3 + $0x1] sm:$0xff]
        %v4241 = vld [vmem:[#allocation3 + $0x9] sm:$0xff]
        %v4242 = vld [vmem:[#allocation3 + $0x19] sm:$0xff]
        %v4243 = vld [vmem:[#allocation3 + $0x21] sm:$0xff]
        %v4244 = vld [vmem:[#allocation3 + $0x31] sm:$0xff]
        %v4245 = vld [vmem:[#allocation3 + $0x39] sm:$0xff]
        %v4246 = vld [vmem:[#allocation3 + $0x49] sm:$0xff]
        %v4247 = vld [vmem:[#allocation3 + $0x51] sm:$0xff]
        %v4248 = vld [vmem:[#allocation3 + $0x61] sm:$0xff]
        %v4249 = vld [vmem:[#allocation3 + $0x69] sm:$0xff]
        %v4250 = vld [vmem:[#allocation3 + $0x79] sm:$0xff]
        %v4251 = vld [vmem:[#allocation3 + $0x81] sm:$0xff]
        %v4252 = vld [vmem:[#allocation3 + $0x91] sm:$0xff]
        %v4253 = vld [vmem:[#allocation3 + $0x99] sm:$0xff]
        %v4254 = vld [vmem:[#allocation3 + $0xa9] sm:$0xff]
        %v4255 = vld [vmem:[#allocation3 + $0xb1] sm:$0xff]
        %v4256 = vld [vmem:[#allocation3 + $0xc1] sm:$0xff]
        %v4257 = vld [vmem:[#allocation3 + $0xc9] sm:$0xff]
        %v4258 = vld [vmem:[#allocation3 + $0xd9] sm:$0xff]
        %v4259 = vld [vmem:[#allocation3 + $0xe1] sm:$0xff]
        %v4260 = vld [vmem:[#allocation3 + $0xf1] sm:$0xff]
        %v4261 = vld [vmem:[#allocation3 + $0xf9] sm:$0xff]
        %v4262 = vld [vmem:[#allocation3 + $0x109] sm:$0xff]
        %v4263 = vld [vmem:[#allocation3 + $0x111] sm:$0xff]
        %v4264 = vld [vmem:[#allocation3 + $0x121] sm:$0xff]
        %v4265 = vld [vmem:[#allocation3 + $0x129] sm:$0xff]
        %v4266 = vld [vmem:[#allocation3 + $0x139] sm:$0xff]
        %v4267 = vld [vmem:[#allocation3 + $0x141] sm:$0xff]
        %v4268 = vld [vmem:[#allocation3 + $0x151] sm:$0xff]
        %v4269 = vld [vmem:[#allocation3 + $0x159] sm:$0xff]
        %v4270 = vld [vmem:[#allocation3 + $0x169] sm:$0xff]
        %v4271 = vld [vmem:[#allocation3 + $0x171] sm:$0xff]
        %v4272 = vld [vmem:[#allocation3 + $0x2] sm:$0xff]
        %v4273 = vld [vmem:[#allocation3 + $0xa] sm:$0xff]
        %v4274 = vld [vmem:[#allocation3 + $0x1a] sm:$0xff]
        %v4275 = vld [vmem:[#allocation3 + $0x22] sm:$0xff]
        %v4276 = vld [vmem:[#allocation3 + $0x32] sm:$0xff]
        %v4277 = vld [vmem:[#allocation3 + $0x3a] sm:$0xff]
        %v4278 = vld [vmem:[#allocation3 + $0x4a] sm:$0xff]
        %v4279 = vld [vmem:[#allocation3 + $0x52] sm:$0xff]
        %v4280 = vld [vmem:[#allocation3 + $0x62] sm:$0xff]
        %v4281 = vld [vmem:[#allocation3 + $0x6a] sm:$0xff]
        %v4282 = vld [vmem:[#allocation3 + $0x7a] sm:$0xff]
        %v4283 = vld [vmem:[#allocation3 + $0x82] sm:$0xff]
        %v4284 = vld [vmem:[#allocation3 + $0x92] sm:$0xff]
        %v4285 = vld [vmem:[#allocation3 + $0x9a] sm:$0xff]
        %v4286 = vld [vmem:[#allocation3 + $0xaa] sm:$0xff]
        %v4287 = vld [vmem:[#allocation3 + $0xb2] sm:$0xff]
        %v4288 = vld [vmem:[#allocation3 + $0xc2] sm:$0xff]
        %v4289 = vld [vmem:[#allocation3 + $0xca] sm:$0xff]
        %v4290 = vld [vmem:[#allocation3 + $0xda] sm:$0xff]
        %v4291 = vld [vmem:[#allocation3 + $0xe2] sm:$0xff]
        %v4292 = vld [vmem:[#allocation3 + $0xf2] sm:$0xff]
        %v4293 = vld [vmem:[#allocation3 + $0xfa] sm:$0xff]
        %v4294 = vld [vmem:[#allocation3 + $0x10a] sm:$0xff]
        %v4295 = vld [vmem:[#allocation3 + $0x112] sm:$0xff]
        %v4296 = vld [vmem:[#allocation3 + $0x122] sm:$0xff]
        %v4297 = vld [vmem:[#allocation3 + $0x12a] sm:$0xff]
        %v4298 = vld [vmem:[#allocation3 + $0x13a] sm:$0xff]
        %v4299 = vld [vmem:[#allocation3 + $0x142] sm:$0xff]
        %v4300 = vld [vmem:[#allocation3 + $0x152] sm:$0xff]
        %v4301 = vld [vmem:[#allocation3 + $0x15a] sm:$0xff]
        %v4302 = vld [vmem:[#allocation3 + $0x16a] sm:$0xff]
        %v4303 = vld [vmem:[#allocation3 + $0x172] sm:$0xff]
        %v4304 = vld [vmem:[%s4175] sm:$0xff]
        %v4305 = vld [vmem:[%s4175 + $0x8] sm:$0xff]
        %v4306 = vld [vmem:[%s4175 + $0x18] sm:$0xff]
        %v4307 = vld [vmem:[%s4175 + $0x20] sm:$0xff]
        %v4308 = vld [vmem:[%s4175 + $0x30] sm:$0xff]
        %v4309 = vld [vmem:[%s4175 + $0x38] sm:$0xff]
        %v4310 = vld [vmem:[%s4175 + $0x48] sm:$0xff]
        %v4311 = vld [vmem:[%s4175 + $0x50] sm:$0xff]
        %v4312 = vld [vmem:[%s4175 + $0x60] sm:$0xff]
        %v4313 = vld [vmem:[%s4175 + $0x68] sm:$0xff]
        %v4314 = vld [vmem:[%s4175 + $0x78] sm:$0xff]
        %v4315 = vld [vmem:[%s4175 + $0x80] sm:$0xff]
        %v4316 = vld [vmem:[%s4175 + $0x90] sm:$0xff]
        %v4317 = vld [vmem:[%s4175 + $0x98] sm:$0xff]
        %v4318 = vld [vmem:[%s4175 + $0xa8] sm:$0xff]
        %v4319 = vld [vmem:[%s4175 + $0xb0] sm:$0xff]
        %v4320 = vld [vmem:[%s4175 + $0xc0] sm:$0xff]
        %v4321 = vld [vmem:[%s4175 + $0xc8] sm:$0xff]
        %v4322 = vld [vmem:[%s4175 + $0xd8] sm:$0xff]
        %v4323 = vld [vmem:[%s4175 + $0xe0] sm:$0xff]
        %v4324 = vld [vmem:[%s4175 + $0xf0] sm:$0xff]
        %v4325 = vld [vmem:[%s4175 + $0xf8] sm:$0xff]
        %v4326 = vld [vmem:[%s4175 + $0x108] sm:$0xff]
        %v4327 = vld [vmem:[%s4175 + $0x110] sm:$0xff]
        %v4328 = vld [vmem:[%s4175 + $0x120] sm:$0xff]
        %v4329 = vld [vmem:[%s4175 + $0x128] sm:$0xff]
        %v4330 = vld [vmem:[%s4175 + $0x138] sm:$0xff]
        %v4331 = vld [vmem:[%s4175 + $0x140] sm:$0xff]
        %v4332 = vld [vmem:[%s4175 + $0x150] sm:$0xff]
        %v4333 = vld [vmem:[%s4175 + $0x158] sm:$0xff]
        %v4334 = vld [vmem:[%s4175 + $0x168] sm:$0xff]
        %v4335 = vld [vmem:[%s4175 + $0x170] sm:$0xff]
        %v4336 = vld [vmem:[%s4175 + $0x1] sm:$0xff]
        %v4337 = vld [vmem:[%s4175 + $0x9] sm:$0xff]
        %v4338 = vld [vmem:[%s4175 + $0x19] sm:$0xff]
        %v4339 = vld [vmem:[%s4175 + $0x21] sm:$0xff]
        %v4340 = vld [vmem:[%s4175 + $0x31] sm:$0xff]
        %v4341 = vld [vmem:[%s4175 + $0x39] sm:$0xff]
        %v4342 = vld [vmem:[%s4175 + $0x49] sm:$0xff]
        %v4343 = vld [vmem:[%s4175 + $0x51] sm:$0xff]
        %v4344 = vld [vmem:[%s4175 + $0x61] sm:$0xff]
        %v4345 = vld [vmem:[%s4175 + $0x69] sm:$0xff]
        %v4346 = vld [vmem:[%s4175 + $0x79] sm:$0xff]
        %v4347 = vld [vmem:[%s4175 + $0x81] sm:$0xff]
        %v4348 = vld [vmem:[%s4175 + $0x91] sm:$0xff]
        %v4349 = vld [vmem:[%s4175 + $0x99] sm:$0xff]
        %v4350 = vld [vmem:[%s4175 + $0xa9] sm:$0xff]
        %v4351 = vld [vmem:[%s4175 + $0xb1] sm:$0xff]
        %v4352 = vld [vmem:[%s4175 + $0xc1] sm:$0xff]
        %v4353 = vld [vmem:[%s4175 + $0xc9] sm:$0xff]
        %v4354 = vld [vmem:[%s4175 + $0xd9] sm:$0xff]
        %v4355 = vld [vmem:[%s4175 + $0xe1] sm:$0xff]
        %v4356 = vld [vmem:[%s4175 + $0xf1] sm:$0xff]
        %v4357 = vld [vmem:[%s4175 + $0xf9] sm:$0xff]
        %v4358 = vld [vmem:[%s4175 + $0x109] sm:$0xff]
        %v4359 = vld [vmem:[%s4175 + $0x111] sm:$0xff]
        %v4360 = vld [vmem:[%s4175 + $0x121] sm:$0xff]
        %v4361 = vld [vmem:[%s4175 + $0x129] sm:$0xff]
        %v4362 = vld [vmem:[%s4175 + $0x139] sm:$0xff]
        %v4363 = vld [vmem:[%s4175 + $0x141] sm:$0xff]
        %v4364 = vld [vmem:[%s4175 + $0x151] sm:$0xff]
        %v4365 = vld [vmem:[%s4175 + $0x159] sm:$0xff]
        %v4366 = vld [vmem:[%s4175 + $0x169] sm:$0xff]
        %v4367 = vld [vmem:[%s4175 + $0x171] sm:$0xff]
        %v4368 = vld [vmem:[%s4175 + $0x2] sm:$0xff]
        %v4369 = vld [vmem:[%s4175 + $0xa] sm:$0xff]
        %v4370 = vld [vmem:[%s4175 + $0x1a] sm:$0xff]
        %v4371 = vld [vmem:[%s4175 + $0x22] sm:$0xff]
        %v4372 = vld [vmem:[%s4175 + $0x32] sm:$0xff]
        %v4373 = vld [vmem:[%s4175 + $0x3a] sm:$0xff]
        %v4374 = vld [vmem:[%s4175 + $0x4a] sm:$0xff]
        %v4375 = vld [vmem:[%s4175 + $0x52] sm:$0xff]
        %v4376 = vld [vmem:[%s4175 + $0x62] sm:$0xff]
        %v4377 = vld [vmem:[%s4175 + $0x6a] sm:$0xff]
        %v4378 = vld [vmem:[%s4175 + $0x7a] sm:$0xff]
        %v4379 = vld [vmem:[%s4175 + $0x82] sm:$0xff]
        %v4380 = vld [vmem:[%s4175 + $0x92] sm:$0xff]
        %v4381 = vld [vmem:[%s4175 + $0x9a] sm:$0xff]
        %v4382 = vld [vmem:[%s4175 + $0xaa] sm:$0xff]
        %v4383 = vld [vmem:[%s4175 + $0xb2] sm:$0xff]
        %v4384 = vld [vmem:[%s4175 + $0xc2] sm:$0xff]
        %v4385 = vld [vmem:[%s4175 + $0xca] sm:$0xff]
        %v4386 = vld [vmem:[%s4175 + $0xda] sm:$0xff]
        %v4387 = vld [vmem:[%s4175 + $0xe2] sm:$0xff]
        %v4388 = vld [vmem:[%s4175 + $0xf2] sm:$0xff]
        %v4389 = vld [vmem:[%s4175 + $0xfa] sm:$0xff]
        %v4390 = vld [vmem:[%s4175 + $0x10a] sm:$0xff]
        %v4391 = vld [vmem:[%s4175 + $0x112] sm:$0xff]
        %v4392 = vld [vmem:[%s4175 + $0x122] sm:$0xff]
        %v4393 = vld [vmem:[%s4175 + $0x12a] sm:$0xff]
        %v4394 = vld [vmem:[%s4175 + $0x13a] sm:$0xff]
        %v4395 = vld [vmem:[%s4175 + $0x142] sm:$0xff]
        %v4396 = vld [vmem:[%s4175 + $0x152] sm:$0xff]
        %v4397 = vld [vmem:[%s4175 + $0x15a] sm:$0xff]
        %v4398 = vld [vmem:[%s4175 + $0x16a] sm:$0xff]
        %v4399 = vld [vmem:[%s4175 + $0x172] sm:$0xff]
        %s4400 = scalar_lea.vmem [#allocation3], 48
        %v4401 = vld [vmem:[%s4400] sm:$0xff]
        %v4402 = vld [vmem:[%s4400 + $0x8] sm:$0xff]
        %v4403 = vld [vmem:[%s4400 + $0x18] sm:$0xff]
        %v4404 = vld [vmem:[%s4400 + $0x20] sm:$0xff]
        %v4405 = vld [vmem:[%s4400 + $0x30] sm:$0xff]
        %v4406 = vld [vmem:[%s4400 + $0x38] sm:$0xff]
        %v4407 = vld [vmem:[%s4400 + $0x48] sm:$0xff]
        %v4408 = vld [vmem:[%s4400 + $0x50] sm:$0xff]
        %v4409 = vld [vmem:[%s4400 + $0x60] sm:$0xff]
        %v4410 = vld [vmem:[%s4400 + $0x68] sm:$0xff]
        %v4411 = vld [vmem:[%s4400 + $0x78] sm:$0xff]
        %v4412 = vld [vmem:[%s4400 + $0x80] sm:$0xff]
        %v4413 = vld [vmem:[%s4400 + $0x90] sm:$0xff]
        %v4414 = vld [vmem:[%s4400 + $0x98] sm:$0xff]
        %v4415 = vld [vmem:[%s4400 + $0xa8] sm:$0xff]
        %v4416 = vld [vmem:[%s4400 + $0xb0] sm:$0xff]
        %v4417 = vld [vmem:[%s4400 + $0xc0] sm:$0xff]
        %v4418 = vld [vmem:[%s4400 + $0xc8] sm:$0xff]
        %v4419 = vld [vmem:[%s4400 + $0xd8] sm:$0xff]
        %v4420 = vld [vmem:[%s4400 + $0xe0] sm:$0xff]
        %v4421 = vld [vmem:[%s4400 + $0xf0] sm:$0xff]
        %v4422 = vld [vmem:[%s4400 + $0xf8] sm:$0xff]
        %v4423 = vld [vmem:[%s4400 + $0x108] sm:$0xff]
        %v4424 = vld [vmem:[%s4400 + $0x110] sm:$0xff]
        %v4425 = vld [vmem:[%s4400 + $0x120] sm:$0xff]
        %v4426 = vld [vmem:[%s4400 + $0x128] sm:$0xff]
        %v4427 = vld [vmem:[%s4400 + $0x138] sm:$0xff]
        %v4428 = vld [vmem:[%s4400 + $0x140] sm:$0xff]
        %v4429 = vld [vmem:[%s4400 + $0x150] sm:$0xff]
        %v4430 = vld [vmem:[%s4400 + $0x158] sm:$0xff]
        %v4431 = vld [vmem:[%s4400 + $0x168] sm:$0xff]
        %v4432 = vld [vmem:[%s4400 + $0x170] sm:$0xff]
        %v4433 = vld [vmem:[%s4400 + $0x1] sm:$0xff]
        %v4434 = vld [vmem:[%s4400 + $0x9] sm:$0xff]
        %v4435 = vld [vmem:[%s4400 + $0x19] sm:$0xff]
        %v4436 = vld [vmem:[%s4400 + $0x21] sm:$0xff]
        %v4437 = vld [vmem:[%s4400 + $0x31] sm:$0xff]
        %v4438 = vld [vmem:[%s4400 + $0x39] sm:$0xff]
        %v4439 = vld [vmem:[%s4400 + $0x49] sm:$0xff]
        %v4440 = vld [vmem:[%s4400 + $0x51] sm:$0xff]
        %v4441 = vld [vmem:[%s4400 + $0x61] sm:$0xff]
        %v4442 = vld [vmem:[%s4400 + $0x69] sm:$0xff]
        %v4443 = vld [vmem:[%s4400 + $0x79] sm:$0xff]
        %v4444 = vld [vmem:[%s4400 + $0x81] sm:$0xff]
        %v4445 = vld [vmem:[%s4400 + $0x91] sm:$0xff]
        %v4446 = vld [vmem:[%s4400 + $0x99] sm:$0xff]
        %v4447 = vld [vmem:[%s4400 + $0xa9] sm:$0xff]
        %v4448 = vld [vmem:[%s4400 + $0xb1] sm:$0xff]
        %v4449 = vld [vmem:[%s4400 + $0xc1] sm:$0xff]
        %v4450 = vld [vmem:[%s4400 + $0xc9] sm:$0xff]
        %v4451 = vld [vmem:[%s4400 + $0xd9] sm:$0xff]
        %v4452 = vld [vmem:[%s4400 + $0xe1] sm:$0xff]
        %v4453 = vld [vmem:[%s4400 + $0xf1] sm:$0xff]
        %v4454 = vld [vmem:[%s4400 + $0xf9] sm:$0xff]
        %v4455 = vld [vmem:[%s4400 + $0x109] sm:$0xff]
        %v4456 = vld [vmem:[%s4400 + $0x111] sm:$0xff]
        %v4457 = vld [vmem:[%s4400 + $0x121] sm:$0xff]
        %v4458 = vld [vmem:[%s4400 + $0x129] sm:$0xff]
        %v4459 = vld [vmem:[%s4400 + $0x139] sm:$0xff]
        %v4460 = vld [vmem:[%s4400 + $0x141] sm:$0xff]
        %v4461 = vld [vmem:[%s4400 + $0x151] sm:$0xff]
        %v4462 = vld [vmem:[%s4400 + $0x159] sm:$0xff]
        %v4463 = vld [vmem:[%s4400 + $0x169] sm:$0xff]
        %v4464 = vld [vmem:[%s4400 + $0x171] sm:$0xff]
        %v4465 = vld [vmem:[%s4400 + $0x2] sm:$0xff]
        %v4466 = vld [vmem:[%s4400 + $0xa] sm:$0xff]
        %v4467 = vld [vmem:[%s4400 + $0x1a] sm:$0xff]
        %v4468 = vld [vmem:[%s4400 + $0x22] sm:$0xff]
        %v4469 = vld [vmem:[%s4400 + $0x32] sm:$0xff]
        %v4470 = vld [vmem:[%s4400 + $0x3a] sm:$0xff]
        %v4471 = vld [vmem:[%s4400 + $0x4a] sm:$0xff]
        %v4472 = vld [vmem:[%s4400 + $0x52] sm:$0xff]
        %v4473 = vld [vmem:[%s4400 + $0x62] sm:$0xff]
        %v4474 = vld [vmem:[%s4400 + $0x6a] sm:$0xff]
        %v4475 = vld [vmem:[%s4400 + $0x7a] sm:$0xff]
        %v4476 = vld [vmem:[%s4400 + $0x82] sm:$0xff]
        %v4477 = vld [vmem:[%s4400 + $0x92] sm:$0xff]
        %v4478 = vld [vmem:[%s4400 + $0x9a] sm:$0xff]
        %v4479 = vld [vmem:[%s4400 + $0xaa] sm:$0xff]
        %v4480 = vld [vmem:[%s4400 + $0xb2] sm:$0xff]
        %v4481 = vld [vmem:[%s4400 + $0xc2] sm:$0xff]
        %v4482 = vld [vmem:[%s4400 + $0xca] sm:$0xff]
        %v4483 = vld [vmem:[%s4400 + $0xda] sm:$0xff]
        %v4484 = vld [vmem:[%s4400 + $0xe2] sm:$0xff]
        %v4485 = vld [vmem:[%s4400 + $0xf2] sm:$0xff]
        %v4486 = vld [vmem:[%s4400 + $0xfa] sm:$0xff]
        %v4487 = vld [vmem:[%s4400 + $0x10a] sm:$0xff]
        %v4488 = vld [vmem:[%s4400 + $0x112] sm:$0xff]
        %v4489 = vld [vmem:[%s4400 + $0x122] sm:$0xff]
        %v4490 = vld [vmem:[%s4400 + $0x12a] sm:$0xff]
        %v4491 = vld [vmem:[%s4400 + $0x13a] sm:$0xff]
        %v4492 = vld [vmem:[%s4400 + $0x142] sm:$0xff]
        %v4493 = vld [vmem:[%s4400 + $0x152] sm:$0xff]
        %v4494 = vld [vmem:[%s4400 + $0x15a] sm:$0xff]
        %v4495 = vld [vmem:[%s4400 + $0x16a] sm:$0xff]
        %v4496 = vld [vmem:[%s4400 + $0x172] sm:$0xff]
        %4529 = vrot.lane.b32.xlu0 %v4240, 64
        %v4530 = vpop.permute.xlu0 %4529
        %4531 = vrot.lane.b32.xlu0 %v4241, 64
        %v4532 = vpop.permute.xlu0 %4531
        %4533 = vrot.lane.b32.xlu0 %v4242, 64
        %v4534 = vpop.permute.xlu0 %4533
        %4535 = vrot.lane.b32.xlu0 %v4243, 64
        %v4536 = vpop.permute.xlu0 %4535
        %4537 = vrot.lane.b32.xlu0 %v4244, 64
        %v4538 = vpop.permute.xlu0 %4537
        %4539 = vrot.lane.b32.xlu0 %v4245, 64
        %v4540 = vpop.permute.xlu0 %4539
        %4541 = vrot.lane.b32.xlu0 %v4246, 64
        %v4542 = vpop.permute.xlu0 %4541
        %4543 = vrot.lane.b32.xlu0 %v4247, 64
        %v4544 = vpop.permute.xlu0 %4543
        %4545 = vrot.lane.b32.xlu0 %v4248, 64
        %v4546 = vpop.permute.xlu0 %4545
        %4547 = vrot.lane.b32.xlu0 %v4249, 64
        %v4548 = vpop.permute.xlu0 %4547
        %4549 = vrot.lane.b32.xlu0 %v4250, 64
        %v4550 = vpop.permute.xlu0 %4549
        %4551 = vrot.lane.b32.xlu0 %v4251, 64
        %v4552 = vpop.permute.xlu0 %4551
        %4553 = vrot.lane.b32.xlu0 %v4252, 64
        %v4554 = vpop.permute.xlu0 %4553
        %4555 = vrot.lane.b32.xlu0 %v4253, 64
        %v4556 = vpop.permute.xlu0 %4555
        %4557 = vrot.lane.b32.xlu0 %v4254, 64
        %v4558 = vpop.permute.xlu0 %4557
        %4559 = vrot.lane.b32.xlu0 %v4255, 64
        %v4560 = vpop.permute.xlu0 %4559
        %4561 = vrot.lane.b32.xlu0 %v4256, 64
        %v4562 = vpop.permute.xlu0 %4561
        %4563 = vrot.lane.b32.xlu0 %v4257, 64
        %v4564 = vpop.permute.xlu0 %4563
        %4565 = vrot.lane.b32.xlu0 %v4258, 64
        %v4566 = vpop.permute.xlu0 %4565
        %4567 = vrot.lane.b32.xlu0 %v4259, 64
        %v4568 = vpop.permute.xlu0 %4567
        %4569 = vrot.lane.b32.xlu0 %v4260, 64
        %v4570 = vpop.permute.xlu0 %4569
        %4571 = vrot.lane.b32.xlu0 %v4261, 64
        %v4572 = vpop.permute.xlu0 %4571
        %4573 = vrot.lane.b32.xlu0 %v4262, 64
        %v4574 = vpop.permute.xlu0 %4573
        %4575 = vrot.lane.b32.xlu0 %v4263, 64
        %v4576 = vpop.permute.xlu0 %4575
        %4577 = vrot.lane.b32.xlu0 %v4264, 64
        %v4578 = vpop.permute.xlu0 %4577
        %4579 = vrot.lane.b32.xlu0 %v4265, 64
        %v4580 = vpop.permute.xlu0 %4579
        %4581 = vrot.lane.b32.xlu0 %v4266, 64
        %v4582 = vpop.permute.xlu0 %4581
        %4583 = vrot.lane.b32.xlu0 %v4267, 64
        %v4584 = vpop.permute.xlu0 %4583
        %4585 = vrot.lane.b32.xlu0 %v4268, 64
        %v4586 = vpop.permute.xlu0 %4585
        %4587 = vrot.lane.b32.xlu0 %v4269, 64
        %v4588 = vpop.permute.xlu0 %4587
        %4589 = vrot.lane.b32.xlu0 %v4270, 64
        %v4590 = vpop.permute.xlu0 %4589
        %4591 = vrot.lane.b32.xlu0 %v4271, 64
        %v4592 = vpop.permute.xlu0 %4591
        %4657 = vrot.lane.b32.xlu0 %v4304, 64
        %v4658 = vpop.permute.xlu0 %4657
        %4659 = vrot.lane.b32.xlu0 %v4305, 64
        %v4660 = vpop.permute.xlu0 %4659
        %4661 = vrot.lane.b32.xlu0 %v4306, 64
        %v4662 = vpop.permute.xlu0 %4661
        %4663 = vrot.lane.b32.xlu0 %v4307, 64
        %v4664 = vpop.permute.xlu0 %4663
        %4665 = vrot.lane.b32.xlu0 %v4308, 64
        %v4666 = vpop.permute.xlu0 %4665
        %4667 = vrot.lane.b32.xlu0 %v4309, 64
        %v4668 = vpop.permute.xlu0 %4667
        %4669 = vrot.lane.b32.xlu0 %v4310, 64
        %v4670 = vpop.permute.xlu0 %4669
        %4671 = vrot.lane.b32.xlu0 %v4311, 64
        %v4672 = vpop.permute.xlu0 %4671
        %4673 = vrot.lane.b32.xlu0 %v4312, 64
        %v4674 = vpop.permute.xlu0 %4673
        %4675 = vrot.lane.b32.xlu0 %v4313, 64
        %v4676 = vpop.permute.xlu0 %4675
        %4677 = vrot.lane.b32.xlu0 %v4314, 64
        %v4678 = vpop.permute.xlu0 %4677
        %4679 = vrot.lane.b32.xlu0 %v4315, 64
        %v4680 = vpop.permute.xlu0 %4679
        %4681 = vrot.lane.b32.xlu0 %v4316, 64
        %v4682 = vpop.permute.xlu0 %4681
        %4683 = vrot.lane.b32.xlu0 %v4317, 64
        %v4684 = vpop.permute.xlu0 %4683
        %4685 = vrot.lane.b32.xlu0 %v4318, 64
        %v4686 = vpop.permute.xlu0 %4685
        %4687 = vrot.lane.b32.xlu0 %v4319, 64
        %v4688 = vpop.permute.xlu0 %4687
        %4689 = vrot.lane.b32.xlu0 %v4320, 64
        %v4690 = vpop.permute.xlu0 %4689
        %4691 = vrot.lane.b32.xlu0 %v4321, 64
        %v4692 = vpop.permute.xlu0 %4691
        %4693 = vrot.lane.b32.xlu0 %v4322, 64
        %v4694 = vpop.permute.xlu0 %4693
        %4695 = vrot.lane.b32.xlu0 %v4323, 64
        %v4696 = vpop.permute.xlu0 %4695
        %4697 = vrot.lane.b32.xlu0 %v4324, 64
        %v4698 = vpop.permute.xlu0 %4697
        %4699 = vrot.lane.b32.xlu0 %v4325, 64
        %v4700 = vpop.permute.xlu0 %4699
        %4701 = vrot.lane.b32.xlu0 %v4326, 64
        %v4702 = vpop.permute.xlu0 %4701
        %4703 = vrot.lane.b32.xlu0 %v4327, 64
        %v4704 = vpop.permute.xlu0 %4703
        %4705 = vrot.lane.b32.xlu0 %v4328, 64
        %v4706 = vpop.permute.xlu0 %4705
        %4707 = vrot.lane.b32.xlu0 %v4329, 64
        %v4708 = vpop.permute.xlu0 %4707
        %4709 = vrot.lane.b32.xlu0 %v4330, 64
        %v4710 = vpop.permute.xlu0 %4709
        %4711 = vrot.lane.b32.xlu0 %v4331, 64
        %v4712 = vpop.permute.xlu0 %4711
        %4713 = vrot.lane.b32.xlu0 %v4332, 64
        %v4714 = vpop.permute.xlu0 %4713
        %4715 = vrot.lane.b32.xlu0 %v4333, 64
        %v4716 = vpop.permute.xlu0 %4715
        %4717 = vrot.lane.b32.xlu0 %v4334, 64
        %v4718 = vpop.permute.xlu0 %4717
        %4719 = vrot.lane.b32.xlu0 %v4335, 64
        %v4720 = vpop.permute.xlu0 %4719
        %4785 = vrot.lane.b32.xlu0 %v4368, 64
        %v4786 = vpop.permute.xlu0 %4785
        %4787 = vrot.lane.b32.xlu0 %v4369, 64
        %v4788 = vpop.permute.xlu0 %4787
        %4789 = vrot.lane.b32.xlu0 %v4370, 64
        %v4790 = vpop.permute.xlu0 %4789
        %4791 = vrot.lane.b32.xlu0 %v4371, 64
        %v4792 = vpop.permute.xlu0 %4791
        %4793 = vrot.lane.b32.xlu0 %v4372, 64
        %v4794 = vpop.permute.xlu0 %4793
        %4795 = vrot.lane.b32.xlu0 %v4373, 64
        %v4796 = vpop.permute.xlu0 %4795
        %4797 = vrot.lane.b32.xlu0 %v4374, 64
        %v4798 = vpop.permute.xlu0 %4797
        %4799 = vrot.lane.b32.xlu0 %v4375, 64
        %v4800 = vpop.permute.xlu0 %4799
        %4801 = vrot.lane.b32.xlu0 %v4376, 64
        %v4802 = vpop.permute.xlu0 %4801
        %4803 = vrot.lane.b32.xlu0 %v4377, 64
        %v4804 = vpop.permute.xlu0 %4803
        %4805 = vrot.lane.b32.xlu0 %v4378, 64
        %v4806 = vpop.permute.xlu0 %4805
        %4807 = vrot.lane.b32.xlu0 %v4379, 64
        %v4808 = vpop.permute.xlu0 %4807
        %4809 = vrot.lane.b32.xlu0 %v4380, 64
        %v4810 = vpop.permute.xlu0 %4809
        %4811 = vrot.lane.b32.xlu0 %v4381, 64
        %v4812 = vpop.permute.xlu0 %4811
        %4813 = vrot.lane.b32.xlu0 %v4382, 64
        %v4814 = vpop.permute.xlu0 %4813
        %4815 = vrot.lane.b32.xlu0 %v4383, 64
        %v4816 = vpop.permute.xlu0 %4815
        %4817 = vrot.lane.b32.xlu0 %v4384, 64
        %v4818 = vpop.permute.xlu0 %4817
        %4819 = vrot.lane.b32.xlu0 %v4385, 64
        %v4820 = vpop.permute.xlu0 %4819
        %4821 = vrot.lane.b32.xlu0 %v4386, 64
        %v4822 = vpop.permute.xlu0 %4821
        %4823 = vrot.lane.b32.xlu0 %v4387, 64
        %v4824 = vpop.permute.xlu0 %4823
        %4825 = vrot.lane.b32.xlu0 %v4388, 64
        %v4826 = vpop.permute.xlu0 %4825
        %4827 = vrot.lane.b32.xlu0 %v4389, 64
        %v4828 = vpop.permute.xlu0 %4827
        %4829 = vrot.lane.b32.xlu0 %v4390, 64
        %v4830 = vpop.permute.xlu0 %4829
        %4831 = vrot.lane.b32.xlu0 %v4391, 64
        %v4832 = vpop.permute.xlu0 %4831
        %4833 = vrot.lane.b32.xlu0 %v4392, 64
        %v4834 = vpop.permute.xlu0 %4833
        %4835 = vrot.lane.b32.xlu0 %v4393, 64
        %v4836 = vpop.permute.xlu0 %4835
        %4837 = vrot.lane.b32.xlu0 %v4394, 64
        %v4838 = vpop.permute.xlu0 %4837
        %4839 = vrot.lane.b32.xlu0 %v4395, 64
        %v4840 = vpop.permute.xlu0 %4839
        %4841 = vrot.lane.b32.xlu0 %v4396, 64
        %v4842 = vpop.permute.xlu0 %4841
        %4843 = vrot.lane.b32.xlu0 %v4397, 64
        %v4844 = vpop.permute.xlu0 %4843
        %4845 = vrot.lane.b32.xlu0 %v4398, 64
        %v4846 = vpop.permute.xlu0 %4845
        %4847 = vrot.lane.b32.xlu0 %v4399, 64
        %v4848 = vpop.permute.xlu0 %4847
        %4913 = vrot.lane.b32.xlu0 %v4433, 64
        %v4914 = vpop.permute.xlu0 %4913
        %4915 = vrot.lane.b32.xlu0 %v4434, 64
        %v4916 = vpop.permute.xlu0 %4915
        %4917 = vrot.lane.b32.xlu0 %v4435, 64
        %v4918 = vpop.permute.xlu0 %4917
        %4919 = vrot.lane.b32.xlu0 %v4436, 64
        %v4920 = vpop.permute.xlu0 %4919
        %4921 = vrot.lane.b32.xlu0 %v4437, 64
        %v4922 = vpop.permute.xlu0 %4921
        %4923 = vrot.lane.b32.xlu0 %v4438, 64
        %v4924 = vpop.permute.xlu0 %4923
        %4925 = vrot.lane.b32.xlu0 %v4439, 64
        %v4926 = vpop.permute.xlu0 %4925
        %4927 = vrot.lane.b32.xlu0 %v4440, 64
        %v4928 = vpop.permute.xlu0 %4927
        %4929 = vrot.lane.b32.xlu0 %v4441, 64
        %v4930 = vpop.permute.xlu0 %4929
        %4931 = vrot.lane.b32.xlu0 %v4442, 64
        %v4932 = vpop.permute.xlu0 %4931
        %4933 = vrot.lane.b32.xlu0 %v4443, 64
        %v4934 = vpop.permute.xlu0 %4933
        %4935 = vrot.lane.b32.xlu0 %v4444, 64
        %v4936 = vpop.permute.xlu0 %4935
        %4937 = vrot.lane.b32.xlu0 %v4445, 64
        %v4938 = vpop.permute.xlu0 %4937
        %4939 = vrot.lane.b32.xlu0 %v4446, 64
        %v4940 = vpop.permute.xlu0 %4939
        %4941 = vrot.lane.b32.xlu0 %v4447, 64
        %v4942 = vpop.permute.xlu0 %4941
        %4943 = vrot.lane.b32.xlu0 %v4448, 64
        %v4944 = vpop.permute.xlu0 %4943
        %4945 = vrot.lane.b32.xlu0 %v4449, 64
        %v4946 = vpop.permute.xlu0 %4945
        %4947 = vrot.lane.b32.xlu0 %v4450, 64
        %v4948 = vpop.permute.xlu0 %4947
        %4949 = vrot.lane.b32.xlu0 %v4451, 64
        %v4950 = vpop.permute.xlu0 %4949
        %4951 = vrot.lane.b32.xlu0 %v4452, 64
        %v4952 = vpop.permute.xlu0 %4951
        %4953 = vrot.lane.b32.xlu0 %v4453, 64
        %v4954 = vpop.permute.xlu0 %4953
        %4955 = vrot.lane.b32.xlu0 %v4454, 64
        %v4956 = vpop.permute.xlu0 %4955
        %4957 = vrot.lane.b32.xlu0 %v4455, 64
        %v4958 = vpop.permute.xlu0 %4957
        %4959 = vrot.lane.b32.xlu0 %v4456, 64
        %v4960 = vpop.permute.xlu0 %4959
        %4961 = vrot.lane.b32.xlu0 %v4457, 64
        %v4962 = vpop.permute.xlu0 %4961
        %4963 = vrot.lane.b32.xlu0 %v4458, 64
        %v4964 = vpop.permute.xlu0 %4963
        %4965 = vrot.lane.b32.xlu0 %v4459, 64
        %v4966 = vpop.permute.xlu0 %4965
        %4967 = vrot.lane.b32.xlu0 %v4460, 64
        %v4968 = vpop.permute.xlu0 %4967
        %4969 = vrot.lane.b32.xlu0 %v4461, 64
        %v4970 = vpop.permute.xlu0 %4969
        %4971 = vrot.lane.b32.xlu0 %v4462, 64
        %v4972 = vpop.permute.xlu0 %4971
        %4973 = vrot.lane.b32.xlu0 %v4463, 64
        %v4974 = vpop.permute.xlu0 %4973
        %4975 = vrot.lane.b32.xlu0 %v4464, 64
        %v4976 = vpop.permute.xlu0 %4975
        %v5009 = vsel %vm2491, %v4208, %v4530
        %v5010 = vsel %vm2491, %v4209, %v4532
        %v5011 = vsel %vm2491, %v4210, %v4534
        %v5012 = vsel %vm2491, %v4211, %v4536
        %v5013 = vsel %vm2491, %v4212, %v4538
        %v5014 = vsel %vm2491, %v4213, %v4540
        %v5015 = vsel %vm2491, %v4214, %v4542
        %v5016 = vsel %vm2491, %v4215, %v4544
        %v5017 = vsel %vm2491, %v4216, %v4546
        %v5018 = vsel %vm2491, %v4217, %v4548
        %v5019 = vsel %vm2491, %v4218, %v4550
        %v5020 = vsel %vm2491, %v4219, %v4552
        %v5021 = vsel %vm2491, %v4220, %v4554
        %v5022 = vsel %vm2491, %v4221, %v4556
        %v5023 = vsel %vm2491, %v4222, %v4558
        %v5024 = vsel %vm2491, %v4223, %v4560
        %v5025 = vsel %vm2491, %v4224, %v4562
        %v5026 = vsel %vm2491, %v4225, %v4564
        %v5027 = vsel %vm2491, %v4226, %v4566
        %v5028 = vsel %vm2491, %v4227, %v4568
        %v5029 = vsel %vm2491, %v4228, %v4570
        %v5030 = vsel %vm2491, %v4229, %v4572
        %v5031 = vsel %vm2491, %v4230, %v4574
        %v5032 = vsel %vm2491, %v4231, %v4576
        %v5033 = vsel %vm2491, %v4232, %v4578
        %v5034 = vsel %vm2491, %v4233, %v4580
        %v5035 = vsel %vm2491, %v4234, %v4582
        %v5036 = vsel %vm2491, %v4235, %v4584
        %v5037 = vsel %vm2491, %v4236, %v4586
        %v5038 = vsel %vm2491, %v4237, %v4588
        %v5039 = vsel %vm2491, %v4238, %v4590
        %v5040 = vsel %vm2491, %v4239, %v4592
        %v5041 = vsel %vm2491, %v4272, %v4658
        %v5042 = vsel %vm2491, %v4273, %v4660
        %v5043 = vsel %vm2491, %v4274, %v4662
        %v5044 = vsel %vm2491, %v4275, %v4664
        %v5045 = vsel %vm2491, %v4276, %v4666
        %v5046 = vsel %vm2491, %v4277, %v4668
        %v5047 = vsel %vm2491, %v4278, %v4670
        %v5048 = vsel %vm2491, %v4279, %v4672
        %v5049 = vsel %vm2491, %v4280, %v4674
        %v5050 = vsel %vm2491, %v4281, %v4676
        %v5051 = vsel %vm2491, %v4282, %v4678
        %v5052 = vsel %vm2491, %v4283, %v4680
        %v5053 = vsel %vm2491, %v4284, %v4682
        %v5054 = vsel %vm2491, %v4285, %v4684
        %v5055 = vsel %vm2491, %v4286, %v4686
        %v5056 = vsel %vm2491, %v4287, %v4688
        %v5057 = vsel %vm2491, %v4288, %v4690
        %v5058 = vsel %vm2491, %v4289, %v4692
        %v5059 = vsel %vm2491, %v4290, %v4694
        %v5060 = vsel %vm2491, %v4291, %v4696
        %v5061 = vsel %vm2491, %v4292, %v4698
        %v5062 = vsel %vm2491, %v4293, %v4700
        %v5063 = vsel %vm2491, %v4294, %v4702
        %v5064 = vsel %vm2491, %v4295, %v4704
        %v5065 = vsel %vm2491, %v4296, %v4706
        %v5066 = vsel %vm2491, %v4297, %v4708
        %v5067 = vsel %vm2491, %v4298, %v4710
        %v5068 = vsel %vm2491, %v4299, %v4712
        %v5069 = vsel %vm2491, %v4300, %v4714
        %v5070 = vsel %vm2491, %v4301, %v4716
        %v5071 = vsel %vm2491, %v4302, %v4718
        %v5072 = vsel %vm2491, %v4303, %v4720
        %v5073 = vsel %vm2491, %v4336, %v4786
        %v5074 = vsel %vm2491, %v4337, %v4788
        %v5075 = vsel %vm2491, %v4338, %v4790
        %v5076 = vsel %vm2491, %v4339, %v4792
        %v5077 = vsel %vm2491, %v4340, %v4794
        %v5078 = vsel %vm2491, %v4341, %v4796
        %v5079 = vsel %vm2491, %v4342, %v4798
        %v5080 = vsel %vm2491, %v4343, %v4800
        %v5081 = vsel %vm2491, %v4344, %v4802
        %v5082 = vsel %vm2491, %v4345, %v4804
        %v5083 = vsel %vm2491, %v4346, %v4806
        %v5084 = vsel %vm2491, %v4347, %v4808
        %v5085 = vsel %vm2491, %v4348, %v4810
        %v5086 = vsel %vm2491, %v4349, %v4812
        %v5087 = vsel %vm2491, %v4350, %v4814
        %v5088 = vsel %vm2491, %v4351, %v4816
        %v5089 = vsel %vm2491, %v4352, %v4818
        %v5090 = vsel %vm2491, %v4353, %v4820
        %v5091 = vsel %vm2491, %v4354, %v4822
        %v5092 = vsel %vm2491, %v4355, %v4824
        %v5093 = vsel %vm2491, %v4356, %v4826
        %v5094 = vsel %vm2491, %v4357, %v4828
        %v5095 = vsel %vm2491, %v4358, %v4830
        %v5096 = vsel %vm2491, %v4359, %v4832
        %v5097 = vsel %vm2491, %v4360, %v4834
        %v5098 = vsel %vm2491, %v4361, %v4836
        %v5099 = vsel %vm2491, %v4362, %v4838
        %v5100 = vsel %vm2491, %v4363, %v4840
        %v5101 = vsel %vm2491, %v4364, %v4842
        %v5102 = vsel %vm2491, %v4365, %v4844
        %v5103 = vsel %vm2491, %v4366, %v4846
        %v5104 = vsel %vm2491, %v4367, %v4848
        %v5105 = vsel %vm2491, %v4401, %v4914
        %v5106 = vsel %vm2491, %v4402, %v4916
        %v5107 = vsel %vm2491, %v4403, %v4918
        %v5108 = vsel %vm2491, %v4404, %v4920
        %v5109 = vsel %vm2491, %v4405, %v4922
        %v5110 = vsel %vm2491, %v4406, %v4924
        %v5111 = vsel %vm2491, %v4407, %v4926
        %v5112 = vsel %vm2491, %v4408, %v4928
        %v5113 = vsel %vm2491, %v4409, %v4930
        %v5114 = vsel %vm2491, %v4410, %v4932
        %v5115 = vsel %vm2491, %v4411, %v4934
        %v5116 = vsel %vm2491, %v4412, %v4936
        %v5117 = vsel %vm2491, %v4413, %v4938
        %v5118 = vsel %vm2491, %v4414, %v4940
        %v5119 = vsel %vm2491, %v4415, %v4942
        %v5120 = vsel %vm2491, %v4416, %v4944
        %v5121 = vsel %vm2491, %v4417, %v4946
        %v5122 = vsel %vm2491, %v4418, %v4948
        %v5123 = vsel %vm2491, %v4419, %v4950
        %v5124 = vsel %vm2491, %v4420, %v4952
        %v5125 = vsel %vm2491, %v4421, %v4954
        %v5126 = vsel %vm2491, %v4422, %v4956
        %v5127 = vsel %vm2491, %v4423, %v4958
        %v5128 = vsel %vm2491, %v4424, %v4960
        %v5129 = vsel %vm2491, %v4425, %v4962
        %v5130 = vsel %vm2491, %v4426, %v4964
        %v5131 = vsel %vm2491, %v4427, %v4966
        %v5132 = vsel %vm2491, %v4428, %v4968
        %v5133 = vsel %vm2491, %v4429, %v4970
        %v5134 = vsel %vm2491, %v4430, %v4972
        %v5135 = vsel %vm2491, %v4431, %v4974
        %v5136 = vsel %vm2491, %v4432, %v4976
        %v5137 = vld [vmem:[%s7] sm:$0xff]
        %v5138 = vld [vmem:[%s7 + $0x8] sm:$0xff]
        %v5139 = vld [vmem:[%s7 + $0x10] sm:$0xff]
        %v5140 = vld [vmem:[%s7 + $0x18] sm:$0xff]
        %v5141 = vld [vmem:[%s7 + $0x20] sm:$0xff]
        %v5142 = vld [vmem:[%s7 + $0x28] sm:$0xff]
        %v5143 = vld [vmem:[%s7 + $0x30] sm:$0xff]
        %v5144 = vld [vmem:[%s7 + $0x38] sm:$0xff]
        %v5145 = vld [vmem:[%s7 + $0x40] sm:$0xff]
        %v5146 = vld [vmem:[%s7 + $0x48] sm:$0xff]
        %v5147 = vld [vmem:[%s7 + $0x50] sm:$0xff]
        %v5148 = vld [vmem:[%s7 + $0x58] sm:$0xff]
        %v5149 = vld [vmem:[%s7 + $0x60] sm:$0xff]
        %v5150 = vld [vmem:[%s7 + $0x68] sm:$0xff]
        %v5151 = vld [vmem:[%s7 + $0x70] sm:$0xff]
        %v5152 = vld [vmem:[%s7 + $0x78] sm:$0xff]
        %v5153 = vld [vmem:[%s7 + $0x80] sm:$0xff]
        %v5154 = vld [vmem:[%s7 + $0x88] sm:$0xff]
        %v5155 = vld [vmem:[%s7 + $0x90] sm:$0xff]
        %v5156 = vld [vmem:[%s7 + $0x98] sm:$0xff]
        %v5157 = vld [vmem:[%s7 + $0xa0] sm:$0xff]
        %v5158 = vld [vmem:[%s7 + $0xa8] sm:$0xff]
        %v5159 = vld [vmem:[%s7 + $0xb0] sm:$0xff]
        %v5160 = vld [vmem:[%s7 + $0xb8] sm:$0xff]
        %v5161 = vld [vmem:[%s7 + $0xc0] sm:$0xff]
        %v5162 = vld [vmem:[%s7 + $0xc8] sm:$0xff]
        %v5163 = vld [vmem:[%s7 + $0xd0] sm:$0xff]
        %v5164 = vld [vmem:[%s7 + $0xd8] sm:$0xff]
        %v5165 = vld [vmem:[%s7 + $0xe0] sm:$0xff]
        %v5166 = vld [vmem:[%s7 + $0xe8] sm:$0xff]
        %v5167 = vld [vmem:[%s7 + $0xf0] sm:$0xff]
        %v5168 = vld [vmem:[%s7 + $0xf8] sm:$0xff]
        %v5169 = vld [vmem:[%s7 + $0x100] sm:$0xff]
        %v5170 = vld [vmem:[%s7 + $0x108] sm:$0xff]
        %v5171 = vld [vmem:[%s7 + $0x110] sm:$0xff]
        %v5172 = vld [vmem:[%s7 + $0x118] sm:$0xff]
        %v5173 = vld [vmem:[%s7 + $0x120] sm:$0xff]
        %v5174 = vld [vmem:[%s7 + $0x128] sm:$0xff]
        %v5175 = vld [vmem:[%s7 + $0x130] sm:$0xff]
        %v5176 = vld [vmem:[%s7 + $0x138] sm:$0xff]
        %v5177 = vld [vmem:[%s7 + $0x140] sm:$0xff]
        %v5178 = vld [vmem:[%s7 + $0x148] sm:$0xff]
        %v5179 = vld [vmem:[%s7 + $0x150] sm:$0xff]
        %v5180 = vld [vmem:[%s7 + $0x158] sm:$0xff]
        %v5181 = vld [vmem:[%s7 + $0x160] sm:$0xff]
        %v5182 = vld [vmem:[%s7 + $0x168] sm:$0xff]
        %v5183 = vld [vmem:[%s7 + $0x170] sm:$0xff]
        %v5184 = vld [vmem:[%s7 + $0x178] sm:$0xff]
        %v5185 = vld [vmem:[%s7 + $0x180] sm:$0xff]
        %v5186 = vld [vmem:[%s7 + $0x188] sm:$0xff]
        %v5187 = vld [vmem:[%s7 + $0x190] sm:$0xff]
        %v5188 = vld [vmem:[%s7 + $0x198] sm:$0xff]
        %v5189 = vld [vmem:[%s7 + $0x1a0] sm:$0xff]
        %v5190 = vld [vmem:[%s7 + $0x1a8] sm:$0xff]
        %v5191 = vld [vmem:[%s7 + $0x1b0] sm:$0xff]
        %v5192 = vld [vmem:[%s7 + $0x1b8] sm:$0xff]
        %v5193 = vld [vmem:[%s7 + $0x1c0] sm:$0xff]
        %v5194 = vld [vmem:[%s7 + $0x1c8] sm:$0xff]
        %v5195 = vld [vmem:[%s7 + $0x1d0] sm:$0xff]
        %v5196 = vld [vmem:[%s7 + $0x1d8] sm:$0xff]
        %v5197 = vld [vmem:[%s7 + $0x1e0] sm:$0xff]
        %v5198 = vld [vmem:[%s7 + $0x1e8] sm:$0xff]
        %v5199 = vld [vmem:[%s7 + $0x1f0] sm:$0xff]
        %v5200 = vld [vmem:[%s7 + $0x1f8] sm:$0xff]
        %v5201 = vld [vmem:[%s7 + $0x200] sm:$0xff]
        %v5202 = vld [vmem:[%s7 + $0x208] sm:$0xff]
        %v5203 = vld [vmem:[%s7 + $0x210] sm:$0xff]
        %v5204 = vld [vmem:[%s7 + $0x218] sm:$0xff]
        %v5205 = vld [vmem:[%s7 + $0x220] sm:$0xff]
        %v5206 = vld [vmem:[%s7 + $0x228] sm:$0xff]
        %v5207 = vld [vmem:[%s7 + $0x230] sm:$0xff]
        %v5208 = vld [vmem:[%s7 + $0x238] sm:$0xff]
        %v5209 = vld [vmem:[%s8] sm:$0x1]
        %v5211 = vlaneseq
        %v5212 = vshrl.u32 %v5211, 7
        %v5213 = vsub.s32 0, %v5212
        %v5214 = vrot.slane %v5209, %v5213
        %v5217 = vsel %vm2491, %v4465, 0
        %v5220 = vsel %vm2491, %v4466, 0
        %v5223 = vsel %vm2491, %v4467, 0
        %v5226 = vsel %vm2491, %v4468, 0
        %v5229 = vsel %vm2491, %v4469, 0
        %v5232 = vsel %vm2491, %v4470, 0
        %v5235 = vsel %vm2491, %v4471, 0
        %v5238 = vsel %vm2491, %v4472, 0
        %v5241 = vsel %vm2491, %v4473, 0
        %v5244 = vsel %vm2491, %v4474, 0
        %v5247 = vsel %vm2491, %v4475, 0
        %v5250 = vsel %vm2491, %v4476, 0
        %v5253 = vsel %vm2491, %v4477, 0
        %v5256 = vsel %vm2491, %v4478, 0
        %v5259 = vsel %vm2491, %v4479, 0
        %v5262 = vsel %vm2491, %v4480, 0
        %v5265 = vsel %vm2491, %v4481, 0
        %v5268 = vsel %vm2491, %v4482, 0
        %v5271 = vsel %vm2491, %v4483, 0
        %v5274 = vsel %vm2491, %v4484, 0
        %v5277 = vsel %vm2491, %v4485, 0
        %v5280 = vsel %vm2491, %v4486, 0
        %v5283 = vsel %vm2491, %v4487, 0
        %v5286 = vsel %vm2491, %v4488, 0
        %v5289 = vsel %vm2491, %v4489, 0
        %v5292 = vsel %vm2491, %v4490, 0
        %v5295 = vsel %vm2491, %v4491, 0
        %v5298 = vsel %vm2491, %v4492, 0
        %v5301 = vsel %vm2491, %v4493, 0
        %v5304 = vsel %vm2491, %v4494, 0
        %v5307 = vsel %vm2491, %v4495, 0
        %v5310 = vsel %vm2491, %v4496, 0
        %5312 = vmatprep.subr.mxu0 0.0
        %5313 = vmatpush1.msra.mxu0 %v5137
        %5314 = vmatprep.subr.mxu0 0.0
        %5315 = vmatpush1.msra.mxu0 %v5138
        %5316 = vmatprep.subr.mxu0 0.0
        %5317 = vmatpush1.msra.mxu0 %v5139
        %5318 = vmatprep.subr.mxu0 0.0
        %5319 = vmatpush1.msra.mxu0 %v5140
        %5320 = vmatprep.subr.mxu0 0.0
        %5321 = vmatpush1.msra.mxu0 %v5141
        %5322 = vmatprep.subr.mxu0 0.0
        %5323 = vmatpush1.msra.mxu0 %v5142
        %5324 = vmatprep.subr.mxu0 0.0
        %5325 = vmatpush1.msra.mxu0 %v5143
        %5326 = vmatprep.subr.mxu0 0.0
        %5327 = vmatpush1.msra.mxu0 %v5144
        %5328 = vmatprep.subr.mxu0 0.0
        %5329 = vmatpush1.msra.mxu0 %v5145
        %5330 = vmatprep.subr.mxu0 0.0
        %5331 = vmatpush1.msra.mxu0 %v5146
        %5332 = vmatprep.subr.mxu0 0.0
        %5333 = vmatpush1.msra.mxu0 %v5147
        %5334 = vmatprep.subr.mxu0 0.0
        %5335 = vmatpush1.msra.mxu0 %v5148
        %5336 = vmatprep.subr.mxu0 0.0
        %5337 = vmatpush1.msra.mxu0 %v5149
        %5338 = vmatprep.subr.mxu0 0.0
        %5339 = vmatpush1.msra.mxu0 %v5150
        %5340 = vmatprep.subr.mxu0 0.0
        %5341 = vmatpush1.msra.mxu0 %v5151
        %5342 = vmatprep.subr.mxu0 0.0
        %5343 = vmatpush1.msra.mxu0 %v5152
        %5344 = vmatprep.subr.mxu0 0.0
        %5345 = vmatpush1.msra.mxu0 %v5153
        %5346 = vmatprep.subr.mxu0 0.0
        %5347 = vmatpush1.msra.mxu0 %v5154
        %5348 = vmatprep.subr.mxu0 0.0
        %5349 = vmatpush1.msra.mxu0 %v5155
        %5350 = vmatprep.subr.mxu0 0.0
        %5351 = vmatpush1.msra.mxu0 %v5156
        %5352 = vmatprep.subr.mxu0 0.0
        %5353 = vmatpush1.msra.mxu0 %v5157
        %5354 = vmatprep.subr.mxu0 0.0
        %5355 = vmatpush1.msra.mxu0 %v5158
        %5356 = vmatprep.subr.mxu0 0.0
        %5357 = vmatpush1.msra.mxu0 %v5159
        %5358 = vmatprep.subr.mxu0 0.0
        %5359 = vmatpush1.msra.mxu0 %v5160
        %5360 = vmatprep.subr.mxu0 0.0
        %5361 = vmatpush1.msra.mxu0 %v5161
        %5362 = vmatprep.subr.mxu0 0.0
        %5363 = vmatpush1.msra.mxu0 %v5162
        %5364 = vmatprep.subr.mxu0 0.0
        %5365 = vmatpush1.msra.mxu0 %v5163
        %5366 = vmatprep.subr.mxu0 0.0
        %5367 = vmatpush1.msra.mxu0 %v5164
        %5368 = vmatprep.subr.mxu0 0.0
        %5369 = vmatpush1.msra.mxu0 %v5165
        %5370 = vmatprep.subr.mxu0 0.0
        %5371 = vmatpush1.msra.mxu0 %v5166
        %5372 = vmatprep.subr.mxu0 0.0
        %5373 = vmatpush1.msra.mxu0 %v5167
        %5374 = vmatprep.subr.mxu0 0.0
        %5375 = vmatpush1.msra.mxu0 %v5168
        %5376 = vmatprep.mubr.f32.mxu0 %v5041
        %5377 = vmatmul.mubr.f32.gmra.mrb[0].mxu0 %v5009
        %v5378 = vpop.f32.mrb[0].mxu0
        %v5379 = vadd.f32 %v5214, %v5378
        %v5380 = vpop.f32.mrb[0].mxu0
        %5381 = vmatprep.mubr.f32.mxu0 %v5042
        %5382 = vmatmul.mubr.f32.gmra.mrb[0].mxu0 %v5010
        %v5383 = vpop.f32.mrb[0].mxu0
        %v5384 = vadd.f32 %v5214, %v5383
        %v5385 = vpop.f32.mrb[0].mxu0
        %5386 = vmatprep.mubr.f32.mxu0 %v5043
        %5387 = vmatmul.mubr.f32.gmra.mrb[0].mxu0 %v5011
        %v5388 = vpop.f32.mrb[0].mxu0
        %v5389 = vadd.f32 %v5214, %v5388
        %v5390 = vpop.f32.mrb[0].mxu0
        %5391 = vmatprep.mubr.f32.mxu0 %v5044
        %5392 = vmatmul.mubr.f32.gmra.mrb[0].mxu0 %v5012
        %v5393 = vpop.f32.mrb[0].mxu0
        %v5394 = vadd.f32 %v5214, %v5393
        %v5395 = vpop.f32.mrb[0].mxu0
        %5396 = vmatprep.mubr.f32.mxu0 %v5045
        %5397 = vmatmul.mubr.f32.gmra.mrb[0].mxu0 %v5013
        %v5398 = vpop.f32.mrb[0].mxu0
        %v5399 = vadd.f32 %v5214, %v5398
        %v5400 = vpop.f32.mrb[0].mxu0
        %5401 = vmatprep.mubr.f32.mxu0 %v5046
        %5402 = vmatmul.mubr.f32.gmra.mrb[0].mxu0 %v5014
        %v5403 = vpop.f32.mrb[0].mxu0
        %v5404 = vadd.f32 %v5214, %v5403
        %v5405 = vpop.f32.mrb[0].mxu0
        %5406 = vmatprep.mubr.f32.mxu0 %v5047
        %5407 = vmatmul.mubr.f32.gmra.mrb[0].mxu0 %v5015
        %v5408 = vpop.f32.mrb[0].mxu0
        %v5409 = vadd.f32 %v5214, %v5408
        %v5410 = vpop.f32.mrb[0].mxu0
        %5411 = vmatprep.mubr.f32.mxu0 %v5048
        %5412 = vmatmul.mubr.f32.gmra.mrb[0].mxu0 %v5016
        %v5413 = vpop.f32.mrb[0].mxu0
        %v5414 = vadd.f32 %v5214, %v5413
        %v5415 = vpop.f32.mrb[0].mxu0
        %5416 = vmatprep.mubr.f32.mxu0 %v5049
        %5417 = vmatmul.mubr.f32.gmra.mrb[0].mxu0 %v5017
        %v5418 = vpop.f32.mrb[0].mxu0
        %v5419 = vadd.f32 %v5214, %v5418
        %v5420 = vpop.f32.mrb[0].mxu0
        %5421 = vmatprep.mubr.f32.mxu0 %v5050
        %5422 = vmatmul.mubr.f32.gmra.mrb[0].mxu0 %v5018
        %v5423 = vpop.f32.mrb[0].mxu0
        %v5424 = vadd.f32 %v5214, %v5423
        %v5425 = vpop.f32.mrb[0].mxu0
        %5426 = vmatprep.mubr.f32.mxu0 %v5051
        %5427 = vmatmul.mubr.f32.gmra.mrb[0].mxu0 %v5019
        %v5428 = vpop.f32.mrb[0].mxu0
        %v5429 = vadd.f32 %v5214, %v5428
        %v5430 = vpop.f32.mrb[0].mxu0
        %5431 = vmatprep.mubr.f32.mxu0 %v5052
        %5432 = vmatmul.mubr.f32.gmra.mrb[0].mxu0 %v5020
        %v5433 = vpop.f32.mrb[0].mxu0
        %v5434 = vadd.f32 %v5214, %v5433
        %v5435 = vpop.f32.mrb[0].mxu0
        %5436 = vmatprep.mubr.f32.mxu0 %v5053
        %5437 = vmatmul.mubr.f32.gmra.mrb[0].mxu0 %v5021
        %v5438 = vpop.f32.mrb[0].mxu0
        %v5439 = vadd.f32 %v5214, %v5438
        %v5440 = vpop.f32.mrb[0].mxu0
        %5441 = vmatprep.mubr.f32.mxu0 %v5054
        %5442 = vmatmul.mubr.f32.gmra.mrb[0].mxu0 %v5022
        %v5443 = vpop.f32.mrb[0].mxu0
        %v5444 = vadd.f32 %v5214, %v5443
        %v5445 = vpop.f32.mrb[0].mxu0
        %5446 = vmatprep.mubr.f32.mxu0 %v5055
        %5447 = vmatmul.mubr.f32.gmra.mrb[0].mxu0 %v5023
        %v5448 = vpop.f32.mrb[0].mxu0
        %v5449 = vadd.f32 %v5214, %v5448
        %v5450 = vpop.f32.mrb[0].mxu0
        %5451 = vmatprep.mubr.f32.mxu0 %v5056
        %5452 = vmatmul.mubr.f32.gmra.mrb[0].mxu0 %v5024
        %v5453 = vpop.f32.mrb[0].mxu0
        %v5454 = vadd.f32 %v5214, %v5453
        %v5455 = vpop.f32.mrb[0].mxu0
        %5456 = vmatprep.mubr.f32.mxu0 %v5057
        %5457 = vmatmul.mubr.f32.gmra.mrb[0].mxu0 %v5025
        %v5458 = vpop.f32.mrb[0].mxu0
        %v5459 = vadd.f32 %v5214, %v5458
        %v5460 = vpop.f32.mrb[0].mxu0
        %5461 = vmatprep.mubr.f32.mxu0 %v5058
        %5462 = vmatmul.mubr.f32.gmra.mrb[0].mxu0 %v5026
        %v5463 = vpop.f32.mrb[0].mxu0
        %v5464 = vadd.f32 %v5214, %v5463
        %v5465 = vpop.f32.mrb[0].mxu0
        %5466 = vmatprep.mubr.f32.mxu0 %v5059
        %5467 = vmatmul.mubr.f32.gmra.mrb[0].mxu0 %v5027
        %v5468 = vpop.f32.mrb[0].mxu0
        %v5469 = vadd.f32 %v5214, %v5468
        %v5470 = vpop.f32.mrb[0].mxu0
        %5471 = vmatprep.mubr.f32.mxu0 %v5060
        %5472 = vmatmul.mubr.f32.gmra.mrb[0].mxu0 %v5028
        %v5473 = vpop.f32.mrb[0].mxu0
        %v5474 = vadd.f32 %v5214, %v5473
        %v5475 = vpop.f32.mrb[0].mxu0
        %5476 = vmatprep.mubr.f32.mxu0 %v5061
        %5477 = vmatmul.mubr.f32.gmra.mrb[0].mxu0 %v5029
        %v5478 = vpop.f32.mrb[0].mxu0
        %v5479 = vadd.f32 %v5214, %v5478
        %v5480 = vpop.f32.mrb[0].mxu0
        %5481 = vmatprep.mubr.f32.mxu0 %v5062
        %5482 = vmatmul.mubr.f32.gmra.mrb[0].mxu0 %v5030
        %v5483 = vpop.f32.mrb[0].mxu0
        %v5484 = vadd.f32 %v5214, %v5483
        %v5485 = vpop.f32.mrb[0].mxu0
        %5486 = vmatprep.mubr.f32.mxu0 %v5063
        %5487 = vmatmul.mubr.f32.gmra.mrb[0].mxu0 %v5031
        %v5488 = vpop.f32.mrb[0].mxu0
        %v5489 = vadd.f32 %v5214, %v5488
        %v5490 = vpop.f32.mrb[0].mxu0
        %5491 = vmatprep.mubr.f32.mxu0 %v5064
        %5492 = vmatmul.mubr.f32.gmra.mrb[0].mxu0 %v5032
        %v5493 = vpop.f32.mrb[0].mxu0
        %v5494 = vadd.f32 %v5214, %v5493
        %v5495 = vpop.f32.mrb[0].mxu0
        %5496 = vmatprep.mubr.f32.mxu0 %v5065
        %5497 = vmatmul.mubr.f32.gmra.mrb[0].mxu0 %v5033
        %v5498 = vpop.f32.mrb[0].mxu0
        %v5499 = vadd.f32 %v5214, %v5498
        %v5500 = vpop.f32.mrb[0].mxu0
        %5501 = vmatprep.mubr.f32.mxu0 %v5066
        %5502 = vmatmul.mubr.f32.gmra.mrb[0].mxu0 %v5034
        %v5503 = vpop.f32.mrb[0].mxu0
        %v5504 = vadd.f32 %v5214, %v5503
        %v5505 = vpop.f32.mrb[0].mxu0
        %5506 = vmatprep.mubr.f32.mxu0 %v5067
        %5507 = vmatmul.mubr.f32.gmra.mrb[0].mxu0 %v5035
        %v5508 = vpop.f32.mrb[0].mxu0
        %v5509 = vadd.f32 %v5214, %v5508
        %v5510 = vpop.f32.mrb[0].mxu0
        %5511 = vmatprep.mubr.f32.mxu0 %v5068
        %5512 = vmatmul.mubr.f32.gmra.mrb[0].mxu0 %v5036
        %v5513 = vpop.f32.mrb[0].mxu0
        %v5514 = vadd.f32 %v5214, %v5513
        %v5515 = vpop.f32.mrb[0].mxu0
        %5516 = vmatprep.mubr.f32.mxu0 %v5069
        %5517 = vmatmul.mubr.f32.gmra.mrb[0].mxu0 %v5037
        %v5518 = vpop.f32.mrb[0].mxu0
        %v5519 = vadd.f32 %v5214, %v5518
        %v5520 = vpop.f32.mrb[0].mxu0
        %5521 = vmatprep.mubr.f32.mxu0 %v5070
        %5522 = vmatmul.mubr.f32.gmra.mrb[0].mxu0 %v5038
        %v5523 = vpop.f32.mrb[0].mxu0
        %v5524 = vadd.f32 %v5214, %v5523
        %v5525 = vpop.f32.mrb[0].mxu0
        %5526 = vmatprep.mubr.f32.mxu0 %v5071
        %5527 = vmatmul.mubr.f32.gmra.mrb[0].mxu0 %v5039
        %v5528 = vpop.f32.mrb[0].mxu0
        %v5529 = vadd.f32 %v5214, %v5528
        %v5530 = vpop.f32.mrb[0].mxu0
        %5531 = vmatprep.mubr.f32.mxu0 %v5072
        %5532 = vmatmul.mubr.f32.gmra.mrb[0].mxu0 %v5040
        %v5533 = vpop.f32.mrb[0].mxu0
        %v5534 = vadd.f32 %v5214, %v5533
        %v5535 = vpop.f32.mrb[0].mxu0
        %5536 = vdwg.mxu0
        %5537 = vmatprep.subr.mxu0 0.0
        %5538 = vmatpush1.msra.mxu0 %v5169
        %5539 = vmatprep.subr.mxu0 0.0
        %5540 = vmatpush1.msra.mxu0 %v5170
        %5541 = vmatprep.subr.mxu0 0.0
        %5542 = vmatpush1.msra.mxu0 %v5171
        %5543 = vmatprep.subr.mxu0 0.0
        %5544 = vmatpush1.msra.mxu0 %v5172
        %5545 = vmatprep.subr.mxu0 0.0
        %5546 = vmatpush1.msra.mxu0 %v5173
        %5547 = vmatprep.subr.mxu0 0.0
        %5548 = vmatpush1.msra.mxu0 %v5174
        %5549 = vmatprep.subr.mxu0 0.0
        %5550 = vmatpush1.msra.mxu0 %v5175
        %5551 = vmatprep.subr.mxu0 0.0
        %5552 = vmatpush1.msra.mxu0 %v5176
        %5553 = vmatprep.subr.mxu0 0.0
        %5554 = vmatpush1.msra.mxu0 %v5177
        %5555 = vmatprep.subr.mxu0 0.0
        %5556 = vmatpush1.msra.mxu0 %v5178
        %5557 = vmatprep.subr.mxu0 0.0
        %5558 = vmatpush1.msra.mxu0 %v5179
        %5559 = vmatprep.subr.mxu0 0.0
        %5560 = vmatpush1.msra.mxu0 %v5180
        %5561 = vmatprep.subr.mxu0 0.0
        %5562 = vmatpush1.msra.mxu0 %v5181
        %5563 = vmatprep.subr.mxu0 0.0
        %5564 = vmatpush1.msra.mxu0 %v5182
        %5565 = vmatprep.subr.mxu0 0.0
        %5566 = vmatpush1.msra.mxu0 %v5183
        %5567 = vmatprep.subr.mxu0 0.0
        %5568 = vmatpush1.msra.mxu0 %v5184
        %5569 = vmatprep.subr.mxu0 0.0
        %5570 = vmatpush1.msra.mxu0 %v5185
        %5571 = vmatprep.subr.mxu0 0.0
        %5572 = vmatpush1.msra.mxu0 %v5186
        %5573 = vmatprep.subr.mxu0 0.0
        %5574 = vmatpush1.msra.mxu0 %v5187
        %5575 = vmatprep.subr.mxu0 0.0
        %5576 = vmatpush1.msra.mxu0 %v5188
        %5577 = vmatprep.subr.mxu0 0.0
        %5578 = vmatpush1.msra.mxu0 %v5189
        %5579 = vmatprep.subr.mxu0 0.0
        %5580 = vmatpush1.msra.mxu0 %v5190
        %5581 = vmatprep.subr.mxu0 0.0
        %5582 = vmatpush1.msra.mxu0 %v5191
        %5583 = vmatprep.subr.mxu0 0.0
        %5584 = vmatpush1.msra.mxu0 %v5192
        %5585 = vmatprep.subr.mxu0 0.0
        %5586 = vmatpush1.msra.mxu0 %v5193
        %5587 = vmatprep.subr.mxu0 0.0
        %5588 = vmatpush1.msra.mxu0 %v5194
        %5589 = vmatprep.subr.mxu0 0.0
        %5590 = vmatpush1.msra.mxu0 %v5195
        %5591 = vmatprep.subr.mxu0 0.0
        %5592 = vmatpush1.msra.mxu0 %v5196
        %5593 = vmatprep.subr.mxu0 0.0
        %5594 = vmatpush1.msra.mxu0 %v5197
        %5595 = vmatprep.subr.mxu0 0.0
        %5596 = vmatpush1.msra.mxu0 %v5198
        %5597 = vmatprep.subr.mxu0 0.0
        %5598 = vmatpush1.msra.mxu0 %v5199
        %5599 = vmatprep.subr.mxu0 0.0
        %5600 = vmatpush1.msra.mxu0 %v5200
        %5601 = vmatprep.mubr.f32.mxu0 %v5105
        %5602 = vmatmul.mubr.f32.gmra.mrb[0].mxu0 %v5073
        %v5603 = vpop.f32.mrb[0].mxu0
        %v5604 = vadd.f32 %v5379, %v5603
        %v5605 = vpop.f32.mrb[0].mxu0
        %5606 = vmatprep.mubr.f32.mxu0 %v5106
        %5607 = vmatmul.mubr.f32.gmra.mrb[0].mxu0 %v5074
        %v5608 = vpop.f32.mrb[0].mxu0
        %v5609 = vadd.f32 %v5384, %v5608
        %v5610 = vpop.f32.mrb[0].mxu0
        %5611 = vmatprep.mubr.f32.mxu0 %v5107
        %5612 = vmatmul.mubr.f32.gmra.mrb[0].mxu0 %v5075
        %v5613 = vpop.f32.mrb[0].mxu0
        %v5614 = vadd.f32 %v5389, %v5613
        %v5615 = vpop.f32.mrb[0].mxu0
        %5616 = vmatprep.mubr.f32.mxu0 %v5108
        %5617 = vmatmul.mubr.f32.gmra.mrb[0].mxu0 %v5076
        %v5618 = vpop.f32.mrb[0].mxu0
        %v5619 = vadd.f32 %v5394, %v5618
        %v5620 = vpop.f32.mrb[0].mxu0
        %5621 = vmatprep.mubr.f32.mxu0 %v5109
        %5622 = vmatmul.mubr.f32.gmra.mrb[0].mxu0 %v5077
        %v5623 = vpop.f32.mrb[0].mxu0
        %v5624 = vadd.f32 %v5399, %v5623
        %v5625 = vpop.f32.mrb[0].mxu0
        %5626 = vmatprep.mubr.f32.mxu0 %v5110
        %5627 = vmatmul.mubr.f32.gmra.mrb[0].mxu0 %v5078
        %v5628 = vpop.f32.mrb[0].mxu0
        %v5629 = vadd.f32 %v5404, %v5628
        %v5630 = vpop.f32.mrb[0].mxu0
        %5631 = vmatprep.mubr.f32.mxu0 %v5111
        %5632 = vmatmul.mubr.f32.gmra.mrb[0].mxu0 %v5079
        %v5633 = vpop.f32.mrb[0].mxu0
        %v5634 = vadd.f32 %v5409, %v5633
        %v5635 = vpop.f32.mrb[0].mxu0
        %5636 = vmatprep.mubr.f32.mxu0 %v5112
        %5637 = vmatmul.mubr.f32.gmra.mrb[0].mxu0 %v5080
        %v5638 = vpop.f32.mrb[0].mxu0
        %v5639 = vadd.f32 %v5414, %v5638
        %v5640 = vpop.f32.mrb[0].mxu0
        %5641 = vmatprep.mubr.f32.mxu0 %v5113
        %5642 = vmatmul.mubr.f32.gmra.mrb[0].mxu0 %v5081
        %v5643 = vpop.f32.mrb[0].mxu0
        %v5644 = vadd.f32 %v5419, %v5643
        %v5645 = vpop.f32.mrb[0].mxu0
        %5646 = vmatprep.mubr.f32.mxu0 %v5114
        %5647 = vmatmul.mubr.f32.gmra.mrb[0].mxu0 %v5082
        %v5648 = vpop.f32.mrb[0].mxu0
        %v5649 = vadd.f32 %v5424, %v5648
        %v5650 = vpop.f32.mrb[0].mxu0
        %5651 = vmatprep.mubr.f32.mxu0 %v5115
        %5652 = vmatmul.mubr.f32.gmra.mrb[0].mxu0 %v5083
        %v5653 = vpop.f32.mrb[0].mxu0
        %v5654 = vadd.f32 %v5429, %v5653
        %v5655 = vpop.f32.mrb[0].mxu0
        %5656 = vmatprep.mubr.f32.mxu0 %v5116
        %5657 = vmatmul.mubr.f32.gmra.mrb[0].mxu0 %v5084
        %v5658 = vpop.f32.mrb[0].mxu0
        %v5659 = vadd.f32 %v5434, %v5658
        %v5660 = vpop.f32.mrb[0].mxu0
        %5661 = vmatprep.mubr.f32.mxu0 %v5117
        %5662 = vmatmul.mubr.f32.gmra.mrb[0].mxu0 %v5085
        %v5663 = vpop.f32.mrb[0].mxu0
        %v5664 = vadd.f32 %v5439, %v5663
        %v5665 = vpop.f32.mrb[0].mxu0
        %5666 = vmatprep.mubr.f32.mxu0 %v5118
        %5667 = vmatmul.mubr.f32.gmra.mrb[0].mxu0 %v5086
        %v5668 = vpop.f32.mrb[0].mxu0
        %v5669 = vadd.f32 %v5444, %v5668
        %v5670 = vpop.f32.mrb[0].mxu0
        %5671 = vmatprep.mubr.f32.mxu0 %v5119
        %5672 = vmatmul.mubr.f32.gmra.mrb[0].mxu0 %v5087
        %v5673 = vpop.f32.mrb[0].mxu0
        %v5674 = vadd.f32 %v5449, %v5673
        %v5675 = vpop.f32.mrb[0].mxu0
        %5676 = vmatprep.mubr.f32.mxu0 %v5120
        %5677 = vmatmul.mubr.f32.gmra.mrb[0].mxu0 %v5088
        %v5678 = vpop.f32.mrb[0].mxu0
        %v5679 = vadd.f32 %v5454, %v5678
        %v5680 = vpop.f32.mrb[0].mxu0
        %5681 = vmatprep.mubr.f32.mxu0 %v5121
        %5682 = vmatmul.mubr.f32.gmra.mrb[0].mxu0 %v5089
        %v5683 = vpop.f32.mrb[0].mxu0
        %v5684 = vadd.f32 %v5459, %v5683
        %v5685 = vpop.f32.mrb[0].mxu0
        %5686 = vmatprep.mubr.f32.mxu0 %v5122
        %5687 = vmatmul.mubr.f32.gmra.mrb[0].mxu0 %v5090
        %v5688 = vpop.f32.mrb[0].mxu0
        %v5689 = vadd.f32 %v5464, %v5688
        %v5690 = vpop.f32.mrb[0].mxu0
        %5691 = vmatprep.mubr.f32.mxu0 %v5123
        %5692 = vmatmul.mubr.f32.gmra.mrb[0].mxu0 %v5091
        %v5693 = vpop.f32.mrb[0].mxu0
        %v5694 = vadd.f32 %v5469, %v5693
        %v5695 = vpop.f32.mrb[0].mxu0
        %5696 = vmatprep.mubr.f32.mxu0 %v5124
        %5697 = vmatmul.mubr.f32.gmra.mrb[0].mxu0 %v5092
        %v5698 = vpop.f32.mrb[0].mxu0
        %v5699 = vadd.f32 %v5474, %v5698
        %v5700 = vpop.f32.mrb[0].mxu0
        %5701 = vmatprep.mubr.f32.mxu0 %v5125
        %5702 = vmatmul.mubr.f32.gmra.mrb[0].mxu0 %v5093
        %v5703 = vpop.f32.mrb[0].mxu0
        %v5704 = vadd.f32 %v5479, %v5703
        %v5705 = vpop.f32.mrb[0].mxu0
        %5706 = vmatprep.mubr.f32.mxu0 %v5126
        %5707 = vmatmul.mubr.f32.gmra.mrb[0].mxu0 %v5094
        %v5708 = vpop.f32.mrb[0].mxu0
        %v5709 = vadd.f32 %v5484, %v5708
        %v5710 = vpop.f32.mrb[0].mxu0
        %5711 = vmatprep.mubr.f32.mxu0 %v5127
        %5712 = vmatmul.mubr.f32.gmra.mrb[0].mxu0 %v5095
        %v5713 = vpop.f32.mrb[0].mxu0
        %v5714 = vadd.f32 %v5489, %v5713
        %v5715 = vpop.f32.mrb[0].mxu0
        %5716 = vmatprep.mubr.f32.mxu0 %v5128
        %5717 = vmatmul.mubr.f32.gmra.mrb[0].mxu0 %v5096
        %v5718 = vpop.f32.mrb[0].mxu0
        %v5719 = vadd.f32 %v5494, %v5718
        %v5720 = vpop.f32.mrb[0].mxu0
        %5721 = vmatprep.mubr.f32.mxu0 %v5129
        %5722 = vmatmul.mubr.f32.gmra.mrb[0].mxu0 %v5097
        %v5723 = vpop.f32.mrb[0].mxu0
        %v5724 = vadd.f32 %v5499, %v5723
        %v5725 = vpop.f32.mrb[0].mxu0
        %5726 = vmatprep.mubr.f32.mxu0 %v5130
        %5727 = vmatmul.mubr.f32.gmra.mrb[0].mxu0 %v5098
        %v5728 = vpop.f32.mrb[0].mxu0
        %v5729 = vadd.f32 %v5504, %v5728
        %v5730 = vpop.f32.mrb[0].mxu0
        %5731 = vmatprep.mubr.f32.mxu0 %v5131
        %5732 = vmatmul.mubr.f32.gmra.mrb[0].mxu0 %v5099
        %v5733 = vpop.f32.mrb[0].mxu0
        %v5734 = vadd.f32 %v5509, %v5733
        %v5735 = vpop.f32.mrb[0].mxu0
        %5736 = vmatprep.mubr.f32.mxu0 %v5132
        %5737 = vmatmul.mubr.f32.gmra.mrb[0].mxu0 %v5100
        %v5738 = vpop.f32.mrb[0].mxu0
        %v5739 = vadd.f32 %v5514, %v5738
        %v5740 = vpop.f32.mrb[0].mxu0
        %5741 = vmatprep.mubr.f32.mxu0 %v5133
        %5742 = vmatmul.mubr.f32.gmra.mrb[0].mxu0 %v5101
        %v5743 = vpop.f32.mrb[0].mxu0
        %v5744 = vadd.f32 %v5519, %v5743
        %v5745 = vpop.f32.mrb[0].mxu0
        %5746 = vmatprep.mubr.f32.mxu0 %v5134
        %5747 = vmatmul.mubr.f32.gmra.mrb[0].mxu0 %v5102
        %v5748 = vpop.f32.mrb[0].mxu0
        %v5749 = vadd.f32 %v5524, %v5748
        %v5750 = vpop.f32.mrb[0].mxu0
        %5751 = vmatprep.mubr.f32.mxu0 %v5135
        %5752 = vmatmul.mubr.f32.gmra.mrb[0].mxu0 %v5103
        %v5753 = vpop.f32.mrb[0].mxu0
        %v5754 = vadd.f32 %v5529, %v5753
        %v5755 = vpop.f32.mrb[0].mxu0
        %5756 = vmatprep.mubr.f32.mxu0 %v5136
        %5757 = vmatmul.mubr.f32.gmra.mrb[0].mxu0 %v5104
        %v5758 = vpop.f32.mrb[0].mxu0
        %v5759 = vadd.f32 %v5534, %v5758
        %v5760 = vpop.f32.mrb[0].mxu0
        %5761 = vdwg.mxu0
        %5762 = vmatprep.subr.mxu0 0.0
        %5763 = vmatpush1.msra.mxu0 %v5201
        %5764 = vmatprep.subr.mxu0 0.0
        %5765 = vmatpush1.msra.mxu0 %v5202
        %5766 = vmatprep.subr.mxu0 0.0
        %5767 = vmatpush1.msra.mxu0 %v5203
        %5768 = vmatprep.subr.mxu0 0.0
        %5769 = vmatpush1.msra.mxu0 %v5204
        %5770 = vmatprep.subr.mxu0 0.0
        %5771 = vmatpush1.msra.mxu0 %v5205
        %5772 = vmatprep.subr.mxu0 0.0
        %5773 = vmatpush1.msra.mxu0 %v5206
        %5774 = vmatprep.subr.mxu0 0.0
        %5775 = vmatpush1.msra.mxu0 %v5207
        %5776 = vmatprep.subr.mxu0 0.0
        %5777 = vmatpush1.msra.mxu0 %v5208
        %5778 = vmatprep.subr.mxu0 0.0
        %5779 = vmatpush1.msra.mxu0 0.0
        %5780 = vmatprep.subr.mxu0 0.0
        %5781 = vmatpush1.msra.mxu0 0.0
        %5782 = vmatprep.subr.mxu0 0.0
        %5783 = vmatpush1.msra.mxu0 0.0
        %5784 = vmatprep.subr.mxu0 0.0
        %5785 = vmatpush1.msra.mxu0 0.0
        %5786 = vmatprep.subr.mxu0 0.0
        %5787 = vmatpush1.msra.mxu0 0.0
        %5788 = vmatprep.subr.mxu0 0.0
        %5789 = vmatpush1.msra.mxu0 0.0
        %5790 = vmatprep.subr.mxu0 0.0
        %5791 = vmatpush1.msra.mxu0 0.0
        %5792 = vmatprep.subr.mxu0 0.0
        %5793 = vmatpush1.msra.mxu0 0.0
        %5794 = vmatprep.subr.mxu0 0.0
        %5795 = vmatpush1.msra.mxu0 0.0
        %5796 = vmatprep.subr.mxu0 0.0
        %5797 = vmatpush1.msra.mxu0 0.0
        %5798 = vmatprep.subr.mxu0 0.0
        %5799 = vmatpush1.msra.mxu0 0.0
        %5800 = vmatprep.subr.mxu0 0.0
        %5801 = vmatpush1.msra.mxu0 0.0
        %5802 = vmatprep.subr.mxu0 0.0
        %5803 = vmatpush1.msra.mxu0 0.0
        %5804 = vmatprep.subr.mxu0 0.0
        %5805 = vmatpush1.msra.mxu0 0.0
        %5806 = vmatprep.subr.mxu0 0.0
        %5807 = vmatpush1.msra.mxu0 0.0
        %5808 = vmatprep.subr.mxu0 0.0
        %5809 = vmatpush1.msra.mxu0 0.0
        %5810 = vmatprep.subr.mxu0 0.0
        %5811 = vmatpush1.msra.mxu0 0.0
        %5812 = vmatprep.subr.mxu0 0.0
        %5813 = vmatpush1.msra.mxu0 0.0
        %5814 = vmatprep.subr.mxu0 0.0
        %5815 = vmatpush1.msra.mxu0 0.0
        %5816 = vmatprep.subr.mxu0 0.0
        %5817 = vmatpush1.msra.mxu0 0.0
        %5818 = vmatprep.subr.mxu0 0.0
        %5819 = vmatpush1.msra.mxu0 0.0
        %5820 = vmatprep.subr.mxu0 0.0
        %5821 = vmatpush1.msra.mxu0 0.0
        %5822 = vmatprep.subr.mxu0 0.0
        %5823 = vmatpush1.msra.mxu0 0.0
        %5824 = vmatprep.subr.mxu0 0.0
        %5825 = vmatpush1.msra.mxu0 0.0
        %5826 = vmatprep.mubr.f32.mxu0 0.0
        %5827 = vmatmul.mubr.f32.gmra.mrb[0].mxu0 %v5217
        %v5828 = vpop.f32.mrb[0].mxu0
        %v5829 = vadd.f32 %v5604, %v5828
        %v5830 = vpop.f32.mrb[0].mxu0
        %5831 = vmatprep.mubr.f32.mxu0 0.0
        %5832 = vmatmul.mubr.f32.gmra.mrb[0].mxu0 %v5220
        %v5833 = vpop.f32.mrb[0].mxu0
        %v5834 = vadd.f32 %v5609, %v5833
        %v5835 = vpop.f32.mrb[0].mxu0
        %5836 = vmatprep.mubr.f32.mxu0 0.0
        %5837 = vmatmul.mubr.f32.gmra.mrb[0].mxu0 %v5223
        %v5838 = vpop.f32.mrb[0].mxu0
        %v5839 = vadd.f32 %v5614, %v5838
        %v5840 = vpop.f32.mrb[0].mxu0
        %5841 = vmatprep.mubr.f32.mxu0 0.0
        %5842 = vmatmul.mubr.f32.gmra.mrb[0].mxu0 %v5226
        %v5843 = vpop.f32.mrb[0].mxu0
        %v5844 = vadd.f32 %v5619, %v5843
        %v5845 = vpop.f32.mrb[0].mxu0
        %5846 = vmatprep.mubr.f32.mxu0 0.0
        %5847 = vmatmul.mubr.f32.gmra.mrb[0].mxu0 %v5229
        %v5848 = vpop.f32.mrb[0].mxu0
        %v5849 = vadd.f32 %v5624, %v5848
        %v5850 = vpop.f32.mrb[0].mxu0
        %5851 = vmatprep.mubr.f32.mxu0 0.0
        %5852 = vmatmul.mubr.f32.gmra.mrb[0].mxu0 %v5232
        %v5853 = vpop.f32.mrb[0].mxu0
        %v5854 = vadd.f32 %v5629, %v5853
        %v5855 = vpop.f32.mrb[0].mxu0
        %5856 = vmatprep.mubr.f32.mxu0 0.0
        %5857 = vmatmul.mubr.f32.gmra.mrb[0].mxu0 %v5235
        %v5858 = vpop.f32.mrb[0].mxu0
        %v5859 = vadd.f32 %v5634, %v5858
        %v5860 = vpop.f32.mrb[0].mxu0
        %5861 = vmatprep.mubr.f32.mxu0 0.0
        %5862 = vmatmul.mubr.f32.gmra.mrb[0].mxu0 %v5238
        %v5863 = vpop.f32.mrb[0].mxu0
        %v5864 = vadd.f32 %v5639, %v5863
        %v5865 = vpop.f32.mrb[0].mxu0
        %5866 = vmatprep.mubr.f32.mxu0 0.0
        %5867 = vmatmul.mubr.f32.gmra.mrb[0].mxu0 %v5241
        %v5868 = vpop.f32.mrb[0].mxu0
        %v5869 = vadd.f32 %v5644, %v5868
        %v5870 = vpop.f32.mrb[0].mxu0
        %5871 = vmatprep.mubr.f32.mxu0 0.0
        %5872 = vmatmul.mubr.f32.gmra.mrb[0].mxu0 %v5244
        %v5873 = vpop.f32.mrb[0].mxu0
        %v5874 = vadd.f32 %v5649, %v5873
        %v5875 = vpop.f32.mrb[0].mxu0
        %5876 = vmatprep.mubr.f32.mxu0 0.0
        %5877 = vmatmul.mubr.f32.gmra.mrb[0].mxu0 %v5247
        %v5878 = vpop.f32.mrb[0].mxu0
        %v5879 = vadd.f32 %v5654, %v5878
        %v5880 = vpop.f32.mrb[0].mxu0
        %5881 = vmatprep.mubr.f32.mxu0 0.0
        %5882 = vmatmul.mubr.f32.gmra.mrb[0].mxu0 %v5250
        %v5883 = vpop.f32.mrb[0].mxu0
        %v5884 = vadd.f32 %v5659, %v5883
        %v5885 = vpop.f32.mrb[0].mxu0
        %5886 = vmatprep.mubr.f32.mxu0 0.0
        %5887 = vmatmul.mubr.f32.gmra.mrb[0].mxu0 %v5253
        %v5888 = vpop.f32.mrb[0].mxu0
        %v5889 = vadd.f32 %v5664, %v5888
        %v5890 = vpop.f32.mrb[0].mxu0
        %5891 = vmatprep.mubr.f32.mxu0 0.0
        %5892 = vmatmul.mubr.f32.gmra.mrb[0].mxu0 %v5256
        %v5893 = vpop.f32.mrb[0].mxu0
        %v5894 = vadd.f32 %v5669, %v5893
        %v5895 = vpop.f32.mrb[0].mxu0
        %5896 = vmatprep.mubr.f32.mxu0 0.0
        %5897 = vmatmul.mubr.f32.gmra.mrb[0].mxu0 %v5259
        %v5898 = vpop.f32.mrb[0].mxu0
        %v5899 = vadd.f32 %v5674, %v5898
        %v5900 = vpop.f32.mrb[0].mxu0
        %5901 = vmatprep.mubr.f32.mxu0 0.0
        %5902 = vmatmul.mubr.f32.gmra.mrb[0].mxu0 %v5262
        %v5903 = vpop.f32.mrb[0].mxu0
        %v5904 = vadd.f32 %v5679, %v5903
        %v5905 = vpop.f32.mrb[0].mxu0
        %5906 = vmatprep.mubr.f32.mxu0 0.0
        %5907 = vmatmul.mubr.f32.gmra.mrb[0].mxu0 %v5265
        %v5908 = vpop.f32.mrb[0].mxu0
        %v5909 = vadd.f32 %v5684, %v5908
        %v5910 = vpop.f32.mrb[0].mxu0
        %5911 = vmatprep.mubr.f32.mxu0 0.0
        %5912 = vmatmul.mubr.f32.gmra.mrb[0].mxu0 %v5268
        %v5913 = vpop.f32.mrb[0].mxu0
        %v5914 = vadd.f32 %v5689, %v5913
        %v5915 = vpop.f32.mrb[0].mxu0
        %5916 = vmatprep.mubr.f32.mxu0 0.0
        %5917 = vmatmul.mubr.f32.gmra.mrb[0].mxu0 %v5271
        %v5918 = vpop.f32.mrb[0].mxu0
        %v5919 = vadd.f32 %v5694, %v5918
        %v5920 = vpop.f32.mrb[0].mxu0
        %5921 = vmatprep.mubr.f32.mxu0 0.0
        %5922 = vmatmul.mubr.f32.gmra.mrb[0].mxu0 %v5274
        %v5923 = vpop.f32.mrb[0].mxu0
        %v5924 = vadd.f32 %v5699, %v5923
        %v5925 = vpop.f32.mrb[0].mxu0
        %5926 = vmatprep.mubr.f32.mxu0 0.0
        %5927 = vmatmul.mubr.f32.gmra.mrb[0].mxu0 %v5277
        %v5928 = vpop.f32.mrb[0].mxu0
        %v5929 = vadd.f32 %v5704, %v5928
        %v5930 = vpop.f32.mrb[0].mxu0
        %5931 = vmatprep.mubr.f32.mxu0 0.0
        %5932 = vmatmul.mubr.f32.gmra.mrb[0].mxu0 %v5280
        %v5933 = vpop.f32.mrb[0].mxu0
        %v5934 = vadd.f32 %v5709, %v5933
        %v5935 = vpop.f32.mrb[0].mxu0
        %5936 = vmatprep.mubr.f32.mxu0 0.0
        %5937 = vmatmul.mubr.f32.gmra.mrb[0].mxu0 %v5283
        %v5938 = vpop.f32.mrb[0].mxu0
        %v5939 = vadd.f32 %v5714, %v5938
        %v5940 = vpop.f32.mrb[0].mxu0
        %5941 = vmatprep.mubr.f32.mxu0 0.0
        %5942 = vmatmul.mubr.f32.gmra.mrb[0].mxu0 %v5286
        %v5943 = vpop.f32.mrb[0].mxu0
        %v5944 = vadd.f32 %v5719, %v5943
        %v5945 = vpop.f32.mrb[0].mxu0
        %5946 = vmatprep.mubr.f32.mxu0 0.0
        %5947 = vmatmul.mubr.f32.gmra.mrb[0].mxu0 %v5289
        %v5948 = vpop.f32.mrb[0].mxu0
        %v5949 = vadd.f32 %v5724, %v5948
        %v5950 = vpop.f32.mrb[0].mxu0
        %5951 = vmatprep.mubr.f32.mxu0 0.0
        %5952 = vmatmul.mubr.f32.gmra.mrb[0].mxu0 %v5292
        %v5953 = vpop.f32.mrb[0].mxu0
        %v5954 = vadd.f32 %v5729, %v5953
        %v5955 = vpop.f32.mrb[0].mxu0
        %5956 = vmatprep.mubr.f32.mxu0 0.0
        %5957 = vmatmul.mubr.f32.gmra.mrb[0].mxu0 %v5295
        %v5958 = vpop.f32.mrb[0].mxu0
        %v5959 = vadd.f32 %v5734, %v5958
        %v5960 = vpop.f32.mrb[0].mxu0
        %5961 = vmatprep.mubr.f32.mxu0 0.0
        %5962 = vmatmul.mubr.f32.gmra.mrb[0].mxu0 %v5298
        %v5963 = vpop.f32.mrb[0].mxu0
        %v5964 = vadd.f32 %v5739, %v5963
        %v5965 = vpop.f32.mrb[0].mxu0
        %5966 = vmatprep.mubr.f32.mxu0 0.0
        %5967 = vmatmul.mubr.f32.gmra.mrb[0].mxu0 %v5301
        %v5968 = vpop.f32.mrb[0].mxu0
        %v5969 = vadd.f32 %v5744, %v5968
        %v5970 = vpop.f32.mrb[0].mxu0
        %5971 = vmatprep.mubr.f32.mxu0 0.0
        %5972 = vmatmul.mubr.f32.gmra.mrb[0].mxu0 %v5304
        %v5973 = vpop.f32.mrb[0].mxu0
        %v5974 = vadd.f32 %v5749, %v5973
        %v5975 = vpop.f32.mrb[0].mxu0
        %5976 = vmatprep.mubr.f32.mxu0 0.0
        %5977 = vmatmul.mubr.f32.gmra.mrb[0].mxu0 %v5307
        %v5978 = vpop.f32.mrb[0].mxu0
        %v5979 = vadd.f32 %v5754, %v5978
        %v5980 = vpop.f32.mrb[0].mxu0
        %5981 = vmatprep.mubr.f32.mxu0 0.0
        %5982 = vmatmul.mubr.f32.gmra.mrb[0].mxu0 %v5310
        %v5983 = vpop.f32.mrb[0].mxu0
        %v5984 = vadd.f32 %v5759, %v5983
        %v5985 = vpop.f32.mrb[0].mxu0
        %5986 = vdwg.mxu0
        %v5987 = vld [vmem:[%s9] sm:$0xff]
        %v5988 = vld [vmem:[%s9 + $0x8] sm:$0xff]
        %v5989 = vld [vmem:[%s9 + $0x10] sm:$0xff]
        %v5990 = vld [vmem:[%s9 + $0x18] sm:$0xff]
        %v5991 = vld [vmem:[%s10] sm:$0x1]
        %v5993 = vlaneseq
        %v5994 = vshrl.u32 %v5993, 7
        %v5995 = vsub.s32 0, %v5994
        %v5996 = vrot.slane %v5991, %v5995
        %v5999 = vsel %vm511, %v409, 0
        %v6002 = vsel %vm511, %v410, 0
        %v6005 = vsel %vm511, %v411, 0
        %v6008 = vsel %vm511, %v412, 0
        %v6011 = vsel %vm511, %v413, 0
        %v6014 = vsel %vm511, %v414, 0
        %v6017 = vsel %vm511, %v415, 0
        %v6020 = vsel %vm511, %v416, 0
        %v6023 = vsel %vm511, %v417, 0
        %v6026 = vsel %vm511, %v418, 0
        %v6029 = vsel %vm511, %v419, 0
        %v6032 = vsel %vm511, %v420, 0
        %v6035 = vsel %vm511, %v421, 0
        %v6038 = vsel %vm511, %v422, 0
        %v6041 = vsel %vm511, %v423, 0
        %v6044 = vsel %vm511, %v424, 0
        %v6047 = vsel %vm511, %v441, 0
        %v6050 = vsel %vm511, %v442, 0
        %v6053 = vsel %vm511, %v443, 0
        %v6056 = vsel %vm511, %v444, 0
        %v6059 = vsel %vm511, %v445, 0
        %v6062 = vsel %vm511, %v446, 0
        %v6065 = vsel %vm511, %v447, 0
        %v6068 = vsel %vm511, %v448, 0
        %v6071 = vsel %vm511, %v449, 0
        %v6074 = vsel %vm511, %v450, 0
        %v6077 = vsel %vm511, %v451, 0
        %v6080 = vsel %vm511, %v452, 0
        %v6083 = vsel %vm511, %v453, 0
        %v6086 = vsel %vm511, %v454, 0
        %v6089 = vsel %vm511, %v455, 0
        %v6092 = vsel %vm511, %v456, 0
        %6094 = vmatprep.subr.mxu0 0.0
        %6095 = vmatpush1.msra.mxu0 %v5987
        %6096 = vmatprep.subr.mxu0 0.0
        %6097 = vmatpush1.msra.mxu0 %v5988
        %6098 = vmatprep.subr.mxu0 0.0
        %6099 = vmatpush1.msra.mxu0 %v5989
        %6100 = vmatprep.subr.mxu0 0.0
        %6101 = vmatpush1.msra.mxu0 %v5990
        %6102 = vmatprep.subr.mxu0 0.0
        %6103 = vmatpush1.msra.mxu0 0.0
        %6104 = vmatprep.subr.mxu0 0.0
        %6105 = vmatpush1.msra.mxu0 0.0
        %6106 = vmatprep.subr.mxu0 0.0
        %6107 = vmatpush1.msra.mxu0 0.0
        %6108 = vmatprep.subr.mxu0 0.0
        %6109 = vmatpush1.msra.mxu0 0.0
        %6110 = vmatprep.subr.mxu0 0.0
        %6111 = vmatpush1.msra.mxu0 0.0
        %6112 = vmatprep.subr.mxu0 0.0
        %6113 = vmatpush1.msra.mxu0 0.0
        %6114 = vmatprep.subr.mxu0 0.0
        %6115 = vmatpush1.msra.mxu0 0.0
        %6116 = vmatprep.subr.mxu0 0.0
        %6117 = vmatpush1.msra.mxu0 0.0
        %6118 = vmatprep.subr.mxu0 0.0
        %6119 = vmatpush1.msra.mxu0 0.0
        %6120 = vmatprep.subr.mxu0 0.0
        %6121 = vmatpush1.msra.mxu0 0.0
        %6122 = vmatprep.subr.mxu0 0.0
        %6123 = vmatpush1.msra.mxu0 0.0
        %6124 = vmatprep.subr.mxu0 0.0
        %6125 = vmatpush1.msra.mxu0 0.0
        %6126 = vmatprep.subr.mxu0 0.0
        %6127 = vmatpush1.msra.mxu0 0.0
        %6128 = vmatprep.subr.mxu0 0.0
        %6129 = vmatpush1.msra.mxu0 0.0
        %6130 = vmatprep.subr.mxu0 0.0
        %6131 = vmatpush1.msra.mxu0 0.0
        %6132 = vmatprep.subr.mxu0 0.0
        %6133 = vmatpush1.msra.mxu0 0.0
        %6134 = vmatprep.subr.mxu0 0.0
        %6135 = vmatpush1.msra.mxu0 0.0
        %6136 = vmatprep.subr.mxu0 0.0
        %6137 = vmatpush1.msra.mxu0 0.0
        %6138 = vmatprep.subr.mxu0 0.0
        %6139 = vmatpush1.msra.mxu0 0.0
        %6140 = vmatprep.subr.mxu0 0.0
        %6141 = vmatpush1.msra.mxu0 0.0
        %6142 = vmatprep.subr.mxu0 0.0
        %6143 = vmatpush1.msra.mxu0 0.0
        %6144 = vmatprep.subr.mxu0 0.0
        %6145 = vmatpush1.msra.mxu0 0.0
        %6146 = vmatprep.subr.mxu0 0.0
        %6147 = vmatpush1.msra.mxu0 0.0
        %6148 = vmatprep.subr.mxu0 0.0
        %6149 = vmatpush1.msra.mxu0 0.0
        %6150 = vmatprep.subr.mxu0 0.0
        %6151 = vmatpush1.msra.mxu0 0.0
        %6152 = vmatprep.subr.mxu0 0.0
        %6153 = vmatpush1.msra.mxu0 0.0
        %6154 = vmatprep.subr.mxu0 0.0
        %6155 = vmatpush1.msra.mxu0 0.0
        %6156 = vmatprep.subr.mxu0 0.0
        %6157 = vmatpush1.msra.mxu0 0.0
        %6158 = vmatprep.mubr.f32.mxu0 0.0
        %6159 = vmatmul.mubr.f32.gmra.mrb[0].mxu0 %v5999
        %v6160 = vpop.f32.mrb[0].mxu0
        %v6161 = vadd.f32 %v5996, %v6160
        %v6162 = vpop.f32.mrb[0].mxu0
        %6163 = vmatprep.mubr.f32.mxu0 0.0
        %6164 = vmatmul.mubr.f32.gmra.mrb[0].mxu0 %v6002
        %v6165 = vpop.f32.mrb[0].mxu0
        %v6166 = vadd.f32 %v5996, %v6165
        %v6167 = vpop.f32.mrb[0].mxu0
        %6168 = vmatprep.mubr.f32.mxu0 0.0
        %6169 = vmatmul.mubr.f32.gmra.mrb[0].mxu0 %v6005
        %v6170 = vpop.f32.mrb[0].mxu0
        %v6171 = vadd.f32 %v5996, %v6170
        %v6172 = vpop.f32.mrb[0].mxu0
        %6173 = vmatprep.mubr.f32.mxu0 0.0
        %6174 = vmatmul.mubr.f32.gmra.mrb[0].mxu0 %v6008
        %v6175 = vpop.f32.mrb[0].mxu0
        %v6176 = vadd.f32 %v5996, %v6175
        %v6177 = vpop.f32.mrb[0].mxu0
        %6178 = vmatprep.mubr.f32.mxu0 0.0
        %6179 = vmatmul.mubr.f32.gmra.mrb[0].mxu0 %v6011
        %v6180 = vpop.f32.mrb[0].mxu0
        %v6181 = vadd.f32 %v5996, %v6180
        %v6182 = vpop.f32.mrb[0].mxu0
        %6183 = vmatprep.mubr.f32.mxu0 0.0
        %6184 = vmatmul.mubr.f32.gmra.mrb[0].mxu0 %v6014
        %v6185 = vpop.f32.mrb[0].mxu0
        %v6186 = vadd.f32 %v5996, %v6185
        %v6187 = vpop.f32.mrb[0].mxu0
        %6188 = vmatprep.mubr.f32.mxu0 0.0
        %6189 = vmatmul.mubr.f32.gmra.mrb[0].mxu0 %v6017
        %v6190 = vpop.f32.mrb[0].mxu0
        %v6191 = vadd.f32 %v5996, %v6190
        %v6192 = vpop.f32.mrb[0].mxu0
        %6193 = vmatprep.mubr.f32.mxu0 0.0
        %6194 = vmatmul.mubr.f32.gmra.mrb[0].mxu0 %v6020
        %v6195 = vpop.f32.mrb[0].mxu0
        %v6196 = vadd.f32 %v5996, %v6195
        %v6197 = vpop.f32.mrb[0].mxu0
        %6198 = vmatprep.mubr.f32.mxu0 0.0
        %6199 = vmatmul.mubr.f32.gmra.mrb[0].mxu0 %v6023
        %v6200 = vpop.f32.mrb[0].mxu0
        %v6201 = vadd.f32 %v5996, %v6200
        %v6202 = vpop.f32.mrb[0].mxu0
        %6203 = vmatprep.mubr.f32.mxu0 0.0
        %6204 = vmatmul.mubr.f32.gmra.mrb[0].mxu0 %v6026
        %v6205 = vpop.f32.mrb[0].mxu0
        %v6206 = vadd.f32 %v5996, %v6205
        %v6207 = vpop.f32.mrb[0].mxu0
        %6208 = vmatprep.mubr.f32.mxu0 0.0
        %6209 = vmatmul.mubr.f32.gmra.mrb[0].mxu0 %v6029
        %v6210 = vpop.f32.mrb[0].mxu0
        %v6211 = vadd.f32 %v5996, %v6210
        %v6212 = vpop.f32.mrb[0].mxu0
        %6213 = vmatprep.mubr.f32.mxu0 0.0
        %6214 = vmatmul.mubr.f32.gmra.mrb[0].mxu0 %v6032
        %v6215 = vpop.f32.mrb[0].mxu0
        %v6216 = vadd.f32 %v5996, %v6215
        %v6217 = vpop.f32.mrb[0].mxu0
        %6218 = vmatprep.mubr.f32.mxu0 0.0
        %6219 = vmatmul.mubr.f32.gmra.mrb[0].mxu0 %v6035
        %v6220 = vpop.f32.mrb[0].mxu0
        %v6221 = vadd.f32 %v5996, %v6220
        %v6222 = vpop.f32.mrb[0].mxu0
        %6223 = vmatprep.mubr.f32.mxu0 0.0
        %6224 = vmatmul.mubr.f32.gmra.mrb[0].mxu0 %v6038
        %v6225 = vpop.f32.mrb[0].mxu0
        %v6226 = vadd.f32 %v5996, %v6225
        %v6227 = vpop.f32.mrb[0].mxu0
        %6228 = vmatprep.mubr.f32.mxu0 0.0
        %6229 = vmatmul.mubr.f32.gmra.mrb[0].mxu0 %v6041
        %v6230 = vpop.f32.mrb[0].mxu0
        %v6231 = vadd.f32 %v5996, %v6230
        %v6232 = vpop.f32.mrb[0].mxu0
        %6233 = vmatprep.mubr.f32.mxu0 0.0
        %6234 = vmatmul.mubr.f32.gmra.mrb[0].mxu0 %v6044
        %v6235 = vpop.f32.mrb[0].mxu0
        %v6236 = vadd.f32 %v5996, %v6235
        %v6237 = vpop.f32.mrb[0].mxu0
        %6238 = vmatprep.mubr.f32.mxu0 0.0
        %6239 = vmatmul.mubr.f32.gmra.mrb[0].mxu0 %v6047
        %v6240 = vpop.f32.mrb[0].mxu0
        %v6241 = vadd.f32 %v5996, %v6240
        %v6242 = vpop.f32.mrb[0].mxu0
        %6243 = vmatprep.mubr.f32.mxu0 0.0
        %6244 = vmatmul.mubr.f32.gmra.mrb[0].mxu0 %v6050
        %v6245 = vpop.f32.mrb[0].mxu0
        %v6246 = vadd.f32 %v5996, %v6245
        %v6247 = vpop.f32.mrb[0].mxu0
        %6248 = vmatprep.mubr.f32.mxu0 0.0
        %6249 = vmatmul.mubr.f32.gmra.mrb[0].mxu0 %v6053
        %v6250 = vpop.f32.mrb[0].mxu0
        %v6251 = vadd.f32 %v5996, %v6250
        %v6252 = vpop.f32.mrb[0].mxu0
        %6253 = vmatprep.mubr.f32.mxu0 0.0
        %6254 = vmatmul.mubr.f32.gmra.mrb[0].mxu0 %v6056
        %v6255 = vpop.f32.mrb[0].mxu0
        %v6256 = vadd.f32 %v5996, %v6255
        %v6257 = vpop.f32.mrb[0].mxu0
        %6258 = vmatprep.mubr.f32.mxu0 0.0
        %6259 = vmatmul.mubr.f32.gmra.mrb[0].mxu0 %v6059
        %v6260 = vpop.f32.mrb[0].mxu0
        %v6261 = vadd.f32 %v5996, %v6260
        %v6262 = vpop.f32.mrb[0].mxu0
        %6263 = vmatprep.mubr.f32.mxu0 0.0
        %6264 = vmatmul.mubr.f32.gmra.mrb[0].mxu0 %v6062
        %v6265 = vpop.f32.mrb[0].mxu0
        %v6266 = vadd.f32 %v5996, %v6265
        %v6267 = vpop.f32.mrb[0].mxu0
        %6268 = vmatprep.mubr.f32.mxu0 0.0
        %6269 = vmatmul.mubr.f32.gmra.mrb[0].mxu0 %v6065
        %v6270 = vpop.f32.mrb[0].mxu0
        %v6271 = vadd.f32 %v5996, %v6270
        %v6272 = vpop.f32.mrb[0].mxu0
        %6273 = vmatprep.mubr.f32.mxu0 0.0
        %6274 = vmatmul.mubr.f32.gmra.mrb[0].mxu0 %v6068
        %v6275 = vpop.f32.mrb[0].mxu0
        %v6276 = vadd.f32 %v5996, %v6275
        %v6277 = vpop.f32.mrb[0].mxu0
        %6278 = vmatprep.mubr.f32.mxu0 0.0
        %6279 = vmatmul.mubr.f32.gmra.mrb[0].mxu0 %v6071
        %v6280 = vpop.f32.mrb[0].mxu0
        %v6281 = vadd.f32 %v5996, %v6280
        %v6282 = vpop.f32.mrb[0].mxu0
        %6283 = vmatprep.mubr.f32.mxu0 0.0
        %6284 = vmatmul.mubr.f32.gmra.mrb[0].mxu0 %v6074
        %v6285 = vpop.f32.mrb[0].mxu0
        %v6286 = vadd.f32 %v5996, %v6285
        %v6287 = vpop.f32.mrb[0].mxu0
        %6288 = vmatprep.mubr.f32.mxu0 0.0
        %6289 = vmatmul.mubr.f32.gmra.mrb[0].mxu0 %v6077
        %v6290 = vpop.f32.mrb[0].mxu0
        %v6291 = vadd.f32 %v5996, %v6290
        %v6292 = vpop.f32.mrb[0].mxu0
        %6293 = vmatprep.mubr.f32.mxu0 0.0
        %6294 = vmatmul.mubr.f32.gmra.mrb[0].mxu0 %v6080
        %v6295 = vpop.f32.mrb[0].mxu0
        %v6296 = vadd.f32 %v5996, %v6295
        %v6297 = vpop.f32.mrb[0].mxu0
        %6298 = vmatprep.mubr.f32.mxu0 0.0
        %6299 = vmatmul.mubr.f32.gmra.mrb[0].mxu0 %v6083
        %v6300 = vpop.f32.mrb[0].mxu0
        %v6301 = vadd.f32 %v5996, %v6300
        %v6302 = vpop.f32.mrb[0].mxu0
        %6303 = vmatprep.mubr.f32.mxu0 0.0
        %6304 = vmatmul.mubr.f32.gmra.mrb[0].mxu0 %v6086
        %v6305 = vpop.f32.mrb[0].mxu0
        %v6306 = vadd.f32 %v5996, %v6305
        %v6307 = vpop.f32.mrb[0].mxu0
        %6308 = vmatprep.mubr.f32.mxu0 0.0
        %6309 = vmatmul.mubr.f32.gmra.mrb[0].mxu0 %v6089
        %v6310 = vpop.f32.mrb[0].mxu0
        %v6311 = vadd.f32 %v5996, %v6310
        %v6312 = vpop.f32.mrb[0].mxu0
        %6313 = vmatprep.mubr.f32.mxu0 0.0
        %6314 = vmatmul.mubr.f32.gmra.mrb[0].mxu0 %v6092
        %v6315 = vpop.f32.mrb[0].mxu0
        %v6316 = vadd.f32 %v5996, %v6315
        %v6317 = vpop.f32.mrb[0].mxu0
        %6318 = vdwg.mxu0
        %v6319 = vadd.f32 %v5829, %v6161
        %v6320 = vadd.f32 %v5834, %v6166
        %v6321 = vadd.f32 %v5839, %v6171
        %v6322 = vadd.f32 %v5844, %v6176
        %v6323 = vadd.f32 %v5849, %v6181
        %v6324 = vadd.f32 %v5854, %v6186
        %v6325 = vadd.f32 %v5859, %v6191
        %v6326 = vadd.f32 %v5864, %v6196
        %v6327 = vadd.f32 %v5869, %v6201
        %v6328 = vadd.f32 %v5874, %v6206
        %v6329 = vadd.f32 %v5879, %v6211
        %v6330 = vadd.f32 %v5884, %v6216
        %v6331 = vadd.f32 %v5889, %v6221
        %v6332 = vadd.f32 %v5894, %v6226
        %v6333 = vadd.f32 %v5899, %v6231
        %v6334 = vadd.f32 %v5904, %v6236
        %v6335 = vadd.f32 %v5909, %v6241
        %v6336 = vadd.f32 %v5914, %v6246
        %v6337 = vadd.f32 %v5919, %v6251
        %v6338 = vadd.f32 %v5924, %v6256
        %v6339 = vadd.f32 %v5929, %v6261
        %v6340 = vadd.f32 %v5934, %v6266
        %v6341 = vadd.f32 %v5939, %v6271
        %v6342 = vadd.f32 %v5944, %v6276
        %v6343 = vadd.f32 %v5949, %v6281
        %v6344 = vadd.f32 %v5954, %v6286
        %v6345 = vadd.f32 %v5959, %v6291
        %v6346 = vadd.f32 %v5964, %v6296
        %v6347 = vadd.f32 %v5969, %v6301
        %v6348 = vadd.f32 %v5974, %v6306
        %v6349 = vadd.f32 %v5979, %v6311
        %v6350 = vadd.f32 %v5984, %v6316
        %v6351 = vmul.f32 %v6319, 0.70710677
        %v6352 = vmul.f32 %v6320, 0.70710677
        %v6353 = vmul.f32 %v6321, 0.70710677
        %v6354 = vmul.f32 %v6322, 0.70710677
        %v6355 = vmul.f32 %v6323, 0.70710677
        %v6356 = vmul.f32 %v6324, 0.70710677
        %v6357 = vmul.f32 %v6325, 0.70710677
        %v6358 = vmul.f32 %v6326, 0.70710677
        %v6359 = vmul.f32 %v6327, 0.70710677
        %v6360 = vmul.f32 %v6328, 0.70710677
        %v6361 = vmul.f32 %v6329, 0.70710677
        %v6362 = vmul.f32 %v6330, 0.70710677
        %v6363 = vmul.f32 %v6331, 0.70710677
        %v6364 = vmul.f32 %v6332, 0.70710677
        %v6365 = vmul.f32 %v6333, 0.70710677
        %v6366 = vmul.f32 %v6334, 0.70710677
        %v6367 = vmul.f32 %v6335, 0.70710677
        %v6368 = vmul.f32 %v6336, 0.70710677
        %v6369 = vmul.f32 %v6337, 0.70710677
        %v6370 = vmul.f32 %v6338, 0.70710677
        %v6371 = vmul.f32 %v6339, 0.70710677
        %v6372 = vmul.f32 %v6340, 0.70710677
        %v6373 = vmul.f32 %v6341, 0.70710677
        %v6374 = vmul.f32 %v6342, 0.70710677
        %v6375 = vmul.f32 %v6343, 0.70710677
        %v6376 = vmul.f32 %v6344, 0.70710677
        %v6377 = vmul.f32 %v6345, 0.70710677
        %v6378 = vmul.f32 %v6346, 0.70710677
        %v6379 = vmul.f32 %v6347, 0.70710677
        %v6380 = vmul.f32 %v6348, 0.70710677
        %v6381 = vmul.f32 %v6349, 0.70710677
        %v6382 = vmul.f32 %v6350, 0.70710677
        %6383 = vxpose.xlu0.b32.start [1/16] %v6351, 128
        %6384 = vxpose.xlu0.b32.cont [2/16] %v6352, 128
        %6385 = vxpose.xlu0.b32.cont [3/16] %v6353, 128
        %6386 = vxpose.xlu0.b32.cont [4/16] %v6354, 128
        %6387 = vxpose.xlu0.b32.cont [5/16] %v6355, 128
        %6388 = vxpose.xlu0.b32.cont [6/16] %v6356, 128
        %6389 = vxpose.xlu0.b32.cont [7/16] %v6357, 128
        %6390 = vxpose.xlu0.b32.cont [8/16] %v6358, 128
        %6391 = vxpose.xlu0.b32.cont [9/16] %v6359, 128
        %6392 = vxpose.xlu0.b32.cont [10/16] %v6360, 128
        %6393 = vxpose.xlu0.b32.cont [11/16] %v6361, 128
        %6394 = vxpose.xlu0.b32.cont [12/16] %v6362, 128
        %6395 = vxpose.xlu0.b32.cont [13/16] %v6363, 128
        %6396 = vxpose.xlu0.b32.cont [14/16] %v6364, 128
        %6397 = vxpose.xlu0.b32.cont [15/16] %v6365, 128
        %6398 = vxpose.xlu0.b32.end [16/16] %v6366, 128
        %v6399 = vpop.trf.xlu0
        %v6400 = vpop.trf.xlu0
        %v6401 = vpop.trf.xlu0
        %v6402 = vpop.trf.xlu0
        %v6403 = vpop.trf.xlu0
        %v6404 = vpop.trf.xlu0
        %v6405 = vpop.trf.xlu0
        %v6406 = vpop.trf.xlu0
        %v6407 = vpop.trf.xlu0
        %v6408 = vpop.trf.xlu0
        %v6409 = vpop.trf.xlu0
        %v6410 = vpop.trf.xlu0
        %v6411 = vpop.trf.xlu0
        %v6412 = vpop.trf.xlu0
        %v6413 = vpop.trf.xlu0
        %v6414 = vpop.trf.xlu0
        %6415 = vxpose.xlu0.b32.start [1/16] %v6367, 128
        %6416 = vxpose.xlu0.b32.cont [2/16] %v6368, 128
        %6417 = vxpose.xlu0.b32.cont [3/16] %v6369, 128
        %6418 = vxpose.xlu0.b32.cont [4/16] %v6370, 128
        %6419 = vxpose.xlu0.b32.cont [5/16] %v6371, 128
        %6420 = vxpose.xlu0.b32.cont [6/16] %v6372, 128
        %6421 = vxpose.xlu0.b32.cont [7/16] %v6373, 128
        %6422 = vxpose.xlu0.b32.cont [8/16] %v6374, 128
        %6423 = vxpose.xlu0.b32.cont [9/16] %v6375, 128
        %6424 = vxpose.xlu0.b32.cont [10/16] %v6376, 128
        %6425 = vxpose.xlu0.b32.cont [11/16] %v6377, 128
        %6426 = vxpose.xlu0.b32.cont [12/16] %v6378, 128
        %6427 = vxpose.xlu0.b32.cont [13/16] %v6379, 128
        %6428 = vxpose.xlu0.b32.cont [14/16] %v6380, 128
        %6429 = vxpose.xlu0.b32.cont [15/16] %v6381, 128
        %6430 = vxpose.xlu0.b32.end [16/16] %v6382, 128
        %v6431 = vpop.trf.xlu0
        %v6432 = vpop.trf.xlu0
        %v6433 = vpop.trf.xlu0
        %v6434 = vpop.trf.xlu0
        %v6435 = vpop.trf.xlu0
        %v6436 = vpop.trf.xlu0
        %v6437 = vpop.trf.xlu0
        %v6438 = vpop.trf.xlu0
        %v6439 = vpop.trf.xlu0
        %v6440 = vpop.trf.xlu0
        %v6441 = vpop.trf.xlu0
        %v6442 = vpop.trf.xlu0
        %v6443 = vpop.trf.xlu0
        %v6444 = vpop.trf.xlu0
        %v6445 = vpop.trf.xlu0
        %v6446 = vpop.trf.xlu0
        %6447 = vst [vmem:[%s379] sm:$0xff] %v6399
        %6448 = vst [vmem:[%s379 + $0x8] sm:$0xff] %v6431
        %6449 = vst [vmem:[%s379 + $0x10] sm:$0xff] %v6400
        %6450 = vst [vmem:[%s379 + $0x18] sm:$0xff] %v6432
        %6451 = vst [vmem:[%s379 + $0x20] sm:$0xff] %v6401
        %6452 = vst [vmem:[%s379 + $0x28] sm:$0xff] %v6433
        %6453 = vst [vmem:[%s379 + $0x30] sm:$0xff] %v6402
        %6454 = vst [vmem:[%s379 + $0x38] sm:$0xff] %v6434
        %6455 = vst [vmem:[%s379 + $0x40] sm:$0xff] %v6403
        %6456 = vst [vmem:[%s379 + $0x48] sm:$0xff] %v6435
        %6457 = vst [vmem:[%s379 + $0x50] sm:$0xff] %v6404
        %6458 = vst [vmem:[%s379 + $0x58] sm:$0xff] %v6436
        %6459 = vst [vmem:[%s379 + $0x60] sm:$0xff] %v6405
        %6460 = vst [vmem:[%s379 + $0x68] sm:$0xff] %v6437
        %6461 = vst [vmem:[%s379 + $0x70] sm:$0xff] %v6406
        %6462 = vst [vmem:[%s379 + $0x78] sm:$0xff] %v6438
        %s6463 = sand.u32 %s269, 1
        %s6464 = scalar_lea.sflag [#allocation5], %s6463
        %s6465 = sand.u32 %s269, 1
        %s6466 = smul.addr %s6465, 128
        %s6467 = scalar_lea.vmem [#allocation4], %s6466
        // Predicated region
        $region65: #{tpu_custom_call.1} parent=63 // pred_check
          %p6468 = pneg %p279
        $region66: #{tpu_custom_call.1} parent=63 // pred_check_branch
          %6470 = sbr.rel (%p6468) target = $region68
        $region67: #{tpu_custom_call.1} parent=63 // pred_region
          %s6472 = ssub.s32 2048, 2048
          %6473 = vsyncadd %s6464, %s6472
          %s6474 = smul.addr %s25, 16
          %s6475 = smul.addr %s6474, 128
          %s6476 = scalar_lea.hbm %s11, %s6475
          %s6477 = sshll.u32 %s6467, 4
          %s6478 = int_to_ptr.vmem [resolvable:$true] %s6477
          %6483 = dma.vmem_to_hbm [thread:$0]  %s6478, 2048, %s6476, %s6464, 256, 256, 16
        $region68: #{tpu_custom_call.1} parent=63 // pred_fallthru
          _
      $region64: #{tpu_custom_call.1} parent=5 // pred_fallthru
        _
      %p6484 = scmp.le.s32.totalorder 2, %s20
      // Predicated region
      $region69: #{tpu_custom_call.1} parent=5 // pred_check
        %p6485 = pneg %p6484
      $region70: #{tpu_custom_call.1} parent=5 // pred_check_branch
        %6487 = sbr.rel (%p6485) target = $region72
      $region71: #{tpu_custom_call.1} parent=5 // pred_region
        %s6488 = ssub.s32 %s20, 2
        // Predicated region
        $region73: #{tpu_custom_call.1} parent=71 // pred_check
          %p6489 = pneg %p285
        $region74: #{tpu_custom_call.1} parent=71 // pred_check_branch
          %6491 = sbr.rel (%p6489) target = $region76
        $region75: #{tpu_custom_call.1} parent=71 // pred_region
          %s6492 = sand.u32 %s270, 1
          %s6493 = scalar_lea.sflag [#allocation5], %s6492
          %s6494 = sand.u32 %s270, 1
          %s6495 = smul.addr %s6494, 128
          %s6496 = scalar_lea.vmem [#allocation4], %s6495
          %6497 = dma.done %s6493, 2048
        $region76: #{tpu_custom_call.1} parent=71 // pred_fallthru
          _
      $region72: #{tpu_custom_call.1} parent=5 // pred_fallthru
        _
    $region6: #{tpu_custom_call.1} parent=1 // loop_footer
      %s24 = sadd.s32 1, %s20
    $region7: #{tpu_custom_call.1} parent=1 // loop_footer_branch
      %19 = sbr.rel target = $region3
    $region8: #{tpu_custom_call.1} parent=1 // loop_exit
      _
    %6498 = vsyncpa [#allocation5], 1
    %s6499 = scalar_lea.sflag [#allocation5], 1
    %6500 = vsyncpa %s6499, 1

</llo_original>
